<compile_context>
chip_gen: v5e
topology: v5e:2x2
jax: 0.10.0
libtpu: 0.0.40
codegen_flags: <defaults>
</compile_context>

<pallas_src>
import functools

import jax
import jax.numpy as jnp
from jax.experimental import pallas as pl
from jax.experimental.pallas import tpu as pltpu


CPAD = 128   # lane-dense channel padding (message / output width)
KPAD = 8     # contraction padding of the per-node channel dim (sublane granule)


# ----------------------------- fused Pallas kernel ------------------------- #
def gnn_fused_kernel(x_ref, g_ref, sadd_ref, smean_ref, ea_ref, wm_ref,
                     rmat_ref, root_ref, affine_ref, out_ref, *,
                     num_layers: int, cin_max: int, cpad: int, kpad: int):
    """Entire GNN_Network_infer forward in one kernel.

    x_ref      : [NB, cpad]      f32   padded node features (data in lanes [0, kpad))
    g_ref      : [EB, NB]        bf16  one-hot gather matrix (source nodes)
    sadd_ref   : [NB, EB]        bf16  scatter matrix, aggr='add'
    smean_ref  : [NB, EB]        f32   scatter matrix, aggr='mean' (exact 1/deg)
    ea_ref     : [EB, F+1]       f32   edge attrs with a trailing ones column
    wm_ref     : [F+1, L*wl]     f32   all layers' edge-MLP weights (+bias row)
    rmat_ref   : [kpad, wl]      bf16  channel -> 128-lane-block replication matrix
    root_ref   : [L, kpad, cpad] f32   NNConv root weights (contraction dim = kpad)
    affine_ref : [L, 2, cpad]    f32   row0 = scale, row1 = shift (bias+BN folded)
    out_ref    : [NB, cpad]      f32   padded output (real result in lane 0)
    """
    x = x_ref[...]                                   # [NB, cpad] f32
    g = g_ref[...]                                   # [EB, NB]   bf16
    sadd = sadd_ref[...]                             # [NB, EB]   bf16
    smean = smean_ref[...]                           # [NB, EB]   f32
    rmat_f = rmat_ref[...].astype(jnp.float32)       # [kpad, wl] (tiny, one convert)
    wl = cin_max * cpad

    # All layers' edge MLPs in one MXU pass + one tanh EUP stream.
    w_all = jnp.tanh(jnp.dot(ea_ref[...], wm_ref[...],
                             preferred_element_type=jnp.float32))     # [EB, L*wl]

    for l in range(num_layers):
        residual = l < num_layers - 1          # last layer: plain NNConv, aggr='mean'
        w_edge = w_all[:, l * wl:(l + 1) * wl]                          # [EB, wl]

        x8 = x[:, :kpad]                                                # [NB, kpad]
        # Replicate each channel across its 128-lane block, THEN gather
        # (reassociated: far fewer MACs than gather-then-replicate).
        x_rep = jnp.dot(x8, rmat_f, preferred_element_type=jnp.float32)  # [NB, wl]
        h_rep = jnp.dot(g, x_rep.astype(jnp.bfloat16),                   # bf16 MXU pass
                        preferred_element_type=jnp.float32)              # [EB, wl]

        # Per-edge message: whole-vreg FMAs + pairwise tree over channel blocks.
        prod = h_rep * w_edge                                            # [EB, wl]
        parts = [prod[:, c * cpad:(c + 1) * cpad] for c in range(cin_max)]
        while len(parts) > 1:
            nxt = [parts[i] + parts[i + 1] for i in range(0, len(parts) - 1, 2)]
            if len(parts) % 2:
                nxt.append(parts[-1])
            parts = nxt
        msg = parts[0]                                                   # [EB, cpad]

        # Aggregate onto target nodes, root transform, folded bias+BN affine.
        if residual:
            agg = jnp.dot(sadd, msg.astype(jnp.bfloat16),                # bf16 MXU pass
                          preferred_element_type=jnp.float32)            # [NB, cpad]
        else:
            agg = jnp.dot(smean, msg, preferred_element_type=jnp.float32)
        aff = affine_ref[l]                                              # [2, cpad]
        h = (jnp.dot(x8, root_ref[l], preferred_element_type=jnp.float32)
             + agg) * aff[0:1, :] + aff[1:2, :]

        if residual:
            x = x + jnp.maximum(h, 0.0)          # eval-BN + ReLU + residual (folded)
        else:
            x = h

    out_ref[...] = x


def run_gnn_fused(x_pad, gmat_bf16, sadd_bf16, smean, ea1, wm_all, rmat_bf16,
                  root_all, affine_all, *, num_layers, cin_max):
    nb = x_pad.shape[0]
    eb = gmat_bf16.shape[0]
    wl = cin_max * CPAD
    args = (x_pad, gmat_bf16, sadd_bf16, smean, ea1, wm_all, rmat_bf16,
            root_all, affine_all)
    # Resident slab = inputs + output + w_all + a few [EB, wl] temporaries.
    resident = (sum(int(a.size) * a.dtype.itemsize for a in args)
                + nb * CPAD * 4                       # output
                + eb * num_layers * wl * 4            # w_all slab
                + 4 * eb * wl * 4)                    # h_rep / prod / partials
    vmem_limit = int(min(max(2 * resident, 16 * 1024 * 1024), 64 * 1024 * 1024))

    vmem = pl.BlockSpec(memory_space=pltpu.MemorySpace.VMEM)
    return pl.pallas_call(
        functools.partial(gnn_fused_kernel, num_layers=num_layers,
                          cin_max=cin_max, cpad=CPAD, kpad=KPAD),
        out_shape=jax.ShapeDtypeStruct((nb, CPAD), jnp.float32),
        in_specs=[vmem] * len(args),
        out_specs=vmem,
        compiler_params=pltpu.CompilerParams(vmem_limit_bytes=vmem_limit),
    )(*args)


# --------------------------- plain-JAX reference --------------------------- #
def layer_ref(x, gmat, smat, edge_attr, params, *, residual):
    cin = x.shape[1]
    cout = params["root"].shape[1]
    h_src = gmat @ x
    w_edge = jnp.tanh(edge_attr @ params["wm"] + params["bm"]).reshape(-1, cin, cout)
    msg = jnp.einsum("ec,eco->eo", h_src, w_edge)
    h = x @ params["root"] + smat @ msg + params["bias"]
    if residual:
        h = (h - params["mean"]) * jax.lax.rsqrt(params["var"] + 1e-5) \
            * params["gamma"] + params["beta"]
        return x + jnp.maximum(h, 0.0)
    return h


def gnn_network_ref(x, gmat, smat_add, smat_mean, edge_attr, all_params):
    for p in all_params[:-1]:
        x = layer_ref(x, gmat, smat_add, edge_attr, p, residual=True)
    return layer_ref(x, gmat, smat_mean, edge_attr, all_params[-1], residual=False)


# ----------------------------- param / graph setup -------------------------- #
def make_layer_params(key, cin, cout, ftr_dim):
    ks = jax.random.split(key, 8)
    return {
        "wm":    0.15 * jax.random.normal(ks[0], (ftr_dim, cin * cout), jnp.float32),
        "bm":    0.05 * jax.random.normal(ks[1], (1, cin * cout), jnp.float32),
        "root":  0.15 * jax.random.normal(ks[2], (cin, cout), jnp.float32),
        "bias":  0.05 * jax.random.normal(ks[3], (1, cout), jnp.float32),
        "gamma": 1.0 + 0.1 * jax.random.normal(ks[4], (1, cout), jnp.float32),
        "beta":  0.05 * jax.random.normal(ks[5], (1, cout), jnp.float32),
        "mean":  0.05 * jax.random.normal(ks[6], (1, cout), jnp.float32),
        "var":   1.0 + 0.1 * jnp.abs(jax.random.normal(ks[7], (1, cout), jnp.float32)),
    }


def build_graph_mats(src, dst, num_nodes, aggr):
    n_edges = src.shape[0]
    gmat = jnp.zeros((n_edges, num_nodes), jnp.float32).at[jnp.arange(n_edges), src].set(1.0)
    smat = jnp.zeros((num_nodes, n_edges), jnp.float32).at[dst, jnp.arange(n_edges)].set(1.0)
    if aggr == "mean":
        deg = smat.sum(axis=1, keepdims=True)
        smat = smat / jnp.maximum(deg, 1.0)
    return gmat, smat


def pack_params(all_params, dims, cin_max, ftr_dim, eps=1e-5):
    """Repack raw per-layer params into the lane-dense fused-kernel layout."""
    assert cin_max <= KPAD, (cin_max, KPAD)
    num_layers = len(dims)
    wl = cin_max * CPAD
    wm_cols, roots, affines = [], [], []
    for idx, (p, (cin, cout)) in enumerate(zip(all_params, dims)):
        residual = idx < num_layers - 1
        if residual:
            # padded residual add x + relu(h) requires matching channel counts
            assert cin == cout, f"residual block {idx}: cin={cin} != cout={cout}"
        assert cin <= KPAD and cout <= CPAD

        # edge MLP: fold bias in as an extra input row; block c (width CPAD)
        # holds the cout columns of input channel c, zero-padded to 128 lanes.
        wm_ext = jnp.concatenate([p["wm"], p["bm"]], axis=0)        # [F+1, cin*cout]
        blk = jnp.zeros((ftr_dim + 1, wl), jnp.float32)
        for c in range(cin):
            blk = blk.at[:, c * CPAD:c * CPAD + cout].set(
                wm_ext[:, c * cout:(c + 1) * cout])
        wm_cols.append(blk)

        roots.append(jnp.zeros((KPAD, CPAD), jnp.float32).at[:cin, :cout].set(p["root"]))

        # bias + eval-BatchNorm folded into (scale, shift); padded lanes get
        # scale=0, shift=0 so they stay exactly zero through the whole stack.
        aff = jnp.zeros((2, CPAD), jnp.float32)
        if residual:
            scale = p["gamma"][0] * jax.lax.rsqrt(p["var"][0] + eps)
            shift = p["beta"][0] + (p["bias"][0] - p["mean"][0]) * scale
        else:
            scale = jnp.ones((cout,), jnp.float32)
            shift = p["bias"][0]
        affines.append(aff.at[0, :cout].set(scale).at[1, :cout].set(shift))

    wm_all = jnp.concatenate(wm_cols, axis=1)        # [F+1, L*wl]
    root_all = jnp.stack(roots)                      # [L, KPAD, CPAD]
    affine_all = jnp.stack(affines)                  # [L, 2, CPAD]
    # channel -> 128-lane-block replication matrix (exact 0/1, bf16)
    rmat = (jnp.arange(KPAD)[:, None]
            == jnp.arange(wl)[None, :] // CPAD).astype(jnp.bfloat16)
    return wm_all, root_all, affine_all, rmat


if __name__ == "__main__":
    # Hyperparameters mirroring GNN_Network_infer.__init__
    IN_CHNLS = 4          # node feature channels
    BASE_MULT = 1.0       # base_chnls multiplier -> base = 4 (residual add stays valid)
    GRWTH_RATE = 1.0      # hidden layers stay at 4 channels
    DEPTH = 2
    FTR_DIM = 8           # edge attribute dim
    N_NODES = 8           # nodes per graph
    N_EDGES = 16          # edges per graph
    N_GRAPHS = 16         # batch graphs so every matmul M dim is 128 / 256

    key = jax.random.PRNGKey(0)
    k_x, k_ea, k_src, k_dst, k_p = jax.random.split(key, 5)

    # The module stores a single (edge_index, edge_attr); a batch of graphs shares them.
    x = jax.random.normal(k_x, (N_GRAPHS, N_NODES, IN_CHNLS), jnp.float32)
    edge_attr = jax.random.normal(k_ea, (N_EDGES, FTR_DIM), jnp.float32)
    src = jax.random.randint(k_src, (N_EDGES,), 0, N_NODES)
    dst = jax.random.randint(k_dst, (N_EDGES,), 0, N_NODES)

    # Host-side batching: block-diagonal "big graph" (kernel body unchanged).
    NB, EB = N_GRAPHS * N_NODES, N_GRAPHS * N_EDGES
    offs = N_NODES * jnp.arange(N_GRAPHS, dtype=src.dtype)
    src_b = (src[None, :] + offs[:, None]).reshape(-1)
    dst_b = (dst[None, :] + offs[:, None]).reshape(-1)
    x_b = x.reshape(NB, IN_CHNLS)
    ea_b = jnp.tile(edge_attr, (N_GRAPHS, 1))

    gmat, smat_add = build_graph_mats(src_b, dst_b, NB, aggr="add")   # aggr_md='add'
    _, smat_mean = build_graph_mats(src_b, dst_b, NB, aggr="mean")    # final layer

    # Channel schedule: in -> base, then `depth` residual blocks, then -> 1 (mean aggr)
    base = int(BASE_MULT * IN_CHNLS)
    dims = [(IN_CHNLS, base)]
    cin = base
    for _ in range(DEPTH):
        cout = max(int(cin * GRWTH_RATE), 1)
        cin = max(cin, 1)
        dims.append((cin, cout))
        cin = cout
    dims.append((cin, 1))                 # final NNConv(in, 1, ..., aggr='mean')
    num_layers = len(dims)
    cin_max = max(ci for ci, _ in dims)

    pkeys = jax.random.split(k_p, num_layers)
    all_params = [make_layer_params(pk, ci, co, FTR_DIM)
                  for pk, (ci, co) in zip(pkeys, dims)]

    # --- pack into fused, lane-dense layout ---
    wm_all, root_all, affine_all, rmat = pack_params(all_params, dims, cin_max, FTR_DIM)
    x_pad = jnp.zeros((NB, CPAD), jnp.float32).at[:, :IN_CHNLS].set(x_b)
    ea1 = jnp.concatenate([ea_b, jnp.ones((EB, 1), jnp.float32)], axis=1)

    out_pad = run_gnn_fused(
        x_pad,
        gmat.astype(jnp.bfloat16),        # structural (exact 0/1) -> bf16 MXU pass
        smat_add.astype(jnp.bfloat16),    # structural (exact 0/1) -> bf16 MXU pass
        smat_mean,                        # keep exact 1/deg weights in f32
        ea1, wm_all, rmat, root_all, affine_all,
        num_layers=num_layers, cin_max=cin_max)
    out_pad = jax.block_until_ready(out_pad)
    out = out_pad[:, :1]                  # real output lives in channel 0

    ref = gnn_network_ref(x_b, gmat, smat_add, smat_mean, ea_b, all_params)
    ref = jax.block_until_ready(ref)

    assert out.shape == (NB, 1), out.shape
    # Kernel runs the gather / add-scatter matmuls as single-pass bf16 MXU
    # (f32 accumulation); the reference runs default-precision f32, hence 5e-2.
    assert jnp.allclose(out, ref, rtol=5e-2, atol=5e-2), \
        float(jnp.max(jnp.abs(out - ref)))
    # padded channels must remain exactly zero
    assert jnp.allclose(out_pad[:, 1:], 0.0, atol=1e-6)
    print("KERNEL_OK")
</pallas_src>

<mosaic_0001>
module attributes {stable_mosaic.version = 11 : i64} {
  func.func @gnn_fused_kernel(%arg0: memref<128x128xf32, #tpu.memory_space<vmem>>, %arg1: memref<256x128xbf16, #tpu.memory_space<vmem>>, %arg2: memref<128x256xbf16, #tpu.memory_space<vmem>>, %arg3: memref<128x256xf32, #tpu.memory_space<vmem>>, %arg4: memref<256x9xf32, #tpu.memory_space<vmem>>, %arg5: memref<9x2048xf32, #tpu.memory_space<vmem>>, %arg6: memref<8x512xbf16, #tpu.memory_space<vmem>>, %arg7: memref<4x8x128xf32, #tpu.memory_space<vmem>>, %arg8: memref<4x2x128xf32, #tpu.memory_space<vmem>>, %arg9: memref<128x128xf32, #tpu.memory_space<vmem>>) attributes {dimension_semantics = [], scalar_prefetch = 0 : i64, scratch_operands = 0 : i64, tpu.core_type = #tpu.core_type<tc>} {
    %c0 = arith.constant 0 : index
    %c0_0 = arith.constant 0 : index
    %0 = vector.load %arg0[%c0, %c0_0] : memref<128x128xf32, #tpu.memory_space<vmem>>, vector<128x128xf32>
    %c0_1 = arith.constant 0 : index
    %c0_2 = arith.constant 0 : index
    %1 = vector.load %arg1[%c0_1, %c0_2] : memref<256x128xbf16, #tpu.memory_space<vmem>>, vector<256x128xbf16>
    %c0_3 = arith.constant 0 : index
    %c0_4 = arith.constant 0 : index
    %2 = vector.load %arg2[%c0_3, %c0_4] : memref<128x256xbf16, #tpu.memory_space<vmem>>, vector<128x256xbf16>
    %c0_5 = arith.constant 0 : index
    %c0_6 = arith.constant 0 : index
    %3 = vector.load %arg3[%c0_5, %c0_6] : memref<128x256xf32, #tpu.memory_space<vmem>>, vector<128x256xf32>
    %c0_7 = arith.constant 0 : index
    %c0_8 = arith.constant 0 : index
    %4 = vector.load %arg6[%c0_7, %c0_8] : memref<8x512xbf16, #tpu.memory_space<vmem>>, vector<8x512xbf16>
    %5 = arith.extf %4 : vector<8x512xbf16> to vector<8x512xf32>
    %c0_9 = arith.constant 0 : index
    %c0_10 = arith.constant 0 : index
    %6 = vector.load %arg4[%c0_9, %c0_10] : memref<256x9xf32, #tpu.memory_space<vmem>>, vector<256x9xf32>
    %c0_11 = arith.constant 0 : index
    %c0_12 = arith.constant 0 : index
    %7 = vector.load %arg5[%c0_11, %c0_12] : memref<9x2048xf32, #tpu.memory_space<vmem>>, vector<9x2048xf32>
    %cst = arith.constant dense<0.000000e+00> : vector<256x2048xf32>
    %8 = tpu.matmul %6, %7, %cst {dimension_numbers = #tpu.dot_dimension_numbers<[1], [0], [0], [1], [0, 0, 1, 1], [], []>} : vector<256x9xf32>, vector<9x2048xf32>, vector<256x2048xf32> -> vector<256x2048xf32>
    %9 = math.tanh %8 : vector<256x2048xf32>
    %10 = vector.extract_strided_slice %9 {offsets = [0, 0], sizes = [256, 512], strides = [1, 1]} : vector<256x2048xf32> to vector<256x512xf32>
    %11 = vector.extract_strided_slice %0 {offsets = [0, 0], sizes = [128, 8], strides = [1, 1]} : vector<128x128xf32> to vector<128x8xf32>
    %cst_13 = arith.constant dense<0.000000e+00> : vector<128x512xf32>
    %12 = tpu.matmul %11, %5, %cst_13 {dimension_numbers = #tpu.dot_dimension_numbers<[1], [0], [0], [1], [0, 0, 1, 1], [], []>} : vector<128x8xf32>, vector<8x512xf32>, vector<128x512xf32> -> vector<128x512xf32>
    %13 = arith.truncf %12 : vector<128x512xf32> to vector<128x512xbf16>
    %cst_14 = arith.constant dense<0.000000e+00> : vector<256x512xf32>
    %14 = tpu.matmul %1, %13, %cst_14 {dimension_numbers = #tpu.dot_dimension_numbers<[1], [0], [0], [1], [0, 0, 1, 1], [], []>} : vector<256x128xbf16>, vector<128x512xbf16>, vector<256x512xf32> -> vector<256x512xf32>
    %15 = arith.mulf %14, %10 : vector<256x512xf32>
    %16 = vector.extract_strided_slice %15 {offsets = [0, 0], sizes = [256, 128], strides = [1, 1]} : vector<256x512xf32> to vector<256x128xf32>
    %17 = vector.extract_strided_slice %15 {offsets = [0, 128], sizes = [256, 128], strides = [1, 1]} : vector<256x512xf32> to vector<256x128xf32>
    %18 = vector.extract_strided_slice %15 {offsets = [0, 256], sizes = [256, 128], strides = [1, 1]} : vector<256x512xf32> to vector<256x128xf32>
    %19 = vector.extract_strided_slice %15 {offsets = [0, 384], sizes = [256, 128], strides = [1, 1]} : vector<256x512xf32> to vector<256x128xf32>
    %20 = arith.addf %16, %17 : vector<256x128xf32>
    %21 = arith.addf %18, %19 : vector<256x128xf32>
    %22 = arith.addf %20, %21 : vector<256x128xf32>
    %23 = arith.truncf %22 : vector<256x128xf32> to vector<256x128xbf16>
    %cst_15 = arith.constant dense<0.000000e+00> : vector<128x128xf32>
    %24 = tpu.matmul %2, %23, %cst_15 {dimension_numbers = #tpu.dot_dimension_numbers<[1], [0], [0], [1], [0, 0, 1, 1], [], []>} : vector<128x256xbf16>, vector<256x128xbf16>, vector<128x128xf32> -> vector<128x128xf32>
    %c0_16 = arith.constant 0 : index
    %c0_17 = arith.constant 0 : index
    %c0_18 = arith.constant 0 : index
    %25 = vector.load %arg8[%c0_16, %c0_17, %c0_18] : memref<4x2x128xf32, #tpu.memory_space<vmem>>, vector<1x2x128xf32>
    %26 = vector.shape_cast %25 : vector<1x2x128xf32> to vector<2x128xf32>
    %c0_19 = arith.constant 0 : index
    %c0_20 = arith.constant 0 : index
    %c0_21 = arith.constant 0 : index
    %27 = vector.load %arg7[%c0_19, %c0_20, %c0_21] : memref<4x8x128xf32, #tpu.memory_space<vmem>>, vector<1x8x128xf32>
    %28 = vector.shape_cast %27 : vector<1x8x128xf32> to vector<8x128xf32>
    %cst_22 = arith.constant dense<0.000000e+00> : vector<128x128xf32>
    %29 = tpu.matmul %11, %28, %cst_22 {dimension_numbers = #tpu.dot_dimension_numbers<[1], [0], [0], [1], [0, 0, 1, 1], [], []>} : vector<128x8xf32>, vector<8x128xf32>, vector<128x128xf32> -> vector<128x128xf32>
    %30 = arith.addf %29, %24 : vector<128x128xf32>
    %31 = vector.extract_strided_slice %26 {offsets = [0, 0], sizes = [1, 128], strides = [1, 1]} : vector<2x128xf32> to vector<1x128xf32>
    %32 = vector.broadcast %31 : vector<1x128xf32> to vector<128x128xf32>
    %33 = arith.mulf %30, %32 : vector<128x128xf32>
    %34 = vector.extract_strided_slice %26 {offsets = [1, 0], sizes = [1, 128], strides = [1, 1]} : vector<2x128xf32> to vector<1x128xf32>
    %35 = vector.broadcast %34 : vector<1x128xf32> to vector<128x128xf32>
    %36 = arith.addf %33, %35 : vector<128x128xf32>
    %cst_23 = arith.constant 0.000000e+00 : f32
    %37 = vector.broadcast %cst_23 : f32 to vector<128x128xf32>
    %38 = arith.maximumf %36, %37 : vector<128x128xf32>
    %39 = arith.addf %0, %38 : vector<128x128xf32>
    %40 = vector.extract_strided_slice %9 {offsets = [0, 512], sizes = [256, 512], strides = [1, 1]} : vector<256x2048xf32> to vector<256x512xf32>
    %41 = vector.extract_strided_slice %39 {offsets = [0, 0], sizes = [128, 8], strides = [1, 1]} : vector<128x128xf32> to vector<128x8xf32>
    %cst_24 = arith.constant dense<0.000000e+00> : vector<128x512xf32>
    %42 = tpu.matmul %41, %5, %cst_24 {dimension_numbers = #tpu.dot_dimension_numbers<[1], [0], [0], [1], [0, 0, 1, 1], [], []>} : vector<128x8xf32>, vector<8x512xf32>, vector<128x512xf32> -> vector<128x512xf32>
    %43 = arith.truncf %42 : vector<128x512xf32> to vector<128x512xbf16>
    %cst_25 = arith.constant dense<0.000000e+00> : vector<256x512xf32>
    %44 = tpu.matmul %1, %43, %cst_25 {dimension_numbers = #tpu.dot_dimension_numbers<[1], [0], [0], [1], [0, 0, 1, 1], [], []>} : vector<256x128xbf16>, vector<128x512xbf16>, vector<256x512xf32> -> vector<256x512xf32>
    %45 = arith.mulf %44, %40 : vector<256x512xf32>
    %46 = vector.extract_strided_slice %45 {offsets = [0, 0], sizes = [256, 128], strides = [1, 1]} : vector<256x512xf32> to vector<256x128xf32>
    %47 = vector.extract_strided_slice %45 {offsets = [0, 128], sizes = [256, 128], strides = [1, 1]} : vector<256x512xf32> to vector<256x128xf32>
    %48 = vector.extract_strided_slice %45 {offsets = [0, 256], sizes = [256, 128], strides = [1, 1]} : vector<256x512xf32> to vector<256x128xf32>
    %49 = vector.extract_strided_slice %45 {offsets = [0, 384], sizes = [256, 128], strides = [1, 1]} : vector<256x512xf32> to vector<256x128xf32>
    %50 = arith.addf %46, %47 : vector<256x128xf32>
    %51 = arith.addf %48, %49 : vector<256x128xf32>
    %52 = arith.addf %50, %51 : vector<256x128xf32>
    %53 = arith.truncf %52 : vector<256x128xf32> to vector<256x128xbf16>
    %cst_26 = arith.constant dense<0.000000e+00> : vector<128x128xf32>
    %54 = tpu.matmul %2, %53, %cst_26 {dimension_numbers = #tpu.dot_dimension_numbers<[1], [0], [0], [1], [0, 0, 1, 1], [], []>} : vector<128x256xbf16>, vector<256x128xbf16>, vector<128x128xf32> -> vector<128x128xf32>
    %c1 = arith.constant 1 : index
    %c0_27 = arith.constant 0 : index
    %c0_28 = arith.constant 0 : index
    %55 = vector.load %arg8[%c1, %c0_27, %c0_28] : memref<4x2x128xf32, #tpu.memory_space<vmem>>, vector<1x2x128xf32>
    %56 = vector.shape_cast %55 : vector<1x2x128xf32> to vector<2x128xf32>
    %c1_29 = arith.constant 1 : index
    %c0_30 = arith.constant 0 : index
    %c0_31 = arith.constant 0 : index
    %57 = vector.load %arg7[%c1_29, %c0_30, %c0_31] : memref<4x8x128xf32, #tpu.memory_space<vmem>>, vector<1x8x128xf32>
    %58 = vector.shape_cast %57 : vector<1x8x128xf32> to vector<8x128xf32>
    %cst_32 = arith.constant dense<0.000000e+00> : vector<128x128xf32>
    %59 = tpu.matmul %41, %58, %cst_32 {dimension_numbers = #tpu.dot_dimension_numbers<[1], [0], [0], [1], [0, 0, 1, 1], [], []>} : vector<128x8xf32>, vector<8x128xf32>, vector<128x128xf32> -> vector<128x128xf32>
    %60 = arith.addf %59, %54 : vector<128x128xf32>
    %61 = vector.extract_strided_slice %56 {offsets = [0, 0], sizes = [1, 128], strides = [1, 1]} : vector<2x128xf32> to vector<1x128xf32>
    %62 = vector.broadcast %61 : vector<1x128xf32> to vector<128x128xf32>
    %63 = arith.mulf %60, %62 : vector<128x128xf32>
    %64 = vector.extract_strided_slice %56 {offsets = [1, 0], sizes = [1, 128], strides = [1, 1]} : vector<2x128xf32> to vector<1x128xf32>
    %65 = vector.broadcast %64 : vector<1x128xf32> to vector<128x128xf32>
    %66 = arith.addf %63, %65 : vector<128x128xf32>
    %cst_33 = arith.constant 0.000000e+00 : f32
    %67 = vector.broadcast %cst_33 : f32 to vector<128x128xf32>
    %68 = arith.maximumf %66, %67 : vector<128x128xf32>
    %69 = arith.addf %39, %68 : vector<128x128xf32>
    %70 = vector.extract_strided_slice %9 {offsets = [0, 1024], sizes = [256, 512], strides = [1, 1]} : vector<256x2048xf32> to vector<256x512xf32>
    %71 = vector.extract_strided_slice %69 {offsets = [0, 0], sizes = [128, 8], strides = [1, 1]} : vector<128x128xf32> to vector<128x8xf32>
    %cst_34 = arith.constant dense<0.000000e+00> : vector<128x512xf32>
    %72 = tpu.matmul %71, %5, %cst_34 {dimension_numbers = #tpu.dot_dimension_numbers<[1], [0], [0], [1], [0, 0, 1, 1], [], []>} : vector<128x8xf32>, vector<8x512xf32>, vector<128x512xf32> -> vector<128x512xf32>
    %73 = arith.truncf %72 : vector<128x512xf32> to vector<128x512xbf16>
    %cst_35 = arith.constant dense<0.000000e+00> : vector<256x512xf32>
    %74 = tpu.matmul %1, %73, %cst_35 {dimension_numbers = #tpu.dot_dimension_numbers<[1], [0], [0], [1], [0, 0, 1, 1], [], []>} : vector<256x128xbf16>, vector<128x512xbf16>, vector<256x512xf32> -> vector<256x512xf32>
    %75 = arith.mulf %74, %70 : vector<256x512xf32>
    %76 = vector.extract_strided_slice %75 {offsets = [0, 0], sizes = [256, 128], strides = [1, 1]} : vector<256x512xf32> to vector<256x128xf32>
    %77 = vector.extract_strided_slice %75 {offsets = [0, 128], sizes = [256, 128], strides = [1, 1]} : vector<256x512xf32> to vector<256x128xf32>
    %78 = vector.extract_strided_slice %75 {offsets = [0, 256], sizes = [256, 128], strides = [1, 1]} : vector<256x512xf32> to vector<256x128xf32>
    %79 = vector.extract_strided_slice %75 {offsets = [0, 384], sizes = [256, 128], strides = [1, 1]} : vector<256x512xf32> to vector<256x128xf32>
    %80 = arith.addf %76, %77 : vector<256x128xf32>
    %81 = arith.addf %78, %79 : vector<256x128xf32>
    %82 = arith.addf %80, %81 : vector<256x128xf32>
    %83 = arith.truncf %82 : vector<256x128xf32> to vector<256x128xbf16>
    %cst_36 = arith.constant dense<0.000000e+00> : vector<128x128xf32>
    %84 = tpu.matmul %2, %83, %cst_36 {dimension_numbers = #tpu.dot_dimension_numbers<[1], [0], [0], [1], [0, 0, 1, 1], [], []>} : vector<128x256xbf16>, vector<256x128xbf16>, vector<128x128xf32> -> vector<128x128xf32>
    %c2 = arith.constant 2 : index
    %c0_37 = arith.constant 0 : index
    %c0_38 = arith.constant 0 : index
    %85 = vector.load %arg8[%c2, %c0_37, %c0_38] : memref<4x2x128xf32, #tpu.memory_space<vmem>>, vector<1x2x128xf32>
    %86 = vector.shape_cast %85 : vector<1x2x128xf32> to vector<2x128xf32>
    %c2_39 = arith.constant 2 : index
    %c0_40 = arith.constant 0 : index
    %c0_41 = arith.constant 0 : index
    %87 = vector.load %arg7[%c2_39, %c0_40, %c0_41] : memref<4x8x128xf32, #tpu.memory_space<vmem>>, vector<1x8x128xf32>
    %88 = vector.shape_cast %87 : vector<1x8x128xf32> to vector<8x128xf32>
    %cst_42 = arith.constant dense<0.000000e+00> : vector<128x128xf32>
    %89 = tpu.matmul %71, %88, %cst_42 {dimension_numbers = #tpu.dot_dimension_numbers<[1], [0], [0], [1], [0, 0, 1, 1], [], []>} : vector<128x8xf32>, vector<8x128xf32>, vector<128x128xf32> -> vector<128x128xf32>
    %90 = arith.addf %89, %84 : vector<128x128xf32>
    %91 = vector.extract_strided_slice %86 {offsets = [0, 0], sizes = [1, 128], strides = [1, 1]} : vector<2x128xf32> to vector<1x128xf32>
    %92 = vector.broadcast %91 : vector<1x128xf32> to vector<128x128xf32>
    %93 = arith.mulf %90, %92 : vector<128x128xf32>
    %94 = vector.extract_strided_slice %86 {offsets = [1, 0], sizes = [1, 128], strides = [1, 1]} : vector<2x128xf32> to vector<1x128xf32>
    %95 = vector.broadcast %94 : vector<1x128xf32> to vector<128x128xf32>
    %96 = arith.addf %93, %95 : vector<128x128xf32>
    %cst_43 = arith.constant 0.000000e+00 : f32
    %97 = vector.broadcast %cst_43 : f32 to vector<128x128xf32>
    %98 = arith.maximumf %96, %97 : vector<128x128xf32>
    %99 = arith.addf %69, %98 : vector<128x128xf32>
    %100 = vector.extract_strided_slice %9 {offsets = [0, 1536], sizes = [256, 512], strides = [1, 1]} : vector<256x2048xf32> to vector<256x512xf32>
    %101 = vector.extract_strided_slice %99 {offsets = [0, 0], sizes = [128, 8], strides = [1, 1]} : vector<128x128xf32> to vector<128x8xf32>
    %cst_44 = arith.constant dense<0.000000e+00> : vector<128x512xf32>
    %102 = tpu.matmul %101, %5, %cst_44 {dimension_numbers = #tpu.dot_dimension_numbers<[1], [0], [0], [1], [0, 0, 1, 1], [], []>} : vector<128x8xf32>, vector<8x512xf32>, vector<128x512xf32> -> vector<128x512xf32>
    %103 = arith.truncf %102 : vector<128x512xf32> to vector<128x512xbf16>
    %cst_45 = arith.constant dense<0.000000e+00> : vector<256x512xf32>
    %104 = tpu.matmul %1, %103, %cst_45 {dimension_numbers = #tpu.dot_dimension_numbers<[1], [0], [0], [1], [0, 0, 1, 1], [], []>} : vector<256x128xbf16>, vector<128x512xbf16>, vector<256x512xf32> -> vector<256x512xf32>
    %105 = arith.mulf %104, %100 : vector<256x512xf32>
    %106 = vector.extract_strided_slice %105 {offsets = [0, 0], sizes = [256, 128], strides = [1, 1]} : vector<256x512xf32> to vector<256x128xf32>
    %107 = vector.extract_strided_slice %105 {offsets = [0, 128], sizes = [256, 128], strides = [1, 1]} : vector<256x512xf32> to vector<256x128xf32>
    %108 = vector.extract_strided_slice %105 {offsets = [0, 256], sizes = [256, 128], strides = [1, 1]} : vector<256x512xf32> to vector<256x128xf32>
    %109 = vector.extract_strided_slice %105 {offsets = [0, 384], sizes = [256, 128], strides = [1, 1]} : vector<256x512xf32> to vector<256x128xf32>
    %110 = arith.addf %106, %107 : vector<256x128xf32>
    %111 = arith.addf %108, %109 : vector<256x128xf32>
    %112 = arith.addf %110, %111 : vector<256x128xf32>
    %cst_46 = arith.constant dense<0.000000e+00> : vector<128x128xf32>
    %113 = tpu.matmul %3, %112, %cst_46 {dimension_numbers = #tpu.dot_dimension_numbers<[1], [0], [0], [1], [0, 0, 1, 1], [], []>} : vector<128x256xf32>, vector<256x128xf32>, vector<128x128xf32> -> vector<128x128xf32>
    %c3 = arith.constant 3 : index
    %c0_47 = arith.constant 0 : index
    %c0_48 = arith.constant 0 : index
    %114 = vector.load %arg8[%c3, %c0_47, %c0_48] : memref<4x2x128xf32, #tpu.memory_space<vmem>>, vector<1x2x128xf32>
    %115 = vector.shape_cast %114 : vector<1x2x128xf32> to vector<2x128xf32>
    %c3_49 = arith.constant 3 : index
    %c0_50 = arith.constant 0 : index
    %c0_51 = arith.constant 0 : index
    %116 = vector.load %arg7[%c3_49, %c0_50, %c0_51] : memref<4x8x128xf32, #tpu.memory_space<vmem>>, vector<1x8x128xf32>
    %117 = vector.shape_cast %116 : vector<1x8x128xf32> to vector<8x128xf32>
    %cst_52 = arith.constant dense<0.000000e+00> : vector<128x128xf32>
    %118 = tpu.matmul %101, %117, %cst_52 {dimension_numbers = #tpu.dot_dimension_numbers<[1], [0], [0], [1], [0, 0, 1, 1], [], []>} : vector<128x8xf32>, vector<8x128xf32>, vector<128x128xf32> -> vector<128x128xf32>
    %119 = arith.addf %118, %113 : vector<128x128xf32>
    %120 = vector.extract_strided_slice %115 {offsets = [0, 0], sizes = [1, 128], strides = [1, 1]} : vector<2x128xf32> to vector<1x128xf32>
    %121 = vector.broadcast %120 : vector<1x128xf32> to vector<128x128xf32>
    %122 = arith.mulf %119, %121 : vector<128x128xf32>
    %123 = vector.extract_strided_slice %115 {offsets = [1, 0], sizes = [1, 128], strides = [1, 1]} : vector<2x128xf32> to vector<1x128xf32>
    %124 = vector.broadcast %123 : vector<1x128xf32> to vector<128x128xf32>
    %125 = arith.addf %122, %124 : vector<128x128xf32>
    %c0_53 = arith.constant 0 : index
    %c0_54 = arith.constant 0 : index
    %126 = vector.load %arg9[%c0_53, %c0_54] : memref<128x128xf32, #tpu.memory_space<vmem>>, vector<128x128xf32>
    tpu.vector_store %arg9[%c0_53, %c0_54], %125 {strides = array<i32>} : memref<128x128xf32, #tpu.memory_space<vmem>>, vector<128x128xf32>,
    return
  }
}

</mosaic_0001>

<llo_original>
// kernel: tpu_custom_call.1
$region0: #{tpu_custom_call.1}
  #allocation0 [shape = 'u32[]', space=smem, size = 0x4, offset = 0x4, fixed_abs, tag = 'smem constant byte address 0x4 - core index']
  #allocation1 [shape = 'u32[72,128]{1,0:T(1,128)}', space=vmem, size = 0x9000, scoped, tag = 'internal scratch']
  %s0 = inlined_call_operand.hbm [shape: f32[128,128], index: 0, kind: input, shape index: {}]
  %s1 = inlined_call_operand.hbm [shape: bf16[256,128], index: 1, kind: input, shape index: {}]
  %s2 = inlined_call_operand.hbm [shape: bf16[128,256], index: 2, kind: input, shape index: {}]
  %s3 = inlined_call_operand.vmem [shape: f32[128,256], index: 3, kind: input, shape index: {}]
  %s4 = inlined_call_operand.vmem [shape: f32[256,9], index: 4, kind: input, shape index: {}]
  %s5 = inlined_call_operand.hbm [shape: f32[9,2048], index: 5, kind: input, shape index: {}]
  %s6 = inlined_call_operand.hbm [shape: bf16[8,512], index: 6, kind: input, shape index: {}]
  %s7 = inlined_call_operand.vmem [shape: f32[4,8,128], index: 7, kind: input, shape index: {}]
  %s8 = inlined_call_operand.hbm [shape: f32[4,2,128], index: 8, kind: input, shape index: {}]
  %s9 = inlined_call_operand.hbm [shape: f32[128,128], index: 9, kind: output, shape index: {}]
  %s10 = sld [smem:[#allocation0]]
  $region70: #{tpu_custom_call.1} parent=0
    _
  %s12 = ssub.s32 1, %s10
  %s13 = scalar_select 0, %s12, %s10
  $region1: #{tpu_custom_call.1} parent=0
    #allocation2 [shape = 'u8[65536]{0}', space=vmem, size = 0x10000, scoped, tag = 'input window, operand 0, single buffered']
    #allocation3 [shape = 's32[1]{0}', space=sflag, size = 0x4, scoped, tag = 'scoped memory for tpu_custom_call.1']
    #allocation4 [shape = 's32[1]{0}', space=sflag, size = 0x4, scoped, tag = 'scoped memory for tpu_custom_call.1']
    #allocation5 [shape = 'u8[65536]{0}', space=vmem, size = 0x10000, scoped, tag = 'input window, operand 1, single buffered']
    #allocation6 [shape = 's32[1]{0}', space=sflag, size = 0x4, scoped, tag = 'scoped memory for tpu_custom_call.1']
    #allocation7 [shape = 'u8[65536]{0}', space=vmem, size = 0x10000, scoped, tag = 'input window, operand 2, single buffered']
    #allocation8 [shape = 'u8[131072]{0}', space=vmem, size = 0x20000, scoped, tag = 'input window, operand 5, single buffered']
    #allocation9 [shape = 's32[1]{0}', space=sflag, size = 0x4, scoped, tag = 'scoped memory for tpu_custom_call.1']
    #allocation10 [shape = 'u8[8192]{0}', space=vmem, size = 0x2000, scoped, tag = 'input window, operand 6, single buffered']
    #allocation11 [shape = 'u8[4096]{0}', space=vmem, size = 0x1000, scoped, tag = 'input window, operand 8, single buffered']
    #allocation12 [shape = 's32[1]{0}', space=sflag, size = 0x4, scoped, tag = 'scoped memory for tpu_custom_call.1']
    #allocation13 [shape = 'u8[65536]{0}', space=vmem, size = 0x10000, scoped, tag = 'output window, operand 0, single buffered']
    %14 = vsyncpa [#allocation3], 0
    %15 = vsyncpa [#allocation6], 0
    %16 = vsyncpa [#allocation9], 0
    %17 = vsyncpa [#allocation12], 0
    %18 = vsyncpa [#allocation4], 0
    // Predicated region
    $region2: #{tpu_custom_call.1} parent=1 // pred_check
      _
    $region3: #{tpu_custom_call.1} parent=1 // pred_check_branch
      %20 = sbr.rel (0) target = $region5
    $region4: #{tpu_custom_call.1} parent=1 // pred_region
      %22 = vsyncadd [#allocation3], 0
      %s23 = sshll.u32 %s0, 4
      %s24 = int_to_ptr.hbm [resolvable:$true] %s23
      %s25 = sshll.u32 [#allocation2], 4
      %s26 = int_to_ptr.vmem [resolvable:$true] %s25
      %31 = dma.hbm_to_vmem [thread:$0]  %s24, 2048, %s26, [#allocation3], 128, 128, 8
    $region5: #{tpu_custom_call.1} parent=1 // pred_fallthru
      _
    // Predicated region
    $region6: #{tpu_custom_call.1} parent=1 // pred_check
      _
    $region7: #{tpu_custom_call.1} parent=1 // pred_check_branch
      %33 = sbr.rel (0) target = $region9
    $region8: #{tpu_custom_call.1} parent=1 // pred_region
      %35 = vsyncadd [#allocation6], 0
      %s36 = sshll.u32 %s1, 4
      %s37 = int_to_ptr.hbm [resolvable:$true] %s36
      %s38 = sshll.u32 [#allocation5], 4
      %s39 = int_to_ptr.vmem [resolvable:$true] %s38
      %44 = dma.hbm_to_vmem [thread:$0]  %s37, 2048, %s39, [#allocation6], 64, 64, 4
    $region9: #{tpu_custom_call.1} parent=1 // pred_fallthru
      _
    // Predicated region
    $region10: #{tpu_custom_call.1} parent=1 // pred_check
      _
    $region11: #{tpu_custom_call.1} parent=1 // pred_check_branch
      %46 = sbr.rel (0) target = $region13
    $region12: #{tpu_custom_call.1} parent=1 // pred_region
      %48 = vsyncadd [#allocation6], 0
      %s49 = sshll.u32 %s2, 4
      %s50 = int_to_ptr.hbm [resolvable:$true] %s49
      %s51 = sshll.u32 [#allocation7], 4
      %s52 = int_to_ptr.vmem [resolvable:$true] %s51
      %57 = dma.hbm_to_vmem [thread:$0]  %s50, 2048, %s52, [#allocation6], 128, 128, 8
    $region13: #{tpu_custom_call.1} parent=1 // pred_fallthru
      _
    // Predicated region
    $region14: #{tpu_custom_call.1} parent=1 // pred_check
      _
    $region15: #{tpu_custom_call.1} parent=1 // pred_check_branch
      %59 = sbr.rel (0) target = $region17
    $region16: #{tpu_custom_call.1} parent=1 // pred_region
      _
    $region17: #{tpu_custom_call.1} parent=1 // pred_fallthru
      _
    // Predicated region
    $region18: #{tpu_custom_call.1} parent=1 // pred_check
      _
    $region19: #{tpu_custom_call.1} parent=1 // pred_check_branch
      %61 = sbr.rel (0) target = $region21
    $region20: #{tpu_custom_call.1} parent=1 // pred_region
      _
    $region21: #{tpu_custom_call.1} parent=1 // pred_fallthru
      _
    // Predicated region
    $region22: #{tpu_custom_call.1} parent=1 // pred_check
      _
    $region23: #{tpu_custom_call.1} parent=1 // pred_check_branch
      %63 = sbr.rel (0) target = $region25
    $region24: #{tpu_custom_call.1} parent=1 // pred_region
      %65 = vsyncadd [#allocation9], 0
      %s66 = sshll.u32 %s5, 4
      %s67 = int_to_ptr.hbm [resolvable:$true] %s66
      %s68 = sshll.u32 [#allocation8], 4
      %s69 = int_to_ptr.vmem [resolvable:$true] %s68
      %74 = dma.hbm_to_vmem [thread:$0]  %s67, 4096, %s69, [#allocation9], 2048, 2048, 128
    $region25: #{tpu_custom_call.1} parent=1 // pred_fallthru
      _
    // Predicated region
    $region26: #{tpu_custom_call.1} parent=1 // pred_check
      _
    $region27: #{tpu_custom_call.1} parent=1 // pred_check_branch
      %76 = sbr.rel (0) target = $region29
    $region28: #{tpu_custom_call.1} parent=1 // pred_region
      %78 = vsyncadd [#allocation9], 0
      %s80 = sshll.u32 %s6, 4
      %s81 = int_to_ptr.hbm [resolvable:$true] %s80
      %s82 = sshll.u32 [#allocation10], 4
      %s83 = int_to_ptr.vmem [resolvable:$true] %s82
      %85 = dma.hbm_to_vmem [thread:$0]  %s81, 256, %s83, [#allocation9]
    $region29: #{tpu_custom_call.1} parent=1 // pred_fallthru
      _
    // Predicated region
    $region30: #{tpu_custom_call.1} parent=1 // pred_check
      _
    $region31: #{tpu_custom_call.1} parent=1 // pred_check_branch
      %87 = sbr.rel (0) target = $region33
    $region32: #{tpu_custom_call.1} parent=1 // pred_region
      _
    $region33: #{tpu_custom_call.1} parent=1 // pred_fallthru
      _
    // Predicated region
    $region34: #{tpu_custom_call.1} parent=1 // pred_check
      _
    $region35: #{tpu_custom_call.1} parent=1 // pred_check_branch
      %89 = sbr.rel (0) target = $region37
    $region36: #{tpu_custom_call.1} parent=1 // pred_region
      %91 = vsyncadd [#allocation12], 0
      %s92 = sshll.u32 %s8, 4
      %s93 = int_to_ptr.hbm [resolvable:$true] %s92
      %s94 = sshll.u32 [#allocation11], 4
      %s95 = int_to_ptr.vmem [resolvable:$true] %s94
      %100 = dma.hbm_to_vmem [thread:$0]  %s93, 128, %s95, [#allocation12], 32, 32, 2
    $region37: #{tpu_custom_call.1} parent=1 // pred_fallthru
      _
    // Predicated region
    $region38: #{tpu_custom_call.1} parent=1 // pred_check
      _
    $region39: #{tpu_custom_call.1} parent=1 // pred_check_branch
      %102 = sbr.rel (0) target = $region41
    $region40: #{tpu_custom_call.1} parent=1 // pred_region
      %104 = dma.done [#allocation3], 2048
    $region41: #{tpu_custom_call.1} parent=1 // pred_fallthru
      _
    // Predicated region
    $region42: #{tpu_custom_call.1} parent=1 // pred_check
      _
    $region43: #{tpu_custom_call.1} parent=1 // pred_check_branch
      %106 = sbr.rel (0) target = $region45
    $region44: #{tpu_custom_call.1} parent=1 // pred_region
      %108 = dma.done [#allocation6], 2048
    $region45: #{tpu_custom_call.1} parent=1 // pred_fallthru
      _
    // Predicated region
    $region46: #{tpu_custom_call.1} parent=1 // pred_check
      _
    $region47: #{tpu_custom_call.1} parent=1 // pred_check_branch
      %110 = sbr.rel (0) target = $region49
    $region48: #{tpu_custom_call.1} parent=1 // pred_region
      %112 = dma.done [#allocation6], 2048
    $region49: #{tpu_custom_call.1} parent=1 // pred_fallthru
      _
    // Predicated region
    $region50: #{tpu_custom_call.1} parent=1 // pred_check
      _
    $region51: #{tpu_custom_call.1} parent=1 // pred_check_branch
      %114 = sbr.rel (0) target = $region53
    $region52: #{tpu_custom_call.1} parent=1 // pred_region
      %116 = dma.done [#allocation9], 4096
    $region53: #{tpu_custom_call.1} parent=1 // pred_fallthru
      _
    // Predicated region
    $region54: #{tpu_custom_call.1} parent=1 // pred_check
      _
    $region55: #{tpu_custom_call.1} parent=1 // pred_check_branch
      %118 = sbr.rel (0) target = $region57
    $region56: #{tpu_custom_call.1} parent=1 // pred_region
      %120 = dma.done [#allocation9], 256
    $region57: #{tpu_custom_call.1} parent=1 // pred_fallthru
      _
    // Predicated region
    $region58: #{tpu_custom_call.1} parent=1 // pred_check
      _
    $region59: #{tpu_custom_call.1} parent=1 // pred_check_branch
      %122 = sbr.rel (0) target = $region61
    $region60: #{tpu_custom_call.1} parent=1 // pred_region
      %124 = dma.done [#allocation12], 128
    $region61: #{tpu_custom_call.1} parent=1 // pred_fallthru
      _
    %v125 = vld [vmem:[#allocation2] sm:$0xff]
    %v126 = vld [vmem:[#allocation2 + $0x8] sm:$0xff]
    %v127 = vld [vmem:[#allocation2 + $0x10] sm:$0xff]
    %v128 = vld [vmem:[#allocation2 + $0x18] sm:$0xff]
    %v129 = vld [vmem:[#allocation2 + $0x20] sm:$0xff]
    %v130 = vld [vmem:[#allocation2 + $0x28] sm:$0xff]
    %v131 = vld [vmem:[#allocation2 + $0x30] sm:$0xff]
    %v132 = vld [vmem:[#allocation2 + $0x38] sm:$0xff]
    %v133 = vld [vmem:[#allocation2 + $0x40] sm:$0xff]
    %v134 = vld [vmem:[#allocation2 + $0x48] sm:$0xff]
    %v135 = vld [vmem:[#allocation2 + $0x50] sm:$0xff]
    %v136 = vld [vmem:[#allocation2 + $0x58] sm:$0xff]
    %v137 = vld [vmem:[#allocation2 + $0x60] sm:$0xff]
    %v138 = vld [vmem:[#allocation2 + $0x68] sm:$0xff]
    %v139 = vld [vmem:[#allocation2 + $0x70] sm:$0xff]
    %v140 = vld [vmem:[#allocation2 + $0x78] sm:$0xff]
    %v141 = vld [vmem:[#allocation5] sm:$0xf]
    %v142 = vld [vmem:[#allocation5 + $0x4] sm:$0xf]
    %v143 = vld [vmem:[#allocation5 + $0x8] sm:$0xf]
    %v144 = vld [vmem:[#allocation5 + $0xc] sm:$0xf]
    %v145 = vld [vmem:[#allocation5 + $0x10] sm:$0xf]
    %v146 = vld [vmem:[#allocation5 + $0x14] sm:$0xf]
    %v147 = vld [vmem:[#allocation5 + $0x18] sm:$0xf]
    %v148 = vld [vmem:[#allocation5 + $0x1c] sm:$0xf]
    %v149 = vld [vmem:[#allocation5 + $0x20] sm:$0xf]
    %v150 = vld [vmem:[#allocation5 + $0x24] sm:$0xf]
    %v151 = vld [vmem:[#allocation5 + $0x28] sm:$0xf]
    %v152 = vld [vmem:[#allocation5 + $0x2c] sm:$0xf]
    %v153 = vld [vmem:[#allocation5 + $0x30] sm:$0xf]
    %v154 = vld [vmem:[#allocation5 + $0x34] sm:$0xf]
    %v155 = vld [vmem:[#allocation5 + $0x38] sm:$0xf]
    %v156 = vld [vmem:[#allocation5 + $0x3c] sm:$0xf]
    %v157 = vld [vmem:[#allocation5 + $0x40] sm:$0xf]
    %v158 = vld [vmem:[#allocation5 + $0x44] sm:$0xf]
    %v159 = vld [vmem:[#allocation5 + $0x48] sm:$0xf]
    %v160 = vld [vmem:[#allocation5 + $0x4c] sm:$0xf]
    %v161 = vld [vmem:[#allocation5 + $0x50] sm:$0xf]
    %v162 = vld [vmem:[#allocation5 + $0x54] sm:$0xf]
    %v163 = vld [vmem:[#allocation5 + $0x58] sm:$0xf]
    %v164 = vld [vmem:[#allocation5 + $0x5c] sm:$0xf]
    %v165 = vld [vmem:[#allocation5 + $0x60] sm:$0xf]
    %v166 = vld [vmem:[#allocation5 + $0x64] sm:$0xf]
    %v167 = vld [vmem:[#allocation5 + $0x68] sm:$0xf]
    %v168 = vld [vmem:[#allocation5 + $0x6c] sm:$0xf]
    %v169 = vld [vmem:[#allocation5 + $0x70] sm:$0xf]
    %v170 = vld [vmem:[#allocation5 + $0x74] sm:$0xf]
    %v171 = vld [vmem:[#allocation5 + $0x78] sm:$0xf]
    %v172 = vld [vmem:[#allocation5 + $0x7c] sm:$0xf]
    %v173 = vld [vmem:[#allocation7] sm:$0xff]
    %v174 = vld [vmem:[#allocation7 + $0x8] sm:$0xff]
    %v175 = vld [vmem:[#allocation7 + $0x10] sm:$0xff]
    %v176 = vld [vmem:[#allocation7 + $0x18] sm:$0xff]
    %v177 = vld [vmem:[#allocation7 + $0x20] sm:$0xff]
    %v178 = vld [vmem:[#allocation7 + $0x28] sm:$0xff]
    %v179 = vld [vmem:[#allocation7 + $0x30] sm:$0xff]
    %v180 = vld [vmem:[#allocation7 + $0x38] sm:$0xff]
    %v181 = vld [vmem:[#allocation7 + $0x40] sm:$0xff]
    %v182 = vld [vmem:[#allocation7 + $0x48] sm:$0xff]
    %v183 = vld [vmem:[#allocation7 + $0x50] sm:$0xff]
    %v184 = vld [vmem:[#allocation7 + $0x58] sm:$0xff]
    %v185 = vld [vmem:[#allocation7 + $0x60] sm:$0xff]
    %v186 = vld [vmem:[#allocation7 + $0x68] sm:$0xff]
    %v187 = vld [vmem:[#allocation7 + $0x70] sm:$0xff]
    %v188 = vld [vmem:[#allocation7 + $0x78] sm:$0xff]
    %v189 = vld [vmem:[%s3] sm:$0xff]
    %v190 = vld [vmem:[%s3 + $0x8] sm:$0xff]
    %v191 = vld [vmem:[%s3 + $0x10] sm:$0xff]
    %v192 = vld [vmem:[%s3 + $0x18] sm:$0xff]
    %v193 = vld [vmem:[%s3 + $0x20] sm:$0xff]
    %v194 = vld [vmem:[%s3 + $0x28] sm:$0xff]
    %v195 = vld [vmem:[%s3 + $0x30] sm:$0xff]
    %v196 = vld [vmem:[%s3 + $0x38] sm:$0xff]
    %v197 = vld [vmem:[%s3 + $0x40] sm:$0xff]
    %v198 = vld [vmem:[%s3 + $0x48] sm:$0xff]
    %v199 = vld [vmem:[%s3 + $0x50] sm:$0xff]
    %v200 = vld [vmem:[%s3 + $0x58] sm:$0xff]
    %v201 = vld [vmem:[%s3 + $0x60] sm:$0xff]
    %v202 = vld [vmem:[%s3 + $0x68] sm:$0xff]
    %v203 = vld [vmem:[%s3 + $0x70] sm:$0xff]
    %v204 = vld [vmem:[%s3 + $0x78] sm:$0xff]
    %v205 = vld [vmem:[%s3 + $0x80] sm:$0xff]
    %v206 = vld [vmem:[%s3 + $0x88] sm:$0xff]
    %v207 = vld [vmem:[%s3 + $0x90] sm:$0xff]
    %v208 = vld [vmem:[%s3 + $0x98] sm:$0xff]
    %v209 = vld [vmem:[%s3 + $0xa0] sm:$0xff]
    %v210 = vld [vmem:[%s3 + $0xa8] sm:$0xff]
    %v211 = vld [vmem:[%s3 + $0xb0] sm:$0xff]
    %v212 = vld [vmem:[%s3 + $0xb8] sm:$0xff]
    %v213 = vld [vmem:[%s3 + $0xc0] sm:$0xff]
    %v214 = vld [vmem:[%s3 + $0xc8] sm:$0xff]
    %v215 = vld [vmem:[%s3 + $0xd0] sm:$0xff]
    %v216 = vld [vmem:[%s3 + $0xd8] sm:$0xff]
    %v217 = vld [vmem:[%s3 + $0xe0] sm:$0xff]
    %v218 = vld [vmem:[%s3 + $0xe8] sm:$0xff]
    %v219 = vld [vmem:[%s3 + $0xf0] sm:$0xff]
    %v220 = vld [vmem:[%s3 + $0xf8] sm:$0xff]
    %v221 = vld [vmem:[#allocation10] sm:$0xff]
    %v222 = vld [vmem:[#allocation10 + $0x8] sm:$0xff]
    %v223 = vunpack.c.l.bf16 %v221
    %v224 = vunpack.c.h.bf16 %v221
    %v225 = vunpack.c.l.bf16 %v222
    %v226 = vunpack.c.h.bf16 %v222
    %v227 = vld [vmem:[%s4] sm:$0xff]
    %v228 = vld [vmem:[%s4 + $0x8] sm:$0xff]
    %v229 = vld [vmem:[%s4 + $0x10] sm:$0xff]
    %v230 = vld [vmem:[%s4 + $0x18] sm:$0xff]
    %v231 = vld [vmem:[%s4 + $0x20] sm:$0xff]
    %v232 = vld [vmem:[%s4 + $0x28] sm:$0xff]
    %v233 = vld [vmem:[%s4 + $0x30] sm:$0xff]
    %v234 = vld [vmem:[%s4 + $0x38] sm:$0xff]
    %v235 = vld [vmem:[%s4 + $0x40] sm:$0xff]
    %v236 = vld [vmem:[%s4 + $0x48] sm:$0xff]
    %v237 = vld [vmem:[%s4 + $0x50] sm:$0xff]
    %v238 = vld [vmem:[%s4 + $0x58] sm:$0xff]
    %v239 = vld [vmem:[%s4 + $0x60] sm:$0xff]
    %v240 = vld [vmem:[%s4 + $0x68] sm:$0xff]
    %v241 = vld [vmem:[%s4 + $0x70] sm:$0xff]
    %v242 = vld [vmem:[%s4 + $0x78] sm:$0xff]
    %v243 = vld [vmem:[%s4 + $0x80] sm:$0xff]
    %v244 = vld [vmem:[%s4 + $0x88] sm:$0xff]
    %v245 = vld [vmem:[%s4 + $0x90] sm:$0xff]
    %v246 = vld [vmem:[%s4 + $0x98] sm:$0xff]
    %v247 = vld [vmem:[%s4 + $0xa0] sm:$0xff]
    %v248 = vld [vmem:[%s4 + $0xa8] sm:$0xff]
    %v249 = vld [vmem:[%s4 + $0xb0] sm:$0xff]
    %v250 = vld [vmem:[%s4 + $0xb8] sm:$0xff]
    %v251 = vld [vmem:[%s4 + $0xc0] sm:$0xff]
    %v252 = vld [vmem:[%s4 + $0xc8] sm:$0xff]
    %v253 = vld [vmem:[%s4 + $0xd0] sm:$0xff]
    %v254 = vld [vmem:[%s4 + $0xd8] sm:$0xff]
    %v255 = vld [vmem:[%s4 + $0xe0] sm:$0xff]
    %v256 = vld [vmem:[%s4 + $0xe8] sm:$0xff]
    %v257 = vld [vmem:[%s4 + $0xf0] sm:$0xff]
    %v258 = vld [vmem:[%s4 + $0xf8] sm:$0xff]
    %v259 = vld [vmem:[#allocation8] sm:$0xff]
    %v260 = vld [vmem:[#allocation8 + $0x8] sm:$0xff]
    %v261 = vld [vmem:[#allocation8 + $0x10] sm:$0xff]
    %v262 = vld [vmem:[#allocation8 + $0x18] sm:$0xff]
    %v263 = vld [vmem:[#allocation8 + $0x20] sm:$0xff]
    %v264 = vld [vmem:[#allocation8 + $0x28] sm:$0xff]
    %v265 = vld [vmem:[#allocation8 + $0x30] sm:$0xff]
    %v266 = vld [vmem:[#allocation8 + $0x38] sm:$0xff]
    %v267 = vld [vmem:[#allocation8 + $0x40] sm:$0xff]
    %v268 = vld [vmem:[#allocation8 + $0x48] sm:$0xff]
    %v269 = vld [vmem:[#allocation8 + $0x50] sm:$0xff]
    %v270 = vld [vmem:[#allocation8 + $0x58] sm:$0xff]
    %v271 = vld [vmem:[#allocation8 + $0x60] sm:$0xff]
    %v272 = vld [vmem:[#allocation8 + $0x68] sm:$0xff]
    %v273 = vld [vmem:[#allocation8 + $0x70] sm:$0xff]
    %v274 = vld [vmem:[#allocation8 + $0x78] sm:$0xff]
    %v275 = vld [vmem:[#allocation8 + $0x80] sm:$0x1]
    %v276 = vld [vmem:[#allocation8 + $0x88] sm:$0x1]
    %v277 = vld [vmem:[#allocation8 + $0x90] sm:$0x1]
    %v278 = vld [vmem:[#allocation8 + $0x98] sm:$0x1]
    %v279 = vld [vmem:[#allocation8 + $0xa0] sm:$0x1]
    %v280 = vld [vmem:[#allocation8 + $0xa8] sm:$0x1]
    %v281 = vld [vmem:[#allocation8 + $0xb0] sm:$0x1]
    %v282 = vld [vmem:[#allocation8 + $0xb8] sm:$0x1]
    %v283 = vld [vmem:[#allocation8 + $0xc0] sm:$0x1]
    %v284 = vld [vmem:[#allocation8 + $0xc8] sm:$0x1]
    %v285 = vld [vmem:[#allocation8 + $0xd0] sm:$0x1]
    %v286 = vld [vmem:[#allocation8 + $0xd8] sm:$0x1]
    %v287 = vld [vmem:[#allocation8 + $0xe0] sm:$0x1]
    %v288 = vld [vmem:[#allocation8 + $0xe8] sm:$0x1]
    %v289 = vld [vmem:[#allocation8 + $0xf0] sm:$0x1]
    %v290 = vld [vmem:[#allocation8 + $0xf8] sm:$0x1]
    %vm291 = vcmask 72704
    %v293 = vsel %vm291, %v227, 0
    %v296 = vsel %vm291, %v228, 0
    %v299 = vsel %vm291, %v229, 0
    %v302 = vsel %vm291, %v230, 0
    %v305 = vsel %vm291, %v231, 0
    %v308 = vsel %vm291, %v232, 0
    %v311 = vsel %vm291, %v233, 0
    %v314 = vsel %vm291, %v234, 0
    %v317 = vsel %vm291, %v235, 0
    %v320 = vsel %vm291, %v236, 0
    %v323 = vsel %vm291, %v237, 0
    %v326 = vsel %vm291, %v238, 0
    %v329 = vsel %vm291, %v239, 0
    %v332 = vsel %vm291, %v240, 0
    %v335 = vsel %vm291, %v241, 0
    %v338 = vsel %vm291, %v242, 0
    %v341 = vsel %vm291, %v243, 0
    %v344 = vsel %vm291, %v244, 0
    %v347 = vsel %vm291, %v245, 0
    %v350 = vsel %vm291, %v246, 0
    %v353 = vsel %vm291, %v247, 0
    %v356 = vsel %vm291, %v248, 0
    %v359 = vsel %vm291, %v249, 0
    %v362 = vsel %vm291, %v250, 0
    %v365 = vsel %vm291, %v251, 0
    %v368 = vsel %vm291, %v252, 0
    %v371 = vsel %vm291, %v253, 0
    %v374 = vsel %vm291, %v254, 0
    %v377 = vsel %vm291, %v255, 0
    %v380 = vsel %vm291, %v256, 0
    %v383 = vsel %vm291, %v257, 0
    %v386 = vsel %vm291, %v258, 0
    %vm388 = vcmask 1040384
    %v390 = vsel %vm388, %v275, 0
    %v393 = vsel %vm388, %v276, 0
    %v396 = vsel %vm388, %v277, 0
    %v399 = vsel %vm388, %v278, 0
    %v402 = vsel %vm388, %v279, 0
    %v405 = vsel %vm388, %v280, 0
    %v408 = vsel %vm388, %v281, 0
    %v411 = vsel %vm388, %v282, 0
    %v414 = vsel %vm388, %v283, 0
    %v417 = vsel %vm388, %v284, 0
    %v420 = vsel %vm388, %v285, 0
    %v423 = vsel %vm388, %v286, 0
    %v426 = vsel %vm388, %v287, 0
    %v429 = vsel %vm388, %v288, 0
    %v432 = vsel %vm388, %v289, 0
    %v435 = vsel %vm388, %v290, 0
    %437 = vmatpush.msra.mxu0 0.0
    %438 = vmatpush.msra.mxu0 0.0
    %439 = vmatpush.msra.mxu0 0.0
    %440 = vmatpush.msra.mxu0 0.0
    %441 = vmatpush.msra.mxu0 0.0
    %442 = vmatpush.msra.mxu0 0.0
    %443 = vmatpush.msra.mxu0 0.0
    %444 = vmatpush.msra.mxu0 0.0
    %445 = vmatpush.msra.mxu0 0.0
    %446 = vmatpush.msra.mxu0 0.0
    %447 = vmatpush.msra.mxu0 0.0
    %448 = vmatpush.msra.mxu0 0.0
    %449 = vmatpush.msra.mxu0 0.0
    %450 = vmatpush.msra.mxu0 0.0
    %451 = vmatpush.msra.mxu0 %v390
    %452 = vmatpush.msra.mxu0 %v259
    %453 = vmatmul.f32.gmra.mxu0 %v293
    %v454 = vpop.f32.mrf.mxu0
    %v455 = vadd.f32 0.0, %v454
    %456 = vmatmul.f32.gmra.mxu0 %v296
    %v457 = vpop.f32.mrf.mxu0
    %v458 = vadd.f32 0.0, %v457
    %459 = vmatmul.f32.gmra.mxu0 %v299
    %v460 = vpop.f32.mrf.mxu0
    %v461 = vadd.f32 0.0, %v460
    %462 = vmatmul.f32.gmra.mxu0 %v302
    %v463 = vpop.f32.mrf.mxu0
    %v464 = vadd.f32 0.0, %v463
    %465 = vmatmul.f32.gmra.mxu0 %v305
    %v466 = vpop.f32.mrf.mxu0
    %v467 = vadd.f32 0.0, %v466
    %468 = vmatmul.f32.gmra.mxu0 %v308
    %v469 = vpop.f32.mrf.mxu0
    %v470 = vadd.f32 0.0, %v469
    %471 = vmatmul.f32.gmra.mxu0 %v311
    %v472 = vpop.f32.mrf.mxu0
    %v473 = vadd.f32 0.0, %v472
    %474 = vmatmul.f32.gmra.mxu0 %v314
    %v475 = vpop.f32.mrf.mxu0
    %v476 = vadd.f32 0.0, %v475
    %477 = vmatmul.f32.gmra.mxu0 %v317
    %v478 = vpop.f32.mrf.mxu0
    %v479 = vadd.f32 0.0, %v478
    %480 = vmatmul.f32.gmra.mxu0 %v320
    %v481 = vpop.f32.mrf.mxu0
    %v482 = vadd.f32 0.0, %v481
    %483 = vmatmul.f32.gmra.mxu0 %v323
    %v484 = vpop.f32.mrf.mxu0
    %v485 = vadd.f32 0.0, %v484
    %486 = vmatmul.f32.gmra.mxu0 %v326
    %v487 = vpop.f32.mrf.mxu0
    %v488 = vadd.f32 0.0, %v487
    %489 = vmatmul.f32.gmra.mxu0 %v329
    %v490 = vpop.f32.mrf.mxu0
    %v491 = vadd.f32 0.0, %v490
    %492 = vmatmul.f32.gmra.mxu0 %v332
    %v493 = vpop.f32.mrf.mxu0
    %v494 = vadd.f32 0.0, %v493
    %495 = vmatmul.f32.gmra.mxu0 %v335
    %v496 = vpop.f32.mrf.mxu0
    %v497 = vadd.f32 0.0, %v496
    %498 = vmatmul.f32.gmra.mxu0 %v338
    %v499 = vpop.f32.mrf.mxu0
    %v500 = vadd.f32 0.0, %v499
    %501 = vmatmul.f32.gmra.mxu0 %v341
    %v502 = vpop.f32.mrf.mxu0
    %v503 = vadd.f32 0.0, %v502
    %504 = vmatmul.f32.gmra.mxu0 %v344
    %v505 = vpop.f32.mrf.mxu0
    %v506 = vadd.f32 0.0, %v505
    %507 = vmatmul.f32.gmra.mxu0 %v347
    %v508 = vpop.f32.mrf.mxu0
    %v509 = vadd.f32 0.0, %v508
    %510 = vmatmul.f32.gmra.mxu0 %v350
    %v511 = vpop.f32.mrf.mxu0
    %v512 = vadd.f32 0.0, %v511
    %513 = vmatmul.f32.gmra.mxu0 %v353
    %v514 = vpop.f32.mrf.mxu0
    %v515 = vadd.f32 0.0, %v514
    %516 = vmatmul.f32.gmra.mxu0 %v356
    %v517 = vpop.f32.mrf.mxu0
    %v518 = vadd.f32 0.0, %v517
    %519 = vmatmul.f32.gmra.mxu0 %v359
    %v520 = vpop.f32.mrf.mxu0
    %v521 = vadd.f32 0.0, %v520
    %522 = vmatmul.f32.gmra.mxu0 %v362
    %v523 = vpop.f32.mrf.mxu0
    %v524 = vadd.f32 0.0, %v523
    %525 = vmatmul.f32.gmra.mxu0 %v365
    %v526 = vpop.f32.mrf.mxu0
    %v527 = vadd.f32 0.0, %v526
    %528 = vmatmul.f32.gmra.mxu0 %v368
    %v529 = vpop.f32.mrf.mxu0
    %v530 = vadd.f32 0.0, %v529
    %531 = vmatmul.f32.gmra.mxu0 %v371
    %v532 = vpop.f32.mrf.mxu0
    %v533 = vadd.f32 0.0, %v532
    %534 = vmatmul.f32.gmra.mxu0 %v374
    %v535 = vpop.f32.mrf.mxu0
    %v536 = vadd.f32 0.0, %v535
    %537 = vmatmul.f32.gmra.mxu0 %v377
    %v538 = vpop.f32.mrf.mxu0
    %v539 = vadd.f32 0.0, %v538
    %540 = vmatmul.f32.gmra.mxu0 %v380
    %v541 = vpop.f32.mrf.mxu0
    %v542 = vadd.f32 0.0, %v541
    %543 = vmatmul.f32.gmra.mxu0 %v383
    %v544 = vpop.f32.mrf.mxu0
    %v545 = vadd.f32 0.0, %v544
    %546 = vmatmul.f32.gmra.mxu0 %v386
    %v547 = vpop.f32.mrf.mxu0
    %v548 = vadd.f32 0.0, %v547
    %549 = vdwg.mxu0
    %550 = vmatpush.msra.mxu0 0.0
    %551 = vmatpush.msra.mxu0 0.0
    %552 = vmatpush.msra.mxu0 0.0
    %553 = vmatpush.msra.mxu0 0.0
    %554 = vmatpush.msra.mxu0 0.0
    %555 = vmatpush.msra.mxu0 0.0
    %556 = vmatpush.msra.mxu0 0.0
    %557 = vmatpush.msra.mxu0 0.0
    %558 = vmatpush.msra.mxu0 0.0
    %559 = vmatpush.msra.mxu0 0.0
    %560 = vmatpush.msra.mxu0 0.0
    %561 = vmatpush.msra.mxu0 0.0
    %562 = vmatpush.msra.mxu0 0.0
    %563 = vmatpush.msra.mxu0 0.0
    %564 = vmatpush.msra.mxu0 %v393
    %565 = vmatpush.msra.mxu0 %v260
    %566 = vmatmul.f32.gmra.mxu0 %v293
    %v567 = vpop.f32.mrf.mxu0
    %v568 = vadd.f32 0.0, %v567
    %569 = vmatmul.f32.gmra.mxu0 %v296
    %v570 = vpop.f32.mrf.mxu0
    %v571 = vadd.f32 0.0, %v570
    %572 = vmatmul.f32.gmra.mxu0 %v299
    %v573 = vpop.f32.mrf.mxu0
    %v574 = vadd.f32 0.0, %v573
    %575 = vmatmul.f32.gmra.mxu0 %v302
    %v576 = vpop.f32.mrf.mxu0
    %v577 = vadd.f32 0.0, %v576
    %578 = vmatmul.f32.gmra.mxu0 %v305
    %v579 = vpop.f32.mrf.mxu0
    %v580 = vadd.f32 0.0, %v579
    %581 = vmatmul.f32.gmra.mxu0 %v308
    %v582 = vpop.f32.mrf.mxu0
    %v583 = vadd.f32 0.0, %v582
    %584 = vmatmul.f32.gmra.mxu0 %v311
    %v585 = vpop.f32.mrf.mxu0
    %v586 = vadd.f32 0.0, %v585
    %587 = vmatmul.f32.gmra.mxu0 %v314
    %v588 = vpop.f32.mrf.mxu0
    %v589 = vadd.f32 0.0, %v588
    %590 = vmatmul.f32.gmra.mxu0 %v317
    %v591 = vpop.f32.mrf.mxu0
    %v592 = vadd.f32 0.0, %v591
    %593 = vmatmul.f32.gmra.mxu0 %v320
    %v594 = vpop.f32.mrf.mxu0
    %v595 = vadd.f32 0.0, %v594
    %596 = vmatmul.f32.gmra.mxu0 %v323
    %v597 = vpop.f32.mrf.mxu0
    %v598 = vadd.f32 0.0, %v597
    %599 = vmatmul.f32.gmra.mxu0 %v326
    %v600 = vpop.f32.mrf.mxu0
    %v601 = vadd.f32 0.0, %v600
    %602 = vmatmul.f32.gmra.mxu0 %v329
    %v603 = vpop.f32.mrf.mxu0
    %v604 = vadd.f32 0.0, %v603
    %605 = vmatmul.f32.gmra.mxu0 %v332
    %v606 = vpop.f32.mrf.mxu0
    %v607 = vadd.f32 0.0, %v606
    %608 = vmatmul.f32.gmra.mxu0 %v335
    %v609 = vpop.f32.mrf.mxu0
    %v610 = vadd.f32 0.0, %v609
    %611 = vmatmul.f32.gmra.mxu0 %v338
    %v612 = vpop.f32.mrf.mxu0
    %v613 = vadd.f32 0.0, %v612
    %614 = vmatmul.f32.gmra.mxu0 %v341
    %v615 = vpop.f32.mrf.mxu0
    %v616 = vadd.f32 0.0, %v615
    %617 = vmatmul.f32.gmra.mxu0 %v344
    %v618 = vpop.f32.mrf.mxu0
    %v619 = vadd.f32 0.0, %v618
    %620 = vmatmul.f32.gmra.mxu0 %v347
    %v621 = vpop.f32.mrf.mxu0
    %v622 = vadd.f32 0.0, %v621
    %623 = vmatmul.f32.gmra.mxu0 %v350
    %v624 = vpop.f32.mrf.mxu0
    %v625 = vadd.f32 0.0, %v624
    %626 = vmatmul.f32.gmra.mxu0 %v353
    %v627 = vpop.f32.mrf.mxu0
    %v628 = vadd.f32 0.0, %v627
    %629 = vmatmul.f32.gmra.mxu0 %v356
    %v630 = vpop.f32.mrf.mxu0
    %v631 = vadd.f32 0.0, %v630
    %632 = vmatmul.f32.gmra.mxu0 %v359
    %v633 = vpop.f32.mrf.mxu0
    %v634 = vadd.f32 0.0, %v633
    %635 = vmatmul.f32.gmra.mxu0 %v362
    %v636 = vpop.f32.mrf.mxu0
    %v637 = vadd.f32 0.0, %v636
    %638 = vmatmul.f32.gmra.mxu0 %v365
    %v639 = vpop.f32.mrf.mxu0
    %v640 = vadd.f32 0.0, %v639
    %641 = vmatmul.f32.gmra.mxu0 %v368
    %v642 = vpop.f32.mrf.mxu0
    %v643 = vadd.f32 0.0, %v642
    %644 = vmatmul.f32.gmra.mxu0 %v371
    %v645 = vpop.f32.mrf.mxu0
    %v646 = vadd.f32 0.0, %v645
    %647 = vmatmul.f32.gmra.mxu0 %v374
    %v648 = vpop.f32.mrf.mxu0
    %v649 = vadd.f32 0.0, %v648
    %650 = vmatmul.f32.gmra.mxu0 %v377
    %v651 = vpop.f32.mrf.mxu0
    %v652 = vadd.f32 0.0, %v651
    %653 = vmatmul.f32.gmra.mxu0 %v380
    %v654 = vpop.f32.mrf.mxu0
    %v655 = vadd.f32 0.0, %v654
    %656 = vmatmul.f32.gmra.mxu0 %v383
    %v657 = vpop.f32.mrf.mxu0
    %v658 = vadd.f32 0.0, %v657
    %659 = vmatmul.f32.gmra.mxu0 %v386
    %v660 = vpop.f32.mrf.mxu0
    %v661 = vadd.f32 0.0, %v660
    %662 = vdwg.mxu0
    %663 = vmatpush.msra.mxu0 0.0
    %664 = vmatpush.msra.mxu0 0.0
    %665 = vmatpush.msra.mxu0 0.0
    %666 = vmatpush.msra.mxu0 0.0
    %667 = vmatpush.msra.mxu0 0.0
    %668 = vmatpush.msra.mxu0 0.0
    %669 = vmatpush.msra.mxu0 0.0
    %670 = vmatpush.msra.mxu0 0.0
    %671 = vmatpush.msra.mxu0 0.0
    %672 = vmatpush.msra.mxu0 0.0
    %673 = vmatpush.msra.mxu0 0.0
    %674 = vmatpush.msra.mxu0 0.0
    %675 = vmatpush.msra.mxu0 0.0
    %676 = vmatpush.msra.mxu0 0.0
    %677 = vmatpush.msra.mxu0 %v396
    %678 = vmatpush.msra.mxu0 %v261
    %679 = vmatmul.f32.gmra.mxu0 %v293
    %v680 = vpop.f32.mrf.mxu0
    %v681 = vadd.f32 0.0, %v680
    %682 = vmatmul.f32.gmra.mxu0 %v296
    %v683 = vpop.f32.mrf.mxu0
    %v684 = vadd.f32 0.0, %v683
    %685 = vmatmul.f32.gmra.mxu0 %v299
    %v686 = vpop.f32.mrf.mxu0
    %v687 = vadd.f32 0.0, %v686
    %688 = vmatmul.f32.gmra.mxu0 %v302
    %v689 = vpop.f32.mrf.mxu0
    %v690 = vadd.f32 0.0, %v689
    %691 = vmatmul.f32.gmra.mxu0 %v305
    %v692 = vpop.f32.mrf.mxu0
    %v693 = vadd.f32 0.0, %v692
    %694 = vmatmul.f32.gmra.mxu0 %v308
    %v695 = vpop.f32.mrf.mxu0
    %v696 = vadd.f32 0.0, %v695
    %697 = vmatmul.f32.gmra.mxu0 %v311
    %v698 = vpop.f32.mrf.mxu0
    %v699 = vadd.f32 0.0, %v698
    %700 = vmatmul.f32.gmra.mxu0 %v314
    %v701 = vpop.f32.mrf.mxu0
    %v702 = vadd.f32 0.0, %v701
    %703 = vmatmul.f32.gmra.mxu0 %v317
    %v704 = vpop.f32.mrf.mxu0
    %v705 = vadd.f32 0.0, %v704
    %706 = vmatmul.f32.gmra.mxu0 %v320
    %v707 = vpop.f32.mrf.mxu0
    %v708 = vadd.f32 0.0, %v707
    %709 = vmatmul.f32.gmra.mxu0 %v323
    %v710 = vpop.f32.mrf.mxu0
    %v711 = vadd.f32 0.0, %v710
    %712 = vmatmul.f32.gmra.mxu0 %v326
    %v713 = vpop.f32.mrf.mxu0
    %v714 = vadd.f32 0.0, %v713
    %715 = vmatmul.f32.gmra.mxu0 %v329
    %v716 = vpop.f32.mrf.mxu0
    %v717 = vadd.f32 0.0, %v716
    %718 = vmatmul.f32.gmra.mxu0 %v332
    %v719 = vpop.f32.mrf.mxu0
    %v720 = vadd.f32 0.0, %v719
    %721 = vmatmul.f32.gmra.mxu0 %v335
    %v722 = vpop.f32.mrf.mxu0
    %v723 = vadd.f32 0.0, %v722
    %724 = vmatmul.f32.gmra.mxu0 %v338
    %v725 = vpop.f32.mrf.mxu0
    %v726 = vadd.f32 0.0, %v725
    %727 = vmatmul.f32.gmra.mxu0 %v341
    %v728 = vpop.f32.mrf.mxu0
    %v729 = vadd.f32 0.0, %v728
    %730 = vmatmul.f32.gmra.mxu0 %v344
    %v731 = vpop.f32.mrf.mxu0
    %v732 = vadd.f32 0.0, %v731
    %733 = vmatmul.f32.gmra.mxu0 %v347
    %v734 = vpop.f32.mrf.mxu0
    %v735 = vadd.f32 0.0, %v734
    %736 = vmatmul.f32.gmra.mxu0 %v350
    %v737 = vpop.f32.mrf.mxu0
    %v738 = vadd.f32 0.0, %v737
    %739 = vmatmul.f32.gmra.mxu0 %v353
    %v740 = vpop.f32.mrf.mxu0
    %v741 = vadd.f32 0.0, %v740
    %742 = vmatmul.f32.gmra.mxu0 %v356
    %v743 = vpop.f32.mrf.mxu0
    %v744 = vadd.f32 0.0, %v743
    %745 = vmatmul.f32.gmra.mxu0 %v359
    %v746 = vpop.f32.mrf.mxu0
    %v747 = vadd.f32 0.0, %v746
    %748 = vmatmul.f32.gmra.mxu0 %v362
    %v749 = vpop.f32.mrf.mxu0
    %v750 = vadd.f32 0.0, %v749
    %751 = vmatmul.f32.gmra.mxu0 %v365
    %v752 = vpop.f32.mrf.mxu0
    %v753 = vadd.f32 0.0, %v752
    %754 = vmatmul.f32.gmra.mxu0 %v368
    %v755 = vpop.f32.mrf.mxu0
    %v756 = vadd.f32 0.0, %v755
    %757 = vmatmul.f32.gmra.mxu0 %v371
    %v758 = vpop.f32.mrf.mxu0
    %v759 = vadd.f32 0.0, %v758
    %760 = vmatmul.f32.gmra.mxu0 %v374
    %v761 = vpop.f32.mrf.mxu0
    %v762 = vadd.f32 0.0, %v761
    %763 = vmatmul.f32.gmra.mxu0 %v377
    %v764 = vpop.f32.mrf.mxu0
    %v765 = vadd.f32 0.0, %v764
    %766 = vmatmul.f32.gmra.mxu0 %v380
    %v767 = vpop.f32.mrf.mxu0
    %v768 = vadd.f32 0.0, %v767
    %769 = vmatmul.f32.gmra.mxu0 %v383
    %v770 = vpop.f32.mrf.mxu0
    %v771 = vadd.f32 0.0, %v770
    %772 = vmatmul.f32.gmra.mxu0 %v386
    %v773 = vpop.f32.mrf.mxu0
    %v774 = vadd.f32 0.0, %v773
    %775 = vdwg.mxu0
    %776 = vmatpush.msra.mxu0 0.0
    %777 = vmatpush.msra.mxu0 0.0
    %778 = vmatpush.msra.mxu0 0.0
    %779 = vmatpush.msra.mxu0 0.0
    %780 = vmatpush.msra.mxu0 0.0
    %781 = vmatpush.msra.mxu0 0.0
    %782 = vmatpush.msra.mxu0 0.0
    %783 = vmatpush.msra.mxu0 0.0
    %784 = vmatpush.msra.mxu0 0.0
    %785 = vmatpush.msra.mxu0 0.0
    %786 = vmatpush.msra.mxu0 0.0
    %787 = vmatpush.msra.mxu0 0.0
    %788 = vmatpush.msra.mxu0 0.0
    %789 = vmatpush.msra.mxu0 0.0
    %790 = vmatpush.msra.mxu0 %v399
    %791 = vmatpush.msra.mxu0 %v262
    %792 = vmatmul.f32.gmra.mxu0 %v293
    %v793 = vpop.f32.mrf.mxu0
    %v794 = vadd.f32 0.0, %v793
    %795 = vmatmul.f32.gmra.mxu0 %v296
    %v796 = vpop.f32.mrf.mxu0
    %v797 = vadd.f32 0.0, %v796
    %798 = vmatmul.f32.gmra.mxu0 %v299
    %v799 = vpop.f32.mrf.mxu0
    %v800 = vadd.f32 0.0, %v799
    %801 = vmatmul.f32.gmra.mxu0 %v302
    %v802 = vpop.f32.mrf.mxu0
    %v803 = vadd.f32 0.0, %v802
    %804 = vmatmul.f32.gmra.mxu0 %v305
    %v805 = vpop.f32.mrf.mxu0
    %v806 = vadd.f32 0.0, %v805
    %807 = vmatmul.f32.gmra.mxu0 %v308
    %v808 = vpop.f32.mrf.mxu0
    %v809 = vadd.f32 0.0, %v808
    %810 = vmatmul.f32.gmra.mxu0 %v311
    %v811 = vpop.f32.mrf.mxu0
    %v812 = vadd.f32 0.0, %v811
    %813 = vmatmul.f32.gmra.mxu0 %v314
    %v814 = vpop.f32.mrf.mxu0
    %v815 = vadd.f32 0.0, %v814
    %816 = vmatmul.f32.gmra.mxu0 %v317
    %v817 = vpop.f32.mrf.mxu0
    %v818 = vadd.f32 0.0, %v817
    %819 = vmatmul.f32.gmra.mxu0 %v320
    %v820 = vpop.f32.mrf.mxu0
    %v821 = vadd.f32 0.0, %v820
    %822 = vmatmul.f32.gmra.mxu0 %v323
    %v823 = vpop.f32.mrf.mxu0
    %v824 = vadd.f32 0.0, %v823
    %825 = vmatmul.f32.gmra.mxu0 %v326
    %v826 = vpop.f32.mrf.mxu0
    %v827 = vadd.f32 0.0, %v826
    %828 = vmatmul.f32.gmra.mxu0 %v329
    %v829 = vpop.f32.mrf.mxu0
    %v830 = vadd.f32 0.0, %v829
    %831 = vmatmul.f32.gmra.mxu0 %v332
    %v832 = vpop.f32.mrf.mxu0
    %v833 = vadd.f32 0.0, %v832
    %834 = vmatmul.f32.gmra.mxu0 %v335
    %v835 = vpop.f32.mrf.mxu0
    %v836 = vadd.f32 0.0, %v835
    %837 = vmatmul.f32.gmra.mxu0 %v338
    %v838 = vpop.f32.mrf.mxu0
    %v839 = vadd.f32 0.0, %v838
    %840 = vmatmul.f32.gmra.mxu0 %v341
    %v841 = vpop.f32.mrf.mxu0
    %v842 = vadd.f32 0.0, %v841
    %843 = vmatmul.f32.gmra.mxu0 %v344
    %v844 = vpop.f32.mrf.mxu0
    %v845 = vadd.f32 0.0, %v844
    %846 = vmatmul.f32.gmra.mxu0 %v347
    %v847 = vpop.f32.mrf.mxu0
    %v848 = vadd.f32 0.0, %v847
    %849 = vmatmul.f32.gmra.mxu0 %v350
    %v850 = vpop.f32.mrf.mxu0
    %v851 = vadd.f32 0.0, %v850
    %852 = vmatmul.f32.gmra.mxu0 %v353
    %v853 = vpop.f32.mrf.mxu0
    %v854 = vadd.f32 0.0, %v853
    %855 = vmatmul.f32.gmra.mxu0 %v356
    %v856 = vpop.f32.mrf.mxu0
    %v857 = vadd.f32 0.0, %v856
    %858 = vmatmul.f32.gmra.mxu0 %v359
    %v859 = vpop.f32.mrf.mxu0
    %v860 = vadd.f32 0.0, %v859
    %861 = vmatmul.f32.gmra.mxu0 %v362
    %v862 = vpop.f32.mrf.mxu0
    %v863 = vadd.f32 0.0, %v862
    %864 = vmatmul.f32.gmra.mxu0 %v365
    %v865 = vpop.f32.mrf.mxu0
    %v866 = vadd.f32 0.0, %v865
    %867 = vmatmul.f32.gmra.mxu0 %v368
    %v868 = vpop.f32.mrf.mxu0
    %v869 = vadd.f32 0.0, %v868
    %870 = vmatmul.f32.gmra.mxu0 %v371
    %v871 = vpop.f32.mrf.mxu0
    %v872 = vadd.f32 0.0, %v871
    %873 = vmatmul.f32.gmra.mxu0 %v374
    %v874 = vpop.f32.mrf.mxu0
    %v875 = vadd.f32 0.0, %v874
    %876 = vmatmul.f32.gmra.mxu0 %v377
    %v877 = vpop.f32.mrf.mxu0
    %v878 = vadd.f32 0.0, %v877
    %879 = vmatmul.f32.gmra.mxu0 %v380
    %v880 = vpop.f32.mrf.mxu0
    %v881 = vadd.f32 0.0, %v880
    %882 = vmatmul.f32.gmra.mxu0 %v383
    %v883 = vpop.f32.mrf.mxu0
    %v884 = vadd.f32 0.0, %v883
    %885 = vmatmul.f32.gmra.mxu0 %v386
    %v886 = vpop.f32.mrf.mxu0
    %v887 = vadd.f32 0.0, %v886
    %888 = vdwg.mxu0
    %889 = vmatpush.msra.mxu0 0.0
    %890 = vmatpush.msra.mxu0 0.0
    %891 = vmatpush.msra.mxu0 0.0
    %892 = vmatpush.msra.mxu0 0.0
    %893 = vmatpush.msra.mxu0 0.0
    %894 = vmatpush.msra.mxu0 0.0
    %895 = vmatpush.msra.mxu0 0.0
    %896 = vmatpush.msra.mxu0 0.0
    %897 = vmatpush.msra.mxu0 0.0
    %898 = vmatpush.msra.mxu0 0.0
    %899 = vmatpush.msra.mxu0 0.0
    %900 = vmatpush.msra.mxu0 0.0
    %901 = vmatpush.msra.mxu0 0.0
    %902 = vmatpush.msra.mxu0 0.0
    %903 = vmatpush.msra.mxu0 %v402
    %904 = vmatpush.msra.mxu0 %v263
    %905 = vmatmul.f32.gmra.mxu0 %v293
    %v906 = vpop.f32.mrf.mxu0
    %v907 = vadd.f32 0.0, %v906
    %908 = vmatmul.f32.gmra.mxu0 %v296
    %v909 = vpop.f32.mrf.mxu0
    %v910 = vadd.f32 0.0, %v909
    %911 = vmatmul.f32.gmra.mxu0 %v299
    %v912 = vpop.f32.mrf.mxu0
    %v913 = vadd.f32 0.0, %v912
    %914 = vmatmul.f32.gmra.mxu0 %v302
    %v915 = vpop.f32.mrf.mxu0
    %v916 = vadd.f32 0.0, %v915
    %917 = vmatmul.f32.gmra.mxu0 %v305
    %v918 = vpop.f32.mrf.mxu0
    %v919 = vadd.f32 0.0, %v918
    %920 = vmatmul.f32.gmra.mxu0 %v308
    %v921 = vpop.f32.mrf.mxu0
    %v922 = vadd.f32 0.0, %v921
    %923 = vmatmul.f32.gmra.mxu0 %v311
    %v924 = vpop.f32.mrf.mxu0
    %v925 = vadd.f32 0.0, %v924
    %926 = vmatmul.f32.gmra.mxu0 %v314
    %v927 = vpop.f32.mrf.mxu0
    %v928 = vadd.f32 0.0, %v927
    %929 = vmatmul.f32.gmra.mxu0 %v317
    %v930 = vpop.f32.mrf.mxu0
    %v931 = vadd.f32 0.0, %v930
    %932 = vmatmul.f32.gmra.mxu0 %v320
    %v933 = vpop.f32.mrf.mxu0
    %v934 = vadd.f32 0.0, %v933
    %935 = vmatmul.f32.gmra.mxu0 %v323
    %v936 = vpop.f32.mrf.mxu0
    %v937 = vadd.f32 0.0, %v936
    %938 = vmatmul.f32.gmra.mxu0 %v326
    %v939 = vpop.f32.mrf.mxu0
    %v940 = vadd.f32 0.0, %v939
    %941 = vmatmul.f32.gmra.mxu0 %v329
    %v942 = vpop.f32.mrf.mxu0
    %v943 = vadd.f32 0.0, %v942
    %944 = vmatmul.f32.gmra.mxu0 %v332
    %v945 = vpop.f32.mrf.mxu0
    %v946 = vadd.f32 0.0, %v945
    %947 = vmatmul.f32.gmra.mxu0 %v335
    %v948 = vpop.f32.mrf.mxu0
    %v949 = vadd.f32 0.0, %v948
    %950 = vmatmul.f32.gmra.mxu0 %v338
    %v951 = vpop.f32.mrf.mxu0
    %v952 = vadd.f32 0.0, %v951
    %953 = vmatmul.f32.gmra.mxu0 %v341
    %v954 = vpop.f32.mrf.mxu0
    %v955 = vadd.f32 0.0, %v954
    %956 = vmatmul.f32.gmra.mxu0 %v344
    %v957 = vpop.f32.mrf.mxu0
    %v958 = vadd.f32 0.0, %v957
    %959 = vmatmul.f32.gmra.mxu0 %v347
    %v960 = vpop.f32.mrf.mxu0
    %v961 = vadd.f32 0.0, %v960
    %962 = vmatmul.f32.gmra.mxu0 %v350
    %v963 = vpop.f32.mrf.mxu0
    %v964 = vadd.f32 0.0, %v963
    %965 = vmatmul.f32.gmra.mxu0 %v353
    %v966 = vpop.f32.mrf.mxu0
    %v967 = vadd.f32 0.0, %v966
    %968 = vmatmul.f32.gmra.mxu0 %v356
    %v969 = vpop.f32.mrf.mxu0
    %v970 = vadd.f32 0.0, %v969
    %971 = vmatmul.f32.gmra.mxu0 %v359
    %v972 = vpop.f32.mrf.mxu0
    %v973 = vadd.f32 0.0, %v972
    %974 = vmatmul.f32.gmra.mxu0 %v362
    %v975 = vpop.f32.mrf.mxu0
    %v976 = vadd.f32 0.0, %v975
    %977 = vmatmul.f32.gmra.mxu0 %v365
    %v978 = vpop.f32.mrf.mxu0
    %v979 = vadd.f32 0.0, %v978
    %980 = vmatmul.f32.gmra.mxu0 %v368
    %v981 = vpop.f32.mrf.mxu0
    %v982 = vadd.f32 0.0, %v981
    %983 = vmatmul.f32.gmra.mxu0 %v371
    %v984 = vpop.f32.mrf.mxu0
    %v985 = vadd.f32 0.0, %v984
    %986 = vmatmul.f32.gmra.mxu0 %v374
    %v987 = vpop.f32.mrf.mxu0
    %v988 = vadd.f32 0.0, %v987
    %989 = vmatmul.f32.gmra.mxu0 %v377
    %v990 = vpop.f32.mrf.mxu0
    %v991 = vadd.f32 0.0, %v990
    %992 = vmatmul.f32.gmra.mxu0 %v380
    %v993 = vpop.f32.mrf.mxu0
    %v994 = vadd.f32 0.0, %v993
    %995 = vmatmul.f32.gmra.mxu0 %v383
    %v996 = vpop.f32.mrf.mxu0
    %v997 = vadd.f32 0.0, %v996
    %998 = vmatmul.f32.gmra.mxu0 %v386
    %v999 = vpop.f32.mrf.mxu0
    %v1000 = vadd.f32 0.0, %v999
    %1001 = vdwg.mxu0
    %1002 = vmatpush.msra.mxu0 0.0
    %1003 = vmatpush.msra.mxu0 0.0
    %1004 = vmatpush.msra.mxu0 0.0
    %1005 = vmatpush.msra.mxu0 0.0
    %1006 = vmatpush.msra.mxu0 0.0
    %1007 = vmatpush.msra.mxu0 0.0
    %1008 = vmatpush.msra.mxu0 0.0
    %1009 = vmatpush.msra.mxu0 0.0
    %1010 = vmatpush.msra.mxu0 0.0
    %1011 = vmatpush.msra.mxu0 0.0
    %1012 = vmatpush.msra.mxu0 0.0
    %1013 = vmatpush.msra.mxu0 0.0
    %1014 = vmatpush.msra.mxu0 0.0
    %1015 = vmatpush.msra.mxu0 0.0
    %1016 = vmatpush.msra.mxu0 %v405
    %1017 = vmatpush.msra.mxu0 %v264
    %1018 = vmatmul.f32.gmra.mxu0 %v293
    %v1019 = vpop.f32.mrf.mxu0
    %v1020 = vadd.f32 0.0, %v1019
    %1021 = vmatmul.f32.gmra.mxu0 %v296
    %v1022 = vpop.f32.mrf.mxu0
    %v1023 = vadd.f32 0.0, %v1022
    %1024 = vmatmul.f32.gmra.mxu0 %v299
    %v1025 = vpop.f32.mrf.mxu0
    %v1026 = vadd.f32 0.0, %v1025
    %1027 = vmatmul.f32.gmra.mxu0 %v302
    %v1028 = vpop.f32.mrf.mxu0
    %v1029 = vadd.f32 0.0, %v1028
    %1030 = vmatmul.f32.gmra.mxu0 %v305
    %v1031 = vpop.f32.mrf.mxu0
    %v1032 = vadd.f32 0.0, %v1031
    %1033 = vmatmul.f32.gmra.mxu0 %v308
    %v1034 = vpop.f32.mrf.mxu0
    %v1035 = vadd.f32 0.0, %v1034
    %1036 = vmatmul.f32.gmra.mxu0 %v311
    %v1037 = vpop.f32.mrf.mxu0
    %v1038 = vadd.f32 0.0, %v1037
    %1039 = vmatmul.f32.gmra.mxu0 %v314
    %v1040 = vpop.f32.mrf.mxu0
    %v1041 = vadd.f32 0.0, %v1040
    %1042 = vmatmul.f32.gmra.mxu0 %v317
    %v1043 = vpop.f32.mrf.mxu0
    %v1044 = vadd.f32 0.0, %v1043
    %1045 = vmatmul.f32.gmra.mxu0 %v320
    %v1046 = vpop.f32.mrf.mxu0
    %v1047 = vadd.f32 0.0, %v1046
    %1048 = vmatmul.f32.gmra.mxu0 %v323
    %v1049 = vpop.f32.mrf.mxu0
    %v1050 = vadd.f32 0.0, %v1049
    %1051 = vmatmul.f32.gmra.mxu0 %v326
    %v1052 = vpop.f32.mrf.mxu0
    %v1053 = vadd.f32 0.0, %v1052
    %1054 = vmatmul.f32.gmra.mxu0 %v329
    %v1055 = vpop.f32.mrf.mxu0
    %v1056 = vadd.f32 0.0, %v1055
    %1057 = vmatmul.f32.gmra.mxu0 %v332
    %v1058 = vpop.f32.mrf.mxu0
    %v1059 = vadd.f32 0.0, %v1058
    %1060 = vmatmul.f32.gmra.mxu0 %v335
    %v1061 = vpop.f32.mrf.mxu0
    %v1062 = vadd.f32 0.0, %v1061
    %1063 = vmatmul.f32.gmra.mxu0 %v338
    %v1064 = vpop.f32.mrf.mxu0
    %v1065 = vadd.f32 0.0, %v1064
    %1066 = vmatmul.f32.gmra.mxu0 %v341
    %v1067 = vpop.f32.mrf.mxu0
    %v1068 = vadd.f32 0.0, %v1067
    %1069 = vmatmul.f32.gmra.mxu0 %v344
    %v1070 = vpop.f32.mrf.mxu0
    %v1071 = vadd.f32 0.0, %v1070
    %1072 = vmatmul.f32.gmra.mxu0 %v347
    %v1073 = vpop.f32.mrf.mxu0
    %v1074 = vadd.f32 0.0, %v1073
    %1075 = vmatmul.f32.gmra.mxu0 %v350
    %v1076 = vpop.f32.mrf.mxu0
    %v1077 = vadd.f32 0.0, %v1076
    %1078 = vmatmul.f32.gmra.mxu0 %v353
    %v1079 = vpop.f32.mrf.mxu0
    %v1080 = vadd.f32 0.0, %v1079
    %1081 = vmatmul.f32.gmra.mxu0 %v356
    %v1082 = vpop.f32.mrf.mxu0
    %v1083 = vadd.f32 0.0, %v1082
    %1084 = vmatmul.f32.gmra.mxu0 %v359
    %v1085 = vpop.f32.mrf.mxu0
    %v1086 = vadd.f32 0.0, %v1085
    %1087 = vmatmul.f32.gmra.mxu0 %v362
    %v1088 = vpop.f32.mrf.mxu0
    %v1089 = vadd.f32 0.0, %v1088
    %1090 = vmatmul.f32.gmra.mxu0 %v365
    %v1091 = vpop.f32.mrf.mxu0
    %v1092 = vadd.f32 0.0, %v1091
    %1093 = vmatmul.f32.gmra.mxu0 %v368
    %v1094 = vpop.f32.mrf.mxu0
    %v1095 = vadd.f32 0.0, %v1094
    %1096 = vmatmul.f32.gmra.mxu0 %v371
    %v1097 = vpop.f32.mrf.mxu0
    %v1098 = vadd.f32 0.0, %v1097
    %1099 = vmatmul.f32.gmra.mxu0 %v374
    %v1100 = vpop.f32.mrf.mxu0
    %v1101 = vadd.f32 0.0, %v1100
    %1102 = vmatmul.f32.gmra.mxu0 %v377
    %v1103 = vpop.f32.mrf.mxu0
    %v1104 = vadd.f32 0.0, %v1103
    %1105 = vmatmul.f32.gmra.mxu0 %v380
    %v1106 = vpop.f32.mrf.mxu0
    %v1107 = vadd.f32 0.0, %v1106
    %1108 = vmatmul.f32.gmra.mxu0 %v383
    %v1109 = vpop.f32.mrf.mxu0
    %v1110 = vadd.f32 0.0, %v1109
    %1111 = vmatmul.f32.gmra.mxu0 %v386
    %v1112 = vpop.f32.mrf.mxu0
    %v1113 = vadd.f32 0.0, %v1112
    %1114 = vdwg.mxu0
    %1115 = vmatpush.msra.mxu0 0.0
    %1116 = vmatpush.msra.mxu0 0.0
    %1117 = vmatpush.msra.mxu0 0.0
    %1118 = vmatpush.msra.mxu0 0.0
    %1119 = vmatpush.msra.mxu0 0.0
    %1120 = vmatpush.msra.mxu0 0.0
    %1121 = vmatpush.msra.mxu0 0.0
    %1122 = vmatpush.msra.mxu0 0.0
    %1123 = vmatpush.msra.mxu0 0.0
    %1124 = vmatpush.msra.mxu0 0.0
    %1125 = vmatpush.msra.mxu0 0.0
    %1126 = vmatpush.msra.mxu0 0.0
    %1127 = vmatpush.msra.mxu0 0.0
    %1128 = vmatpush.msra.mxu0 0.0
    %1129 = vmatpush.msra.mxu0 %v408
    %1130 = vmatpush.msra.mxu0 %v265
    %1131 = vmatmul.f32.gmra.mxu0 %v293
    %v1132 = vpop.f32.mrf.mxu0
    %v1133 = vadd.f32 0.0, %v1132
    %1134 = vmatmul.f32.gmra.mxu0 %v296
    %v1135 = vpop.f32.mrf.mxu0
    %v1136 = vadd.f32 0.0, %v1135
    %1137 = vmatmul.f32.gmra.mxu0 %v299
    %v1138 = vpop.f32.mrf.mxu0
    %v1139 = vadd.f32 0.0, %v1138
    %1140 = vmatmul.f32.gmra.mxu0 %v302
    %v1141 = vpop.f32.mrf.mxu0
    %v1142 = vadd.f32 0.0, %v1141
    %1143 = vmatmul.f32.gmra.mxu0 %v305
    %v1144 = vpop.f32.mrf.mxu0
    %v1145 = vadd.f32 0.0, %v1144
    %1146 = vmatmul.f32.gmra.mxu0 %v308
    %v1147 = vpop.f32.mrf.mxu0
    %v1148 = vadd.f32 0.0, %v1147
    %1149 = vmatmul.f32.gmra.mxu0 %v311
    %v1150 = vpop.f32.mrf.mxu0
    %v1151 = vadd.f32 0.0, %v1150
    %1152 = vmatmul.f32.gmra.mxu0 %v314
    %v1153 = vpop.f32.mrf.mxu0
    %v1154 = vadd.f32 0.0, %v1153
    %1155 = vmatmul.f32.gmra.mxu0 %v317
    %v1156 = vpop.f32.mrf.mxu0
    %v1157 = vadd.f32 0.0, %v1156
    %1158 = vmatmul.f32.gmra.mxu0 %v320
    %v1159 = vpop.f32.mrf.mxu0
    %v1160 = vadd.f32 0.0, %v1159
    %1161 = vmatmul.f32.gmra.mxu0 %v323
    %v1162 = vpop.f32.mrf.mxu0
    %v1163 = vadd.f32 0.0, %v1162
    %1164 = vmatmul.f32.gmra.mxu0 %v326
    %v1165 = vpop.f32.mrf.mxu0
    %v1166 = vadd.f32 0.0, %v1165
    %1167 = vmatmul.f32.gmra.mxu0 %v329
    %v1168 = vpop.f32.mrf.mxu0
    %v1169 = vadd.f32 0.0, %v1168
    %1170 = vmatmul.f32.gmra.mxu0 %v332
    %v1171 = vpop.f32.mrf.mxu0
    %v1172 = vadd.f32 0.0, %v1171
    %1173 = vmatmul.f32.gmra.mxu0 %v335
    %v1174 = vpop.f32.mrf.mxu0
    %v1175 = vadd.f32 0.0, %v1174
    %1176 = vmatmul.f32.gmra.mxu0 %v338
    %v1177 = vpop.f32.mrf.mxu0
    %v1178 = vadd.f32 0.0, %v1177
    %1179 = vmatmul.f32.gmra.mxu0 %v341
    %v1180 = vpop.f32.mrf.mxu0
    %v1181 = vadd.f32 0.0, %v1180
    %1182 = vmatmul.f32.gmra.mxu0 %v344
    %v1183 = vpop.f32.mrf.mxu0
    %v1184 = vadd.f32 0.0, %v1183
    %1185 = vmatmul.f32.gmra.mxu0 %v347
    %v1186 = vpop.f32.mrf.mxu0
    %v1187 = vadd.f32 0.0, %v1186
    %1188 = vmatmul.f32.gmra.mxu0 %v350
    %v1189 = vpop.f32.mrf.mxu0
    %v1190 = vadd.f32 0.0, %v1189
    %1191 = vmatmul.f32.gmra.mxu0 %v353
    %v1192 = vpop.f32.mrf.mxu0
    %v1193 = vadd.f32 0.0, %v1192
    %1194 = vmatmul.f32.gmra.mxu0 %v356
    %v1195 = vpop.f32.mrf.mxu0
    %v1196 = vadd.f32 0.0, %v1195
    %1197 = vmatmul.f32.gmra.mxu0 %v359
    %v1198 = vpop.f32.mrf.mxu0
    %v1199 = vadd.f32 0.0, %v1198
    %1200 = vmatmul.f32.gmra.mxu0 %v362
    %v1201 = vpop.f32.mrf.mxu0
    %v1202 = vadd.f32 0.0, %v1201
    %1203 = vmatmul.f32.gmra.mxu0 %v365
    %v1204 = vpop.f32.mrf.mxu0
    %v1205 = vadd.f32 0.0, %v1204
    %1206 = vmatmul.f32.gmra.mxu0 %v368
    %v1207 = vpop.f32.mrf.mxu0
    %v1208 = vadd.f32 0.0, %v1207
    %1209 = vmatmul.f32.gmra.mxu0 %v371
    %v1210 = vpop.f32.mrf.mxu0
    %v1211 = vadd.f32 0.0, %v1210
    %1212 = vmatmul.f32.gmra.mxu0 %v374
    %v1213 = vpop.f32.mrf.mxu0
    %v1214 = vadd.f32 0.0, %v1213
    %1215 = vmatmul.f32.gmra.mxu0 %v377
    %v1216 = vpop.f32.mrf.mxu0
    %v1217 = vadd.f32 0.0, %v1216
    %1218 = vmatmul.f32.gmra.mxu0 %v380
    %v1219 = vpop.f32.mrf.mxu0
    %v1220 = vadd.f32 0.0, %v1219
    %1221 = vmatmul.f32.gmra.mxu0 %v383
    %v1222 = vpop.f32.mrf.mxu0
    %v1223 = vadd.f32 0.0, %v1222
    %1224 = vmatmul.f32.gmra.mxu0 %v386
    %v1225 = vpop.f32.mrf.mxu0
    %v1226 = vadd.f32 0.0, %v1225
    %1227 = vdwg.mxu0
    %1228 = vmatpush.msra.mxu0 0.0
    %1229 = vmatpush.msra.mxu0 0.0
    %1230 = vmatpush.msra.mxu0 0.0
    %1231 = vmatpush.msra.mxu0 0.0
    %1232 = vmatpush.msra.mxu0 0.0
    %1233 = vmatpush.msra.mxu0 0.0
    %1234 = vmatpush.msra.mxu0 0.0
    %1235 = vmatpush.msra.mxu0 0.0
    %1236 = vmatpush.msra.mxu0 0.0
    %1237 = vmatpush.msra.mxu0 0.0
    %1238 = vmatpush.msra.mxu0 0.0
    %1239 = vmatpush.msra.mxu0 0.0
    %1240 = vmatpush.msra.mxu0 0.0
    %1241 = vmatpush.msra.mxu0 0.0
    %1242 = vmatpush.msra.mxu0 %v411
    %1243 = vmatpush.msra.mxu0 %v266
    %1244 = vmatmul.f32.gmra.mxu0 %v293
    %v1245 = vpop.f32.mrf.mxu0
    %v1246 = vadd.f32 0.0, %v1245
    %1247 = vmatmul.f32.gmra.mxu0 %v296
    %v1248 = vpop.f32.mrf.mxu0
    %v1249 = vadd.f32 0.0, %v1248
    %1250 = vmatmul.f32.gmra.mxu0 %v299
    %v1251 = vpop.f32.mrf.mxu0
    %v1252 = vadd.f32 0.0, %v1251
    %1253 = vmatmul.f32.gmra.mxu0 %v302
    %v1254 = vpop.f32.mrf.mxu0
    %v1255 = vadd.f32 0.0, %v1254
    %1256 = vmatmul.f32.gmra.mxu0 %v305
    %v1257 = vpop.f32.mrf.mxu0
    %v1258 = vadd.f32 0.0, %v1257
    %1259 = vmatmul.f32.gmra.mxu0 %v308
    %v1260 = vpop.f32.mrf.mxu0
    %v1261 = vadd.f32 0.0, %v1260
    %1262 = vmatmul.f32.gmra.mxu0 %v311
    %v1263 = vpop.f32.mrf.mxu0
    %v1264 = vadd.f32 0.0, %v1263
    %1265 = vmatmul.f32.gmra.mxu0 %v314
    %v1266 = vpop.f32.mrf.mxu0
    %v1267 = vadd.f32 0.0, %v1266
    %1268 = vmatmul.f32.gmra.mxu0 %v317
    %v1269 = vpop.f32.mrf.mxu0
    %v1270 = vadd.f32 0.0, %v1269
    %1271 = vmatmul.f32.gmra.mxu0 %v320
    %v1272 = vpop.f32.mrf.mxu0
    %v1273 = vadd.f32 0.0, %v1272
    %1274 = vmatmul.f32.gmra.mxu0 %v323
    %v1275 = vpop.f32.mrf.mxu0
    %v1276 = vadd.f32 0.0, %v1275
    %1277 = vmatmul.f32.gmra.mxu0 %v326
    %v1278 = vpop.f32.mrf.mxu0
    %v1279 = vadd.f32 0.0, %v1278
    %1280 = vmatmul.f32.gmra.mxu0 %v329
    %v1281 = vpop.f32.mrf.mxu0
    %v1282 = vadd.f32 0.0, %v1281
    %1283 = vmatmul.f32.gmra.mxu0 %v332
    %v1284 = vpop.f32.mrf.mxu0
    %v1285 = vadd.f32 0.0, %v1284
    %1286 = vmatmul.f32.gmra.mxu0 %v335
    %v1287 = vpop.f32.mrf.mxu0
    %v1288 = vadd.f32 0.0, %v1287
    %1289 = vmatmul.f32.gmra.mxu0 %v338
    %v1290 = vpop.f32.mrf.mxu0
    %v1291 = vadd.f32 0.0, %v1290
    %1292 = vmatmul.f32.gmra.mxu0 %v341
    %v1293 = vpop.f32.mrf.mxu0
    %v1294 = vadd.f32 0.0, %v1293
    %1295 = vmatmul.f32.gmra.mxu0 %v344
    %v1296 = vpop.f32.mrf.mxu0
    %v1297 = vadd.f32 0.0, %v1296
    %1298 = vmatmul.f32.gmra.mxu0 %v347
    %v1299 = vpop.f32.mrf.mxu0
    %v1300 = vadd.f32 0.0, %v1299
    %1301 = vmatmul.f32.gmra.mxu0 %v350
    %v1302 = vpop.f32.mrf.mxu0
    %v1303 = vadd.f32 0.0, %v1302
    %1304 = vmatmul.f32.gmra.mxu0 %v353
    %v1305 = vpop.f32.mrf.mxu0
    %v1306 = vadd.f32 0.0, %v1305
    %1307 = vmatmul.f32.gmra.mxu0 %v356
    %v1308 = vpop.f32.mrf.mxu0
    %v1309 = vadd.f32 0.0, %v1308
    %1310 = vmatmul.f32.gmra.mxu0 %v359
    %v1311 = vpop.f32.mrf.mxu0
    %v1312 = vadd.f32 0.0, %v1311
    %1313 = vmatmul.f32.gmra.mxu0 %v362
    %v1314 = vpop.f32.mrf.mxu0
    %v1315 = vadd.f32 0.0, %v1314
    %1316 = vmatmul.f32.gmra.mxu0 %v365
    %v1317 = vpop.f32.mrf.mxu0
    %v1318 = vadd.f32 0.0, %v1317
    %1319 = vmatmul.f32.gmra.mxu0 %v368
    %v1320 = vpop.f32.mrf.mxu0
    %v1321 = vadd.f32 0.0, %v1320
    %1322 = vmatmul.f32.gmra.mxu0 %v371
    %v1323 = vpop.f32.mrf.mxu0
    %v1324 = vadd.f32 0.0, %v1323
    %1325 = vmatmul.f32.gmra.mxu0 %v374
    %v1326 = vpop.f32.mrf.mxu0
    %v1327 = vadd.f32 0.0, %v1326
    %1328 = vmatmul.f32.gmra.mxu0 %v377
    %v1329 = vpop.f32.mrf.mxu0
    %v1330 = vadd.f32 0.0, %v1329
    %1331 = vmatmul.f32.gmra.mxu0 %v380
    %v1332 = vpop.f32.mrf.mxu0
    %v1333 = vadd.f32 0.0, %v1332
    %1334 = vmatmul.f32.gmra.mxu0 %v383
    %v1335 = vpop.f32.mrf.mxu0
    %v1336 = vadd.f32 0.0, %v1335
    %1337 = vmatmul.f32.gmra.mxu0 %v386
    %v1338 = vpop.f32.mrf.mxu0
    %v1339 = vadd.f32 0.0, %v1338
    %1340 = vdwg.mxu0
    %1341 = vmatpush.msra.mxu0 0.0
    %1342 = vmatpush.msra.mxu0 0.0
    %1343 = vmatpush.msra.mxu0 0.0
    %1344 = vmatpush.msra.mxu0 0.0
    %1345 = vmatpush.msra.mxu0 0.0
    %1346 = vmatpush.msra.mxu0 0.0
    %1347 = vmatpush.msra.mxu0 0.0
    %1348 = vmatpush.msra.mxu0 0.0
    %1349 = vmatpush.msra.mxu0 0.0
    %1350 = vmatpush.msra.mxu0 0.0
    %1351 = vmatpush.msra.mxu0 0.0
    %1352 = vmatpush.msra.mxu0 0.0
    %1353 = vmatpush.msra.mxu0 0.0
    %1354 = vmatpush.msra.mxu0 0.0
    %1355 = vmatpush.msra.mxu0 %v414
    %1356 = vmatpush.msra.mxu0 %v267
    %1357 = vmatmul.f32.gmra.mxu0 %v293
    %v1358 = vpop.f32.mrf.mxu0
    %v1359 = vadd.f32 0.0, %v1358
    %1360 = vmatmul.f32.gmra.mxu0 %v296
    %v1361 = vpop.f32.mrf.mxu0
    %v1362 = vadd.f32 0.0, %v1361
    %1363 = vmatmul.f32.gmra.mxu0 %v299
    %v1364 = vpop.f32.mrf.mxu0
    %v1365 = vadd.f32 0.0, %v1364
    %1366 = vmatmul.f32.gmra.mxu0 %v302
    %v1367 = vpop.f32.mrf.mxu0
    %v1368 = vadd.f32 0.0, %v1367
    %1369 = vmatmul.f32.gmra.mxu0 %v305
    %v1370 = vpop.f32.mrf.mxu0
    %v1371 = vadd.f32 0.0, %v1370
    %1372 = vmatmul.f32.gmra.mxu0 %v308
    %v1373 = vpop.f32.mrf.mxu0
    %v1374 = vadd.f32 0.0, %v1373
    %1375 = vmatmul.f32.gmra.mxu0 %v311
    %v1376 = vpop.f32.mrf.mxu0
    %v1377 = vadd.f32 0.0, %v1376
    %1378 = vmatmul.f32.gmra.mxu0 %v314
    %v1379 = vpop.f32.mrf.mxu0
    %v1380 = vadd.f32 0.0, %v1379
    %1381 = vmatmul.f32.gmra.mxu0 %v317
    %v1382 = vpop.f32.mrf.mxu0
    %v1383 = vadd.f32 0.0, %v1382
    %1384 = vmatmul.f32.gmra.mxu0 %v320
    %v1385 = vpop.f32.mrf.mxu0
    %v1386 = vadd.f32 0.0, %v1385
    %1387 = vmatmul.f32.gmra.mxu0 %v323
    %v1388 = vpop.f32.mrf.mxu0
    %v1389 = vadd.f32 0.0, %v1388
    %1390 = vmatmul.f32.gmra.mxu0 %v326
    %v1391 = vpop.f32.mrf.mxu0
    %v1392 = vadd.f32 0.0, %v1391
    %1393 = vmatmul.f32.gmra.mxu0 %v329
    %v1394 = vpop.f32.mrf.mxu0
    %v1395 = vadd.f32 0.0, %v1394
    %1396 = vmatmul.f32.gmra.mxu0 %v332
    %v1397 = vpop.f32.mrf.mxu0
    %v1398 = vadd.f32 0.0, %v1397
    %1399 = vmatmul.f32.gmra.mxu0 %v335
    %v1400 = vpop.f32.mrf.mxu0
    %v1401 = vadd.f32 0.0, %v1400
    %1402 = vmatmul.f32.gmra.mxu0 %v338
    %v1403 = vpop.f32.mrf.mxu0
    %v1404 = vadd.f32 0.0, %v1403
    %1405 = vmatmul.f32.gmra.mxu0 %v341
    %v1406 = vpop.f32.mrf.mxu0
    %v1407 = vadd.f32 0.0, %v1406
    %1408 = vmatmul.f32.gmra.mxu0 %v344
    %v1409 = vpop.f32.mrf.mxu0
    %v1410 = vadd.f32 0.0, %v1409
    %1411 = vmatmul.f32.gmra.mxu0 %v347
    %v1412 = vpop.f32.mrf.mxu0
    %v1413 = vadd.f32 0.0, %v1412
    %1414 = vmatmul.f32.gmra.mxu0 %v350
    %v1415 = vpop.f32.mrf.mxu0
    %v1416 = vadd.f32 0.0, %v1415
    %1417 = vmatmul.f32.gmra.mxu0 %v353
    %v1418 = vpop.f32.mrf.mxu0
    %v1419 = vadd.f32 0.0, %v1418
    %1420 = vmatmul.f32.gmra.mxu0 %v356
    %v1421 = vpop.f32.mrf.mxu0
    %v1422 = vadd.f32 0.0, %v1421
    %1423 = vmatmul.f32.gmra.mxu0 %v359
    %v1424 = vpop.f32.mrf.mxu0
    %v1425 = vadd.f32 0.0, %v1424
    %1426 = vmatmul.f32.gmra.mxu0 %v362
    %v1427 = vpop.f32.mrf.mxu0
    %v1428 = vadd.f32 0.0, %v1427
    %1429 = vmatmul.f32.gmra.mxu0 %v365
    %v1430 = vpop.f32.mrf.mxu0
    %v1431 = vadd.f32 0.0, %v1430
    %1432 = vmatmul.f32.gmra.mxu0 %v368
    %v1433 = vpop.f32.mrf.mxu0
    %v1434 = vadd.f32 0.0, %v1433
    %1435 = vmatmul.f32.gmra.mxu0 %v371
    %v1436 = vpop.f32.mrf.mxu0
    %v1437 = vadd.f32 0.0, %v1436
    %1438 = vmatmul.f32.gmra.mxu0 %v374
    %v1439 = vpop.f32.mrf.mxu0
    %v1440 = vadd.f32 0.0, %v1439
    %1441 = vmatmul.f32.gmra.mxu0 %v377
    %v1442 = vpop.f32.mrf.mxu0
    %v1443 = vadd.f32 0.0, %v1442
    %1444 = vmatmul.f32.gmra.mxu0 %v380
    %v1445 = vpop.f32.mrf.mxu0
    %v1446 = vadd.f32 0.0, %v1445
    %1447 = vmatmul.f32.gmra.mxu0 %v383
    %v1448 = vpop.f32.mrf.mxu0
    %v1449 = vadd.f32 0.0, %v1448
    %1450 = vmatmul.f32.gmra.mxu0 %v386
    %v1451 = vpop.f32.mrf.mxu0
    %v1452 = vadd.f32 0.0, %v1451
    %1453 = vdwg.mxu0
    %1454 = vmatpush.msra.mxu0 0.0
    %1455 = vmatpush.msra.mxu0 0.0
    %1456 = vmatpush.msra.mxu0 0.0
    %1457 = vmatpush.msra.mxu0 0.0
    %1458 = vmatpush.msra.mxu0 0.0
    %1459 = vmatpush.msra.mxu0 0.0
    %1460 = vmatpush.msra.mxu0 0.0
    %1461 = vmatpush.msra.mxu0 0.0
    %1462 = vmatpush.msra.mxu0 0.0
    %1463 = vmatpush.msra.mxu0 0.0
    %1464 = vmatpush.msra.mxu0 0.0
    %1465 = vmatpush.msra.mxu0 0.0
    %1466 = vmatpush.msra.mxu0 0.0
    %1467 = vmatpush.msra.mxu0 0.0
    %1468 = vmatpush.msra.mxu0 %v417
    %1469 = vmatpush.msra.mxu0 %v268
    %1470 = vmatmul.f32.gmra.mxu0 %v293
    %v1471 = vpop.f32.mrf.mxu0
    %v1472 = vadd.f32 0.0, %v1471
    %1473 = vmatmul.f32.gmra.mxu0 %v296
    %v1474 = vpop.f32.mrf.mxu0
    %v1475 = vadd.f32 0.0, %v1474
    %1476 = vmatmul.f32.gmra.mxu0 %v299
    %v1477 = vpop.f32.mrf.mxu0
    %v1478 = vadd.f32 0.0, %v1477
    %1479 = vmatmul.f32.gmra.mxu0 %v302
    %v1480 = vpop.f32.mrf.mxu0
    %v1481 = vadd.f32 0.0, %v1480
    %1482 = vmatmul.f32.gmra.mxu0 %v305
    %v1483 = vpop.f32.mrf.mxu0
    %v1484 = vadd.f32 0.0, %v1483
    %1485 = vmatmul.f32.gmra.mxu0 %v308
    %v1486 = vpop.f32.mrf.mxu0
    %v1487 = vadd.f32 0.0, %v1486
    %1488 = vmatmul.f32.gmra.mxu0 %v311
    %v1489 = vpop.f32.mrf.mxu0
    %v1490 = vadd.f32 0.0, %v1489
    %1491 = vmatmul.f32.gmra.mxu0 %v314
    %v1492 = vpop.f32.mrf.mxu0
    %v1493 = vadd.f32 0.0, %v1492
    %1494 = vmatmul.f32.gmra.mxu0 %v317
    %v1495 = vpop.f32.mrf.mxu0
    %v1496 = vadd.f32 0.0, %v1495
    %1497 = vmatmul.f32.gmra.mxu0 %v320
    %v1498 = vpop.f32.mrf.mxu0
    %v1499 = vadd.f32 0.0, %v1498
    %1500 = vmatmul.f32.gmra.mxu0 %v323
    %v1501 = vpop.f32.mrf.mxu0
    %v1502 = vadd.f32 0.0, %v1501
    %1503 = vmatmul.f32.gmra.mxu0 %v326
    %v1504 = vpop.f32.mrf.mxu0
    %v1505 = vadd.f32 0.0, %v1504
    %1506 = vmatmul.f32.gmra.mxu0 %v329
    %v1507 = vpop.f32.mrf.mxu0
    %v1508 = vadd.f32 0.0, %v1507
    %1509 = vmatmul.f32.gmra.mxu0 %v332
    %v1510 = vpop.f32.mrf.mxu0
    %v1511 = vadd.f32 0.0, %v1510
    %1512 = vmatmul.f32.gmra.mxu0 %v335
    %v1513 = vpop.f32.mrf.mxu0
    %v1514 = vadd.f32 0.0, %v1513
    %1515 = vmatmul.f32.gmra.mxu0 %v338
    %v1516 = vpop.f32.mrf.mxu0
    %v1517 = vadd.f32 0.0, %v1516
    %1518 = vmatmul.f32.gmra.mxu0 %v341
    %v1519 = vpop.f32.mrf.mxu0
    %v1520 = vadd.f32 0.0, %v1519
    %1521 = vmatmul.f32.gmra.mxu0 %v344
    %v1522 = vpop.f32.mrf.mxu0
    %v1523 = vadd.f32 0.0, %v1522
    %1524 = vmatmul.f32.gmra.mxu0 %v347
    %v1525 = vpop.f32.mrf.mxu0
    %v1526 = vadd.f32 0.0, %v1525
    %1527 = vmatmul.f32.gmra.mxu0 %v350
    %v1528 = vpop.f32.mrf.mxu0
    %v1529 = vadd.f32 0.0, %v1528
    %1530 = vmatmul.f32.gmra.mxu0 %v353
    %v1531 = vpop.f32.mrf.mxu0
    %v1532 = vadd.f32 0.0, %v1531
    %1533 = vmatmul.f32.gmra.mxu0 %v356
    %v1534 = vpop.f32.mrf.mxu0
    %v1535 = vadd.f32 0.0, %v1534
    %1536 = vmatmul.f32.gmra.mxu0 %v359
    %v1537 = vpop.f32.mrf.mxu0
    %v1538 = vadd.f32 0.0, %v1537
    %1539 = vmatmul.f32.gmra.mxu0 %v362
    %v1540 = vpop.f32.mrf.mxu0
    %v1541 = vadd.f32 0.0, %v1540
    %1542 = vmatmul.f32.gmra.mxu0 %v365
    %v1543 = vpop.f32.mrf.mxu0
    %v1544 = vadd.f32 0.0, %v1543
    %1545 = vmatmul.f32.gmra.mxu0 %v368
    %v1546 = vpop.f32.mrf.mxu0
    %v1547 = vadd.f32 0.0, %v1546
    %1548 = vmatmul.f32.gmra.mxu0 %v371
    %v1549 = vpop.f32.mrf.mxu0
    %v1550 = vadd.f32 0.0, %v1549
    %1551 = vmatmul.f32.gmra.mxu0 %v374
    %v1552 = vpop.f32.mrf.mxu0
    %v1553 = vadd.f32 0.0, %v1552
    %1554 = vmatmul.f32.gmra.mxu0 %v377
    %v1555 = vpop.f32.mrf.mxu0
    %v1556 = vadd.f32 0.0, %v1555
    %1557 = vmatmul.f32.gmra.mxu0 %v380
    %v1558 = vpop.f32.mrf.mxu0
    %v1559 = vadd.f32 0.0, %v1558
    %1560 = vmatmul.f32.gmra.mxu0 %v383
    %v1561 = vpop.f32.mrf.mxu0
    %v1562 = vadd.f32 0.0, %v1561
    %1563 = vmatmul.f32.gmra.mxu0 %v386
    %v1564 = vpop.f32.mrf.mxu0
    %v1565 = vadd.f32 0.0, %v1564
    %1566 = vdwg.mxu0
    %1567 = vmatpush.msra.mxu0 0.0
    %1568 = vmatpush.msra.mxu0 0.0
    %1569 = vmatpush.msra.mxu0 0.0
    %1570 = vmatpush.msra.mxu0 0.0
    %1571 = vmatpush.msra.mxu0 0.0
    %1572 = vmatpush.msra.mxu0 0.0
    %1573 = vmatpush.msra.mxu0 0.0
    %1574 = vmatpush.msra.mxu0 0.0
    %1575 = vmatpush.msra.mxu0 0.0
    %1576 = vmatpush.msra.mxu0 0.0
    %1577 = vmatpush.msra.mxu0 0.0
    %1578 = vmatpush.msra.mxu0 0.0
    %1579 = vmatpush.msra.mxu0 0.0
    %1580 = vmatpush.msra.mxu0 0.0
    %1581 = vmatpush.msra.mxu0 %v420
    %1582 = vmatpush.msra.mxu0 %v269
    %1583 = vmatmul.f32.gmra.mxu0 %v293
    %v1584 = vpop.f32.mrf.mxu0
    %v1585 = vadd.f32 0.0, %v1584
    %1586 = vmatmul.f32.gmra.mxu0 %v296
    %v1587 = vpop.f32.mrf.mxu0
    %v1588 = vadd.f32 0.0, %v1587
    %1589 = vmatmul.f32.gmra.mxu0 %v299
    %v1590 = vpop.f32.mrf.mxu0
    %v1591 = vadd.f32 0.0, %v1590
    %1592 = vmatmul.f32.gmra.mxu0 %v302
    %v1593 = vpop.f32.mrf.mxu0
    %v1594 = vadd.f32 0.0, %v1593
    %1595 = vmatmul.f32.gmra.mxu0 %v305
    %v1596 = vpop.f32.mrf.mxu0
    %v1597 = vadd.f32 0.0, %v1596
    %1598 = vmatmul.f32.gmra.mxu0 %v308
    %v1599 = vpop.f32.mrf.mxu0
    %v1600 = vadd.f32 0.0, %v1599
    %1601 = vmatmul.f32.gmra.mxu0 %v311
    %v1602 = vpop.f32.mrf.mxu0
    %v1603 = vadd.f32 0.0, %v1602
    %1604 = vmatmul.f32.gmra.mxu0 %v314
    %v1605 = vpop.f32.mrf.mxu0
    %v1606 = vadd.f32 0.0, %v1605
    %1607 = vmatmul.f32.gmra.mxu0 %v317
    %v1608 = vpop.f32.mrf.mxu0
    %v1609 = vadd.f32 0.0, %v1608
    %1610 = vmatmul.f32.gmra.mxu0 %v320
    %v1611 = vpop.f32.mrf.mxu0
    %v1612 = vadd.f32 0.0, %v1611
    %1613 = vmatmul.f32.gmra.mxu0 %v323
    %v1614 = vpop.f32.mrf.mxu0
    %v1615 = vadd.f32 0.0, %v1614
    %1616 = vmatmul.f32.gmra.mxu0 %v326
    %v1617 = vpop.f32.mrf.mxu0
    %v1618 = vadd.f32 0.0, %v1617
    %1619 = vmatmul.f32.gmra.mxu0 %v329
    %v1620 = vpop.f32.mrf.mxu0
    %v1621 = vadd.f32 0.0, %v1620
    %1622 = vmatmul.f32.gmra.mxu0 %v332
    %v1623 = vpop.f32.mrf.mxu0
    %v1624 = vadd.f32 0.0, %v1623
    %1625 = vmatmul.f32.gmra.mxu0 %v335
    %v1626 = vpop.f32.mrf.mxu0
    %v1627 = vadd.f32 0.0, %v1626
    %1628 = vmatmul.f32.gmra.mxu0 %v338
    %v1629 = vpop.f32.mrf.mxu0
    %v1630 = vadd.f32 0.0, %v1629
    %1631 = vmatmul.f32.gmra.mxu0 %v341
    %v1632 = vpop.f32.mrf.mxu0
    %v1633 = vadd.f32 0.0, %v1632
    %1634 = vmatmul.f32.gmra.mxu0 %v344
    %v1635 = vpop.f32.mrf.mxu0
    %v1636 = vadd.f32 0.0, %v1635
    %1637 = vmatmul.f32.gmra.mxu0 %v347
    %v1638 = vpop.f32.mrf.mxu0
    %v1639 = vadd.f32 0.0, %v1638
    %1640 = vmatmul.f32.gmra.mxu0 %v350
    %v1641 = vpop.f32.mrf.mxu0
    %v1642 = vadd.f32 0.0, %v1641
    %1643 = vmatmul.f32.gmra.mxu0 %v353
    %v1644 = vpop.f32.mrf.mxu0
    %v1645 = vadd.f32 0.0, %v1644
    %1646 = vmatmul.f32.gmra.mxu0 %v356
    %v1647 = vpop.f32.mrf.mxu0
    %v1648 = vadd.f32 0.0, %v1647
    %1649 = vmatmul.f32.gmra.mxu0 %v359
    %v1650 = vpop.f32.mrf.mxu0
    %v1651 = vadd.f32 0.0, %v1650
    %1652 = vmatmul.f32.gmra.mxu0 %v362
    %v1653 = vpop.f32.mrf.mxu0
    %v1654 = vadd.f32 0.0, %v1653
    %1655 = vmatmul.f32.gmra.mxu0 %v365
    %v1656 = vpop.f32.mrf.mxu0
    %v1657 = vadd.f32 0.0, %v1656
    %1658 = vmatmul.f32.gmra.mxu0 %v368
    %v1659 = vpop.f32.mrf.mxu0
    %v1660 = vadd.f32 0.0, %v1659
    %1661 = vmatmul.f32.gmra.mxu0 %v371
    %v1662 = vpop.f32.mrf.mxu0
    %v1663 = vadd.f32 0.0, %v1662
    %1664 = vmatmul.f32.gmra.mxu0 %v374
    %v1665 = vpop.f32.mrf.mxu0
    %v1666 = vadd.f32 0.0, %v1665
    %1667 = vmatmul.f32.gmra.mxu0 %v377
    %v1668 = vpop.f32.mrf.mxu0
    %v1669 = vadd.f32 0.0, %v1668
    %1670 = vmatmul.f32.gmra.mxu0 %v380
    %v1671 = vpop.f32.mrf.mxu0
    %v1672 = vadd.f32 0.0, %v1671
    %1673 = vmatmul.f32.gmra.mxu0 %v383
    %v1674 = vpop.f32.mrf.mxu0
    %v1675 = vadd.f32 0.0, %v1674
    %1676 = vmatmul.f32.gmra.mxu0 %v386
    %v1677 = vpop.f32.mrf.mxu0
    %v1678 = vadd.f32 0.0, %v1677
    %1679 = vdwg.mxu0
    %1680 = vmatpush.msra.mxu0 0.0
    %1681 = vmatpush.msra.mxu0 0.0
    %1682 = vmatpush.msra.mxu0 0.0
    %1683 = vmatpush.msra.mxu0 0.0
    %1684 = vmatpush.msra.mxu0 0.0
    %1685 = vmatpush.msra.mxu0 0.0
    %1686 = vmatpush.msra.mxu0 0.0
    %1687 = vmatpush.msra.mxu0 0.0
    %1688 = vmatpush.msra.mxu0 0.0
    %1689 = vmatpush.msra.mxu0 0.0
    %1690 = vmatpush.msra.mxu0 0.0
    %1691 = vmatpush.msra.mxu0 0.0
    %1692 = vmatpush.msra.mxu0 0.0
    %1693 = vmatpush.msra.mxu0 0.0
    %1694 = vmatpush.msra.mxu0 %v423
    %1695 = vmatpush.msra.mxu0 %v270
    %1696 = vmatmul.f32.gmra.mxu0 %v293
    %v1697 = vpop.f32.mrf.mxu0
    %v1698 = vadd.f32 0.0, %v1697
    %1699 = vmatmul.f32.gmra.mxu0 %v296
    %v1700 = vpop.f32.mrf.mxu0
    %v1701 = vadd.f32 0.0, %v1700
    %1702 = vmatmul.f32.gmra.mxu0 %v299
    %v1703 = vpop.f32.mrf.mxu0
    %v1704 = vadd.f32 0.0, %v1703
    %1705 = vmatmul.f32.gmra.mxu0 %v302
    %v1706 = vpop.f32.mrf.mxu0
    %v1707 = vadd.f32 0.0, %v1706
    %1708 = vmatmul.f32.gmra.mxu0 %v305
    %v1709 = vpop.f32.mrf.mxu0
    %v1710 = vadd.f32 0.0, %v1709
    %1711 = vmatmul.f32.gmra.mxu0 %v308
    %v1712 = vpop.f32.mrf.mxu0
    %v1713 = vadd.f32 0.0, %v1712
    %1714 = vmatmul.f32.gmra.mxu0 %v311
    %v1715 = vpop.f32.mrf.mxu0
    %v1716 = vadd.f32 0.0, %v1715
    %1717 = vmatmul.f32.gmra.mxu0 %v314
    %v1718 = vpop.f32.mrf.mxu0
    %v1719 = vadd.f32 0.0, %v1718
    %1720 = vmatmul.f32.gmra.mxu0 %v317
    %v1721 = vpop.f32.mrf.mxu0
    %v1722 = vadd.f32 0.0, %v1721
    %1723 = vmatmul.f32.gmra.mxu0 %v320
    %v1724 = vpop.f32.mrf.mxu0
    %v1725 = vadd.f32 0.0, %v1724
    %1726 = vmatmul.f32.gmra.mxu0 %v323
    %v1727 = vpop.f32.mrf.mxu0
    %v1728 = vadd.f32 0.0, %v1727
    %1729 = vmatmul.f32.gmra.mxu0 %v326
    %v1730 = vpop.f32.mrf.mxu0
    %v1731 = vadd.f32 0.0, %v1730
    %1732 = vmatmul.f32.gmra.mxu0 %v329
    %v1733 = vpop.f32.mrf.mxu0
    %v1734 = vadd.f32 0.0, %v1733
    %1735 = vmatmul.f32.gmra.mxu0 %v332
    %v1736 = vpop.f32.mrf.mxu0
    %v1737 = vadd.f32 0.0, %v1736
    %1738 = vmatmul.f32.gmra.mxu0 %v335
    %v1739 = vpop.f32.mrf.mxu0
    %v1740 = vadd.f32 0.0, %v1739
    %1741 = vmatmul.f32.gmra.mxu0 %v338
    %v1742 = vpop.f32.mrf.mxu0
    %v1743 = vadd.f32 0.0, %v1742
    %1744 = vmatmul.f32.gmra.mxu0 %v341
    %v1745 = vpop.f32.mrf.mxu0
    %v1746 = vadd.f32 0.0, %v1745
    %1747 = vmatmul.f32.gmra.mxu0 %v344
    %v1748 = vpop.f32.mrf.mxu0
    %v1749 = vadd.f32 0.0, %v1748
    %1750 = vmatmul.f32.gmra.mxu0 %v347
    %v1751 = vpop.f32.mrf.mxu0
    %v1752 = vadd.f32 0.0, %v1751
    %1753 = vmatmul.f32.gmra.mxu0 %v350
    %v1754 = vpop.f32.mrf.mxu0
    %v1755 = vadd.f32 0.0, %v1754
    %1756 = vmatmul.f32.gmra.mxu0 %v353
    %v1757 = vpop.f32.mrf.mxu0
    %v1758 = vadd.f32 0.0, %v1757
    %1759 = vmatmul.f32.gmra.mxu0 %v356
    %v1760 = vpop.f32.mrf.mxu0
    %v1761 = vadd.f32 0.0, %v1760
    %1762 = vmatmul.f32.gmra.mxu0 %v359
    %v1763 = vpop.f32.mrf.mxu0
    %v1764 = vadd.f32 0.0, %v1763
    %1765 = vmatmul.f32.gmra.mxu0 %v362
    %v1766 = vpop.f32.mrf.mxu0
    %v1767 = vadd.f32 0.0, %v1766
    %1768 = vmatmul.f32.gmra.mxu0 %v365
    %v1769 = vpop.f32.mrf.mxu0
    %v1770 = vadd.f32 0.0, %v1769
    %1771 = vmatmul.f32.gmra.mxu0 %v368
    %v1772 = vpop.f32.mrf.mxu0
    %v1773 = vadd.f32 0.0, %v1772
    %1774 = vmatmul.f32.gmra.mxu0 %v371
    %v1775 = vpop.f32.mrf.mxu0
    %v1776 = vadd.f32 0.0, %v1775
    %1777 = vmatmul.f32.gmra.mxu0 %v374
    %v1778 = vpop.f32.mrf.mxu0
    %v1779 = vadd.f32 0.0, %v1778
    %1780 = vmatmul.f32.gmra.mxu0 %v377
    %v1781 = vpop.f32.mrf.mxu0
    %v1782 = vadd.f32 0.0, %v1781
    %1783 = vmatmul.f32.gmra.mxu0 %v380
    %v1784 = vpop.f32.mrf.mxu0
    %v1785 = vadd.f32 0.0, %v1784
    %1786 = vmatmul.f32.gmra.mxu0 %v383
    %v1787 = vpop.f32.mrf.mxu0
    %v1788 = vadd.f32 0.0, %v1787
    %1789 = vmatmul.f32.gmra.mxu0 %v386
    %v1790 = vpop.f32.mrf.mxu0
    %v1791 = vadd.f32 0.0, %v1790
    %1792 = vdwg.mxu0
    %1793 = vmatpush.msra.mxu0 0.0
    %1794 = vmatpush.msra.mxu0 0.0
    %1795 = vmatpush.msra.mxu0 0.0
    %1796 = vmatpush.msra.mxu0 0.0
    %1797 = vmatpush.msra.mxu0 0.0
    %1798 = vmatpush.msra.mxu0 0.0
    %1799 = vmatpush.msra.mxu0 0.0
    %1800 = vmatpush.msra.mxu0 0.0
    %1801 = vmatpush.msra.mxu0 0.0
    %1802 = vmatpush.msra.mxu0 0.0
    %1803 = vmatpush.msra.mxu0 0.0
    %1804 = vmatpush.msra.mxu0 0.0
    %1805 = vmatpush.msra.mxu0 0.0
    %1806 = vmatpush.msra.mxu0 0.0
    %1807 = vmatpush.msra.mxu0 %v426
    %1808 = vmatpush.msra.mxu0 %v271
    %1809 = vmatmul.f32.gmra.mxu0 %v293
    %v1810 = vpop.f32.mrf.mxu0
    %v1811 = vadd.f32 0.0, %v1810
    %1812 = vmatmul.f32.gmra.mxu0 %v296
    %v1813 = vpop.f32.mrf.mxu0
    %v1814 = vadd.f32 0.0, %v1813
    %1815 = vmatmul.f32.gmra.mxu0 %v299
    %v1816 = vpop.f32.mrf.mxu0
    %v1817 = vadd.f32 0.0, %v1816
    %1818 = vmatmul.f32.gmra.mxu0 %v302
    %v1819 = vpop.f32.mrf.mxu0
    %v1820 = vadd.f32 0.0, %v1819
    %1821 = vmatmul.f32.gmra.mxu0 %v305
    %v1822 = vpop.f32.mrf.mxu0
    %v1823 = vadd.f32 0.0, %v1822
    %1824 = vmatmul.f32.gmra.mxu0 %v308
    %v1825 = vpop.f32.mrf.mxu0
    %v1826 = vadd.f32 0.0, %v1825
    %1827 = vmatmul.f32.gmra.mxu0 %v311
    %v1828 = vpop.f32.mrf.mxu0
    %v1829 = vadd.f32 0.0, %v1828
    %1830 = vmatmul.f32.gmra.mxu0 %v314
    %v1831 = vpop.f32.mrf.mxu0
    %v1832 = vadd.f32 0.0, %v1831
    %1833 = vmatmul.f32.gmra.mxu0 %v317
    %v1834 = vpop.f32.mrf.mxu0
    %v1835 = vadd.f32 0.0, %v1834
    %1836 = vmatmul.f32.gmra.mxu0 %v320
    %v1837 = vpop.f32.mrf.mxu0
    %v1838 = vadd.f32 0.0, %v1837
    %1839 = vmatmul.f32.gmra.mxu0 %v323
    %v1840 = vpop.f32.mrf.mxu0
    %v1841 = vadd.f32 0.0, %v1840
    %1842 = vmatmul.f32.gmra.mxu0 %v326
    %v1843 = vpop.f32.mrf.mxu0
    %v1844 = vadd.f32 0.0, %v1843
    %1845 = vmatmul.f32.gmra.mxu0 %v329
    %v1846 = vpop.f32.mrf.mxu0
    %v1847 = vadd.f32 0.0, %v1846
    %1848 = vmatmul.f32.gmra.mxu0 %v332
    %v1849 = vpop.f32.mrf.mxu0
    %v1850 = vadd.f32 0.0, %v1849
    %1851 = vmatmul.f32.gmra.mxu0 %v335
    %v1852 = vpop.f32.mrf.mxu0
    %v1853 = vadd.f32 0.0, %v1852
    %1854 = vmatmul.f32.gmra.mxu0 %v338
    %v1855 = vpop.f32.mrf.mxu0
    %v1856 = vadd.f32 0.0, %v1855
    %1857 = vmatmul.f32.gmra.mxu0 %v341
    %v1858 = vpop.f32.mrf.mxu0
    %v1859 = vadd.f32 0.0, %v1858
    %1860 = vmatmul.f32.gmra.mxu0 %v344
    %v1861 = vpop.f32.mrf.mxu0
    %v1862 = vadd.f32 0.0, %v1861
    %1863 = vmatmul.f32.gmra.mxu0 %v347
    %v1864 = vpop.f32.mrf.mxu0
    %v1865 = vadd.f32 0.0, %v1864
    %1866 = vmatmul.f32.gmra.mxu0 %v350
    %v1867 = vpop.f32.mrf.mxu0
    %v1868 = vadd.f32 0.0, %v1867
    %1869 = vmatmul.f32.gmra.mxu0 %v353
    %v1870 = vpop.f32.mrf.mxu0
    %v1871 = vadd.f32 0.0, %v1870
    %1872 = vmatmul.f32.gmra.mxu0 %v356
    %v1873 = vpop.f32.mrf.mxu0
    %v1874 = vadd.f32 0.0, %v1873
    %1875 = vmatmul.f32.gmra.mxu0 %v359
    %v1876 = vpop.f32.mrf.mxu0
    %v1877 = vadd.f32 0.0, %v1876
    %1878 = vmatmul.f32.gmra.mxu0 %v362
    %v1879 = vpop.f32.mrf.mxu0
    %v1880 = vadd.f32 0.0, %v1879
    %1881 = vmatmul.f32.gmra.mxu0 %v365
    %v1882 = vpop.f32.mrf.mxu0
    %v1883 = vadd.f32 0.0, %v1882
    %1884 = vmatmul.f32.gmra.mxu0 %v368
    %v1885 = vpop.f32.mrf.mxu0
    %v1886 = vadd.f32 0.0, %v1885
    %1887 = vmatmul.f32.gmra.mxu0 %v371
    %v1888 = vpop.f32.mrf.mxu0
    %v1889 = vadd.f32 0.0, %v1888
    %1890 = vmatmul.f32.gmra.mxu0 %v374
    %v1891 = vpop.f32.mrf.mxu0
    %v1892 = vadd.f32 0.0, %v1891
    %1893 = vmatmul.f32.gmra.mxu0 %v377
    %v1894 = vpop.f32.mrf.mxu0
    %v1895 = vadd.f32 0.0, %v1894
    %1896 = vmatmul.f32.gmra.mxu0 %v380
    %v1897 = vpop.f32.mrf.mxu0
    %v1898 = vadd.f32 0.0, %v1897
    %1899 = vmatmul.f32.gmra.mxu0 %v383
    %v1900 = vpop.f32.mrf.mxu0
    %v1901 = vadd.f32 0.0, %v1900
    %1902 = vmatmul.f32.gmra.mxu0 %v386
    %v1903 = vpop.f32.mrf.mxu0
    %v1904 = vadd.f32 0.0, %v1903
    %1905 = vdwg.mxu0
    %1906 = vmatpush.msra.mxu0 0.0
    %1907 = vmatpush.msra.mxu0 0.0
    %1908 = vmatpush.msra.mxu0 0.0
    %1909 = vmatpush.msra.mxu0 0.0
    %1910 = vmatpush.msra.mxu0 0.0
    %1911 = vmatpush.msra.mxu0 0.0
    %1912 = vmatpush.msra.mxu0 0.0
    %1913 = vmatpush.msra.mxu0 0.0
    %1914 = vmatpush.msra.mxu0 0.0
    %1915 = vmatpush.msra.mxu0 0.0
    %1916 = vmatpush.msra.mxu0 0.0
    %1917 = vmatpush.msra.mxu0 0.0
    %1918 = vmatpush.msra.mxu0 0.0
    %1919 = vmatpush.msra.mxu0 0.0
    %1920 = vmatpush.msra.mxu0 %v429
    %1921 = vmatpush.msra.mxu0 %v272
    %1922 = vmatmul.f32.gmra.mxu0 %v293
    %v1923 = vpop.f32.mrf.mxu0
    %v1924 = vadd.f32 0.0, %v1923
    %1925 = vmatmul.f32.gmra.mxu0 %v296
    %v1926 = vpop.f32.mrf.mxu0
    %v1927 = vadd.f32 0.0, %v1926
    %1928 = vmatmul.f32.gmra.mxu0 %v299
    %v1929 = vpop.f32.mrf.mxu0
    %v1930 = vadd.f32 0.0, %v1929
    %1931 = vmatmul.f32.gmra.mxu0 %v302
    %v1932 = vpop.f32.mrf.mxu0
    %v1933 = vadd.f32 0.0, %v1932
    %1934 = vmatmul.f32.gmra.mxu0 %v305
    %v1935 = vpop.f32.mrf.mxu0
    %v1936 = vadd.f32 0.0, %v1935
    %1937 = vmatmul.f32.gmra.mxu0 %v308
    %v1938 = vpop.f32.mrf.mxu0
    %v1939 = vadd.f32 0.0, %v1938
    %1940 = vmatmul.f32.gmra.mxu0 %v311
    %v1941 = vpop.f32.mrf.mxu0
    %v1942 = vadd.f32 0.0, %v1941
    %1943 = vmatmul.f32.gmra.mxu0 %v314
    %v1944 = vpop.f32.mrf.mxu0
    %v1945 = vadd.f32 0.0, %v1944
    %1946 = vmatmul.f32.gmra.mxu0 %v317
    %v1947 = vpop.f32.mrf.mxu0
    %v1948 = vadd.f32 0.0, %v1947
    %1949 = vmatmul.f32.gmra.mxu0 %v320
    %v1950 = vpop.f32.mrf.mxu0
    %v1951 = vadd.f32 0.0, %v1950
    %1952 = vmatmul.f32.gmra.mxu0 %v323
    %v1953 = vpop.f32.mrf.mxu0
    %v1954 = vadd.f32 0.0, %v1953
    %1955 = vmatmul.f32.gmra.mxu0 %v326
    %v1956 = vpop.f32.mrf.mxu0
    %v1957 = vadd.f32 0.0, %v1956
    %1958 = vmatmul.f32.gmra.mxu0 %v329
    %v1959 = vpop.f32.mrf.mxu0
    %v1960 = vadd.f32 0.0, %v1959
    %1961 = vmatmul.f32.gmra.mxu0 %v332
    %v1962 = vpop.f32.mrf.mxu0
    %v1963 = vadd.f32 0.0, %v1962
    %1964 = vmatmul.f32.gmra.mxu0 %v335
    %v1965 = vpop.f32.mrf.mxu0
    %v1966 = vadd.f32 0.0, %v1965
    %1967 = vmatmul.f32.gmra.mxu0 %v338
    %v1968 = vpop.f32.mrf.mxu0
    %v1969 = vadd.f32 0.0, %v1968
    %1970 = vmatmul.f32.gmra.mxu0 %v341
    %v1971 = vpop.f32.mrf.mxu0
    %v1972 = vadd.f32 0.0, %v1971
    %1973 = vmatmul.f32.gmra.mxu0 %v344
    %v1974 = vpop.f32.mrf.mxu0
    %v1975 = vadd.f32 0.0, %v1974
    %1976 = vmatmul.f32.gmra.mxu0 %v347
    %v1977 = vpop.f32.mrf.mxu0
    %v1978 = vadd.f32 0.0, %v1977
    %1979 = vmatmul.f32.gmra.mxu0 %v350
    %v1980 = vpop.f32.mrf.mxu0
    %v1981 = vadd.f32 0.0, %v1980
    %1982 = vmatmul.f32.gmra.mxu0 %v353
    %v1983 = vpop.f32.mrf.mxu0
    %v1984 = vadd.f32 0.0, %v1983
    %1985 = vmatmul.f32.gmra.mxu0 %v356
    %v1986 = vpop.f32.mrf.mxu0
    %v1987 = vadd.f32 0.0, %v1986
    %1988 = vmatmul.f32.gmra.mxu0 %v359
    %v1989 = vpop.f32.mrf.mxu0
    %v1990 = vadd.f32 0.0, %v1989
    %1991 = vmatmul.f32.gmra.mxu0 %v362
    %v1992 = vpop.f32.mrf.mxu0
    %v1993 = vadd.f32 0.0, %v1992
    %1994 = vmatmul.f32.gmra.mxu0 %v365
    %v1995 = vpop.f32.mrf.mxu0
    %v1996 = vadd.f32 0.0, %v1995
    %1997 = vmatmul.f32.gmra.mxu0 %v368
    %v1998 = vpop.f32.mrf.mxu0
    %v1999 = vadd.f32 0.0, %v1998
    %2000 = vmatmul.f32.gmra.mxu0 %v371
    %v2001 = vpop.f32.mrf.mxu0
    %v2002 = vadd.f32 0.0, %v2001
    %2003 = vmatmul.f32.gmra.mxu0 %v374
    %v2004 = vpop.f32.mrf.mxu0
    %v2005 = vadd.f32 0.0, %v2004
    %2006 = vmatmul.f32.gmra.mxu0 %v377
    %v2007 = vpop.f32.mrf.mxu0
    %v2008 = vadd.f32 0.0, %v2007
    %2009 = vmatmul.f32.gmra.mxu0 %v380
    %v2010 = vpop.f32.mrf.mxu0
    %v2011 = vadd.f32 0.0, %v2010
    %2012 = vmatmul.f32.gmra.mxu0 %v383
    %v2013 = vpop.f32.mrf.mxu0
    %v2014 = vadd.f32 0.0, %v2013
    %2015 = vmatmul.f32.gmra.mxu0 %v386
    %v2016 = vpop.f32.mrf.mxu0
    %v2017 = vadd.f32 0.0, %v2016
    %2018 = vdwg.mxu0
    %2019 = vmatpush.msra.mxu0 0.0
    %2020 = vmatpush.msra.mxu0 0.0
    %2021 = vmatpush.msra.mxu0 0.0
    %2022 = vmatpush.msra.mxu0 0.0
    %2023 = vmatpush.msra.mxu0 0.0
    %2024 = vmatpush.msra.mxu0 0.0
    %2025 = vmatpush.msra.mxu0 0.0
    %2026 = vmatpush.msra.mxu0 0.0
    %2027 = vmatpush.msra.mxu0 0.0
    %2028 = vmatpush.msra.mxu0 0.0
    %2029 = vmatpush.msra.mxu0 0.0
    %2030 = vmatpush.msra.mxu0 0.0
    %2031 = vmatpush.msra.mxu0 0.0
    %2032 = vmatpush.msra.mxu0 0.0
    %2033 = vmatpush.msra.mxu0 %v432
    %2034 = vmatpush.msra.mxu0 %v273
    %2035 = vmatmul.f32.gmra.mxu0 %v293
    %v2036 = vpop.f32.mrf.mxu0
    %v2037 = vadd.f32 0.0, %v2036
    %2038 = vmatmul.f32.gmra.mxu0 %v296
    %v2039 = vpop.f32.mrf.mxu0
    %v2040 = vadd.f32 0.0, %v2039
    %2041 = vmatmul.f32.gmra.mxu0 %v299
    %v2042 = vpop.f32.mrf.mxu0
    %v2043 = vadd.f32 0.0, %v2042
    %2044 = vmatmul.f32.gmra.mxu0 %v302
    %v2045 = vpop.f32.mrf.mxu0
    %v2046 = vadd.f32 0.0, %v2045
    %2047 = vmatmul.f32.gmra.mxu0 %v305
    %v2048 = vpop.f32.mrf.mxu0
    %v2049 = vadd.f32 0.0, %v2048
    %2050 = vmatmul.f32.gmra.mxu0 %v308
    %v2051 = vpop.f32.mrf.mxu0
    %v2052 = vadd.f32 0.0, %v2051
    %2053 = vmatmul.f32.gmra.mxu0 %v311
    %v2054 = vpop.f32.mrf.mxu0
    %v2055 = vadd.f32 0.0, %v2054
    %2056 = vmatmul.f32.gmra.mxu0 %v314
    %v2057 = vpop.f32.mrf.mxu0
    %v2058 = vadd.f32 0.0, %v2057
    %2059 = vmatmul.f32.gmra.mxu0 %v317
    %v2060 = vpop.f32.mrf.mxu0
    %v2061 = vadd.f32 0.0, %v2060
    %2062 = vmatmul.f32.gmra.mxu0 %v320
    %v2063 = vpop.f32.mrf.mxu0
    %v2064 = vadd.f32 0.0, %v2063
    %2065 = vmatmul.f32.gmra.mxu0 %v323
    %v2066 = vpop.f32.mrf.mxu0
    %v2067 = vadd.f32 0.0, %v2066
    %2068 = vmatmul.f32.gmra.mxu0 %v326
    %v2069 = vpop.f32.mrf.mxu0
    %v2070 = vadd.f32 0.0, %v2069
    %2071 = vmatmul.f32.gmra.mxu0 %v329
    %v2072 = vpop.f32.mrf.mxu0
    %v2073 = vadd.f32 0.0, %v2072
    %2074 = vmatmul.f32.gmra.mxu0 %v332
    %v2075 = vpop.f32.mrf.mxu0
    %v2076 = vadd.f32 0.0, %v2075
    %2077 = vmatmul.f32.gmra.mxu0 %v335
    %v2078 = vpop.f32.mrf.mxu0
    %v2079 = vadd.f32 0.0, %v2078
    %2080 = vmatmul.f32.gmra.mxu0 %v338
    %v2081 = vpop.f32.mrf.mxu0
    %v2082 = vadd.f32 0.0, %v2081
    %2083 = vmatmul.f32.gmra.mxu0 %v341
    %v2084 = vpop.f32.mrf.mxu0
    %v2085 = vadd.f32 0.0, %v2084
    %2086 = vmatmul.f32.gmra.mxu0 %v344
    %v2087 = vpop.f32.mrf.mxu0
    %v2088 = vadd.f32 0.0, %v2087
    %2089 = vmatmul.f32.gmra.mxu0 %v347
    %v2090 = vpop.f32.mrf.mxu0
    %v2091 = vadd.f32 0.0, %v2090
    %2092 = vmatmul.f32.gmra.mxu0 %v350
    %v2093 = vpop.f32.mrf.mxu0
    %v2094 = vadd.f32 0.0, %v2093
    %2095 = vmatmul.f32.gmra.mxu0 %v353
    %v2096 = vpop.f32.mrf.mxu0
    %v2097 = vadd.f32 0.0, %v2096
    %2098 = vmatmul.f32.gmra.mxu0 %v356
    %v2099 = vpop.f32.mrf.mxu0
    %v2100 = vadd.f32 0.0, %v2099
    %2101 = vmatmul.f32.gmra.mxu0 %v359
    %v2102 = vpop.f32.mrf.mxu0
    %v2103 = vadd.f32 0.0, %v2102
    %2104 = vmatmul.f32.gmra.mxu0 %v362
    %v2105 = vpop.f32.mrf.mxu0
    %v2106 = vadd.f32 0.0, %v2105
    %2107 = vmatmul.f32.gmra.mxu0 %v365
    %v2108 = vpop.f32.mrf.mxu0
    %v2109 = vadd.f32 0.0, %v2108
    %2110 = vmatmul.f32.gmra.mxu0 %v368
    %v2111 = vpop.f32.mrf.mxu0
    %v2112 = vadd.f32 0.0, %v2111
    %2113 = vmatmul.f32.gmra.mxu0 %v371
    %v2114 = vpop.f32.mrf.mxu0
    %v2115 = vadd.f32 0.0, %v2114
    %2116 = vmatmul.f32.gmra.mxu0 %v374
    %v2117 = vpop.f32.mrf.mxu0
    %v2118 = vadd.f32 0.0, %v2117
    %2119 = vmatmul.f32.gmra.mxu0 %v377
    %v2120 = vpop.f32.mrf.mxu0
    %v2121 = vadd.f32 0.0, %v2120
    %2122 = vmatmul.f32.gmra.mxu0 %v380
    %v2123 = vpop.f32.mrf.mxu0
    %v2124 = vadd.f32 0.0, %v2123
    %2125 = vmatmul.f32.gmra.mxu0 %v383
    %v2126 = vpop.f32.mrf.mxu0
    %v2127 = vadd.f32 0.0, %v2126
    %2128 = vmatmul.f32.gmra.mxu0 %v386
    %v2129 = vpop.f32.mrf.mxu0
    %v2130 = vadd.f32 0.0, %v2129
    %2131 = vdwg.mxu0
    %2132 = vmatpush.msra.mxu0 0.0
    %2133 = vmatpush.msra.mxu0 0.0
    %2134 = vmatpush.msra.mxu0 0.0
    %2135 = vmatpush.msra.mxu0 0.0
    %2136 = vmatpush.msra.mxu0 0.0
    %2137 = vmatpush.msra.mxu0 0.0
    %2138 = vmatpush.msra.mxu0 0.0
    %2139 = vmatpush.msra.mxu0 0.0
    %2140 = vmatpush.msra.mxu0 0.0
    %2141 = vmatpush.msra.mxu0 0.0
    %2142 = vmatpush.msra.mxu0 0.0
    %2143 = vmatpush.msra.mxu0 0.0
    %2144 = vmatpush.msra.mxu0 0.0
    %2145 = vmatpush.msra.mxu0 0.0
    %2146 = vmatpush.msra.mxu0 %v435
    %2147 = vmatpush.msra.mxu0 %v274
    %2148 = vmatmul.f32.gmra.mxu0 %v293
    %v2149 = vpop.f32.mrf.mxu0
    %v2150 = vadd.f32 0.0, %v2149
    %2151 = vmatmul.f32.gmra.mxu0 %v296
    %v2152 = vpop.f32.mrf.mxu0
    %v2153 = vadd.f32 0.0, %v2152
    %2154 = vmatmul.f32.gmra.mxu0 %v299
    %v2155 = vpop.f32.mrf.mxu0
    %v2156 = vadd.f32 0.0, %v2155
    %2157 = vmatmul.f32.gmra.mxu0 %v302
    %v2158 = vpop.f32.mrf.mxu0
    %v2159 = vadd.f32 0.0, %v2158
    %2160 = vmatmul.f32.gmra.mxu0 %v305
    %v2161 = vpop.f32.mrf.mxu0
    %v2162 = vadd.f32 0.0, %v2161
    %2163 = vmatmul.f32.gmra.mxu0 %v308
    %v2164 = vpop.f32.mrf.mxu0
    %v2165 = vadd.f32 0.0, %v2164
    %2166 = vmatmul.f32.gmra.mxu0 %v311
    %v2167 = vpop.f32.mrf.mxu0
    %v2168 = vadd.f32 0.0, %v2167
    %2169 = vmatmul.f32.gmra.mxu0 %v314
    %v2170 = vpop.f32.mrf.mxu0
    %v2171 = vadd.f32 0.0, %v2170
    %2172 = vmatmul.f32.gmra.mxu0 %v317
    %v2173 = vpop.f32.mrf.mxu0
    %v2174 = vadd.f32 0.0, %v2173
    %2175 = vmatmul.f32.gmra.mxu0 %v320
    %v2176 = vpop.f32.mrf.mxu0
    %v2177 = vadd.f32 0.0, %v2176
    %2178 = vmatmul.f32.gmra.mxu0 %v323
    %v2179 = vpop.f32.mrf.mxu0
    %v2180 = vadd.f32 0.0, %v2179
    %2181 = vmatmul.f32.gmra.mxu0 %v326
    %v2182 = vpop.f32.mrf.mxu0
    %v2183 = vadd.f32 0.0, %v2182
    %2184 = vmatmul.f32.gmra.mxu0 %v329
    %v2185 = vpop.f32.mrf.mxu0
    %v2186 = vadd.f32 0.0, %v2185
    %2187 = vmatmul.f32.gmra.mxu0 %v332
    %v2188 = vpop.f32.mrf.mxu0
    %v2189 = vadd.f32 0.0, %v2188
    %2190 = vmatmul.f32.gmra.mxu0 %v335
    %v2191 = vpop.f32.mrf.mxu0
    %v2192 = vadd.f32 0.0, %v2191
    %2193 = vmatmul.f32.gmra.mxu0 %v338
    %v2194 = vpop.f32.mrf.mxu0
    %v2195 = vadd.f32 0.0, %v2194
    %2196 = vmatmul.f32.gmra.mxu0 %v341
    %v2197 = vpop.f32.mrf.mxu0
    %v2198 = vadd.f32 0.0, %v2197
    %2199 = vmatmul.f32.gmra.mxu0 %v344
    %v2200 = vpop.f32.mrf.mxu0
    %v2201 = vadd.f32 0.0, %v2200
    %2202 = vmatmul.f32.gmra.mxu0 %v347
    %v2203 = vpop.f32.mrf.mxu0
    %v2204 = vadd.f32 0.0, %v2203
    %2205 = vmatmul.f32.gmra.mxu0 %v350
    %v2206 = vpop.f32.mrf.mxu0
    %v2207 = vadd.f32 0.0, %v2206
    %2208 = vmatmul.f32.gmra.mxu0 %v353
    %v2209 = vpop.f32.mrf.mxu0
    %v2210 = vadd.f32 0.0, %v2209
    %2211 = vmatmul.f32.gmra.mxu0 %v356
    %v2212 = vpop.f32.mrf.mxu0
    %v2213 = vadd.f32 0.0, %v2212
    %2214 = vmatmul.f32.gmra.mxu0 %v359
    %v2215 = vpop.f32.mrf.mxu0
    %v2216 = vadd.f32 0.0, %v2215
    %2217 = vmatmul.f32.gmra.mxu0 %v362
    %v2218 = vpop.f32.mrf.mxu0
    %v2219 = vadd.f32 0.0, %v2218
    %2220 = vmatmul.f32.gmra.mxu0 %v365
    %v2221 = vpop.f32.mrf.mxu0
    %v2222 = vadd.f32 0.0, %v2221
    %2223 = vmatmul.f32.gmra.mxu0 %v368
    %v2224 = vpop.f32.mrf.mxu0
    %v2225 = vadd.f32 0.0, %v2224
    %2226 = vmatmul.f32.gmra.mxu0 %v371
    %v2227 = vpop.f32.mrf.mxu0
    %v2228 = vadd.f32 0.0, %v2227
    %2229 = vmatmul.f32.gmra.mxu0 %v374
    %v2230 = vpop.f32.mrf.mxu0
    %v2231 = vadd.f32 0.0, %v2230
    %2232 = vmatmul.f32.gmra.mxu0 %v377
    %v2233 = vpop.f32.mrf.mxu0
    %v2234 = vadd.f32 0.0, %v2233
    %2235 = vmatmul.f32.gmra.mxu0 %v380
    %v2236 = vpop.f32.mrf.mxu0
    %v2237 = vadd.f32 0.0, %v2236
    %2238 = vmatmul.f32.gmra.mxu0 %v383
    %v2239 = vpop.f32.mrf.mxu0
    %v2240 = vadd.f32 0.0, %v2239
    %2241 = vmatmul.f32.gmra.mxu0 %v386
    %v2242 = vpop.f32.mrf.mxu0
    %v2243 = vadd.f32 0.0, %v2242
    %2244 = vdwg.mxu0
    %v2245 = vtanh.pop %v455
    %v2246 = vtanh.pop %v568
    %v2247 = vtanh.pop %v681
    %v2248 = vtanh.pop %v794
    %v2249 = vtanh.pop %v907
    %v2250 = vtanh.pop %v1020
    %v2251 = vtanh.pop %v1133
    %v2252 = vtanh.pop %v1246
    %v2253 = vtanh.pop %v1359
    %v2254 = vtanh.pop %v1472
    %v2255 = vtanh.pop %v1585
    %v2256 = vtanh.pop %v1698
    %v2257 = vtanh.pop %v1811
    %v2258 = vtanh.pop %v1924
    %v2259 = vtanh.pop %v2037
    %v2260 = vtanh.pop %v2150
    %v2261 = vtanh.pop %v458
    %v2262 = vtanh.pop %v571
    %v2263 = vtanh.pop %v684
    %v2264 = vtanh.pop %v797
    %v2265 = vtanh.pop %v910
    %v2266 = vtanh.pop %v1023
    %v2267 = vtanh.pop %v1136
    %v2268 = vtanh.pop %v1249
    %v2269 = vtanh.pop %v1362
    %v2270 = vtanh.pop %v1475
    %v2271 = vtanh.pop %v1588
    %v2272 = vtanh.pop %v1701
    %v2273 = vtanh.pop %v1814
    %v2274 = vtanh.pop %v1927
    %v2275 = vtanh.pop %v2040
    %v2276 = vtanh.pop %v2153
    %v2277 = vtanh.pop %v461
    %v2278 = vtanh.pop %v574
    %v2279 = vtanh.pop %v687
    %v2280 = vtanh.pop %v800
    %v2281 = vtanh.pop %v913
    %v2282 = vtanh.pop %v1026
    %v2283 = vtanh.pop %v1139
    %v2284 = vtanh.pop %v1252
    %v2285 = vtanh.pop %v1365
    %v2286 = vtanh.pop %v1478
    %v2287 = vtanh.pop %v1591
    %v2288 = vtanh.pop %v1704
    %v2289 = vtanh.pop %v1817
    %v2290 = vtanh.pop %v1930
    %v2291 = vtanh.pop %v2043
    %v2292 = vtanh.pop %v2156
    %v2293 = vtanh.pop %v464
    %v2294 = vtanh.pop %v577
    %v2295 = vtanh.pop %v690
    %v2296 = vtanh.pop %v803
    %v2297 = vtanh.pop %v916
    %v2298 = vtanh.pop %v1029
    %v2299 = vtanh.pop %v1142
    %v2300 = vtanh.pop %v1255
    %v2301 = vtanh.pop %v1368
    %v2302 = vtanh.pop %v1481
    %v2303 = vtanh.pop %v1594
    %v2304 = vtanh.pop %v1707
    %v2305 = vtanh.pop %v1820
    %v2306 = vtanh.pop %v1933
    %v2307 = vtanh.pop %v2046
    %v2308 = vtanh.pop %v2159
    %v2309 = vtanh.pop %v467
    %v2310 = vtanh.pop %v580
    %v2311 = vtanh.pop %v693
    %v2312 = vtanh.pop %v806
    %v2313 = vtanh.pop %v919
    %v2314 = vtanh.pop %v1032
    %v2315 = vtanh.pop %v1145
    %v2316 = vtanh.pop %v1258
    %v2317 = vtanh.pop %v1371
    %v2318 = vtanh.pop %v1484
    %v2319 = vtanh.pop %v1597
    %v2320 = vtanh.pop %v1710
    %v2321 = vtanh.pop %v1823
    %v2322 = vtanh.pop %v1936
    %v2323 = vtanh.pop %v2049
    %v2324 = vtanh.pop %v2162
    %v2325 = vtanh.pop %v470
    %v2326 = vtanh.pop %v583
    %v2327 = vtanh.pop %v696
    %v2328 = vtanh.pop %v809
    %v2329 = vtanh.pop %v922
    %v2330 = vtanh.pop %v1035
    %v2331 = vtanh.pop %v1148
    %v2332 = vtanh.pop %v1261
    %v2333 = vtanh.pop %v1374
    %v2334 = vtanh.pop %v1487
    %v2335 = vtanh.pop %v1600
    %v2336 = vtanh.pop %v1713
    %v2337 = vtanh.pop %v1826
    %v2338 = vtanh.pop %v1939
    %v2339 = vtanh.pop %v2052
    %v2340 = vtanh.pop %v2165
    %v2341 = vtanh.pop %v473
    %v2342 = vtanh.pop %v586
    %v2343 = vtanh.pop %v699
    %v2344 = vtanh.pop %v812
    %v2345 = vtanh.pop %v925
    %v2346 = vtanh.pop %v1038
    %v2347 = vtanh.pop %v1151
    %v2348 = vtanh.pop %v1264
    %v2349 = vtanh.pop %v1377
    %v2350 = vtanh.pop %v1490
    %v2351 = vtanh.pop %v1603
    %v2352 = vtanh.pop %v1716
    %v2353 = vtanh.pop %v1829
    %v2354 = vtanh.pop %v1942
    %v2355 = vtanh.pop %v2055
    %v2356 = vtanh.pop %v2168
    %v2357 = vtanh.pop %v476
    %v2358 = vtanh.pop %v589
    %v2359 = vtanh.pop %v702
    %v2360 = vtanh.pop %v815
    %v2361 = vtanh.pop %v928
    %v2362 = vtanh.pop %v1041
    %v2363 = vtanh.pop %v1154
    %v2364 = vtanh.pop %v1267
    %v2365 = vtanh.pop %v1380
    %v2366 = vtanh.pop %v1493
    %v2367 = vtanh.pop %v1606
    %v2368 = vtanh.pop %v1719
    %v2369 = vtanh.pop %v1832
    %v2370 = vtanh.pop %v1945
    %v2371 = vtanh.pop %v2058
    %v2372 = vtanh.pop %v2171
    %v2373 = vtanh.pop %v479
    %v2374 = vtanh.pop %v592
    %v2375 = vtanh.pop %v705
    %v2376 = vtanh.pop %v818
    %v2377 = vtanh.pop %v931
    %v2378 = vtanh.pop %v1044
    %v2379 = vtanh.pop %v1157
    %v2380 = vtanh.pop %v1270
    %v2381 = vtanh.pop %v1383
    %v2382 = vtanh.pop %v1496
    %v2383 = vtanh.pop %v1609
    %v2384 = vtanh.pop %v1722
    %v2385 = vtanh.pop %v1835
    %v2386 = vtanh.pop %v1948
    %v2387 = vtanh.pop %v2061
    %v2388 = vtanh.pop %v2174
    %v2389 = vtanh.pop %v482
    %v2390 = vtanh.pop %v595
    %v2391 = vtanh.pop %v708
    %v2392 = vtanh.pop %v821
    %v2393 = vtanh.pop %v934
    %v2394 = vtanh.pop %v1047
    %v2395 = vtanh.pop %v1160
    %v2396 = vtanh.pop %v1273
    %v2397 = vtanh.pop %v1386
    %v2398 = vtanh.pop %v1499
    %v2399 = vtanh.pop %v1612
    %v2400 = vtanh.pop %v1725
    %v2401 = vtanh.pop %v1838
    %v2402 = vtanh.pop %v1951
    %v2403 = vtanh.pop %v2064
    %v2404 = vtanh.pop %v2177
    %v2405 = vtanh.pop %v485
    %v2406 = vtanh.pop %v598
    %v2407 = vtanh.pop %v711
    %v2408 = vtanh.pop %v824
    %v2409 = vtanh.pop %v937
    %v2410 = vtanh.pop %v1050
    %v2411 = vtanh.pop %v1163
    %v2412 = vtanh.pop %v1276
    %v2413 = vtanh.pop %v1389
    %v2414 = vtanh.pop %v1502
    %v2415 = vtanh.pop %v1615
    %v2416 = vtanh.pop %v1728
    %v2417 = vtanh.pop %v1841
    %v2418 = vtanh.pop %v1954
    %v2419 = vtanh.pop %v2067
    %v2420 = vtanh.pop %v2180
    %v2421 = vtanh.pop %v488
    %v2422 = vtanh.pop %v601
    %v2423 = vtanh.pop %v714
    %v2424 = vtanh.pop %v827
    %v2425 = vtanh.pop %v940
    %v2426 = vtanh.pop %v1053
    %v2427 = vtanh.pop %v1166
    %v2428 = vtanh.pop %v1279
    %v2429 = vtanh.pop %v1392
    %v2430 = vtanh.pop %v1505
    %v2431 = vtanh.pop %v1618
    %v2432 = vtanh.pop %v1731
    %v2433 = vtanh.pop %v1844
    %v2434 = vtanh.pop %v1957
    %v2435 = vtanh.pop %v2070
    %v2436 = vtanh.pop %v2183
    %v2437 = vtanh.pop %v491
    %v2438 = vtanh.pop %v604
    %v2439 = vtanh.pop %v717
    %v2440 = vtanh.pop %v830
    %v2441 = vtanh.pop %v943
    %v2442 = vtanh.pop %v1056
    %v2443 = vtanh.pop %v1169
    %v2444 = vtanh.pop %v1282
    %v2445 = vtanh.pop %v1395
    %v2446 = vtanh.pop %v1508
    %v2447 = vtanh.pop %v1621
    %v2448 = vtanh.pop %v1734
    %v2449 = vtanh.pop %v1847
    %v2450 = vtanh.pop %v1960
    %v2451 = vtanh.pop %v2073
    %v2452 = vtanh.pop %v2186
    %v2453 = vtanh.pop %v494
    %v2454 = vtanh.pop %v607
    %v2455 = vtanh.pop %v720
    %v2456 = vtanh.pop %v833
    %v2457 = vtanh.pop %v946
    %v2458 = vtanh.pop %v1059
    %v2459 = vtanh.pop %v1172
    %v2460 = vtanh.pop %v1285
    %v2461 = vtanh.pop %v1398
    %v2462 = vtanh.pop %v1511
    %v2463 = vtanh.pop %v1624
    %v2464 = vtanh.pop %v1737
    %v2465 = vtanh.pop %v1850
    %v2466 = vtanh.pop %v1963
    %v2467 = vtanh.pop %v2076
    %v2468 = vtanh.pop %v2189
    %v2469 = vtanh.pop %v497
    %v2470 = vtanh.pop %v610
    %v2471 = vtanh.pop %v723
    %v2472 = vtanh.pop %v836
    %v2473 = vtanh.pop %v949
    %v2474 = vtanh.pop %v1062
    %v2475 = vtanh.pop %v1175
    %v2476 = vtanh.pop %v1288
    %v2477 = vtanh.pop %v1401
    %v2478 = vtanh.pop %v1514
    %v2479 = vtanh.pop %v1627
    %v2480 = vtanh.pop %v1740
    %v2481 = vtanh.pop %v1853
    %v2482 = vtanh.pop %v1966
    %v2483 = vtanh.pop %v2079
    %v2484 = vtanh.pop %v2192
    %v2485 = vtanh.pop %v500
    %v2486 = vtanh.pop %v613
    %v2487 = vtanh.pop %v726
    %v2488 = vtanh.pop %v839
    %v2489 = vtanh.pop %v952
    %v2490 = vtanh.pop %v1065
    %v2491 = vtanh.pop %v1178
    %v2492 = vtanh.pop %v1291
    %v2493 = vtanh.pop %v1404
    %v2494 = vtanh.pop %v1517
    %v2495 = vtanh.pop %v1630
    %v2496 = vtanh.pop %v1743
    %v2497 = vtanh.pop %v1856
    %v2498 = vtanh.pop %v1969
    %v2499 = vtanh.pop %v2082
    %v2500 = vtanh.pop %v2195
    %v2501 = vtanh.pop %v503
    %v2502 = vtanh.pop %v616
    %v2503 = vtanh.pop %v729
    %v2504 = vtanh.pop %v842
    %v2505 = vtanh.pop %v955
    %v2506 = vtanh.pop %v1068
    %v2507 = vtanh.pop %v1181
    %v2508 = vtanh.pop %v1294
    %v2509 = vtanh.pop %v1407
    %v2510 = vtanh.pop %v1520
    %v2511 = vtanh.pop %v1633
    %v2512 = vtanh.pop %v1746
    %v2513 = vtanh.pop %v1859
    %v2514 = vtanh.pop %v1972
    %v2515 = vtanh.pop %v2085
    %v2516 = vtanh.pop %v2198
    %v2517 = vtanh.pop %v506
    %v2518 = vtanh.pop %v619
    %v2519 = vtanh.pop %v732
    %v2520 = vtanh.pop %v845
    %v2521 = vtanh.pop %v958
    %v2522 = vtanh.pop %v1071
    %v2523 = vtanh.pop %v1184
    %v2524 = vtanh.pop %v1297
    %v2525 = vtanh.pop %v1410
    %v2526 = vtanh.pop %v1523
    %v2527 = vtanh.pop %v1636
    %v2528 = vtanh.pop %v1749
    %v2529 = vtanh.pop %v1862
    %v2530 = vtanh.pop %v1975
    %v2531 = vtanh.pop %v2088
    %v2532 = vtanh.pop %v2201
    %v2533 = vtanh.pop %v509
    %v2534 = vtanh.pop %v622
    %v2535 = vtanh.pop %v735
    %v2536 = vtanh.pop %v848
    %v2537 = vtanh.pop %v961
    %v2538 = vtanh.pop %v1074
    %v2539 = vtanh.pop %v1187
    %v2540 = vtanh.pop %v1300
    %v2541 = vtanh.pop %v1413
    %v2542 = vtanh.pop %v1526
    %v2543 = vtanh.pop %v1639
    %v2544 = vtanh.pop %v1752
    %v2545 = vtanh.pop %v1865
    %v2546 = vtanh.pop %v1978
    %v2547 = vtanh.pop %v2091
    %v2548 = vtanh.pop %v2204
    %v2549 = vtanh.pop %v512
    %v2550 = vtanh.pop %v625
    %v2551 = vtanh.pop %v738
    %v2552 = vtanh.pop %v851
    %v2553 = vtanh.pop %v964
    %v2554 = vtanh.pop %v1077
    %v2555 = vtanh.pop %v1190
    %v2556 = vtanh.pop %v1303
    %v2557 = vtanh.pop %v1416
    %v2558 = vtanh.pop %v1529
    %v2559 = vtanh.pop %v1642
    %v2560 = vtanh.pop %v1755
    %v2561 = vtanh.pop %v1868
    %v2562 = vtanh.pop %v1981
    %v2563 = vtanh.pop %v2094
    %v2564 = vtanh.pop %v2207
    %v2565 = vtanh.pop %v515
    %v2566 = vtanh.pop %v628
    %v2567 = vtanh.pop %v741
    %v2568 = vtanh.pop %v854
    %v2569 = vtanh.pop %v967
    %v2570 = vtanh.pop %v1080
    %v2571 = vtanh.pop %v1193
    %v2572 = vtanh.pop %v1306
    %v2573 = vtanh.pop %v1419
    %v2574 = vtanh.pop %v1532
    %v2575 = vtanh.pop %v1645
    %v2576 = vtanh.pop %v1758
    %v2577 = vtanh.pop %v1871
    %v2578 = vtanh.pop %v1984
    %v2579 = vtanh.pop %v2097
    %v2580 = vtanh.pop %v2210
    %v2581 = vtanh.pop %v518
    %v2582 = vtanh.pop %v631
    %v2583 = vtanh.pop %v744
    %v2584 = vtanh.pop %v857
    %v2585 = vtanh.pop %v970
    %v2586 = vtanh.pop %v1083
    %v2587 = vtanh.pop %v1196
    %v2588 = vtanh.pop %v1309
    %v2589 = vtanh.pop %v1422
    %v2590 = vtanh.pop %v1535
    %v2591 = vtanh.pop %v1648
    %v2592 = vtanh.pop %v1761
    %v2593 = vtanh.pop %v1874
    %v2594 = vtanh.pop %v1987
    %v2595 = vtanh.pop %v2100
    %v2596 = vtanh.pop %v2213
    %v2597 = vtanh.pop %v521
    %v2598 = vtanh.pop %v634
    %v2599 = vtanh.pop %v747
    %v2600 = vtanh.pop %v860
    %v2601 = vtanh.pop %v973
    %v2602 = vtanh.pop %v1086
    %v2603 = vtanh.pop %v1199
    %v2604 = vtanh.pop %v1312
    %v2605 = vtanh.pop %v1425
    %v2606 = vtanh.pop %v1538
    %v2607 = vtanh.pop %v1651
    %v2608 = vtanh.pop %v1764
    %v2609 = vtanh.pop %v1877
    %v2610 = vtanh.pop %v1990
    %v2611 = vtanh.pop %v2103
    %v2612 = vtanh.pop %v2216
    %v2613 = vtanh.pop %v524
    %v2614 = vtanh.pop %v637
    %v2615 = vtanh.pop %v750
    %v2616 = vtanh.pop %v863
    %v2617 = vtanh.pop %v976
    %v2618 = vtanh.pop %v1089
    %v2619 = vtanh.pop %v1202
    %v2620 = vtanh.pop %v1315
    %v2621 = vtanh.pop %v1428
    %v2622 = vtanh.pop %v1541
    %v2623 = vtanh.pop %v1654
    %v2624 = vtanh.pop %v1767
    %v2625 = vtanh.pop %v1880
    %v2626 = vtanh.pop %v1993
    %v2627 = vtanh.pop %v2106
    %v2628 = vtanh.pop %v2219
    %v2629 = vtanh.pop %v527
    %v2630 = vtanh.pop %v640
    %v2631 = vtanh.pop %v753
    %v2632 = vtanh.pop %v866
    %v2633 = vtanh.pop %v979
    %v2634 = vtanh.pop %v1092
    %v2635 = vtanh.pop %v1205
    %v2636 = vtanh.pop %v1318
    %v2637 = vtanh.pop %v1431
    %v2638 = vtanh.pop %v1544
    %v2639 = vtanh.pop %v1657
    %v2640 = vtanh.pop %v1770
    %v2641 = vtanh.pop %v1883
    %v2642 = vtanh.pop %v1996
    %v2643 = vtanh.pop %v2109
    %v2644 = vtanh.pop %v2222
    %v2645 = vtanh.pop %v530
    %v2646 = vtanh.pop %v643
    %v2647 = vtanh.pop %v756
    %v2648 = vtanh.pop %v869
    %v2649 = vtanh.pop %v982
    %v2650 = vtanh.pop %v1095
    %v2651 = vtanh.pop %v1208
    %v2652 = vtanh.pop %v1321
    %v2653 = vtanh.pop %v1434
    %v2654 = vtanh.pop %v1547
    %v2655 = vtanh.pop %v1660
    %v2656 = vtanh.pop %v1773
    %v2657 = vtanh.pop %v1886
    %v2658 = vtanh.pop %v1999
    %v2659 = vtanh.pop %v2112
    %v2660 = vtanh.pop %v2225
    %v2661 = vtanh.pop %v533
    %v2662 = vtanh.pop %v646
    %v2663 = vtanh.pop %v759
    %v2664 = vtanh.pop %v872
    %v2665 = vtanh.pop %v985
    %v2666 = vtanh.pop %v1098
    %v2667 = vtanh.pop %v1211
    %v2668 = vtanh.pop %v1324
    %v2669 = vtanh.pop %v1437
    %v2670 = vtanh.pop %v1550
    %v2671 = vtanh.pop %v1663
    %v2672 = vtanh.pop %v1776
    %v2673 = vtanh.pop %v1889
    %v2674 = vtanh.pop %v2002
    %v2675 = vtanh.pop %v2115
    %v2676 = vtanh.pop %v2228
    %v2677 = vtanh.pop %v536
    %v2678 = vtanh.pop %v649
    %v2679 = vtanh.pop %v762
    %v2680 = vtanh.pop %v875
    %v2681 = vtanh.pop %v988
    %v2682 = vtanh.pop %v1101
    %v2683 = vtanh.pop %v1214
    %v2684 = vtanh.pop %v1327
    %v2685 = vtanh.pop %v1440
    %v2686 = vtanh.pop %v1553
    %v2687 = vtanh.pop %v1666
    %v2688 = vtanh.pop %v1779
    %v2689 = vtanh.pop %v1892
    %v2690 = vtanh.pop %v2005
    %v2691 = vtanh.pop %v2118
    %v2692 = vtanh.pop %v2231
    %v2693 = vtanh.pop %v539
    %v2694 = vtanh.pop %v652
    %v2695 = vtanh.pop %v765
    %v2696 = vtanh.pop %v878
    %v2697 = vtanh.pop %v991
    %v2698 = vtanh.pop %v1104
    %v2699 = vtanh.pop %v1217
    %v2700 = vtanh.pop %v1330
    %v2701 = vtanh.pop %v1443
    %v2702 = vtanh.pop %v1556
    %v2703 = vtanh.pop %v1669
    %v2704 = vtanh.pop %v1782
    %v2705 = vtanh.pop %v1895
    %v2706 = vtanh.pop %v2008
    %v2707 = vtanh.pop %v2121
    %v2708 = vtanh.pop %v2234
    %v2709 = vtanh.pop %v542
    %v2710 = vtanh.pop %v655
    %v2711 = vtanh.pop %v768
    %v2712 = vtanh.pop %v881
    %v2713 = vtanh.pop %v994
    %v2714 = vtanh.pop %v1107
    %v2715 = vtanh.pop %v1220
    %v2716 = vtanh.pop %v1333
    %v2717 = vtanh.pop %v1446
    %v2718 = vtanh.pop %v1559
    %v2719 = vtanh.pop %v1672
    %v2720 = vtanh.pop %v1785
    %v2721 = vtanh.pop %v1898
    %v2722 = vtanh.pop %v2011
    %v2723 = vtanh.pop %v2124
    %v2724 = vtanh.pop %v2237
    %v2725 = vtanh.pop %v545
    %v2726 = vtanh.pop %v658
    %v2727 = vtanh.pop %v771
    %v2728 = vtanh.pop %v884
    %v2729 = vtanh.pop %v997
    %v2730 = vtanh.pop %v1110
    %v2731 = vtanh.pop %v1223
    %v2732 = vtanh.pop %v1336
    %v2733 = vtanh.pop %v1449
    %v2734 = vtanh.pop %v1562
    %v2735 = vtanh.pop %v1675
    %v2736 = vtanh.pop %v1788
    %v2737 = vtanh.pop %v1901
    %v2738 = vtanh.pop %v2014
    %v2739 = vtanh.pop %v2127
    %v2740 = vtanh.pop %v2240
    %v2741 = vtanh.pop %v548
    %v2742 = vtanh.pop %v661
    %v2743 = vtanh.pop %v774
    %v2744 = vtanh.pop %v887
    %v2745 = vtanh.pop %v1000
    %v2746 = vtanh.pop %v1113
    %v2747 = vtanh.pop %v1226
    %v2748 = vtanh.pop %v1339
    %v2749 = vtanh.pop %v1452
    %v2750 = vtanh.pop %v1565
    %v2751 = vtanh.pop %v1678
    %v2752 = vtanh.pop %v1791
    %v2753 = vtanh.pop %v1904
    %v2754 = vtanh.pop %v2017
    %v2755 = vtanh.pop %v2130
    %v2756 = vtanh.pop %v2243
    %vm2757 = vcmask 64512
    %v2759 = vsel %vm2757, %v125, 0
    %v2762 = vsel %vm2757, %v126, 0
    %v2765 = vsel %vm2757, %v127, 0
    %v2768 = vsel %vm2757, %v128, 0
    %v2771 = vsel %vm2757, %v129, 0
    %v2774 = vsel %vm2757, %v130, 0
    %v2777 = vsel %vm2757, %v131, 0
    %v2780 = vsel %vm2757, %v132, 0
    %v2783 = vsel %vm2757, %v133, 0
    %v2786 = vsel %vm2757, %v134, 0
    %v2789 = vsel %vm2757, %v135, 0
    %v2792 = vsel %vm2757, %v136, 0
    %v2795 = vsel %vm2757, %v137, 0
    %v2798 = vsel %vm2757, %v138, 0
    %v2801 = vsel %vm2757, %v139, 0
    %v2804 = vsel %vm2757, %v140, 0
    %2806 = vmatpush.msra.mxu0 0.0
    %2807 = vmatpush.msra.mxu0 0.0
    %2808 = vmatpush.msra.mxu0 0.0
    %2809 = vmatpush.msra.mxu0 0.0
    %2810 = vmatpush.msra.mxu0 0.0
    %2811 = vmatpush.msra.mxu0 0.0
    %2812 = vmatpush.msra.mxu0 0.0
    %2813 = vmatpush.msra.mxu0 0.0
    %2814 = vmatpush.msra.mxu0 0.0
    %2815 = vmatpush.msra.mxu0 0.0
    %2816 = vmatpush.msra.mxu0 0.0
    %2817 = vmatpush.msra.mxu0 0.0
    %2818 = vmatpush.msra.mxu0 0.0
    %2819 = vmatpush.msra.mxu0 0.0
    %2820 = vmatpush.msra.mxu0 0.0
    %2821 = vmatpush.msra.mxu0 %v223
    %2822 = vmatmul.f32.gmra.mxu0 %v2759
    %v2823 = vpop.f32.mrf.mxu0
    %v2824 = vadd.f32 0.0, %v2823
    %2825 = vmatmul.f32.gmra.mxu0 %v2762
    %v2826 = vpop.f32.mrf.mxu0
    %v2827 = vadd.f32 0.0, %v2826
    %2828 = vmatmul.f32.gmra.mxu0 %v2765
    %v2829 = vpop.f32.mrf.mxu0
    %v2830 = vadd.f32 0.0, %v2829
    %2831 = vmatmul.f32.gmra.mxu0 %v2768
    %v2832 = vpop.f32.mrf.mxu0
    %v2833 = vadd.f32 0.0, %v2832
    %2834 = vmatmul.f32.gmra.mxu0 %v2771
    %v2835 = vpop.f32.mrf.mxu0
    %v2836 = vadd.f32 0.0, %v2835
    %2837 = vmatmul.f32.gmra.mxu0 %v2774
    %v2838 = vpop.f32.mrf.mxu0
    %v2839 = vadd.f32 0.0, %v2838
    %2840 = vmatmul.f32.gmra.mxu0 %v2777
    %v2841 = vpop.f32.mrf.mxu0
    %v2842 = vadd.f32 0.0, %v2841
    %2843 = vmatmul.f32.gmra.mxu0 %v2780
    %v2844 = vpop.f32.mrf.mxu0
    %v2845 = vadd.f32 0.0, %v2844
    %2846 = vmatmul.f32.gmra.mxu0 %v2783
    %v2847 = vpop.f32.mrf.mxu0
    %v2848 = vadd.f32 0.0, %v2847
    %2849 = vmatmul.f32.gmra.mxu0 %v2786
    %v2850 = vpop.f32.mrf.mxu0
    %v2851 = vadd.f32 0.0, %v2850
    %2852 = vmatmul.f32.gmra.mxu0 %v2789
    %v2853 = vpop.f32.mrf.mxu0
    %v2854 = vadd.f32 0.0, %v2853
    %2855 = vmatmul.f32.gmra.mxu0 %v2792
    %v2856 = vpop.f32.mrf.mxu0
    %v2857 = vadd.f32 0.0, %v2856
    %2858 = vmatmul.f32.gmra.mxu0 %v2795
    %v2859 = vpop.f32.mrf.mxu0
    %v2860 = vadd.f32 0.0, %v2859
    %2861 = vmatmul.f32.gmra.mxu0 %v2798
    %v2862 = vpop.f32.mrf.mxu0
    %v2863 = vadd.f32 0.0, %v2862
    %2864 = vmatmul.f32.gmra.mxu0 %v2801
    %v2865 = vpop.f32.mrf.mxu0
    %v2866 = vadd.f32 0.0, %v2865
    %2867 = vmatmul.f32.gmra.mxu0 %v2804
    %v2868 = vpop.f32.mrf.mxu0
    %v2869 = vadd.f32 0.0, %v2868
    %2870 = vdwg.mxu0
    %2871 = vmatpush.msra.mxu0 0.0
    %2872 = vmatpush.msra.mxu0 0.0
    %2873 = vmatpush.msra.mxu0 0.0
    %2874 = vmatpush.msra.mxu0 0.0
    %2875 = vmatpush.msra.mxu0 0.0
    %2876 = vmatpush.msra.mxu0 0.0
    %2877 = vmatpush.msra.mxu0 0.0
    %2878 = vmatpush.msra.mxu0 0.0
    %2879 = vmatpush.msra.mxu0 0.0
    %2880 = vmatpush.msra.mxu0 0.0
    %2881 = vmatpush.msra.mxu0 0.0
    %2882 = vmatpush.msra.mxu0 0.0
    %2883 = vmatpush.msra.mxu0 0.0
    %2884 = vmatpush.msra.mxu0 0.0
    %2885 = vmatpush.msra.mxu0 0.0
    %2886 = vmatpush.msra.mxu0 %v224
    %2887 = vmatmul.f32.gmra.mxu0 %v2759
    %v2888 = vpop.f32.mrf.mxu0
    %v2889 = vadd.f32 0.0, %v2888
    %2890 = vmatmul.f32.gmra.mxu0 %v2762
    %v2891 = vpop.f32.mrf.mxu0
    %v2892 = vadd.f32 0.0, %v2891
    %2893 = vmatmul.f32.gmra.mxu0 %v2765
    %v2894 = vpop.f32.mrf.mxu0
    %v2895 = vadd.f32 0.0, %v2894
    %2896 = vmatmul.f32.gmra.mxu0 %v2768
    %v2897 = vpop.f32.mrf.mxu0
    %v2898 = vadd.f32 0.0, %v2897
    %2899 = vmatmul.f32.gmra.mxu0 %v2771
    %v2900 = vpop.f32.mrf.mxu0
    %v2901 = vadd.f32 0.0, %v2900
    %2902 = vmatmul.f32.gmra.mxu0 %v2774
    %v2903 = vpop.f32.mrf.mxu0
    %v2904 = vadd.f32 0.0, %v2903
    %2905 = vmatmul.f32.gmra.mxu0 %v2777
    %v2906 = vpop.f32.mrf.mxu0
    %v2907 = vadd.f32 0.0, %v2906
    %2908 = vmatmul.f32.gmra.mxu0 %v2780
    %v2909 = vpop.f32.mrf.mxu0
    %v2910 = vadd.f32 0.0, %v2909
    %2911 = vmatmul.f32.gmra.mxu0 %v2783
    %v2912 = vpop.f32.mrf.mxu0
    %v2913 = vadd.f32 0.0, %v2912
    %2914 = vmatmul.f32.gmra.mxu0 %v2786
    %v2915 = vpop.f32.mrf.mxu0
    %v2916 = vadd.f32 0.0, %v2915
    %2917 = vmatmul.f32.gmra.mxu0 %v2789
    %v2918 = vpop.f32.mrf.mxu0
    %v2919 = vadd.f32 0.0, %v2918
    %2920 = vmatmul.f32.gmra.mxu0 %v2792
    %v2921 = vpop.f32.mrf.mxu0
    %v2922 = vadd.f32 0.0, %v2921
    %2923 = vmatmul.f32.gmra.mxu0 %v2795
    %v2924 = vpop.f32.mrf.mxu0
    %v2925 = vadd.f32 0.0, %v2924
    %2926 = vmatmul.f32.gmra.mxu0 %v2798
    %v2927 = vpop.f32.mrf.mxu0
    %v2928 = vadd.f32 0.0, %v2927
    %2929 = vmatmul.f32.gmra.mxu0 %v2801
    %v2930 = vpop.f32.mrf.mxu0
    %v2931 = vadd.f32 0.0, %v2930
    %2932 = vmatmul.f32.gmra.mxu0 %v2804
    %v2933 = vpop.f32.mrf.mxu0
    %v2934 = vadd.f32 0.0, %v2933
    %2935 = vdwg.mxu0
    %2936 = vmatpush.msra.mxu0 0.0
    %2937 = vmatpush.msra.mxu0 0.0
    %2938 = vmatpush.msra.mxu0 0.0
    %2939 = vmatpush.msra.mxu0 0.0
    %2940 = vmatpush.msra.mxu0 0.0
    %2941 = vmatpush.msra.mxu0 0.0
    %2942 = vmatpush.msra.mxu0 0.0
    %2943 = vmatpush.msra.mxu0 0.0
    %2944 = vmatpush.msra.mxu0 0.0
    %2945 = vmatpush.msra.mxu0 0.0
    %2946 = vmatpush.msra.mxu0 0.0
    %2947 = vmatpush.msra.mxu0 0.0
    %2948 = vmatpush.msra.mxu0 0.0
    %2949 = vmatpush.msra.mxu0 0.0
    %2950 = vmatpush.msra.mxu0 0.0
    %2951 = vmatpush.msra.mxu0 %v225
    %2952 = vmatmul.f32.gmra.mxu0 %v2759
    %v2953 = vpop.f32.mrf.mxu0
    %v2954 = vadd.f32 0.0, %v2953
    %2955 = vmatmul.f32.gmra.mxu0 %v2762
    %v2956 = vpop.f32.mrf.mxu0
    %v2957 = vadd.f32 0.0, %v2956
    %2958 = vmatmul.f32.gmra.mxu0 %v2765
    %v2959 = vpop.f32.mrf.mxu0
    %v2960 = vadd.f32 0.0, %v2959
    %2961 = vmatmul.f32.gmra.mxu0 %v2768
    %v2962 = vpop.f32.mrf.mxu0
    %v2963 = vadd.f32 0.0, %v2962
    %2964 = vmatmul.f32.gmra.mxu0 %v2771
    %v2965 = vpop.f32.mrf.mxu0
    %v2966 = vadd.f32 0.0, %v2965
    %2967 = vmatmul.f32.gmra.mxu0 %v2774
    %v2968 = vpop.f32.mrf.mxu0
    %v2969 = vadd.f32 0.0, %v2968
    %2970 = vmatmul.f32.gmra.mxu0 %v2777
    %v2971 = vpop.f32.mrf.mxu0
    %v2972 = vadd.f32 0.0, %v2971
    %2973 = vmatmul.f32.gmra.mxu0 %v2780
    %v2974 = vpop.f32.mrf.mxu0
    %v2975 = vadd.f32 0.0, %v2974
    %2976 = vmatmul.f32.gmra.mxu0 %v2783
    %v2977 = vpop.f32.mrf.mxu0
    %v2978 = vadd.f32 0.0, %v2977
    %2979 = vmatmul.f32.gmra.mxu0 %v2786
    %v2980 = vpop.f32.mrf.mxu0
    %v2981 = vadd.f32 0.0, %v2980
    %2982 = vmatmul.f32.gmra.mxu0 %v2789
    %v2983 = vpop.f32.mrf.mxu0
    %v2984 = vadd.f32 0.0, %v2983
    %2985 = vmatmul.f32.gmra.mxu0 %v2792
    %v2986 = vpop.f32.mrf.mxu0
    %v2987 = vadd.f32 0.0, %v2986
    %2988 = vmatmul.f32.gmra.mxu0 %v2795
    %v2989 = vpop.f32.mrf.mxu0
    %v2990 = vadd.f32 0.0, %v2989
    %2991 = vmatmul.f32.gmra.mxu0 %v2798
    %v2992 = vpop.f32.mrf.mxu0
    %v2993 = vadd.f32 0.0, %v2992
    %2994 = vmatmul.f32.gmra.mxu0 %v2801
    %v2995 = vpop.f32.mrf.mxu0
    %v2996 = vadd.f32 0.0, %v2995
    %2997 = vmatmul.f32.gmra.mxu0 %v2804
    %v2998 = vpop.f32.mrf.mxu0
    %v2999 = vadd.f32 0.0, %v2998
    %3000 = vdwg.mxu0
    %3001 = vmatpush.msra.mxu0 0.0
    %3002 = vmatpush.msra.mxu0 0.0
    %3003 = vmatpush.msra.mxu0 0.0
    %3004 = vmatpush.msra.mxu0 0.0
    %3005 = vmatpush.msra.mxu0 0.0
    %3006 = vmatpush.msra.mxu0 0.0
    %3007 = vmatpush.msra.mxu0 0.0
    %3008 = vmatpush.msra.mxu0 0.0
    %3009 = vmatpush.msra.mxu0 0.0
    %3010 = vmatpush.msra.mxu0 0.0
    %3011 = vmatpush.msra.mxu0 0.0
    %3012 = vmatpush.msra.mxu0 0.0
    %3013 = vmatpush.msra.mxu0 0.0
    %3014 = vmatpush.msra.mxu0 0.0
    %3015 = vmatpush.msra.mxu0 0.0
    %3016 = vmatpush.msra.mxu0 %v226
    %3017 = vmatmul.f32.gmra.mxu0 %v2759
    %v3018 = vpop.f32.mrf.mxu0
    %v3019 = vadd.f32 0.0, %v3018
    %3020 = vmatmul.f32.gmra.mxu0 %v2762
    %v3021 = vpop.f32.mrf.mxu0
    %v3022 = vadd.f32 0.0, %v3021
    %3023 = vmatmul.f32.gmra.mxu0 %v2765
    %v3024 = vpop.f32.mrf.mxu0
    %v3025 = vadd.f32 0.0, %v3024
    %3026 = vmatmul.f32.gmra.mxu0 %v2768
    %v3027 = vpop.f32.mrf.mxu0
    %v3028 = vadd.f32 0.0, %v3027
    %3029 = vmatmul.f32.gmra.mxu0 %v2771
    %v3030 = vpop.f32.mrf.mxu0
    %v3031 = vadd.f32 0.0, %v3030
    %3032 = vmatmul.f32.gmra.mxu0 %v2774
    %v3033 = vpop.f32.mrf.mxu0
    %v3034 = vadd.f32 0.0, %v3033
    %3035 = vmatmul.f32.gmra.mxu0 %v2777
    %v3036 = vpop.f32.mrf.mxu0
    %v3037 = vadd.f32 0.0, %v3036
    %3038 = vmatmul.f32.gmra.mxu0 %v2780
    %v3039 = vpop.f32.mrf.mxu0
    %v3040 = vadd.f32 0.0, %v3039
    %3041 = vmatmul.f32.gmra.mxu0 %v2783
    %v3042 = vpop.f32.mrf.mxu0
    %v3043 = vadd.f32 0.0, %v3042
    %3044 = vmatmul.f32.gmra.mxu0 %v2786
    %v3045 = vpop.f32.mrf.mxu0
    %v3046 = vadd.f32 0.0, %v3045
    %3047 = vmatmul.f32.gmra.mxu0 %v2789
    %v3048 = vpop.f32.mrf.mxu0
    %v3049 = vadd.f32 0.0, %v3048
    %3050 = vmatmul.f32.gmra.mxu0 %v2792
    %v3051 = vpop.f32.mrf.mxu0
    %v3052 = vadd.f32 0.0, %v3051
    %3053 = vmatmul.f32.gmra.mxu0 %v2795
    %v3054 = vpop.f32.mrf.mxu0
    %v3055 = vadd.f32 0.0, %v3054
    %3056 = vmatmul.f32.gmra.mxu0 %v2798
    %v3057 = vpop.f32.mrf.mxu0
    %v3058 = vadd.f32 0.0, %v3057
    %3059 = vmatmul.f32.gmra.mxu0 %v2801
    %v3060 = vpop.f32.mrf.mxu0
    %v3061 = vadd.f32 0.0, %v3060
    %3062 = vmatmul.f32.gmra.mxu0 %v2804
    %v3063 = vpop.f32.mrf.mxu0
    %v3064 = vadd.f32 0.0, %v3063
    %3065 = vdwg.mxu0
    %v3066 = vpack.c.bf16 %v2827, %v2824
    %v3067 = vpack.c.bf16 %v2892, %v2889
    %v3068 = vpack.c.bf16 %v2957, %v2954
    %v3069 = vpack.c.bf16 %v3022, %v3019
    %v3070 = vpack.c.bf16 %v2833, %v2830
    %v3071 = vpack.c.bf16 %v2898, %v2895
    %v3072 = vpack.c.bf16 %v2963, %v2960
    %v3073 = vpack.c.bf16 %v3028, %v3025
    %v3074 = vpack.c.bf16 %v2839, %v2836
    %v3075 = vpack.c.bf16 %v2904, %v2901
    %v3076 = vpack.c.bf16 %v2969, %v2966
    %v3077 = vpack.c.bf16 %v3034, %v3031
    %v3078 = vpack.c.bf16 %v2845, %v2842
    %v3079 = vpack.c.bf16 %v2910, %v2907
    %v3080 = vpack.c.bf16 %v2975, %v2972
    %v3081 = vpack.c.bf16 %v3040, %v3037
    %v3082 = vpack.c.bf16 %v2851, %v2848
    %v3083 = vpack.c.bf16 %v2916, %v2913
    %v3084 = vpack.c.bf16 %v2981, %v2978
    %v3085 = vpack.c.bf16 %v3046, %v3043
    %v3086 = vpack.c.bf16 %v2857, %v2854
    %v3087 = vpack.c.bf16 %v2922, %v2919
    %v3088 = vpack.c.bf16 %v2987, %v2984
    %v3089 = vpack.c.bf16 %v3052, %v3049
    %v3090 = vpack.c.bf16 %v2863, %v2860
    %v3091 = vpack.c.bf16 %v2928, %v2925
    %v3092 = vpack.c.bf16 %v2993, %v2990
    %v3093 = vpack.c.bf16 %v3058, %v3055
    %v3094 = vpack.c.bf16 %v2869, %v2866
    %v3095 = vpack.c.bf16 %v2934, %v2931
    %v3096 = vpack.c.bf16 %v2999, %v2996
    %v3097 = vpack.c.bf16 %v3064, %v3061
    %v3130 = vunpack.c.l.b16 %v141
    %v3131 = vunpack.c.l.b16 %v142
    %v3132 = vunpack.c.l.b16 %v143
    %v3133 = vunpack.c.l.b16 %v144
    %v3134 = vunpack.c.l.b16 %v145
    %v3135 = vunpack.c.l.b16 %v146
    %v3136 = vunpack.c.l.b16 %v147
    %v3137 = vunpack.c.l.b16 %v148
    %v3138 = vunpack.c.l.b16 %v149
    %v3139 = vunpack.c.l.b16 %v150
    %v3140 = vunpack.c.l.b16 %v151
    %v3141 = vunpack.c.l.b16 %v152
    %v3142 = vunpack.c.l.b16 %v153
    %v3143 = vunpack.c.l.b16 %v154
    %v3144 = vunpack.c.l.b16 %v155
    %v3145 = vunpack.c.l.b16 %v156
    %v3146 = vunpack.c.l.b16 %v157
    %v3147 = vunpack.c.l.b16 %v158
    %v3148 = vunpack.c.l.b16 %v159
    %v3149 = vunpack.c.l.b16 %v160
    %v3150 = vunpack.c.l.b16 %v161
    %v3151 = vunpack.c.l.b16 %v162
    %v3152 = vunpack.c.l.b16 %v163
    %v3153 = vunpack.c.l.b16 %v164
    %v3154 = vunpack.c.l.b16 %v165
    %v3155 = vunpack.c.l.b16 %v166
    %v3156 = vunpack.c.l.b16 %v167
    %v3157 = vunpack.c.l.b16 %v168
    %v3158 = vunpack.c.l.b16 %v169
    %v3159 = vunpack.c.l.b16 %v170
    %v3160 = vunpack.c.l.b16 %v171
    %v3161 = vunpack.c.l.b16 %v172
    %v3162 = vpack.c.b16 %v3131, %v3130
    %v3163 = vpack.c.b16 %v3133, %v3132
    %v3164 = vpack.c.b16 %v3135, %v3134
    %v3165 = vpack.c.b16 %v3137, %v3136
    %v3166 = vpack.c.b16 %v3139, %v3138
    %v3167 = vpack.c.b16 %v3141, %v3140
    %v3168 = vpack.c.b16 %v3143, %v3142
    %v3169 = vpack.c.b16 %v3145, %v3144
    %v3170 = vpack.c.b16 %v3147, %v3146
    %v3171 = vpack.c.b16 %v3149, %v3148
    %v3172 = vpack.c.b16 %v3151, %v3150
    %v3173 = vpack.c.b16 %v3153, %v3152
    %v3174 = vpack.c.b16 %v3155, %v3154
    %v3175 = vpack.c.b16 %v3157, %v3156
    %v3176 = vpack.c.b16 %v3159, %v3158
    %v3177 = vpack.c.b16 %v3161, %v3160
    %3194 = vmatpush.bf16.msra.mxu0 %v3094
    %3195 = vmatpush.bf16.msra.mxu0 %v3090
    %3196 = vmatpush.bf16.msra.mxu0 %v3086
    %3197 = vmatpush.bf16.msra.mxu0 %v3082
    %3198 = vmatpush.bf16.msra.mxu0 %v3078
    %3199 = vmatpush.bf16.msra.mxu0 %v3074
    %3200 = vmatpush.bf16.msra.mxu0 %v3070
    %3201 = vmatpush.bf16.msra.mxu0 %v3066
    %3202 = vmatmul.bf16.gmra.mxu0 %v3162
    %v3203 = vpop.f32.mrf.mxu0
    %v3204 = vadd.f32 0.0, %v3203
    %v3205 = vpop.f32.mrf.mxu0
    %v3206 = vadd.f32 0.0, %v3205
    %3207 = vmatmul.bf16.gmra.mxu0 %v3163
    %v3208 = vpop.f32.mrf.mxu0
    %v3209 = vadd.f32 0.0, %v3208
    %v3210 = vpop.f32.mrf.mxu0
    %v3211 = vadd.f32 0.0, %v3210
    %3212 = vmatmul.bf16.gmra.mxu0 %v3164
    %v3213 = vpop.f32.mrf.mxu0
    %v3214 = vadd.f32 0.0, %v3213
    %v3215 = vpop.f32.mrf.mxu0
    %v3216 = vadd.f32 0.0, %v3215
    %3217 = vmatmul.bf16.gmra.mxu0 %v3165
    %v3218 = vpop.f32.mrf.mxu0
    %v3219 = vadd.f32 0.0, %v3218
    %v3220 = vpop.f32.mrf.mxu0
    %v3221 = vadd.f32 0.0, %v3220
    %3222 = vmatmul.bf16.gmra.mxu0 %v3166
    %v3223 = vpop.f32.mrf.mxu0
    %v3224 = vadd.f32 0.0, %v3223
    %v3225 = vpop.f32.mrf.mxu0
    %v3226 = vadd.f32 0.0, %v3225
    %3227 = vmatmul.bf16.gmra.mxu0 %v3167
    %v3228 = vpop.f32.mrf.mxu0
    %v3229 = vadd.f32 0.0, %v3228
    %v3230 = vpop.f32.mrf.mxu0
    %v3231 = vadd.f32 0.0, %v3230
    %3232 = vmatmul.bf16.gmra.mxu0 %v3168
    %v3233 = vpop.f32.mrf.mxu0
    %v3234 = vadd.f32 0.0, %v3233
    %v3235 = vpop.f32.mrf.mxu0
    %v3236 = vadd.f32 0.0, %v3235
    %3237 = vmatmul.bf16.gmra.mxu0 %v3169
    %v3238 = vpop.f32.mrf.mxu0
    %v3239 = vadd.f32 0.0, %v3238
    %v3240 = vpop.f32.mrf.mxu0
    %v3241 = vadd.f32 0.0, %v3240
    %3242 = vmatmul.bf16.gmra.mxu0 %v3170
    %v3243 = vpop.f32.mrf.mxu0
    %v3244 = vadd.f32 0.0, %v3243
    %v3245 = vpop.f32.mrf.mxu0
    %v3246 = vadd.f32 0.0, %v3245
    %3247 = vmatmul.bf16.gmra.mxu0 %v3171
    %v3248 = vpop.f32.mrf.mxu0
    %v3249 = vadd.f32 0.0, %v3248
    %v3250 = vpop.f32.mrf.mxu0
    %v3251 = vadd.f32 0.0, %v3250
    %3252 = vmatmul.bf16.gmra.mxu0 %v3172
    %v3253 = vpop.f32.mrf.mxu0
    %v3254 = vadd.f32 0.0, %v3253
    %v3255 = vpop.f32.mrf.mxu0
    %v3256 = vadd.f32 0.0, %v3255
    %3257 = vmatmul.bf16.gmra.mxu0 %v3173
    %v3258 = vpop.f32.mrf.mxu0
    %v3259 = vadd.f32 0.0, %v3258
    %v3260 = vpop.f32.mrf.mxu0
    %v3261 = vadd.f32 0.0, %v3260
    %3262 = vmatmul.bf16.gmra.mxu0 %v3174
    %v3263 = vpop.f32.mrf.mxu0
    %v3264 = vadd.f32 0.0, %v3263
    %v3265 = vpop.f32.mrf.mxu0
    %v3266 = vadd.f32 0.0, %v3265
    %3267 = vmatmul.bf16.gmra.mxu0 %v3175
    %v3268 = vpop.f32.mrf.mxu0
    %v3269 = vadd.f32 0.0, %v3268
    %v3270 = vpop.f32.mrf.mxu0
    %v3271 = vadd.f32 0.0, %v3270
    %3272 = vmatmul.bf16.gmra.mxu0 %v3176
    %v3273 = vpop.f32.mrf.mxu0
    %v3274 = vadd.f32 0.0, %v3273
    %v3275 = vpop.f32.mrf.mxu0
    %v3276 = vadd.f32 0.0, %v3275
    %3277 = vmatmul.bf16.gmra.mxu0 %v3177
    %v3278 = vpop.f32.mrf.mxu0
    %v3279 = vadd.f32 0.0, %v3278
    %v3280 = vpop.f32.mrf.mxu0
    %v3281 = vadd.f32 0.0, %v3280
    %3282 = vdwg.mxu0
    %3283 = vmatpush.bf16.msra.mxu0 %v3095
    %3284 = vmatpush.bf16.msra.mxu0 %v3091
    %3285 = vmatpush.bf16.msra.mxu0 %v3087
    %3286 = vmatpush.bf16.msra.mxu0 %v3083
    %3287 = vmatpush.bf16.msra.mxu0 %v3079
    %3288 = vmatpush.bf16.msra.mxu0 %v3075
    %3289 = vmatpush.bf16.msra.mxu0 %v3071
    %3290 = vmatpush.bf16.msra.mxu0 %v3067
    %3291 = vmatmul.bf16.gmra.mxu0 %v3162
    %v3292 = vpop.f32.mrf.mxu0
    %v3293 = vadd.f32 0.0, %v3292
    %v3294 = vpop.f32.mrf.mxu0
    %v3295 = vadd.f32 0.0, %v3294
    %3296 = vmatmul.bf16.gmra.mxu0 %v3163
    %v3297 = vpop.f32.mrf.mxu0
    %v3298 = vadd.f32 0.0, %v3297
    %v3299 = vpop.f32.mrf.mxu0
    %v3300 = vadd.f32 0.0, %v3299
    %3301 = vmatmul.bf16.gmra.mxu0 %v3164
    %v3302 = vpop.f32.mrf.mxu0
    %v3303 = vadd.f32 0.0, %v3302
    %v3304 = vpop.f32.mrf.mxu0
    %v3305 = vadd.f32 0.0, %v3304
    %3306 = vmatmul.bf16.gmra.mxu0 %v3165
    %v3307 = vpop.f32.mrf.mxu0
    %v3308 = vadd.f32 0.0, %v3307
    %v3309 = vpop.f32.mrf.mxu0
    %v3310 = vadd.f32 0.0, %v3309
    %3311 = vmatmul.bf16.gmra.mxu0 %v3166
    %v3312 = vpop.f32.mrf.mxu0
    %v3313 = vadd.f32 0.0, %v3312
    %v3314 = vpop.f32.mrf.mxu0
    %v3315 = vadd.f32 0.0, %v3314
    %3316 = vmatmul.bf16.gmra.mxu0 %v3167
    %v3317 = vpop.f32.mrf.mxu0
    %v3318 = vadd.f32 0.0, %v3317
    %v3319 = vpop.f32.mrf.mxu0
    %v3320 = vadd.f32 0.0, %v3319
    %3321 = vmatmul.bf16.gmra.mxu0 %v3168
    %v3322 = vpop.f32.mrf.mxu0
    %v3323 = vadd.f32 0.0, %v3322
    %v3324 = vpop.f32.mrf.mxu0
    %v3325 = vadd.f32 0.0, %v3324
    %3326 = vmatmul.bf16.gmra.mxu0 %v3169
    %v3327 = vpop.f32.mrf.mxu0
    %v3328 = vadd.f32 0.0, %v3327
    %v3329 = vpop.f32.mrf.mxu0
    %v3330 = vadd.f32 0.0, %v3329
    %3331 = vmatmul.bf16.gmra.mxu0 %v3170
    %v3332 = vpop.f32.mrf.mxu0
    %v3333 = vadd.f32 0.0, %v3332
    %v3334 = vpop.f32.mrf.mxu0
    %v3335 = vadd.f32 0.0, %v3334
    %3336 = vmatmul.bf16.gmra.mxu0 %v3171
    %v3337 = vpop.f32.mrf.mxu0
    %v3338 = vadd.f32 0.0, %v3337
    %v3339 = vpop.f32.mrf.mxu0
    %v3340 = vadd.f32 0.0, %v3339
    %3341 = vmatmul.bf16.gmra.mxu0 %v3172
    %v3342 = vpop.f32.mrf.mxu0
    %v3343 = vadd.f32 0.0, %v3342
    %v3344 = vpop.f32.mrf.mxu0
    %v3345 = vadd.f32 0.0, %v3344
    %3346 = vmatmul.bf16.gmra.mxu0 %v3173
    %v3347 = vpop.f32.mrf.mxu0
    %v3348 = vadd.f32 0.0, %v3347
    %v3349 = vpop.f32.mrf.mxu0
    %v3350 = vadd.f32 0.0, %v3349
    %3351 = vmatmul.bf16.gmra.mxu0 %v3174
    %v3352 = vpop.f32.mrf.mxu0
    %v3353 = vadd.f32 0.0, %v3352
    %v3354 = vpop.f32.mrf.mxu0
    %v3355 = vadd.f32 0.0, %v3354
    %3356 = vmatmul.bf16.gmra.mxu0 %v3175
    %v3357 = vpop.f32.mrf.mxu0
    %v3358 = vadd.f32 0.0, %v3357
    %v3359 = vpop.f32.mrf.mxu0
    %v3360 = vadd.f32 0.0, %v3359
    %3361 = vmatmul.bf16.gmra.mxu0 %v3176
    %v3362 = vpop.f32.mrf.mxu0
    %v3363 = vadd.f32 0.0, %v3362
    %v3364 = vpop.f32.mrf.mxu0
    %v3365 = vadd.f32 0.0, %v3364
    %3366 = vmatmul.bf16.gmra.mxu0 %v3177
    %v3367 = vpop.f32.mrf.mxu0
    %v3368 = vadd.f32 0.0, %v3367
    %v3369 = vpop.f32.mrf.mxu0
    %v3370 = vadd.f32 0.0, %v3369
    %3371 = vdwg.mxu0
    %3372 = vmatpush.bf16.msra.mxu0 %v3096
    %3373 = vmatpush.bf16.msra.mxu0 %v3092
    %3374 = vmatpush.bf16.msra.mxu0 %v3088
    %3375 = vmatpush.bf16.msra.mxu0 %v3084
    %3376 = vmatpush.bf16.msra.mxu0 %v3080
    %3377 = vmatpush.bf16.msra.mxu0 %v3076
    %3378 = vmatpush.bf16.msra.mxu0 %v3072
    %3379 = vmatpush.bf16.msra.mxu0 %v3068
    %3380 = vmatmul.bf16.gmra.mxu0 %v3162
    %v3381 = vpop.f32.mrf.mxu0
    %v3382 = vadd.f32 0.0, %v3381
    %v3383 = vpop.f32.mrf.mxu0
    %v3384 = vadd.f32 0.0, %v3383
    %3385 = vmatmul.bf16.gmra.mxu0 %v3163
    %v3386 = vpop.f32.mrf.mxu0
    %v3387 = vadd.f32 0.0, %v3386
    %v3388 = vpop.f32.mrf.mxu0
    %v3389 = vadd.f32 0.0, %v3388
    %3390 = vmatmul.bf16.gmra.mxu0 %v3164
    %v3391 = vpop.f32.mrf.mxu0
    %v3392 = vadd.f32 0.0, %v3391
    %v3393 = vpop.f32.mrf.mxu0
    %v3394 = vadd.f32 0.0, %v3393
    %3395 = vmatmul.bf16.gmra.mxu0 %v3165
    %v3396 = vpop.f32.mrf.mxu0
    %v3397 = vadd.f32 0.0, %v3396
    %v3398 = vpop.f32.mrf.mxu0
    %v3399 = vadd.f32 0.0, %v3398
    %3400 = vmatmul.bf16.gmra.mxu0 %v3166
    %v3401 = vpop.f32.mrf.mxu0
    %v3402 = vadd.f32 0.0, %v3401
    %v3403 = vpop.f32.mrf.mxu0
    %v3404 = vadd.f32 0.0, %v3403
    %3405 = vmatmul.bf16.gmra.mxu0 %v3167
    %v3406 = vpop.f32.mrf.mxu0
    %v3407 = vadd.f32 0.0, %v3406
    %v3408 = vpop.f32.mrf.mxu0
    %v3409 = vadd.f32 0.0, %v3408
    %3410 = vmatmul.bf16.gmra.mxu0 %v3168
    %v3411 = vpop.f32.mrf.mxu0
    %v3412 = vadd.f32 0.0, %v3411
    %v3413 = vpop.f32.mrf.mxu0
    %v3414 = vadd.f32 0.0, %v3413
    %3415 = vmatmul.bf16.gmra.mxu0 %v3169
    %v3416 = vpop.f32.mrf.mxu0
    %v3417 = vadd.f32 0.0, %v3416
    %v3418 = vpop.f32.mrf.mxu0
    %v3419 = vadd.f32 0.0, %v3418
    %3420 = vmatmul.bf16.gmra.mxu0 %v3170
    %v3421 = vpop.f32.mrf.mxu0
    %v3422 = vadd.f32 0.0, %v3421
    %v3423 = vpop.f32.mrf.mxu0
    %v3424 = vadd.f32 0.0, %v3423
    %3425 = vmatmul.bf16.gmra.mxu0 %v3171
    %v3426 = vpop.f32.mrf.mxu0
    %v3427 = vadd.f32 0.0, %v3426
    %v3428 = vpop.f32.mrf.mxu0
    %v3429 = vadd.f32 0.0, %v3428
    %3430 = vmatmul.bf16.gmra.mxu0 %v3172
    %v3431 = vpop.f32.mrf.mxu0
    %v3432 = vadd.f32 0.0, %v3431
    %v3433 = vpop.f32.mrf.mxu0
    %v3434 = vadd.f32 0.0, %v3433
    %3435 = vmatmul.bf16.gmra.mxu0 %v3173
    %v3436 = vpop.f32.mrf.mxu0
    %v3437 = vadd.f32 0.0, %v3436
    %v3438 = vpop.f32.mrf.mxu0
    %v3439 = vadd.f32 0.0, %v3438
    %3440 = vmatmul.bf16.gmra.mxu0 %v3174
    %v3441 = vpop.f32.mrf.mxu0
    %v3442 = vadd.f32 0.0, %v3441
    %v3443 = vpop.f32.mrf.mxu0
    %v3444 = vadd.f32 0.0, %v3443
    %3445 = vmatmul.bf16.gmra.mxu0 %v3175
    %v3446 = vpop.f32.mrf.mxu0
    %v3447 = vadd.f32 0.0, %v3446
    %v3448 = vpop.f32.mrf.mxu0
    %v3449 = vadd.f32 0.0, %v3448
    %3450 = vmatmul.bf16.gmra.mxu0 %v3176
    %v3451 = vpop.f32.mrf.mxu0
    %v3452 = vadd.f32 0.0, %v3451
    %v3453 = vpop.f32.mrf.mxu0
    %v3454 = vadd.f32 0.0, %v3453
    %3455 = vmatmul.bf16.gmra.mxu0 %v3177
    %v3456 = vpop.f32.mrf.mxu0
    %v3457 = vadd.f32 0.0, %v3456
    %v3458 = vpop.f32.mrf.mxu0
    %v3459 = vadd.f32 0.0, %v3458
    %3460 = vdwg.mxu0
    %3461 = vmatpush.bf16.msra.mxu0 %v3097
    %3462 = vmatpush.bf16.msra.mxu0 %v3093
    %3463 = vmatpush.bf16.msra.mxu0 %v3089
    %3464 = vmatpush.bf16.msra.mxu0 %v3085
    %3465 = vmatpush.bf16.msra.mxu0 %v3081
    %3466 = vmatpush.bf16.msra.mxu0 %v3077
    %3467 = vmatpush.bf16.msra.mxu0 %v3073
    %3468 = vmatpush.bf16.msra.mxu0 %v3069
    %3469 = vmatmul.bf16.gmra.mxu0 %v3162
    %v3470 = vpop.f32.mrf.mxu0
    %v3471 = vadd.f32 0.0, %v3470
    %v3472 = vpop.f32.mrf.mxu0
    %v3473 = vadd.f32 0.0, %v3472
    %3474 = vmatmul.bf16.gmra.mxu0 %v3163
    %v3475 = vpop.f32.mrf.mxu0
    %v3476 = vadd.f32 0.0, %v3475
    %v3477 = vpop.f32.mrf.mxu0
    %v3478 = vadd.f32 0.0, %v3477
    %3479 = vmatmul.bf16.gmra.mxu0 %v3164
    %v3480 = vpop.f32.mrf.mxu0
    %v3481 = vadd.f32 0.0, %v3480
    %v3482 = vpop.f32.mrf.mxu0
    %v3483 = vadd.f32 0.0, %v3482
    %3484 = vmatmul.bf16.gmra.mxu0 %v3165
    %v3485 = vpop.f32.mrf.mxu0
    %v3486 = vadd.f32 0.0, %v3485
    %v3487 = vpop.f32.mrf.mxu0
    %v3488 = vadd.f32 0.0, %v3487
    %3489 = vmatmul.bf16.gmra.mxu0 %v3166
    %v3490 = vpop.f32.mrf.mxu0
    %v3491 = vadd.f32 0.0, %v3490
    %v3492 = vpop.f32.mrf.mxu0
    %v3493 = vadd.f32 0.0, %v3492
    %3494 = vmatmul.bf16.gmra.mxu0 %v3167
    %v3495 = vpop.f32.mrf.mxu0
    %v3496 = vadd.f32 0.0, %v3495
    %v3497 = vpop.f32.mrf.mxu0
    %v3498 = vadd.f32 0.0, %v3497
    %3499 = vmatmul.bf16.gmra.mxu0 %v3168
    %v3500 = vpop.f32.mrf.mxu0
    %v3501 = vadd.f32 0.0, %v3500
    %v3502 = vpop.f32.mrf.mxu0
    %v3503 = vadd.f32 0.0, %v3502
    %3504 = vmatmul.bf16.gmra.mxu0 %v3169
    %v3505 = vpop.f32.mrf.mxu0
    %v3506 = vadd.f32 0.0, %v3505
    %v3507 = vpop.f32.mrf.mxu0
    %v3508 = vadd.f32 0.0, %v3507
    %3509 = vmatmul.bf16.gmra.mxu0 %v3170
    %v3510 = vpop.f32.mrf.mxu0
    %v3511 = vadd.f32 0.0, %v3510
    %v3512 = vpop.f32.mrf.mxu0
    %v3513 = vadd.f32 0.0, %v3512
    %3514 = vmatmul.bf16.gmra.mxu0 %v3171
    %v3515 = vpop.f32.mrf.mxu0
    %v3516 = vadd.f32 0.0, %v3515
    %v3517 = vpop.f32.mrf.mxu0
    %v3518 = vadd.f32 0.0, %v3517
    %3519 = vmatmul.bf16.gmra.mxu0 %v3172
    %v3520 = vpop.f32.mrf.mxu0
    %v3521 = vadd.f32 0.0, %v3520
    %v3522 = vpop.f32.mrf.mxu0
    %v3523 = vadd.f32 0.0, %v3522
    %3524 = vmatmul.bf16.gmra.mxu0 %v3173
    %v3525 = vpop.f32.mrf.mxu0
    %v3526 = vadd.f32 0.0, %v3525
    %v3527 = vpop.f32.mrf.mxu0
    %v3528 = vadd.f32 0.0, %v3527
    %3529 = vmatmul.bf16.gmra.mxu0 %v3174
    %v3530 = vpop.f32.mrf.mxu0
    %v3531 = vadd.f32 0.0, %v3530
    %v3532 = vpop.f32.mrf.mxu0
    %v3533 = vadd.f32 0.0, %v3532
    %3534 = vmatmul.bf16.gmra.mxu0 %v3175
    %v3535 = vpop.f32.mrf.mxu0
    %v3536 = vadd.f32 0.0, %v3535
    %v3537 = vpop.f32.mrf.mxu0
    %v3538 = vadd.f32 0.0, %v3537
    %3539 = vmatmul.bf16.gmra.mxu0 %v3176
    %v3540 = vpop.f32.mrf.mxu0
    %v3541 = vadd.f32 0.0, %v3540
    %v3542 = vpop.f32.mrf.mxu0
    %v3543 = vadd.f32 0.0, %v3542
    %3544 = vmatmul.bf16.gmra.mxu0 %v3177
    %v3545 = vpop.f32.mrf.mxu0
    %v3546 = vadd.f32 0.0, %v3545
    %v3547 = vpop.f32.mrf.mxu0
    %v3548 = vadd.f32 0.0, %v3547
    %3549 = vdwg.mxu0
    %v3550 = vmul.f32 %v3204, %v2245
    %v3551 = vmul.f32 %v3293, %v2246
    %v3552 = vmul.f32 %v3382, %v2247
    %v3553 = vmul.f32 %v3471, %v2248
    %v3554 = vmul.f32 %v3206, %v2261
    %v3555 = vmul.f32 %v3295, %v2262
    %v3556 = vmul.f32 %v3384, %v2263
    %v3557 = vmul.f32 %v3473, %v2264
    %v3558 = vmul.f32 %v3209, %v2277
    %v3559 = vmul.f32 %v3298, %v2278
    %v3560 = vmul.f32 %v3387, %v2279
    %v3561 = vmul.f32 %v3476, %v2280
    %v3562 = vmul.f32 %v3211, %v2293
    %v3563 = vmul.f32 %v3300, %v2294
    %v3564 = vmul.f32 %v3389, %v2295
    %v3565 = vmul.f32 %v3478, %v2296
    %v3566 = vmul.f32 %v3214, %v2309
    %v3567 = vmul.f32 %v3303, %v2310
    %v3568 = vmul.f32 %v3392, %v2311
    %v3569 = vmul.f32 %v3481, %v2312
    %v3570 = vmul.f32 %v3216, %v2325
    %v3571 = vmul.f32 %v3305, %v2326
    %v3572 = vmul.f32 %v3394, %v2327
    %v3573 = vmul.f32 %v3483, %v2328
    %v3574 = vmul.f32 %v3219, %v2341
    %v3575 = vmul.f32 %v3308, %v2342
    %v3576 = vmul.f32 %v3397, %v2343
    %v3577 = vmul.f32 %v3486, %v2344
    %v3578 = vmul.f32 %v3221, %v2357
    %v3579 = vmul.f32 %v3310, %v2358
    %v3580 = vmul.f32 %v3399, %v2359
    %v3581 = vmul.f32 %v3488, %v2360
    %v3582 = vmul.f32 %v3224, %v2373
    %v3583 = vmul.f32 %v3313, %v2374
    %v3584 = vmul.f32 %v3402, %v2375
    %v3585 = vmul.f32 %v3491, %v2376
    %v3586 = vmul.f32 %v3226, %v2389
    %v3587 = vmul.f32 %v3315, %v2390
    %v3588 = vmul.f32 %v3404, %v2391
    %v3589 = vmul.f32 %v3493, %v2392
    %v3590 = vmul.f32 %v3229, %v2405
    %v3591 = vmul.f32 %v3318, %v2406
    %v3592 = vmul.f32 %v3407, %v2407
    %v3593 = vmul.f32 %v3496, %v2408
    %v3594 = vmul.f32 %v3231, %v2421
    %v3595 = vmul.f32 %v3320, %v2422
    %v3596 = vmul.f32 %v3409, %v2423
    %v3597 = vmul.f32 %v3498, %v2424
    %v3598 = vmul.f32 %v3234, %v2437
    %v3599 = vmul.f32 %v3323, %v2438
    %v3600 = vmul.f32 %v3412, %v2439
    %v3601 = vmul.f32 %v3501, %v2440
    %v3602 = vmul.f32 %v3236, %v2453
    %v3603 = vmul.f32 %v3325, %v2454
    %v3604 = vmul.f32 %v3414, %v2455
    %v3605 = vmul.f32 %v3503, %v2456
    %v3606 = vmul.f32 %v3239, %v2469
    %v3607 = vmul.f32 %v3328, %v2470
    %v3608 = vmul.f32 %v3417, %v2471
    %v3609 = vmul.f32 %v3506, %v2472
    %v3610 = vmul.f32 %v3241, %v2485
    %v3611 = vmul.f32 %v3330, %v2486
    %v3612 = vmul.f32 %v3419, %v2487
    %v3613 = vmul.f32 %v3508, %v2488
    %v3614 = vmul.f32 %v3244, %v2501
    %v3615 = vmul.f32 %v3333, %v2502
    %v3616 = vmul.f32 %v3422, %v2503
    %v3617 = vmul.f32 %v3511, %v2504
    %v3618 = vmul.f32 %v3246, %v2517
    %v3619 = vmul.f32 %v3335, %v2518
    %v3620 = vmul.f32 %v3424, %v2519
    %v3621 = vmul.f32 %v3513, %v2520
    %v3622 = vmul.f32 %v3249, %v2533
    %v3623 = vmul.f32 %v3338, %v2534
    %v3624 = vmul.f32 %v3427, %v2535
    %v3625 = vmul.f32 %v3516, %v2536
    %v3626 = vmul.f32 %v3251, %v2549
    %v3627 = vmul.f32 %v3340, %v2550
    %v3628 = vmul.f32 %v3429, %v2551
    %v3629 = vmul.f32 %v3518, %v2552
    %v3630 = vmul.f32 %v3254, %v2565
    %v3631 = vmul.f32 %v3343, %v2566
    %v3632 = vmul.f32 %v3432, %v2567
    %v3633 = vmul.f32 %v3521, %v2568
    %v3634 = vmul.f32 %v3256, %v2581
    %v3635 = vmul.f32 %v3345, %v2582
    %v3636 = vmul.f32 %v3434, %v2583
    %v3637 = vmul.f32 %v3523, %v2584
    %v3638 = vmul.f32 %v3259, %v2597
    %v3639 = vmul.f32 %v3348, %v2598
    %v3640 = vmul.f32 %v3437, %v2599
    %v3641 = vmul.f32 %v3526, %v2600
    %v3642 = vmul.f32 %v3261, %v2613
    %v3643 = vmul.f32 %v3350, %v2614
    %v3644 = vmul.f32 %v3439, %v2615
    %v3645 = vmul.f32 %v3528, %v2616
    %v3646 = vmul.f32 %v3264, %v2629
    %v3647 = vmul.f32 %v3353, %v2630
    %v3648 = vmul.f32 %v3442, %v2631
    %v3649 = vmul.f32 %v3531, %v2632
    %v3650 = vmul.f32 %v3266, %v2645
    %v3651 = vmul.f32 %v3355, %v2646
    %v3652 = vmul.f32 %v3444, %v2647
    %v3653 = vmul.f32 %v3533, %v2648
    %v3654 = vmul.f32 %v3269, %v2661
    %v3655 = vmul.f32 %v3358, %v2662
    %v3656 = vmul.f32 %v3447, %v2663
    %v3657 = vmul.f32 %v3536, %v2664
    %v3658 = vmul.f32 %v3271, %v2677
    %v3659 = vmul.f32 %v3360, %v2678
    %v3660 = vmul.f32 %v3449, %v2679
    %v3661 = vmul.f32 %v3538, %v2680
    %v3662 = vmul.f32 %v3274, %v2693
    %v3663 = vmul.f32 %v3363, %v2694
    %v3664 = vmul.f32 %v3452, %v2695
    %v3665 = vmul.f32 %v3541, %v2696
    %v3666 = vmul.f32 %v3276, %v2709
    %v3667 = vmul.f32 %v3365, %v2710
    %v3668 = vmul.f32 %v3454, %v2711
    %v3669 = vmul.f32 %v3543, %v2712
    %v3670 = vmul.f32 %v3279, %v2725
    %v3671 = vmul.f32 %v3368, %v2726
    %v3672 = vmul.f32 %v3457, %v2727
    %v3673 = vmul.f32 %v3546, %v2728
    %v3674 = vmul.f32 %v3281, %v2741
    %v3675 = vmul.f32 %v3370, %v2742
    %v3676 = vmul.f32 %v3459, %v2743
    %v3677 = vmul.f32 %v3548, %v2744
    %v3678 = vadd.f32 %v3550, %v3551
    %v3679 = vadd.f32 %v3554, %v3555
    %v3680 = vadd.f32 %v3558, %v3559
    %v3681 = vadd.f32 %v3562, %v3563
    %v3682 = vadd.f32 %v3566, %v3567
    %v3683 = vadd.f32 %v3570, %v3571
    %v3684 = vadd.f32 %v3574, %v3575
    %v3685 = vadd.f32 %v3578, %v3579
    %v3686 = vadd.f32 %v3582, %v3583
    %v3687 = vadd.f32 %v3586, %v3587
    %v3688 = vadd.f32 %v3590, %v3591
    %v3689 = vadd.f32 %v3594, %v3595
    %v3690 = vadd.f32 %v3598, %v3599
    %v3691 = vadd.f32 %v3602, %v3603
    %v3692 = vadd.f32 %v3606, %v3607
    %v3693 = vadd.f32 %v3610, %v3611
    %v3694 = vadd.f32 %v3614, %v3615
    %v3695 = vadd.f32 %v3618, %v3619
    %v3696 = vadd.f32 %v3622, %v3623
    %v3697 = vadd.f32 %v3626, %v3627
    %v3698 = vadd.f32 %v3630, %v3631
    %v3699 = vadd.f32 %v3634, %v3635
    %v3700 = vadd.f32 %v3638, %v3639
    %v3701 = vadd.f32 %v3642, %v3643
    %v3702 = vadd.f32 %v3646, %v3647
    %v3703 = vadd.f32 %v3650, %v3651
    %v3704 = vadd.f32 %v3654, %v3655
    %v3705 = vadd.f32 %v3658, %v3659
    %v3706 = vadd.f32 %v3662, %v3663
    %v3707 = vadd.f32 %v3666, %v3667
    %v3708 = vadd.f32 %v3670, %v3671
    %v3709 = vadd.f32 %v3674, %v3675
    %v3710 = vadd.f32 %v3552, %v3553
    %v3711 = vadd.f32 %v3556, %v3557
    %v3712 = vadd.f32 %v3560, %v3561
    %v3713 = vadd.f32 %v3564, %v3565
    %v3714 = vadd.f32 %v3568, %v3569
    %v3715 = vadd.f32 %v3572, %v3573
    %v3716 = vadd.f32 %v3576, %v3577
    %v3717 = vadd.f32 %v3580, %v3581
    %v3718 = vadd.f32 %v3584, %v3585
    %v3719 = vadd.f32 %v3588, %v3589
    %v3720 = vadd.f32 %v3592, %v3593
    %v3721 = vadd.f32 %v3596, %v3597
    %v3722 = vadd.f32 %v3600, %v3601
    %v3723 = vadd.f32 %v3604, %v3605
    %v3724 = vadd.f32 %v3608, %v3609
    %v3725 = vadd.f32 %v3612, %v3613
    %v3726 = vadd.f32 %v3616, %v3617
    %v3727 = vadd.f32 %v3620, %v3621
    %v3728 = vadd.f32 %v3624, %v3625
    %v3729 = vadd.f32 %v3628, %v3629
    %v3730 = vadd.f32 %v3632, %v3633
    %v3731 = vadd.f32 %v3636, %v3637
    %v3732 = vadd.f32 %v3640, %v3641
    %v3733 = vadd.f32 %v3644, %v3645
    %v3734 = vadd.f32 %v3648, %v3649
    %v3735 = vadd.f32 %v3652, %v3653
    %v3736 = vadd.f32 %v3656, %v3657
    %v3737 = vadd.f32 %v3660, %v3661
    %v3738 = vadd.f32 %v3664, %v3665
    %v3739 = vadd.f32 %v3668, %v3669
    %v3740 = vadd.f32 %v3672, %v3673
    %v3741 = vadd.f32 %v3676, %v3677
    %v3742 = vadd.f32 %v3678, %v3710
    %v3743 = vadd.f32 %v3679, %v3711
    %v3744 = vadd.f32 %v3680, %v3712
    %v3745 = vadd.f32 %v3681, %v3713
    %v3746 = vadd.f32 %v3682, %v3714
    %v3747 = vadd.f32 %v3683, %v3715
    %v3748 = vadd.f32 %v3684, %v3716
    %v3749 = vadd.f32 %v3685, %v3717
    %v3750 = vadd.f32 %v3686, %v3718
    %v3751 = vadd.f32 %v3687, %v3719
    %v3752 = vadd.f32 %v3688, %v3720
    %v3753 = vadd.f32 %v3689, %v3721
    %v3754 = vadd.f32 %v3690, %v3722
    %v3755 = vadd.f32 %v3691, %v3723
    %v3756 = vadd.f32 %v3692, %v3724
    %v3757 = vadd.f32 %v3693, %v3725
    %v3758 = vadd.f32 %v3694, %v3726
    %v3759 = vadd.f32 %v3695, %v3727
    %v3760 = vadd.f32 %v3696, %v3728
    %v3761 = vadd.f32 %v3697, %v3729
    %v3762 = vadd.f32 %v3698, %v3730
    %v3763 = vadd.f32 %v3699, %v3731
    %v3764 = vadd.f32 %v3700, %v3732
    %v3765 = vadd.f32 %v3701, %v3733
    %v3766 = vadd.f32 %v3702, %v3734
    %v3767 = vadd.f32 %v3703, %v3735
    %v3768 = vadd.f32 %v3704, %v3736
    %v3769 = vadd.f32 %v3705, %v3737
    %v3770 = vadd.f32 %v3706, %v3738
    %v3771 = vadd.f32 %v3707, %v3739
    %v3772 = vadd.f32 %v3708, %v3740
    %v3773 = vadd.f32 %v3709, %v3741
    %v3774 = vpack.c.bf16 %v3743, %v3742
    %v3775 = vpack.c.bf16 %v3745, %v3744
    %v3776 = vpack.c.bf16 %v3747, %v3746
    %v3777 = vpack.c.bf16 %v3749, %v3748
    %v3778 = vpack.c.bf16 %v3751, %v3750
    %v3779 = vpack.c.bf16 %v3753, %v3752
    %v3780 = vpack.c.bf16 %v3755, %v3754
    %v3781 = vpack.c.bf16 %v3757, %v3756
    %v3782 = vpack.c.bf16 %v3759, %v3758
    %v3783 = vpack.c.bf16 %v3761, %v3760
    %v3784 = vpack.c.bf16 %v3763, %v3762
    %v3785 = vpack.c.bf16 %v3765, %v3764
    %v3786 = vpack.c.bf16 %v3767, %v3766
    %v3787 = vpack.c.bf16 %v3769, %v3768
    %v3788 = vpack.c.bf16 %v3771, %v3770
    %v3789 = vpack.c.bf16 %v3773, %v3772
    %v3806 = vunpack.c.l.b16 %v173
    %v3807 = vunpack.c.h.b16 %v173
    %v3808 = vunpack.c.l.b16 %v174
    %v3809 = vunpack.c.h.b16 %v174
    %v3810 = vunpack.c.l.b16 %v175
    %v3811 = vunpack.c.h.b16 %v175
    %v3812 = vunpack.c.l.b16 %v176
    %v3813 = vunpack.c.h.b16 %v176
    %v3814 = vunpack.c.l.b16 %v177
    %v3815 = vunpack.c.h.b16 %v177
    %v3816 = vunpack.c.l.b16 %v178
    %v3817 = vunpack.c.h.b16 %v178
    %v3818 = vunpack.c.l.b16 %v179
    %v3819 = vunpack.c.h.b16 %v179
    %v3820 = vunpack.c.l.b16 %v180
    %v3821 = vunpack.c.h.b16 %v180
    %v3822 = vunpack.c.l.b16 %v181
    %v3823 = vunpack.c.h.b16 %v181
    %v3824 = vunpack.c.l.b16 %v182
    %v3825 = vunpack.c.h.b16 %v182
    %v3826 = vunpack.c.l.b16 %v183
    %v3827 = vunpack.c.h.b16 %v183
    %v3828 = vunpack.c.l.b16 %v184
    %v3829 = vunpack.c.h.b16 %v184
    %v3830 = vunpack.c.l.b16 %v185
    %v3831 = vunpack.c.h.b16 %v185
    %v3832 = vunpack.c.l.b16 %v186
    %v3833 = vunpack.c.h.b16 %v186
    %v3834 = vunpack.c.l.b16 %v187
    %v3835 = vunpack.c.h.b16 %v187
    %v3836 = vunpack.c.l.b16 %v188
    %v3837 = vunpack.c.h.b16 %v188
    %v3838 = vpack.c.b16 %v3808, %v3806
    %v3839 = vpack.c.b16 %v3809, %v3807
    %v3840 = vpack.c.b16 %v3812, %v3810
    %v3841 = vpack.c.b16 %v3813, %v3811
    %v3842 = vpack.c.b16 %v3816, %v3814
    %v3843 = vpack.c.b16 %v3817, %v3815
    %v3844 = vpack.c.b16 %v3820, %v3818
    %v3845 = vpack.c.b16 %v3821, %v3819
    %v3846 = vpack.c.b16 %v3824, %v3822
    %v3847 = vpack.c.b16 %v3825, %v3823
    %v3848 = vpack.c.b16 %v3828, %v3826
    %v3849 = vpack.c.b16 %v3829, %v3827
    %v3850 = vpack.c.b16 %v3832, %v3830
    %v3851 = vpack.c.b16 %v3833, %v3831
    %v3852 = vpack.c.b16 %v3836, %v3834
    %v3853 = vpack.c.b16 %v3837, %v3835
    %3870 = vmatpush.bf16.msra.mxu0 %v3781
    %3871 = vmatpush.bf16.msra.mxu0 %v3780
    %3872 = vmatpush.bf16.msra.mxu0 %v3779
    %3873 = vmatpush.bf16.msra.mxu0 %v3778
    %3874 = vmatpush.bf16.msra.mxu0 %v3777
    %3875 = vmatpush.bf16.msra.mxu0 %v3776
    %3876 = vmatpush.bf16.msra.mxu0 %v3775
    %3877 = vmatpush.bf16.msra.mxu0 %v3774
    %3878 = vmatmul.bf16.gmra.mxu0 %v3838
    %v3879 = vpop.f32.mrf.mxu0
    %v3880 = vadd.f32 0.0, %v3879
    %v3881 = vpop.f32.mrf.mxu0
    %v3882 = vadd.f32 0.0, %v3881
    %3883 = vmatmul.bf16.gmra.mxu0 %v3840
    %v3884 = vpop.f32.mrf.mxu0
    %v3885 = vadd.f32 0.0, %v3884
    %v3886 = vpop.f32.mrf.mxu0
    %v3887 = vadd.f32 0.0, %v3886
    %3888 = vmatmul.bf16.gmra.mxu0 %v3842
    %v3889 = vpop.f32.mrf.mxu0
    %v3890 = vadd.f32 0.0, %v3889
    %v3891 = vpop.f32.mrf.mxu0
    %v3892 = vadd.f32 0.0, %v3891
    %3893 = vmatmul.bf16.gmra.mxu0 %v3844
    %v3894 = vpop.f32.mrf.mxu0
    %v3895 = vadd.f32 0.0, %v3894
    %v3896 = vpop.f32.mrf.mxu0
    %v3897 = vadd.f32 0.0, %v3896
    %3898 = vmatmul.bf16.gmra.mxu0 %v3846
    %v3899 = vpop.f32.mrf.mxu0
    %v3900 = vadd.f32 0.0, %v3899
    %v3901 = vpop.f32.mrf.mxu0
    %v3902 = vadd.f32 0.0, %v3901
    %3903 = vmatmul.bf16.gmra.mxu0 %v3848
    %v3904 = vpop.f32.mrf.mxu0
    %v3905 = vadd.f32 0.0, %v3904
    %v3906 = vpop.f32.mrf.mxu0
    %v3907 = vadd.f32 0.0, %v3906
    %3908 = vmatmul.bf16.gmra.mxu0 %v3850
    %v3909 = vpop.f32.mrf.mxu0
    %v3910 = vadd.f32 0.0, %v3909
    %v3911 = vpop.f32.mrf.mxu0
    %v3912 = vadd.f32 0.0, %v3911
    %3913 = vmatmul.bf16.gmra.mxu0 %v3852
    %v3914 = vpop.f32.mrf.mxu0
    %v3915 = vadd.f32 0.0, %v3914
    %v3916 = vpop.f32.mrf.mxu0
    %v3917 = vadd.f32 0.0, %v3916
    %3918 = vdwg.mxu0
    %3919 = vmatpush.bf16.msra.mxu0 %v3789
    %3920 = vmatpush.bf16.msra.mxu0 %v3788
    %3921 = vmatpush.bf16.msra.mxu0 %v3787
    %3922 = vmatpush.bf16.msra.mxu0 %v3786
    %3923 = vmatpush.bf16.msra.mxu0 %v3785
    %3924 = vmatpush.bf16.msra.mxu0 %v3784
    %3925 = vmatpush.bf16.msra.mxu0 %v3783
    %3926 = vmatpush.bf16.msra.mxu0 %v3782
    %3927 = vmatmul.bf16.gmra.mxu0 %v3839
    %v3928 = vpop.f32.mrf.mxu0
    %v3929 = vadd.f32 %v3880, %v3928
    %v3930 = vpop.f32.mrf.mxu0
    %v3931 = vadd.f32 %v3882, %v3930
    %3932 = vmatmul.bf16.gmra.mxu0 %v3841
    %v3933 = vpop.f32.mrf.mxu0
    %v3934 = vadd.f32 %v3885, %v3933
    %v3935 = vpop.f32.mrf.mxu0
    %v3936 = vadd.f32 %v3887, %v3935
    %3937 = vmatmul.bf16.gmra.mxu0 %v3843
    %v3938 = vpop.f32.mrf.mxu0
    %v3939 = vadd.f32 %v3890, %v3938
    %v3940 = vpop.f32.mrf.mxu0
    %v3941 = vadd.f32 %v3892, %v3940
    %3942 = vmatmul.bf16.gmra.mxu0 %v3845
    %v3943 = vpop.f32.mrf.mxu0
    %v3944 = vadd.f32 %v3895, %v3943
    %v3945 = vpop.f32.mrf.mxu0
    %v3946 = vadd.f32 %v3897, %v3945
    %3947 = vmatmul.bf16.gmra.mxu0 %v3847
    %v3948 = vpop.f32.mrf.mxu0
    %v3949 = vadd.f32 %v3900, %v3948
    %v3950 = vpop.f32.mrf.mxu0
    %v3951 = vadd.f32 %v3902, %v3950
    %3952 = vmatmul.bf16.gmra.mxu0 %v3849
    %v3953 = vpop.f32.mrf.mxu0
    %v3954 = vadd.f32 %v3905, %v3953
    %v3955 = vpop.f32.mrf.mxu0
    %v3956 = vadd.f32 %v3907, %v3955
    %3957 = vmatmul.bf16.gmra.mxu0 %v3851
    %v3958 = vpop.f32.mrf.mxu0
    %v3959 = vadd.f32 %v3910, %v3958
    %v3960 = vpop.f32.mrf.mxu0
    %v3961 = vadd.f32 %v3912, %v3960
    %3962 = vmatmul.bf16.gmra.mxu0 %v3853
    %v3963 = vpop.f32.mrf.mxu0
    %v3964 = vadd.f32 %v3915, %v3963
    %v3965 = vpop.f32.mrf.mxu0
    %v3966 = vadd.f32 %v3917, %v3965
    %3967 = vdwg.mxu0
    %v3968 = vld [vmem:[#allocation11] sm:$0x3]
    %v3969 = vld [vmem:[%s7] sm:$0xff]
    %3970 = vmatpush.msra.mxu0 0.0
    %3971 = vmatpush.msra.mxu0 0.0
    %3972 = vmatpush.msra.mxu0 0.0
    %3973 = vmatpush.msra.mxu0 0.0
    %3974 = vmatpush.msra.mxu0 0.0
    %3975 = vmatpush.msra.mxu0 0.0
    %3976 = vmatpush.msra.mxu0 0.0
    %3977 = vmatpush.msra.mxu0 0.0
    %3978 = vmatpush.msra.mxu0 0.0
    %3979 = vmatpush.msra.mxu0 0.0
    %3980 = vmatpush.msra.mxu0 0.0
    %3981 = vmatpush.msra.mxu0 0.0
    %3982 = vmatpush.msra.mxu0 0.0
    %3983 = vmatpush.msra.mxu0 0.0
    %3984 = vmatpush.msra.mxu0 0.0
    %3985 = vmatpush.msra.mxu0 %v3969
    %3986 = vmatmul.f32.gmra.mxu0 %v2759
    %v3987 = vpop.f32.mrf.mxu0
    %v3988 = vadd.f32 %v3929, %v3987
    %3989 = vmatmul.f32.gmra.mxu0 %v2762
    %v3990 = vpop.f32.mrf.mxu0
    %v3991 = vadd.f32 %v3931, %v3990
    %3992 = vmatmul.f32.gmra.mxu0 %v2765
    %v3993 = vpop.f32.mrf.mxu0
    %v3994 = vadd.f32 %v3934, %v3993
    %3995 = vmatmul.f32.gmra.mxu0 %v2768
    %v3996 = vpop.f32.mrf.mxu0
    %v3997 = vadd.f32 %v3936, %v3996
    %3998 = vmatmul.f32.gmra.mxu0 %v2771
    %v3999 = vpop.f32.mrf.mxu0
    %v4000 = vadd.f32 %v3939, %v3999
    %4001 = vmatmul.f32.gmra.mxu0 %v2774
    %v4002 = vpop.f32.mrf.mxu0
    %v4003 = vadd.f32 %v3941, %v4002
    %4004 = vmatmul.f32.gmra.mxu0 %v2777
    %v4005 = vpop.f32.mrf.mxu0
    %v4006 = vadd.f32 %v3944, %v4005
    %4007 = vmatmul.f32.gmra.mxu0 %v2780
    %v4008 = vpop.f32.mrf.mxu0
    %v4009 = vadd.f32 %v3946, %v4008
    %4010 = vmatmul.f32.gmra.mxu0 %v2783
    %v4011 = vpop.f32.mrf.mxu0
    %v4012 = vadd.f32 %v3949, %v4011
    %4013 = vmatmul.f32.gmra.mxu0 %v2786
    %v4014 = vpop.f32.mrf.mxu0
    %v4015 = vadd.f32 %v3951, %v4014
    %4016 = vmatmul.f32.gmra.mxu0 %v2789
    %v4017 = vpop.f32.mrf.mxu0
    %v4018 = vadd.f32 %v3954, %v4017
    %4019 = vmatmul.f32.gmra.mxu0 %v2792
    %v4020 = vpop.f32.mrf.mxu0
    %v4021 = vadd.f32 %v3956, %v4020
    %4022 = vmatmul.f32.gmra.mxu0 %v2795
    %v4023 = vpop.f32.mrf.mxu0
    %v4024 = vadd.f32 %v3959, %v4023
    %4025 = vmatmul.f32.gmra.mxu0 %v2798
    %v4026 = vpop.f32.mrf.mxu0
    %v4027 = vadd.f32 %v3961, %v4026
    %4028 = vmatmul.f32.gmra.mxu0 %v2801
    %v4029 = vpop.f32.mrf.mxu0
    %v4030 = vadd.f32 %v3964, %v4029
    %4031 = vmatmul.f32.gmra.mxu0 %v2804
    %v4032 = vpop.f32.mrf.mxu0
    %v4033 = vadd.f32 %v3966, %v4032
    %4034 = vdwg.mxu0
    %v4035 = vperm.slane %v3968, 0
    %v4036 = vmul.f32 %v3988, %v4035
    %v4037 = vmul.f32 %v3991, %v4035
    %v4038 = vmul.f32 %v3994, %v4035
    %v4039 = vmul.f32 %v3997, %v4035
    %v4040 = vmul.f32 %v4000, %v4035
    %v4041 = vmul.f32 %v4003, %v4035
    %v4042 = vmul.f32 %v4006, %v4035
    %v4043 = vmul.f32 %v4009, %v4035
    %v4044 = vmul.f32 %v4012, %v4035
    %v4045 = vmul.f32 %v4015, %v4035
    %v4046 = vmul.f32 %v4018, %v4035
    %v4047 = vmul.f32 %v4021, %v4035
    %v4048 = vmul.f32 %v4024, %v4035
    %v4049 = vmul.f32 %v4027, %v4035
    %v4050 = vmul.f32 %v4030, %v4035
    %v4051 = vmul.f32 %v4033, %v4035
    %v4052 = vperm.slane %v3968, 1
    %v4053 = vadd.f32 %v4036, %v4052
    %v4054 = vadd.f32 %v4037, %v4052
    %v4055 = vadd.f32 %v4038, %v4052
    %v4056 = vadd.f32 %v4039, %v4052
    %v4057 = vadd.f32 %v4040, %v4052
    %v4058 = vadd.f32 %v4041, %v4052
    %v4059 = vadd.f32 %v4042, %v4052
    %v4060 = vadd.f32 %v4043, %v4052
    %v4061 = vadd.f32 %v4044, %v4052
    %v4062 = vadd.f32 %v4045, %v4052
    %v4063 = vadd.f32 %v4046, %v4052
    %v4064 = vadd.f32 %v4047, %v4052
    %v4065 = vadd.f32 %v4048, %v4052
    %v4066 = vadd.f32 %v4049, %v4052
    %v4067 = vadd.f32 %v4050, %v4052
    %v4068 = vadd.f32 %v4051, %v4052
    %v4069 = vmax.f32 %v4053, 0.0
    %v4070 = vmax.f32 %v4054, 0.0
    %v4071 = vmax.f32 %v4055, 0.0
    %v4072 = vmax.f32 %v4056, 0.0
    %v4073 = vmax.f32 %v4057, 0.0
    %v4074 = vmax.f32 %v4058, 0.0
    %v4075 = vmax.f32 %v4059, 0.0
    %v4076 = vmax.f32 %v4060, 0.0
    %v4077 = vmax.f32 %v4061, 0.0
    %v4078 = vmax.f32 %v4062, 0.0
    %v4079 = vmax.f32 %v4063, 0.0
    %v4080 = vmax.f32 %v4064, 0.0
    %v4081 = vmax.f32 %v4065, 0.0
    %v4082 = vmax.f32 %v4066, 0.0
    %v4083 = vmax.f32 %v4067, 0.0
    %v4084 = vmax.f32 %v4068, 0.0
    %v4085 = vadd.f32 %v125, %v4069
    %v4086 = vadd.f32 %v126, %v4070
    %v4087 = vadd.f32 %v127, %v4071
    %v4088 = vadd.f32 %v128, %v4072
    %v4089 = vadd.f32 %v129, %v4073
    %v4090 = vadd.f32 %v130, %v4074
    %v4091 = vadd.f32 %v131, %v4075
    %v4092 = vadd.f32 %v132, %v4076
    %v4093 = vadd.f32 %v133, %v4077
    %v4094 = vadd.f32 %v134, %v4078
    %v4095 = vadd.f32 %v135, %v4079
    %v4096 = vadd.f32 %v136, %v4080
    %v4097 = vadd.f32 %v137, %v4081
    %v4098 = vadd.f32 %v138, %v4082
    %v4099 = vadd.f32 %v139, %v4083
    %v4100 = vadd.f32 %v140, %v4084
    %v4102 = vsel %vm2757, %v4085, 0
    %v4105 = vsel %vm2757, %v4086, 0
    %v4108 = vsel %vm2757, %v4087, 0
    %v4111 = vsel %vm2757, %v4088, 0
    %v4114 = vsel %vm2757, %v4089, 0
    %v4117 = vsel %vm2757, %v4090, 0
    %v4120 = vsel %vm2757, %v4091, 0
    %v4123 = vsel %vm2757, %v4092, 0
    %v4126 = vsel %vm2757, %v4093, 0
    %v4129 = vsel %vm2757, %v4094, 0
    %v4132 = vsel %vm2757, %v4095, 0
    %v4135 = vsel %vm2757, %v4096, 0
    %v4138 = vsel %vm2757, %v4097, 0
    %v4141 = vsel %vm2757, %v4098, 0
    %v4144 = vsel %vm2757, %v4099, 0
    %v4147 = vsel %vm2757, %v4100, 0
    %4149 = vmatpush.msra.mxu0 0.0
    %4150 = vmatpush.msra.mxu0 0.0
    %4151 = vmatpush.msra.mxu0 0.0
    %4152 = vmatpush.msra.mxu0 0.0
    %4153 = vmatpush.msra.mxu0 0.0
    %4154 = vmatpush.msra.mxu0 0.0
    %4155 = vmatpush.msra.mxu0 0.0
    %4156 = vmatpush.msra.mxu0 0.0
    %4157 = vmatpush.msra.mxu0 0.0
    %4158 = vmatpush.msra.mxu0 0.0
    %4159 = vmatpush.msra.mxu0 0.0
    %4160 = vmatpush.msra.mxu0 0.0
    %4161 = vmatpush.msra.mxu0 0.0
    %4162 = vmatpush.msra.mxu0 0.0
    %4163 = vmatpush.msra.mxu0 0.0
    %4164 = vmatpush.msra.mxu0 %v223
    %4165 = vmatmul.f32.gmra.mxu0 %v4102
    %v4166 = vpop.f32.mrf.mxu0
    %v4167 = vadd.f32 0.0, %v4166
    %4168 = vmatmul.f32.gmra.mxu0 %v4105
    %v4169 = vpop.f32.mrf.mxu0
    %v4170 = vadd.f32 0.0, %v4169
    %4171 = vmatmul.f32.gmra.mxu0 %v4108
    %v4172 = vpop.f32.mrf.mxu0
    %v4173 = vadd.f32 0.0, %v4172
    %4174 = vmatmul.f32.gmra.mxu0 %v4111
    %v4175 = vpop.f32.mrf.mxu0
    %v4176 = vadd.f32 0.0, %v4175
    %4177 = vmatmul.f32.gmra.mxu0 %v4114
    %v4178 = vpop.f32.mrf.mxu0
    %v4179 = vadd.f32 0.0, %v4178
    %4180 = vmatmul.f32.gmra.mxu0 %v4117
    %v4181 = vpop.f32.mrf.mxu0
    %v4182 = vadd.f32 0.0, %v4181
    %4183 = vmatmul.f32.gmra.mxu0 %v4120
    %v4184 = vpop.f32.mrf.mxu0
    %v4185 = vadd.f32 0.0, %v4184
    %4186 = vmatmul.f32.gmra.mxu0 %v4123
    %v4187 = vpop.f32.mrf.mxu0
    %v4188 = vadd.f32 0.0, %v4187
    %4189 = vmatmul.f32.gmra.mxu0 %v4126
    %v4190 = vpop.f32.mrf.mxu0
    %v4191 = vadd.f32 0.0, %v4190
    %4192 = vmatmul.f32.gmra.mxu0 %v4129
    %v4193 = vpop.f32.mrf.mxu0
    %v4194 = vadd.f32 0.0, %v4193
    %4195 = vmatmul.f32.gmra.mxu0 %v4132
    %v4196 = vpop.f32.mrf.mxu0
    %v4197 = vadd.f32 0.0, %v4196
    %4198 = vmatmul.f32.gmra.mxu0 %v4135
    %v4199 = vpop.f32.mrf.mxu0
    %v4200 = vadd.f32 0.0, %v4199
    %4201 = vmatmul.f32.gmra.mxu0 %v4138
    %v4202 = vpop.f32.mrf.mxu0
    %v4203 = vadd.f32 0.0, %v4202
    %4204 = vmatmul.f32.gmra.mxu0 %v4141
    %v4205 = vpop.f32.mrf.mxu0
    %v4206 = vadd.f32 0.0, %v4205
    %4207 = vmatmul.f32.gmra.mxu0 %v4144
    %v4208 = vpop.f32.mrf.mxu0
    %v4209 = vadd.f32 0.0, %v4208
    %4210 = vmatmul.f32.gmra.mxu0 %v4147
    %v4211 = vpop.f32.mrf.mxu0
    %v4212 = vadd.f32 0.0, %v4211
    %4213 = vdwg.mxu0
    %4214 = vmatpush.msra.mxu0 0.0
    %4215 = vmatpush.msra.mxu0 0.0
    %4216 = vmatpush.msra.mxu0 0.0
    %4217 = vmatpush.msra.mxu0 0.0
    %4218 = vmatpush.msra.mxu0 0.0
    %4219 = vmatpush.msra.mxu0 0.0
    %4220 = vmatpush.msra.mxu0 0.0
    %4221 = vmatpush.msra.mxu0 0.0
    %4222 = vmatpush.msra.mxu0 0.0
    %4223 = vmatpush.msra.mxu0 0.0
    %4224 = vmatpush.msra.mxu0 0.0
    %4225 = vmatpush.msra.mxu0 0.0
    %4226 = vmatpush.msra.mxu0 0.0
    %4227 = vmatpush.msra.mxu0 0.0
    %4228 = vmatpush.msra.mxu0 0.0
    %4229 = vmatpush.msra.mxu0 %v224
    %4230 = vmatmul.f32.gmra.mxu0 %v4102
    %v4231 = vpop.f32.mrf.mxu0
    %v4232 = vadd.f32 0.0, %v4231
    %4233 = vmatmul.f32.gmra.mxu0 %v4105
    %v4234 = vpop.f32.mrf.mxu0
    %v4235 = vadd.f32 0.0, %v4234
    %4236 = vmatmul.f32.gmra.mxu0 %v4108
    %v4237 = vpop.f32.mrf.mxu0
    %v4238 = vadd.f32 0.0, %v4237
    %4239 = vmatmul.f32.gmra.mxu0 %v4111
    %v4240 = vpop.f32.mrf.mxu0
    %v4241 = vadd.f32 0.0, %v4240
    %4242 = vmatmul.f32.gmra.mxu0 %v4114
    %v4243 = vpop.f32.mrf.mxu0
    %v4244 = vadd.f32 0.0, %v4243
    %4245 = vmatmul.f32.gmra.mxu0 %v4117
    %v4246 = vpop.f32.mrf.mxu0
    %v4247 = vadd.f32 0.0, %v4246
    %4248 = vmatmul.f32.gmra.mxu0 %v4120
    %v4249 = vpop.f32.mrf.mxu0
    %v4250 = vadd.f32 0.0, %v4249
    %4251 = vmatmul.f32.gmra.mxu0 %v4123
    %v4252 = vpop.f32.mrf.mxu0
    %v4253 = vadd.f32 0.0, %v4252
    %4254 = vmatmul.f32.gmra.mxu0 %v4126
    %v4255 = vpop.f32.mrf.mxu0
    %v4256 = vadd.f32 0.0, %v4255
    %4257 = vmatmul.f32.gmra.mxu0 %v4129
    %v4258 = vpop.f32.mrf.mxu0
    %v4259 = vadd.f32 0.0, %v4258
    %4260 = vmatmul.f32.gmra.mxu0 %v4132
    %v4261 = vpop.f32.mrf.mxu0
    %v4262 = vadd.f32 0.0, %v4261
    %4263 = vmatmul.f32.gmra.mxu0 %v4135
    %v4264 = vpop.f32.mrf.mxu0
    %v4265 = vadd.f32 0.0, %v4264
    %4266 = vmatmul.f32.gmra.mxu0 %v4138
    %v4267 = vpop.f32.mrf.mxu0
    %v4268 = vadd.f32 0.0, %v4267
    %4269 = vmatmul.f32.gmra.mxu0 %v4141
    %v4270 = vpop.f32.mrf.mxu0
    %v4271 = vadd.f32 0.0, %v4270
    %4272 = vmatmul.f32.gmra.mxu0 %v4144
    %v4273 = vpop.f32.mrf.mxu0
    %v4274 = vadd.f32 0.0, %v4273
    %4275 = vmatmul.f32.gmra.mxu0 %v4147
    %v4276 = vpop.f32.mrf.mxu0
    %v4277 = vadd.f32 0.0, %v4276
    %4278 = vdwg.mxu0
    %4279 = vmatpush.msra.mxu0 0.0
    %4280 = vmatpush.msra.mxu0 0.0
    %4281 = vmatpush.msra.mxu0 0.0
    %4282 = vmatpush.msra.mxu0 0.0
    %4283 = vmatpush.msra.mxu0 0.0
    %4284 = vmatpush.msra.mxu0 0.0
    %4285 = vmatpush.msra.mxu0 0.0
    %4286 = vmatpush.msra.mxu0 0.0
    %4287 = vmatpush.msra.mxu0 0.0
    %4288 = vmatpush.msra.mxu0 0.0
    %4289 = vmatpush.msra.mxu0 0.0
    %4290 = vmatpush.msra.mxu0 0.0
    %4291 = vmatpush.msra.mxu0 0.0
    %4292 = vmatpush.msra.mxu0 0.0
    %4293 = vmatpush.msra.mxu0 0.0
    %4294 = vmatpush.msra.mxu0 %v225
    %4295 = vmatmul.f32.gmra.mxu0 %v4102
    %v4296 = vpop.f32.mrf.mxu0
    %v4297 = vadd.f32 0.0, %v4296
    %4298 = vmatmul.f32.gmra.mxu0 %v4105
    %v4299 = vpop.f32.mrf.mxu0
    %v4300 = vadd.f32 0.0, %v4299
    %4301 = vmatmul.f32.gmra.mxu0 %v4108
    %v4302 = vpop.f32.mrf.mxu0
    %v4303 = vadd.f32 0.0, %v4302
    %4304 = vmatmul.f32.gmra.mxu0 %v4111
    %v4305 = vpop.f32.mrf.mxu0
    %v4306 = vadd.f32 0.0, %v4305
    %4307 = vmatmul.f32.gmra.mxu0 %v4114
    %v4308 = vpop.f32.mrf.mxu0
    %v4309 = vadd.f32 0.0, %v4308
    %4310 = vmatmul.f32.gmra.mxu0 %v4117
    %v4311 = vpop.f32.mrf.mxu0
    %v4312 = vadd.f32 0.0, %v4311
    %4313 = vmatmul.f32.gmra.mxu0 %v4120
    %v4314 = vpop.f32.mrf.mxu0
    %v4315 = vadd.f32 0.0, %v4314
    %4316 = vmatmul.f32.gmra.mxu0 %v4123
    %v4317 = vpop.f32.mrf.mxu0
    %v4318 = vadd.f32 0.0, %v4317
    %4319 = vmatmul.f32.gmra.mxu0 %v4126
    %v4320 = vpop.f32.mrf.mxu0
    %v4321 = vadd.f32 0.0, %v4320
    %4322 = vmatmul.f32.gmra.mxu0 %v4129
    %v4323 = vpop.f32.mrf.mxu0
    %v4324 = vadd.f32 0.0, %v4323
    %4325 = vmatmul.f32.gmra.mxu0 %v4132
    %v4326 = vpop.f32.mrf.mxu0
    %v4327 = vadd.f32 0.0, %v4326
    %4328 = vmatmul.f32.gmra.mxu0 %v4135
    %v4329 = vpop.f32.mrf.mxu0
    %v4330 = vadd.f32 0.0, %v4329
    %4331 = vmatmul.f32.gmra.mxu0 %v4138
    %v4332 = vpop.f32.mrf.mxu0
    %v4333 = vadd.f32 0.0, %v4332
    %4334 = vmatmul.f32.gmra.mxu0 %v4141
    %v4335 = vpop.f32.mrf.mxu0
    %v4336 = vadd.f32 0.0, %v4335
    %4337 = vmatmul.f32.gmra.mxu0 %v4144
    %v4338 = vpop.f32.mrf.mxu0
    %v4339 = vadd.f32 0.0, %v4338
    %4340 = vmatmul.f32.gmra.mxu0 %v4147
    %v4341 = vpop.f32.mrf.mxu0
    %v4342 = vadd.f32 0.0, %v4341
    %4343 = vdwg.mxu0
    %4344 = vmatpush.msra.mxu0 0.0
    %4345 = vmatpush.msra.mxu0 0.0
    %4346 = vmatpush.msra.mxu0 0.0
    %4347 = vmatpush.msra.mxu0 0.0
    %4348 = vmatpush.msra.mxu0 0.0
    %4349 = vmatpush.msra.mxu0 0.0
    %4350 = vmatpush.msra.mxu0 0.0
    %4351 = vmatpush.msra.mxu0 0.0
    %4352 = vmatpush.msra.mxu0 0.0
    %4353 = vmatpush.msra.mxu0 0.0
    %4354 = vmatpush.msra.mxu0 0.0
    %4355 = vmatpush.msra.mxu0 0.0
    %4356 = vmatpush.msra.mxu0 0.0
    %4357 = vmatpush.msra.mxu0 0.0
    %4358 = vmatpush.msra.mxu0 0.0
    %4359 = vmatpush.msra.mxu0 %v226
    %4360 = vmatmul.f32.gmra.mxu0 %v4102
    %v4361 = vpop.f32.mrf.mxu0
    %v4362 = vadd.f32 0.0, %v4361
    %4363 = vmatmul.f32.gmra.mxu0 %v4105
    %v4364 = vpop.f32.mrf.mxu0
    %v4365 = vadd.f32 0.0, %v4364
    %4366 = vmatmul.f32.gmra.mxu0 %v4108
    %v4367 = vpop.f32.mrf.mxu0
    %v4368 = vadd.f32 0.0, %v4367
    %4369 = vmatmul.f32.gmra.mxu0 %v4111
    %v4370 = vpop.f32.mrf.mxu0
    %v4371 = vadd.f32 0.0, %v4370
    %4372 = vmatmul.f32.gmra.mxu0 %v4114
    %v4373 = vpop.f32.mrf.mxu0
    %v4374 = vadd.f32 0.0, %v4373
    %4375 = vmatmul.f32.gmra.mxu0 %v4117
    %v4376 = vpop.f32.mrf.mxu0
    %v4377 = vadd.f32 0.0, %v4376
    %4378 = vmatmul.f32.gmra.mxu0 %v4120
    %v4379 = vpop.f32.mrf.mxu0
    %v4380 = vadd.f32 0.0, %v4379
    %4381 = vmatmul.f32.gmra.mxu0 %v4123
    %v4382 = vpop.f32.mrf.mxu0
    %v4383 = vadd.f32 0.0, %v4382
    %4384 = vmatmul.f32.gmra.mxu0 %v4126
    %v4385 = vpop.f32.mrf.mxu0
    %v4386 = vadd.f32 0.0, %v4385
    %4387 = vmatmul.f32.gmra.mxu0 %v4129
    %v4388 = vpop.f32.mrf.mxu0
    %v4389 = vadd.f32 0.0, %v4388
    %4390 = vmatmul.f32.gmra.mxu0 %v4132
    %v4391 = vpop.f32.mrf.mxu0
    %v4392 = vadd.f32 0.0, %v4391
    %4393 = vmatmul.f32.gmra.mxu0 %v4135
    %v4394 = vpop.f32.mrf.mxu0
    %v4395 = vadd.f32 0.0, %v4394
    %4396 = vmatmul.f32.gmra.mxu0 %v4138
    %v4397 = vpop.f32.mrf.mxu0
    %v4398 = vadd.f32 0.0, %v4397
    %4399 = vmatmul.f32.gmra.mxu0 %v4141
    %v4400 = vpop.f32.mrf.mxu0
    %v4401 = vadd.f32 0.0, %v4400
    %4402 = vmatmul.f32.gmra.mxu0 %v4144
    %v4403 = vpop.f32.mrf.mxu0
    %v4404 = vadd.f32 0.0, %v4403
    %4405 = vmatmul.f32.gmra.mxu0 %v4147
    %v4406 = vpop.f32.mrf.mxu0
    %v4407 = vadd.f32 0.0, %v4406
    %4408 = vdwg.mxu0
    %v4409 = vpack.c.bf16 %v4170, %v4167
    %v4410 = vpack.c.bf16 %v4235, %v4232
    %v4411 = vpack.c.bf16 %v4300, %v4297
    %v4412 = vpack.c.bf16 %v4365, %v4362
    %v4413 = vpack.c.bf16 %v4176, %v4173
    %v4414 = vpack.c.bf16 %v4241, %v4238
    %v4415 = vpack.c.bf16 %v4306, %v4303
    %v4416 = vpack.c.bf16 %v4371, %v4368
    %v4417 = vpack.c.bf16 %v4182, %v4179
    %v4418 = vpack.c.bf16 %v4247, %v4244
    %v4419 = vpack.c.bf16 %v4312, %v4309
    %v4420 = vpack.c.bf16 %v4377, %v4374
    %v4421 = vpack.c.bf16 %v4188, %v4185
    %v4422 = vpack.c.bf16 %v4253, %v4250
    %v4423 = vpack.c.bf16 %v4318, %v4315
    %v4424 = vpack.c.bf16 %v4383, %v4380
    %v4425 = vpack.c.bf16 %v4194, %v4191
    %v4426 = vpack.c.bf16 %v4259, %v4256
    %v4427 = vpack.c.bf16 %v4324, %v4321
    %v4428 = vpack.c.bf16 %v4389, %v4386
    %v4429 = vpack.c.bf16 %v4200, %v4197
    %v4430 = vpack.c.bf16 %v4265, %v4262
    %v4431 = vpack.c.bf16 %v4330, %v4327
    %v4432 = vpack.c.bf16 %v4395, %v4392
    %v4433 = vpack.c.bf16 %v4206, %v4203
    %v4434 = vpack.c.bf16 %v4271, %v4268
    %v4435 = vpack.c.bf16 %v4336, %v4333
    %v4436 = vpack.c.bf16 %v4401, %v4398
    %v4437 = vpack.c.bf16 %v4212, %v4209
    %v4438 = vpack.c.bf16 %v4277, %v4274
    %v4439 = vpack.c.bf16 %v4342, %v4339
    %v4440 = vpack.c.bf16 %v4407, %v4404
    %4441 = vmatpush.bf16.msra.mxu0 %v4437
    %4442 = vmatpush.bf16.msra.mxu0 %v4433
    %4443 = vmatpush.bf16.msra.mxu0 %v4429
    %4444 = vmatpush.bf16.msra.mxu0 %v4425
    %4445 = vmatpush.bf16.msra.mxu0 %v4421
    %4446 = vmatpush.bf16.msra.mxu0 %v4417
    %4447 = vmatpush.bf16.msra.mxu0 %v4413
    %4448 = vmatpush.bf16.msra.mxu0 %v4409
    %4449 = vmatmul.bf16.gmra.mxu0 %v3162
    %v4450 = vpop.f32.mrf.mxu0
    %v4451 = vadd.f32 0.0, %v4450
    %v4452 = vpop.f32.mrf.mxu0
    %v4453 = vadd.f32 0.0, %v4452
    %4454 = vmatmul.bf16.gmra.mxu0 %v3163
    %v4455 = vpop.f32.mrf.mxu0
    %v4456 = vadd.f32 0.0, %v4455
    %v4457 = vpop.f32.mrf.mxu0
    %v4458 = vadd.f32 0.0, %v4457
    %4459 = vmatmul.bf16.gmra.mxu0 %v3164
    %v4460 = vpop.f32.mrf.mxu0
    %v4461 = vadd.f32 0.0, %v4460
    %v4462 = vpop.f32.mrf.mxu0
    %v4463 = vadd.f32 0.0, %v4462
    %4464 = vmatmul.bf16.gmra.mxu0 %v3165
    %v4465 = vpop.f32.mrf.mxu0
    %v4466 = vadd.f32 0.0, %v4465
    %v4467 = vpop.f32.mrf.mxu0
    %v4468 = vadd.f32 0.0, %v4467
    %4469 = vmatmul.bf16.gmra.mxu0 %v3166
    %v4470 = vpop.f32.mrf.mxu0
    %v4471 = vadd.f32 0.0, %v4470
    %v4472 = vpop.f32.mrf.mxu0
    %v4473 = vadd.f32 0.0, %v4472
    %4474 = vmatmul.bf16.gmra.mxu0 %v3167
    %v4475 = vpop.f32.mrf.mxu0
    %v4476 = vadd.f32 0.0, %v4475
    %v4477 = vpop.f32.mrf.mxu0
    %v4478 = vadd.f32 0.0, %v4477
    %4479 = vmatmul.bf16.gmra.mxu0 %v3168
    %v4480 = vpop.f32.mrf.mxu0
    %v4481 = vadd.f32 0.0, %v4480
    %v4482 = vpop.f32.mrf.mxu0
    %v4483 = vadd.f32 0.0, %v4482
    %4484 = vmatmul.bf16.gmra.mxu0 %v3169
    %v4485 = vpop.f32.mrf.mxu0
    %v4486 = vadd.f32 0.0, %v4485
    %v4487 = vpop.f32.mrf.mxu0
    %v4488 = vadd.f32 0.0, %v4487
    %4489 = vmatmul.bf16.gmra.mxu0 %v3170
    %v4490 = vpop.f32.mrf.mxu0
    %v4491 = vadd.f32 0.0, %v4490
    %v4492 = vpop.f32.mrf.mxu0
    %v4493 = vadd.f32 0.0, %v4492
    %4494 = vmatmul.bf16.gmra.mxu0 %v3171
    %v4495 = vpop.f32.mrf.mxu0
    %v4496 = vadd.f32 0.0, %v4495
    %v4497 = vpop.f32.mrf.mxu0
    %v4498 = vadd.f32 0.0, %v4497
    %4499 = vmatmul.bf16.gmra.mxu0 %v3172
    %v4500 = vpop.f32.mrf.mxu0
    %v4501 = vadd.f32 0.0, %v4500
    %v4502 = vpop.f32.mrf.mxu0
    %v4503 = vadd.f32 0.0, %v4502
    %4504 = vmatmul.bf16.gmra.mxu0 %v3173
    %v4505 = vpop.f32.mrf.mxu0
    %v4506 = vadd.f32 0.0, %v4505
    %v4507 = vpop.f32.mrf.mxu0
    %v4508 = vadd.f32 0.0, %v4507
    %4509 = vmatmul.bf16.gmra.mxu0 %v3174
    %v4510 = vpop.f32.mrf.mxu0
    %v4511 = vadd.f32 0.0, %v4510
    %v4512 = vpop.f32.mrf.mxu0
    %v4513 = vadd.f32 0.0, %v4512
    %4514 = vmatmul.bf16.gmra.mxu0 %v3175
    %v4515 = vpop.f32.mrf.mxu0
    %v4516 = vadd.f32 0.0, %v4515
    %v4517 = vpop.f32.mrf.mxu0
    %v4518 = vadd.f32 0.0, %v4517
    %4519 = vmatmul.bf16.gmra.mxu0 %v3176
    %v4520 = vpop.f32.mrf.mxu0
    %v4521 = vadd.f32 0.0, %v4520
    %v4522 = vpop.f32.mrf.mxu0
    %v4523 = vadd.f32 0.0, %v4522
    %4524 = vmatmul.bf16.gmra.mxu0 %v3177
    %v4525 = vpop.f32.mrf.mxu0
    %v4526 = vadd.f32 0.0, %v4525
    %v4527 = vpop.f32.mrf.mxu0
    %v4528 = vadd.f32 0.0, %v4527
    %4529 = vdwg.mxu0
    %4530 = vmatpush.bf16.msra.mxu0 %v4438
    %4531 = vmatpush.bf16.msra.mxu0 %v4434
    %4532 = vmatpush.bf16.msra.mxu0 %v4430
    %4533 = vmatpush.bf16.msra.mxu0 %v4426
    %4534 = vmatpush.bf16.msra.mxu0 %v4422
    %4535 = vmatpush.bf16.msra.mxu0 %v4418
    %4536 = vmatpush.bf16.msra.mxu0 %v4414
    %4537 = vmatpush.bf16.msra.mxu0 %v4410
    %4538 = vmatmul.bf16.gmra.mxu0 %v3162
    %v4539 = vpop.f32.mrf.mxu0
    %v4540 = vadd.f32 0.0, %v4539
    %v4541 = vpop.f32.mrf.mxu0
    %v4542 = vadd.f32 0.0, %v4541
    %4543 = vmatmul.bf16.gmra.mxu0 %v3163
    %v4544 = vpop.f32.mrf.mxu0
    %v4545 = vadd.f32 0.0, %v4544
    %v4546 = vpop.f32.mrf.mxu0
    %v4547 = vadd.f32 0.0, %v4546
    %4548 = vmatmul.bf16.gmra.mxu0 %v3164
    %v4549 = vpop.f32.mrf.mxu0
    %v4550 = vadd.f32 0.0, %v4549
    %v4551 = vpop.f32.mrf.mxu0
    %v4552 = vadd.f32 0.0, %v4551
    %4553 = vmatmul.bf16.gmra.mxu0 %v3165
    %v4554 = vpop.f32.mrf.mxu0
    %v4555 = vadd.f32 0.0, %v4554
    %v4556 = vpop.f32.mrf.mxu0
    %v4557 = vadd.f32 0.0, %v4556
    %4558 = vmatmul.bf16.gmra.mxu0 %v3166
    %v4559 = vpop.f32.mrf.mxu0
    %v4560 = vadd.f32 0.0, %v4559
    %v4561 = vpop.f32.mrf.mxu0
    %v4562 = vadd.f32 0.0, %v4561
    %4563 = vmatmul.bf16.gmra.mxu0 %v3167
    %v4564 = vpop.f32.mrf.mxu0
    %v4565 = vadd.f32 0.0, %v4564
    %v4566 = vpop.f32.mrf.mxu0
    %v4567 = vadd.f32 0.0, %v4566
    %4568 = vmatmul.bf16.gmra.mxu0 %v3168
    %v4569 = vpop.f32.mrf.mxu0
    %v4570 = vadd.f32 0.0, %v4569
    %v4571 = vpop.f32.mrf.mxu0
    %v4572 = vadd.f32 0.0, %v4571
    %4573 = vmatmul.bf16.gmra.mxu0 %v3169
    %v4574 = vpop.f32.mrf.mxu0
    %v4575 = vadd.f32 0.0, %v4574
    %v4576 = vpop.f32.mrf.mxu0
    %v4577 = vadd.f32 0.0, %v4576
    %4578 = vmatmul.bf16.gmra.mxu0 %v3170
    %v4579 = vpop.f32.mrf.mxu0
    %v4580 = vadd.f32 0.0, %v4579
    %v4581 = vpop.f32.mrf.mxu0
    %v4582 = vadd.f32 0.0, %v4581
    %4583 = vmatmul.bf16.gmra.mxu0 %v3171
    %v4584 = vpop.f32.mrf.mxu0
    %v4585 = vadd.f32 0.0, %v4584
    %v4586 = vpop.f32.mrf.mxu0
    %v4587 = vadd.f32 0.0, %v4586
    %4588 = vmatmul.bf16.gmra.mxu0 %v3172
    %v4589 = vpop.f32.mrf.mxu0
    %v4590 = vadd.f32 0.0, %v4589
    %v4591 = vpop.f32.mrf.mxu0
    %v4592 = vadd.f32 0.0, %v4591
    %4593 = vmatmul.bf16.gmra.mxu0 %v3173
    %v4594 = vpop.f32.mrf.mxu0
    %v4595 = vadd.f32 0.0, %v4594
    %v4596 = vpop.f32.mrf.mxu0
    %v4597 = vadd.f32 0.0, %v4596
    %4598 = vmatmul.bf16.gmra.mxu0 %v3174
    %v4599 = vpop.f32.mrf.mxu0
    %v4600 = vadd.f32 0.0, %v4599
    %v4601 = vpop.f32.mrf.mxu0
    %v4602 = vadd.f32 0.0, %v4601
    %4603 = vmatmul.bf16.gmra.mxu0 %v3175
    %v4604 = vpop.f32.mrf.mxu0
    %v4605 = vadd.f32 0.0, %v4604
    %v4606 = vpop.f32.mrf.mxu0
    %v4607 = vadd.f32 0.0, %v4606
    %4608 = vmatmul.bf16.gmra.mxu0 %v3176
    %v4609 = vpop.f32.mrf.mxu0
    %v4610 = vadd.f32 0.0, %v4609
    %v4611 = vpop.f32.mrf.mxu0
    %v4612 = vadd.f32 0.0, %v4611
    %4613 = vmatmul.bf16.gmra.mxu0 %v3177
    %v4614 = vpop.f32.mrf.mxu0
    %v4615 = vadd.f32 0.0, %v4614
    %v4616 = vpop.f32.mrf.mxu0
    %v4617 = vadd.f32 0.0, %v4616
    %4618 = vdwg.mxu0
    %4619 = vmatpush.bf16.msra.mxu0 %v4439
    %4620 = vmatpush.bf16.msra.mxu0 %v4435
    %4621 = vmatpush.bf16.msra.mxu0 %v4431
    %4622 = vmatpush.bf16.msra.mxu0 %v4427
    %4623 = vmatpush.bf16.msra.mxu0 %v4423
    %4624 = vmatpush.bf16.msra.mxu0 %v4419
    %4625 = vmatpush.bf16.msra.mxu0 %v4415
    %4626 = vmatpush.bf16.msra.mxu0 %v4411
    %4627 = vmatmul.bf16.gmra.mxu0 %v3162
    %v4628 = vpop.f32.mrf.mxu0
    %v4629 = vadd.f32 0.0, %v4628
    %v4630 = vpop.f32.mrf.mxu0
    %v4631 = vadd.f32 0.0, %v4630
    %4632 = vmatmul.bf16.gmra.mxu0 %v3163
    %v4633 = vpop.f32.mrf.mxu0
    %v4634 = vadd.f32 0.0, %v4633
    %v4635 = vpop.f32.mrf.mxu0
    %v4636 = vadd.f32 0.0, %v4635
    %4637 = vmatmul.bf16.gmra.mxu0 %v3164
    %v4638 = vpop.f32.mrf.mxu0
    %v4639 = vadd.f32 0.0, %v4638
    %v4640 = vpop.f32.mrf.mxu0
    %v4641 = vadd.f32 0.0, %v4640
    %4642 = vmatmul.bf16.gmra.mxu0 %v3165
    %v4643 = vpop.f32.mrf.mxu0
    %v4644 = vadd.f32 0.0, %v4643
    %v4645 = vpop.f32.mrf.mxu0
    %v4646 = vadd.f32 0.0, %v4645
    %4647 = vmatmul.bf16.gmra.mxu0 %v3166
    %v4648 = vpop.f32.mrf.mxu0
    %v4649 = vadd.f32 0.0, %v4648
    %v4650 = vpop.f32.mrf.mxu0
    %v4651 = vadd.f32 0.0, %v4650
    %4652 = vmatmul.bf16.gmra.mxu0 %v3167
    %v4653 = vpop.f32.mrf.mxu0
    %v4654 = vadd.f32 0.0, %v4653
    %v4655 = vpop.f32.mrf.mxu0
    %v4656 = vadd.f32 0.0, %v4655
    %4657 = vmatmul.bf16.gmra.mxu0 %v3168
    %v4658 = vpop.f32.mrf.mxu0
    %v4659 = vadd.f32 0.0, %v4658
    %v4660 = vpop.f32.mrf.mxu0
    %v4661 = vadd.f32 0.0, %v4660
    %4662 = vmatmul.bf16.gmra.mxu0 %v3169
    %v4663 = vpop.f32.mrf.mxu0
    %v4664 = vadd.f32 0.0, %v4663
    %v4665 = vpop.f32.mrf.mxu0
    %v4666 = vadd.f32 0.0, %v4665
    %4667 = vmatmul.bf16.gmra.mxu0 %v3170
    %v4668 = vpop.f32.mrf.mxu0
    %v4669 = vadd.f32 0.0, %v4668
    %v4670 = vpop.f32.mrf.mxu0
    %v4671 = vadd.f32 0.0, %v4670
    %4672 = vmatmul.bf16.gmra.mxu0 %v3171
    %v4673 = vpop.f32.mrf.mxu0
    %v4674 = vadd.f32 0.0, %v4673
    %v4675 = vpop.f32.mrf.mxu0
    %v4676 = vadd.f32 0.0, %v4675
    %4677 = vmatmul.bf16.gmra.mxu0 %v3172
    %v4678 = vpop.f32.mrf.mxu0
    %v4679 = vadd.f32 0.0, %v4678
    %v4680 = vpop.f32.mrf.mxu0
    %v4681 = vadd.f32 0.0, %v4680
    %4682 = vmatmul.bf16.gmra.mxu0 %v3173
    %v4683 = vpop.f32.mrf.mxu0
    %v4684 = vadd.f32 0.0, %v4683
    %v4685 = vpop.f32.mrf.mxu0
    %v4686 = vadd.f32 0.0, %v4685
    %4687 = vmatmul.bf16.gmra.mxu0 %v3174
    %v4688 = vpop.f32.mrf.mxu0
    %v4689 = vadd.f32 0.0, %v4688
    %v4690 = vpop.f32.mrf.mxu0
    %v4691 = vadd.f32 0.0, %v4690
    %4692 = vmatmul.bf16.gmra.mxu0 %v3175
    %v4693 = vpop.f32.mrf.mxu0
    %v4694 = vadd.f32 0.0, %v4693
    %v4695 = vpop.f32.mrf.mxu0
    %v4696 = vadd.f32 0.0, %v4695
    %4697 = vmatmul.bf16.gmra.mxu0 %v3176
    %v4698 = vpop.f32.mrf.mxu0
    %v4699 = vadd.f32 0.0, %v4698
    %v4700 = vpop.f32.mrf.mxu0
    %v4701 = vadd.f32 0.0, %v4700
    %4702 = vmatmul.bf16.gmra.mxu0 %v3177
    %v4703 = vpop.f32.mrf.mxu0
    %v4704 = vadd.f32 0.0, %v4703
    %v4705 = vpop.f32.mrf.mxu0
    %v4706 = vadd.f32 0.0, %v4705
    %4707 = vdwg.mxu0
    %4708 = vmatpush.bf16.msra.mxu0 %v4440
    %4709 = vmatpush.bf16.msra.mxu0 %v4436
    %4710 = vmatpush.bf16.msra.mxu0 %v4432
    %4711 = vmatpush.bf16.msra.mxu0 %v4428
    %4712 = vmatpush.bf16.msra.mxu0 %v4424
    %4713 = vmatpush.bf16.msra.mxu0 %v4420
    %4714 = vmatpush.bf16.msra.mxu0 %v4416
    %4715 = vmatpush.bf16.msra.mxu0 %v4412
    %4716 = vmatmul.bf16.gmra.mxu0 %v3162
    %v4717 = vpop.f32.mrf.mxu0
    %v4718 = vadd.f32 0.0, %v4717
    %v4719 = vpop.f32.mrf.mxu0
    %v4720 = vadd.f32 0.0, %v4719
    %4721 = vmatmul.bf16.gmra.mxu0 %v3163
    %v4722 = vpop.f32.mrf.mxu0
    %v4723 = vadd.f32 0.0, %v4722
    %v4724 = vpop.f32.mrf.mxu0
    %v4725 = vadd.f32 0.0, %v4724
    %4726 = vmatmul.bf16.gmra.mxu0 %v3164
    %v4727 = vpop.f32.mrf.mxu0
    %v4728 = vadd.f32 0.0, %v4727
    %v4729 = vpop.f32.mrf.mxu0
    %v4730 = vadd.f32 0.0, %v4729
    %4731 = vmatmul.bf16.gmra.mxu0 %v3165
    %v4732 = vpop.f32.mrf.mxu0
    %v4733 = vadd.f32 0.0, %v4732
    %v4734 = vpop.f32.mrf.mxu0
    %v4735 = vadd.f32 0.0, %v4734
    %4736 = vmatmul.bf16.gmra.mxu0 %v3166
    %v4737 = vpop.f32.mrf.mxu0
    %v4738 = vadd.f32 0.0, %v4737
    %v4739 = vpop.f32.mrf.mxu0
    %v4740 = vadd.f32 0.0, %v4739
    %4741 = vmatmul.bf16.gmra.mxu0 %v3167
    %v4742 = vpop.f32.mrf.mxu0
    %v4743 = vadd.f32 0.0, %v4742
    %v4744 = vpop.f32.mrf.mxu0
    %v4745 = vadd.f32 0.0, %v4744
    %4746 = vmatmul.bf16.gmra.mxu0 %v3168
    %v4747 = vpop.f32.mrf.mxu0
    %v4748 = vadd.f32 0.0, %v4747
    %v4749 = vpop.f32.mrf.mxu0
    %v4750 = vadd.f32 0.0, %v4749
    %4751 = vmatmul.bf16.gmra.mxu0 %v3169
    %v4752 = vpop.f32.mrf.mxu0
    %v4753 = vadd.f32 0.0, %v4752
    %v4754 = vpop.f32.mrf.mxu0
    %v4755 = vadd.f32 0.0, %v4754
    %4756 = vmatmul.bf16.gmra.mxu0 %v3170
    %v4757 = vpop.f32.mrf.mxu0
    %v4758 = vadd.f32 0.0, %v4757
    %v4759 = vpop.f32.mrf.mxu0
    %v4760 = vadd.f32 0.0, %v4759
    %4761 = vmatmul.bf16.gmra.mxu0 %v3171
    %v4762 = vpop.f32.mrf.mxu0
    %v4763 = vadd.f32 0.0, %v4762
    %v4764 = vpop.f32.mrf.mxu0
    %v4765 = vadd.f32 0.0, %v4764
    %4766 = vmatmul.bf16.gmra.mxu0 %v3172
    %v4767 = vpop.f32.mrf.mxu0
    %v4768 = vadd.f32 0.0, %v4767
    %v4769 = vpop.f32.mrf.mxu0
    %v4770 = vadd.f32 0.0, %v4769
    %4771 = vmatmul.bf16.gmra.mxu0 %v3173
    %v4772 = vpop.f32.mrf.mxu0
    %v4773 = vadd.f32 0.0, %v4772
    %v4774 = vpop.f32.mrf.mxu0
    %v4775 = vadd.f32 0.0, %v4774
    %4776 = vmatmul.bf16.gmra.mxu0 %v3174
    %v4777 = vpop.f32.mrf.mxu0
    %v4778 = vadd.f32 0.0, %v4777
    %v4779 = vpop.f32.mrf.mxu0
    %v4780 = vadd.f32 0.0, %v4779
    %4781 = vmatmul.bf16.gmra.mxu0 %v3175
    %v4782 = vpop.f32.mrf.mxu0
    %v4783 = vadd.f32 0.0, %v4782
    %v4784 = vpop.f32.mrf.mxu0
    %v4785 = vadd.f32 0.0, %v4784
    %4786 = vmatmul.bf16.gmra.mxu0 %v3176
    %v4787 = vpop.f32.mrf.mxu0
    %v4788 = vadd.f32 0.0, %v4787
    %v4789 = vpop.f32.mrf.mxu0
    %v4790 = vadd.f32 0.0, %v4789
    %4791 = vmatmul.bf16.gmra.mxu0 %v3177
    %v4792 = vpop.f32.mrf.mxu0
    %v4793 = vadd.f32 0.0, %v4792
    %v4794 = vpop.f32.mrf.mxu0
    %v4795 = vadd.f32 0.0, %v4794
    %4796 = vdwg.mxu0
    %v4797 = vmul.f32 %v4451, %v2249
    %v4798 = vmul.f32 %v4540, %v2250
    %v4799 = vmul.f32 %v4629, %v2251
    %v4800 = vmul.f32 %v4718, %v2252
    %v4801 = vmul.f32 %v4453, %v2265
    %v4802 = vmul.f32 %v4542, %v2266
    %v4803 = vmul.f32 %v4631, %v2267
    %v4804 = vmul.f32 %v4720, %v2268
    %v4805 = vmul.f32 %v4456, %v2281
    %v4806 = vmul.f32 %v4545, %v2282
    %v4807 = vmul.f32 %v4634, %v2283
    %v4808 = vmul.f32 %v4723, %v2284
    %v4809 = vmul.f32 %v4458, %v2297
    %v4810 = vmul.f32 %v4547, %v2298
    %v4811 = vmul.f32 %v4636, %v2299
    %v4812 = vmul.f32 %v4725, %v2300
    %v4813 = vmul.f32 %v4461, %v2313
    %v4814 = vmul.f32 %v4550, %v2314
    %v4815 = vmul.f32 %v4639, %v2315
    %v4816 = vmul.f32 %v4728, %v2316
    %v4817 = vmul.f32 %v4463, %v2329
    %v4818 = vmul.f32 %v4552, %v2330
    %v4819 = vmul.f32 %v4641, %v2331
    %v4820 = vmul.f32 %v4730, %v2332
    %v4821 = vmul.f32 %v4466, %v2345
    %v4822 = vmul.f32 %v4555, %v2346
    %v4823 = vmul.f32 %v4644, %v2347
    %v4824 = vmul.f32 %v4733, %v2348
    %v4825 = vmul.f32 %v4468, %v2361
    %v4826 = vmul.f32 %v4557, %v2362
    %v4827 = vmul.f32 %v4646, %v2363
    %v4828 = vmul.f32 %v4735, %v2364
    %v4829 = vmul.f32 %v4471, %v2377
    %v4830 = vmul.f32 %v4560, %v2378
    %v4831 = vmul.f32 %v4649, %v2379
    %v4832 = vmul.f32 %v4738, %v2380
    %v4833 = vmul.f32 %v4473, %v2393
    %v4834 = vmul.f32 %v4562, %v2394
    %v4835 = vmul.f32 %v4651, %v2395
    %v4836 = vmul.f32 %v4740, %v2396
    %v4837 = vmul.f32 %v4476, %v2409
    %v4838 = vmul.f32 %v4565, %v2410
    %v4839 = vmul.f32 %v4654, %v2411
    %v4840 = vmul.f32 %v4743, %v2412
    %v4841 = vmul.f32 %v4478, %v2425
    %v4842 = vmul.f32 %v4567, %v2426
    %v4843 = vmul.f32 %v4656, %v2427
    %v4844 = vmul.f32 %v4745, %v2428
    %v4845 = vmul.f32 %v4481, %v2441
    %v4846 = vmul.f32 %v4570, %v2442
    %v4847 = vmul.f32 %v4659, %v2443
    %v4848 = vmul.f32 %v4748, %v2444
    %v4849 = vmul.f32 %v4483, %v2457
    %v4850 = vmul.f32 %v4572, %v2458
    %v4851 = vmul.f32 %v4661, %v2459
    %v4852 = vmul.f32 %v4750, %v2460
    %v4853 = vmul.f32 %v4486, %v2473
    %v4854 = vmul.f32 %v4575, %v2474
    %v4855 = vmul.f32 %v4664, %v2475
    %v4856 = vmul.f32 %v4753, %v2476
    %v4857 = vmul.f32 %v4488, %v2489
    %v4858 = vmul.f32 %v4577, %v2490
    %v4859 = vmul.f32 %v4666, %v2491
    %v4860 = vmul.f32 %v4755, %v2492
    %v4861 = vmul.f32 %v4491, %v2505
    %v4862 = vmul.f32 %v4580, %v2506
    %v4863 = vmul.f32 %v4669, %v2507
    %v4864 = vmul.f32 %v4758, %v2508
    %v4865 = vmul.f32 %v4493, %v2521
    %v4866 = vmul.f32 %v4582, %v2522
    %v4867 = vmul.f32 %v4671, %v2523
    %v4868 = vmul.f32 %v4760, %v2524
    %v4869 = vmul.f32 %v4496, %v2537
    %v4870 = vmul.f32 %v4585, %v2538
    %v4871 = vmul.f32 %v4674, %v2539
    %v4872 = vmul.f32 %v4763, %v2540
    %v4873 = vmul.f32 %v4498, %v2553
    %v4874 = vmul.f32 %v4587, %v2554
    %v4875 = vmul.f32 %v4676, %v2555
    %v4876 = vmul.f32 %v4765, %v2556
    %v4877 = vmul.f32 %v4501, %v2569
    %v4878 = vmul.f32 %v4590, %v2570
    %v4879 = vmul.f32 %v4679, %v2571
    %v4880 = vmul.f32 %v4768, %v2572
    %v4881 = vmul.f32 %v4503, %v2585
    %v4882 = vmul.f32 %v4592, %v2586
    %v4883 = vmul.f32 %v4681, %v2587
    %v4884 = vmul.f32 %v4770, %v2588
    %v4885 = vmul.f32 %v4506, %v2601
    %v4886 = vmul.f32 %v4595, %v2602
    %v4887 = vmul.f32 %v4684, %v2603
    %v4888 = vmul.f32 %v4773, %v2604
    %v4889 = vmul.f32 %v4508, %v2617
    %v4890 = vmul.f32 %v4597, %v2618
    %v4891 = vmul.f32 %v4686, %v2619
    %v4892 = vmul.f32 %v4775, %v2620
    %v4893 = vmul.f32 %v4511, %v2633
    %v4894 = vmul.f32 %v4600, %v2634
    %v4895 = vmul.f32 %v4689, %v2635
    %v4896 = vmul.f32 %v4778, %v2636
    %v4897 = vmul.f32 %v4513, %v2649
    %v4898 = vmul.f32 %v4602, %v2650
    %v4899 = vmul.f32 %v4691, %v2651
    %v4900 = vmul.f32 %v4780, %v2652
    %v4901 = vmul.f32 %v4516, %v2665
    %v4902 = vmul.f32 %v4605, %v2666
    %v4903 = vmul.f32 %v4694, %v2667
    %v4904 = vmul.f32 %v4783, %v2668
    %v4905 = vmul.f32 %v4518, %v2681
    %v4906 = vmul.f32 %v4607, %v2682
    %v4907 = vmul.f32 %v4696, %v2683
    %v4908 = vmul.f32 %v4785, %v2684
    %v4909 = vmul.f32 %v4521, %v2697
    %v4910 = vmul.f32 %v4610, %v2698
    %v4911 = vmul.f32 %v4699, %v2699
    %v4912 = vmul.f32 %v4788, %v2700
    %v4913 = vmul.f32 %v4523, %v2713
    %v4914 = vmul.f32 %v4612, %v2714
    %v4915 = vmul.f32 %v4701, %v2715
    %v4916 = vmul.f32 %v4790, %v2716
    %v4917 = vmul.f32 %v4526, %v2729
    %v4918 = vmul.f32 %v4615, %v2730
    %v4919 = vmul.f32 %v4704, %v2731
    %v4920 = vmul.f32 %v4793, %v2732
    %v4921 = vmul.f32 %v4528, %v2745
    %v4922 = vmul.f32 %v4617, %v2746
    %v4923 = vmul.f32 %v4706, %v2747
    %v4924 = vmul.f32 %v4795, %v2748
    %v4925 = vadd.f32 %v4797, %v4798
    %v4926 = vadd.f32 %v4801, %v4802
    %v4927 = vadd.f32 %v4805, %v4806
    %v4928 = vadd.f32 %v4809, %v4810
    %v4929 = vadd.f32 %v4813, %v4814
    %v4930 = vadd.f32 %v4817, %v4818
    %v4931 = vadd.f32 %v4821, %v4822
    %v4932 = vadd.f32 %v4825, %v4826
    %v4933 = vadd.f32 %v4829, %v4830
    %v4934 = vadd.f32 %v4833, %v4834
    %v4935 = vadd.f32 %v4837, %v4838
    %v4936 = vadd.f32 %v4841, %v4842
    %v4937 = vadd.f32 %v4845, %v4846
    %v4938 = vadd.f32 %v4849, %v4850
    %v4939 = vadd.f32 %v4853, %v4854
    %v4940 = vadd.f32 %v4857, %v4858
    %v4941 = vadd.f32 %v4861, %v4862
    %v4942 = vadd.f32 %v4865, %v4866
    %v4943 = vadd.f32 %v4869, %v4870
    %v4944 = vadd.f32 %v4873, %v4874
    %v4945 = vadd.f32 %v4877, %v4878
    %v4946 = vadd.f32 %v4881, %v4882
    %v4947 = vadd.f32 %v4885, %v4886
    %v4948 = vadd.f32 %v4889, %v4890
    %v4949 = vadd.f32 %v4893, %v4894
    %v4950 = vadd.f32 %v4897, %v4898
    %v4951 = vadd.f32 %v4901, %v4902
    %v4952 = vadd.f32 %v4905, %v4906
    %v4953 = vadd.f32 %v4909, %v4910
    %v4954 = vadd.f32 %v4913, %v4914
    %v4955 = vadd.f32 %v4917, %v4918
    %v4956 = vadd.f32 %v4921, %v4922
    %v4957 = vadd.f32 %v4799, %v4800
    %v4958 = vadd.f32 %v4803, %v4804
    %v4959 = vadd.f32 %v4807, %v4808
    %v4960 = vadd.f32 %v4811, %v4812
    %v4961 = vadd.f32 %v4815, %v4816
    %v4962 = vadd.f32 %v4819, %v4820
    %v4963 = vadd.f32 %v4823, %v4824
    %v4964 = vadd.f32 %v4827, %v4828
    %v4965 = vadd.f32 %v4831, %v4832
    %v4966 = vadd.f32 %v4835, %v4836
    %v4967 = vadd.f32 %v4839, %v4840
    %v4968 = vadd.f32 %v4843, %v4844
    %v4969 = vadd.f32 %v4847, %v4848
    %v4970 = vadd.f32 %v4851, %v4852
    %v4971 = vadd.f32 %v4855, %v4856
    %v4972 = vadd.f32 %v4859, %v4860
    %v4973 = vadd.f32 %v4863, %v4864
    %v4974 = vadd.f32 %v4867, %v4868
    %v4975 = vadd.f32 %v4871, %v4872
    %v4976 = vadd.f32 %v4875, %v4876
    %v4977 = vadd.f32 %v4879, %v4880
    %v4978 = vadd.f32 %v4883, %v4884
    %v4979 = vadd.f32 %v4887, %v4888
    %v4980 = vadd.f32 %v4891, %v4892
    %v4981 = vadd.f32 %v4895, %v4896
    %v4982 = vadd.f32 %v4899, %v4900
    %v4983 = vadd.f32 %v4903, %v4904
    %v4984 = vadd.f32 %v4907, %v4908
    %v4985 = vadd.f32 %v4911, %v4912
    %v4986 = vadd.f32 %v4915, %v4916
    %v4987 = vadd.f32 %v4919, %v4920
    %v4988 = vadd.f32 %v4923, %v4924
    %v4989 = vadd.f32 %v4925, %v4957
    %v4990 = vadd.f32 %v4926, %v4958
    %v4991 = vadd.f32 %v4927, %v4959
    %v4992 = vadd.f32 %v4928, %v4960
    %v4993 = vadd.f32 %v4929, %v4961
    %v4994 = vadd.f32 %v4930, %v4962
    %v4995 = vadd.f32 %v4931, %v4963
    %v4996 = vadd.f32 %v4932, %v4964
    %v4997 = vadd.f32 %v4933, %v4965
    %v4998 = vadd.f32 %v4934, %v4966
    %v4999 = vadd.f32 %v4935, %v4967
    %v5000 = vadd.f32 %v4936, %v4968
    %v5001 = vadd.f32 %v4937, %v4969
    %v5002 = vadd.f32 %v4938, %v4970
    %v5003 = vadd.f32 %v4939, %v4971
    %v5004 = vadd.f32 %v4940, %v4972
    %v5005 = vadd.f32 %v4941, %v4973
    %v5006 = vadd.f32 %v4942, %v4974
    %v5007 = vadd.f32 %v4943, %v4975
    %v5008 = vadd.f32 %v4944, %v4976
    %v5009 = vadd.f32 %v4945, %v4977
    %v5010 = vadd.f32 %v4946, %v4978
    %v5011 = vadd.f32 %v4947, %v4979
    %v5012 = vadd.f32 %v4948, %v4980
    %v5013 = vadd.f32 %v4949, %v4981
    %v5014 = vadd.f32 %v4950, %v4982
    %v5015 = vadd.f32 %v4951, %v4983
    %v5016 = vadd.f32 %v4952, %v4984
    %v5017 = vadd.f32 %v4953, %v4985
    %v5018 = vadd.f32 %v4954, %v4986
    %v5019 = vadd.f32 %v4955, %v4987
    %v5020 = vadd.f32 %v4956, %v4988
    %v5021 = vpack.c.bf16 %v4990, %v4989
    %v5022 = vpack.c.bf16 %v4992, %v4991
    %v5023 = vpack.c.bf16 %v4994, %v4993
    %v5024 = vpack.c.bf16 %v4996, %v4995
    %v5025 = vpack.c.bf16 %v4998, %v4997
    %v5026 = vpack.c.bf16 %v5000, %v4999
    %v5027 = vpack.c.bf16 %v5002, %v5001
    %v5028 = vpack.c.bf16 %v5004, %v5003
    %v5029 = vpack.c.bf16 %v5006, %v5005
    %v5030 = vpack.c.bf16 %v5008, %v5007
    %v5031 = vpack.c.bf16 %v5010, %v5009
    %v5032 = vpack.c.bf16 %v5012, %v5011
    %v5033 = vpack.c.bf16 %v5014, %v5013
    %v5034 = vpack.c.bf16 %v5016, %v5015
    %v5035 = vpack.c.bf16 %v5018, %v5017
    %v5036 = vpack.c.bf16 %v5020, %v5019
    %5037 = vmatpush.bf16.msra.mxu0 %v5028
    %5038 = vmatpush.bf16.msra.mxu0 %v5027
    %5039 = vmatpush.bf16.msra.mxu0 %v5026
    %5040 = vmatpush.bf16.msra.mxu0 %v5025
    %5041 = vmatpush.bf16.msra.mxu0 %v5024
    %5042 = vmatpush.bf16.msra.mxu0 %v5023
    %5043 = vmatpush.bf16.msra.mxu0 %v5022
    %5044 = vmatpush.bf16.msra.mxu0 %v5021
    %5045 = vmatmul.bf16.gmra.mxu0 %v3838
    %v5046 = vpop.f32.mrf.mxu0
    %v5047 = vadd.f32 0.0, %v5046
    %v5048 = vpop.f32.mrf.mxu0
    %v5049 = vadd.f32 0.0, %v5048
    %5050 = vmatmul.bf16.gmra.mxu0 %v3840
    %v5051 = vpop.f32.mrf.mxu0
    %v5052 = vadd.f32 0.0, %v5051
    %v5053 = vpop.f32.mrf.mxu0
    %v5054 = vadd.f32 0.0, %v5053
    %5055 = vmatmul.bf16.gmra.mxu0 %v3842
    %v5056 = vpop.f32.mrf.mxu0
    %v5057 = vadd.f32 0.0, %v5056
    %v5058 = vpop.f32.mrf.mxu0
    %v5059 = vadd.f32 0.0, %v5058
    %5060 = vmatmul.bf16.gmra.mxu0 %v3844
    %v5061 = vpop.f32.mrf.mxu0
    %v5062 = vadd.f32 0.0, %v5061
    %v5063 = vpop.f32.mrf.mxu0
    %v5064 = vadd.f32 0.0, %v5063
    %5065 = vmatmul.bf16.gmra.mxu0 %v3846
    %v5066 = vpop.f32.mrf.mxu0
    %v5067 = vadd.f32 0.0, %v5066
    %v5068 = vpop.f32.mrf.mxu0
    %v5069 = vadd.f32 0.0, %v5068
    %5070 = vmatmul.bf16.gmra.mxu0 %v3848
    %v5071 = vpop.f32.mrf.mxu0
    %v5072 = vadd.f32 0.0, %v5071
    %v5073 = vpop.f32.mrf.mxu0
    %v5074 = vadd.f32 0.0, %v5073
    %5075 = vmatmul.bf16.gmra.mxu0 %v3850
    %v5076 = vpop.f32.mrf.mxu0
    %v5077 = vadd.f32 0.0, %v5076
    %v5078 = vpop.f32.mrf.mxu0
    %v5079 = vadd.f32 0.0, %v5078
    %5080 = vmatmul.bf16.gmra.mxu0 %v3852
    %v5081 = vpop.f32.mrf.mxu0
    %v5082 = vadd.f32 0.0, %v5081
    %v5083 = vpop.f32.mrf.mxu0
    %v5084 = vadd.f32 0.0, %v5083
    %5085 = vdwg.mxu0
    %5086 = vmatpush.bf16.msra.mxu0 %v5036
    %5087 = vmatpush.bf16.msra.mxu0 %v5035
    %5088 = vmatpush.bf16.msra.mxu0 %v5034
    %5089 = vmatpush.bf16.msra.mxu0 %v5033
    %5090 = vmatpush.bf16.msra.mxu0 %v5032
    %5091 = vmatpush.bf16.msra.mxu0 %v5031
    %5092 = vmatpush.bf16.msra.mxu0 %v5030
    %5093 = vmatpush.bf16.msra.mxu0 %v5029
    %5094 = vmatmul.bf16.gmra.mxu0 %v3839
    %v5095 = vpop.f32.mrf.mxu0
    %v5096 = vadd.f32 %v5047, %v5095
    %v5097 = vpop.f32.mrf.mxu0
    %v5098 = vadd.f32 %v5049, %v5097
    %5099 = vmatmul.bf16.gmra.mxu0 %v3841
    %v5100 = vpop.f32.mrf.mxu0
    %v5101 = vadd.f32 %v5052, %v5100
    %v5102 = vpop.f32.mrf.mxu0
    %v5103 = vadd.f32 %v5054, %v5102
    %5104 = vmatmul.bf16.gmra.mxu0 %v3843
    %v5105 = vpop.f32.mrf.mxu0
    %v5106 = vadd.f32 %v5057, %v5105
    %v5107 = vpop.f32.mrf.mxu0
    %v5108 = vadd.f32 %v5059, %v5107
    %5109 = vmatmul.bf16.gmra.mxu0 %v3845
    %v5110 = vpop.f32.mrf.mxu0
    %v5111 = vadd.f32 %v5062, %v5110
    %v5112 = vpop.f32.mrf.mxu0
    %v5113 = vadd.f32 %v5064, %v5112
    %5114 = vmatmul.bf16.gmra.mxu0 %v3847
    %v5115 = vpop.f32.mrf.mxu0
    %v5116 = vadd.f32 %v5067, %v5115
    %v5117 = vpop.f32.mrf.mxu0
    %v5118 = vadd.f32 %v5069, %v5117
    %5119 = vmatmul.bf16.gmra.mxu0 %v3849
    %v5120 = vpop.f32.mrf.mxu0
    %v5121 = vadd.f32 %v5072, %v5120
    %v5122 = vpop.f32.mrf.mxu0
    %v5123 = vadd.f32 %v5074, %v5122
    %5124 = vmatmul.bf16.gmra.mxu0 %v3851
    %v5125 = vpop.f32.mrf.mxu0
    %v5126 = vadd.f32 %v5077, %v5125
    %v5127 = vpop.f32.mrf.mxu0
    %v5128 = vadd.f32 %v5079, %v5127
    %5129 = vmatmul.bf16.gmra.mxu0 %v3853
    %v5130 = vpop.f32.mrf.mxu0
    %v5131 = vadd.f32 %v5082, %v5130
    %v5132 = vpop.f32.mrf.mxu0
    %v5133 = vadd.f32 %v5084, %v5132
    %5134 = vdwg.mxu0
    %s5135 = scalar_lea.vmem [#allocation11], 2
    %v5136 = vld [vmem:[%s5135] sm:$0x3]
    %s5137 = scalar_lea.vmem %s7, 8
    %v5138 = vld [vmem:[%s5137] sm:$0xff]
    %5139 = vmatpush.msra.mxu0 0.0
    %5140 = vmatpush.msra.mxu0 0.0
    %5141 = vmatpush.msra.mxu0 0.0
    %5142 = vmatpush.msra.mxu0 0.0
    %5143 = vmatpush.msra.mxu0 0.0
    %5144 = vmatpush.msra.mxu0 0.0
    %5145 = vmatpush.msra.mxu0 0.0
    %5146 = vmatpush.msra.mxu0 0.0
    %5147 = vmatpush.msra.mxu0 0.0
    %5148 = vmatpush.msra.mxu0 0.0
    %5149 = vmatpush.msra.mxu0 0.0
    %5150 = vmatpush.msra.mxu0 0.0
    %5151 = vmatpush.msra.mxu0 0.0
    %5152 = vmatpush.msra.mxu0 0.0
    %5153 = vmatpush.msra.mxu0 0.0
    %5154 = vmatpush.msra.mxu0 %v5138
    %5155 = vmatmul.f32.gmra.mxu0 %v4102
    %v5156 = vpop.f32.mrf.mxu0
    %v5157 = vadd.f32 %v5096, %v5156
    %5158 = vmatmul.f32.gmra.mxu0 %v4105
    %v5159 = vpop.f32.mrf.mxu0
    %v5160 = vadd.f32 %v5098, %v5159
    %5161 = vmatmul.f32.gmra.mxu0 %v4108
    %v5162 = vpop.f32.mrf.mxu0
    %v5163 = vadd.f32 %v5101, %v5162
    %5164 = vmatmul.f32.gmra.mxu0 %v4111
    %v5165 = vpop.f32.mrf.mxu0
    %v5166 = vadd.f32 %v5103, %v5165
    %5167 = vmatmul.f32.gmra.mxu0 %v4114
    %v5168 = vpop.f32.mrf.mxu0
    %v5169 = vadd.f32 %v5106, %v5168
    %5170 = vmatmul.f32.gmra.mxu0 %v4117
    %v5171 = vpop.f32.mrf.mxu0
    %v5172 = vadd.f32 %v5108, %v5171
    %5173 = vmatmul.f32.gmra.mxu0 %v4120
    %v5174 = vpop.f32.mrf.mxu0
    %v5175 = vadd.f32 %v5111, %v5174
    %5176 = vmatmul.f32.gmra.mxu0 %v4123
    %v5177 = vpop.f32.mrf.mxu0
    %v5178 = vadd.f32 %v5113, %v5177
    %5179 = vmatmul.f32.gmra.mxu0 %v4126
    %v5180 = vpop.f32.mrf.mxu0
    %v5181 = vadd.f32 %v5116, %v5180
    %5182 = vmatmul.f32.gmra.mxu0 %v4129
    %v5183 = vpop.f32.mrf.mxu0
    %v5184 = vadd.f32 %v5118, %v5183
    %5185 = vmatmul.f32.gmra.mxu0 %v4132
    %v5186 = vpop.f32.mrf.mxu0
    %v5187 = vadd.f32 %v5121, %v5186
    %5188 = vmatmul.f32.gmra.mxu0 %v4135
    %v5189 = vpop.f32.mrf.mxu0
    %v5190 = vadd.f32 %v5123, %v5189
    %5191 = vmatmul.f32.gmra.mxu0 %v4138
    %v5192 = vpop.f32.mrf.mxu0
    %v5193 = vadd.f32 %v5126, %v5192
    %5194 = vmatmul.f32.gmra.mxu0 %v4141
    %v5195 = vpop.f32.mrf.mxu0
    %v5196 = vadd.f32 %v5128, %v5195
    %5197 = vmatmul.f32.gmra.mxu0 %v4144
    %v5198 = vpop.f32.mrf.mxu0
    %v5199 = vadd.f32 %v5131, %v5198
    %5200 = vmatmul.f32.gmra.mxu0 %v4147
    %v5201 = vpop.f32.mrf.mxu0
    %v5202 = vadd.f32 %v5133, %v5201
    %5203 = vdwg.mxu0
    %v5204 = vperm.slane %v5136, 0
    %v5205 = vmul.f32 %v5157, %v5204
    %v5206 = vmul.f32 %v5160, %v5204
    %v5207 = vmul.f32 %v5163, %v5204
    %v5208 = vmul.f32 %v5166, %v5204
    %v5209 = vmul.f32 %v5169, %v5204
    %v5210 = vmul.f32 %v5172, %v5204
    %v5211 = vmul.f32 %v5175, %v5204
    %v5212 = vmul.f32 %v5178, %v5204
    %v5213 = vmul.f32 %v5181, %v5204
    %v5214 = vmul.f32 %v5184, %v5204
    %v5215 = vmul.f32 %v5187, %v5204
    %v5216 = vmul.f32 %v5190, %v5204
    %v5217 = vmul.f32 %v5193, %v5204
    %v5218 = vmul.f32 %v5196, %v5204
    %v5219 = vmul.f32 %v5199, %v5204
    %v5220 = vmul.f32 %v5202, %v5204
    %v5221 = vperm.slane %v5136, 1
    %v5222 = vadd.f32 %v5205, %v5221
    %v5223 = vadd.f32 %v5206, %v5221
    %v5224 = vadd.f32 %v5207, %v5221
    %v5225 = vadd.f32 %v5208, %v5221
    %v5226 = vadd.f32 %v5209, %v5221
    %v5227 = vadd.f32 %v5210, %v5221
    %v5228 = vadd.f32 %v5211, %v5221
    %v5229 = vadd.f32 %v5212, %v5221
    %v5230 = vadd.f32 %v5213, %v5221
    %v5231 = vadd.f32 %v5214, %v5221
    %v5232 = vadd.f32 %v5215, %v5221
    %v5233 = vadd.f32 %v5216, %v5221
    %v5234 = vadd.f32 %v5217, %v5221
    %v5235 = vadd.f32 %v5218, %v5221
    %v5236 = vadd.f32 %v5219, %v5221
    %v5237 = vadd.f32 %v5220, %v5221
    %v5238 = vmax.f32 %v5222, 0.0
    %v5239 = vmax.f32 %v5223, 0.0
    %v5240 = vmax.f32 %v5224, 0.0
    %v5241 = vmax.f32 %v5225, 0.0
    %v5242 = vmax.f32 %v5226, 0.0
    %v5243 = vmax.f32 %v5227, 0.0
    %v5244 = vmax.f32 %v5228, 0.0
    %v5245 = vmax.f32 %v5229, 0.0
    %v5246 = vmax.f32 %v5230, 0.0
    %v5247 = vmax.f32 %v5231, 0.0
    %v5248 = vmax.f32 %v5232, 0.0
    %v5249 = vmax.f32 %v5233, 0.0
    %v5250 = vmax.f32 %v5234, 0.0
    %v5251 = vmax.f32 %v5235, 0.0
    %v5252 = vmax.f32 %v5236, 0.0
    %v5253 = vmax.f32 %v5237, 0.0
    %v5254 = vadd.f32 %v4085, %v5238
    %v5255 = vadd.f32 %v4086, %v5239
    %v5256 = vadd.f32 %v4087, %v5240
    %v5257 = vadd.f32 %v4088, %v5241
    %v5258 = vadd.f32 %v4089, %v5242
    %v5259 = vadd.f32 %v4090, %v5243
    %v5260 = vadd.f32 %v4091, %v5244
    %v5261 = vadd.f32 %v4092, %v5245
    %v5262 = vadd.f32 %v4093, %v5246
    %v5263 = vadd.f32 %v4094, %v5247
    %v5264 = vadd.f32 %v4095, %v5248
    %v5265 = vadd.f32 %v4096, %v5249
    %v5266 = vadd.f32 %v4097, %v5250
    %v5267 = vadd.f32 %v4098, %v5251
    %v5268 = vadd.f32 %v4099, %v5252
    %v5269 = vadd.f32 %v4100, %v5253
    %v5271 = vsel %vm2757, %v5254, 0
    %v5274 = vsel %vm2757, %v5255, 0
    %v5277 = vsel %vm2757, %v5256, 0
    %v5280 = vsel %vm2757, %v5257, 0
    %v5283 = vsel %vm2757, %v5258, 0
    %v5286 = vsel %vm2757, %v5259, 0
    %v5289 = vsel %vm2757, %v5260, 0
    %v5292 = vsel %vm2757, %v5261, 0
    %v5295 = vsel %vm2757, %v5262, 0
    %v5298 = vsel %vm2757, %v5263, 0
    %v5301 = vsel %vm2757, %v5264, 0
    %v5304 = vsel %vm2757, %v5265, 0
    %v5307 = vsel %vm2757, %v5266, 0
    %v5310 = vsel %vm2757, %v5267, 0
    %v5313 = vsel %vm2757, %v5268, 0
    %v5316 = vsel %vm2757, %v5269, 0
    %5318 = vmatpush.msra.mxu0 0.0
    %5319 = vmatpush.msra.mxu0 0.0
    %5320 = vmatpush.msra.mxu0 0.0
    %5321 = vmatpush.msra.mxu0 0.0
    %5322 = vmatpush.msra.mxu0 0.0
    %5323 = vmatpush.msra.mxu0 0.0
    %5324 = vmatpush.msra.mxu0 0.0
    %5325 = vmatpush.msra.mxu0 0.0
    %5326 = vmatpush.msra.mxu0 0.0
    %5327 = vmatpush.msra.mxu0 0.0
    %5328 = vmatpush.msra.mxu0 0.0
    %5329 = vmatpush.msra.mxu0 0.0
    %5330 = vmatpush.msra.mxu0 0.0
    %5331 = vmatpush.msra.mxu0 0.0
    %5332 = vmatpush.msra.mxu0 0.0
    %5333 = vmatpush.msra.mxu0 %v223
    %5334 = vmatmul.f32.gmra.mxu0 %v5271
    %v5335 = vpop.f32.mrf.mxu0
    %v5336 = vadd.f32 0.0, %v5335
    %5337 = vmatmul.f32.gmra.mxu0 %v5274
    %v5338 = vpop.f32.mrf.mxu0
    %v5339 = vadd.f32 0.0, %v5338
    %5340 = vmatmul.f32.gmra.mxu0 %v5277
    %v5341 = vpop.f32.mrf.mxu0
    %v5342 = vadd.f32 0.0, %v5341
    %5343 = vmatmul.f32.gmra.mxu0 %v5280
    %v5344 = vpop.f32.mrf.mxu0
    %v5345 = vadd.f32 0.0, %v5344
    %5346 = vmatmul.f32.gmra.mxu0 %v5283
    %v5347 = vpop.f32.mrf.mxu0
    %v5348 = vadd.f32 0.0, %v5347
    %5349 = vmatmul.f32.gmra.mxu0 %v5286
    %v5350 = vpop.f32.mrf.mxu0
    %v5351 = vadd.f32 0.0, %v5350
    %5352 = vmatmul.f32.gmra.mxu0 %v5289
    %v5353 = vpop.f32.mrf.mxu0
    %v5354 = vadd.f32 0.0, %v5353
    %5355 = vmatmul.f32.gmra.mxu0 %v5292
    %v5356 = vpop.f32.mrf.mxu0
    %v5357 = vadd.f32 0.0, %v5356
    %5358 = vmatmul.f32.gmra.mxu0 %v5295
    %v5359 = vpop.f32.mrf.mxu0
    %v5360 = vadd.f32 0.0, %v5359
    %5361 = vmatmul.f32.gmra.mxu0 %v5298
    %v5362 = vpop.f32.mrf.mxu0
    %v5363 = vadd.f32 0.0, %v5362
    %5364 = vmatmul.f32.gmra.mxu0 %v5301
    %v5365 = vpop.f32.mrf.mxu0
    %v5366 = vadd.f32 0.0, %v5365
    %5367 = vmatmul.f32.gmra.mxu0 %v5304
    %v5368 = vpop.f32.mrf.mxu0
    %v5369 = vadd.f32 0.0, %v5368
    %5370 = vmatmul.f32.gmra.mxu0 %v5307
    %v5371 = vpop.f32.mrf.mxu0
    %v5372 = vadd.f32 0.0, %v5371
    %5373 = vmatmul.f32.gmra.mxu0 %v5310
    %v5374 = vpop.f32.mrf.mxu0
    %v5375 = vadd.f32 0.0, %v5374
    %5376 = vmatmul.f32.gmra.mxu0 %v5313
    %v5377 = vpop.f32.mrf.mxu0
    %v5378 = vadd.f32 0.0, %v5377
    %5379 = vmatmul.f32.gmra.mxu0 %v5316
    %v5380 = vpop.f32.mrf.mxu0
    %v5381 = vadd.f32 0.0, %v5380
    %5382 = vdwg.mxu0
    %5383 = vmatpush.msra.mxu0 0.0
    %5384 = vmatpush.msra.mxu0 0.0
    %5385 = vmatpush.msra.mxu0 0.0
    %5386 = vmatpush.msra.mxu0 0.0
    %5387 = vmatpush.msra.mxu0 0.0
    %5388 = vmatpush.msra.mxu0 0.0
    %5389 = vmatpush.msra.mxu0 0.0
    %5390 = vmatpush.msra.mxu0 0.0
    %5391 = vmatpush.msra.mxu0 0.0
    %5392 = vmatpush.msra.mxu0 0.0
    %5393 = vmatpush.msra.mxu0 0.0
    %5394 = vmatpush.msra.mxu0 0.0
    %5395 = vmatpush.msra.mxu0 0.0
    %5396 = vmatpush.msra.mxu0 0.0
    %5397 = vmatpush.msra.mxu0 0.0
    %5398 = vmatpush.msra.mxu0 %v224
    %5399 = vmatmul.f32.gmra.mxu0 %v5271
    %v5400 = vpop.f32.mrf.mxu0
    %v5401 = vadd.f32 0.0, %v5400
    %5402 = vmatmul.f32.gmra.mxu0 %v5274
    %v5403 = vpop.f32.mrf.mxu0
    %v5404 = vadd.f32 0.0, %v5403
    %5405 = vmatmul.f32.gmra.mxu0 %v5277
    %v5406 = vpop.f32.mrf.mxu0
    %v5407 = vadd.f32 0.0, %v5406
    %5408 = vmatmul.f32.gmra.mxu0 %v5280
    %v5409 = vpop.f32.mrf.mxu0
    %v5410 = vadd.f32 0.0, %v5409
    %5411 = vmatmul.f32.gmra.mxu0 %v5283
    %v5412 = vpop.f32.mrf.mxu0
    %v5413 = vadd.f32 0.0, %v5412
    %5414 = vmatmul.f32.gmra.mxu0 %v5286
    %v5415 = vpop.f32.mrf.mxu0
    %v5416 = vadd.f32 0.0, %v5415
    %5417 = vmatmul.f32.gmra.mxu0 %v5289
    %v5418 = vpop.f32.mrf.mxu0
    %v5419 = vadd.f32 0.0, %v5418
    %5420 = vmatmul.f32.gmra.mxu0 %v5292
    %v5421 = vpop.f32.mrf.mxu0
    %v5422 = vadd.f32 0.0, %v5421
    %5423 = vmatmul.f32.gmra.mxu0 %v5295
    %v5424 = vpop.f32.mrf.mxu0
    %v5425 = vadd.f32 0.0, %v5424
    %5426 = vmatmul.f32.gmra.mxu0 %v5298
    %v5427 = vpop.f32.mrf.mxu0
    %v5428 = vadd.f32 0.0, %v5427
    %5429 = vmatmul.f32.gmra.mxu0 %v5301
    %v5430 = vpop.f32.mrf.mxu0
    %v5431 = vadd.f32 0.0, %v5430
    %5432 = vmatmul.f32.gmra.mxu0 %v5304
    %v5433 = vpop.f32.mrf.mxu0
    %v5434 = vadd.f32 0.0, %v5433
    %5435 = vmatmul.f32.gmra.mxu0 %v5307
    %v5436 = vpop.f32.mrf.mxu0
    %v5437 = vadd.f32 0.0, %v5436
    %5438 = vmatmul.f32.gmra.mxu0 %v5310
    %v5439 = vpop.f32.mrf.mxu0
    %v5440 = vadd.f32 0.0, %v5439
    %5441 = vmatmul.f32.gmra.mxu0 %v5313
    %v5442 = vpop.f32.mrf.mxu0
    %v5443 = vadd.f32 0.0, %v5442
    %5444 = vmatmul.f32.gmra.mxu0 %v5316
    %v5445 = vpop.f32.mrf.mxu0
    %v5446 = vadd.f32 0.0, %v5445
    %5447 = vdwg.mxu0
    %5448 = vmatpush.msra.mxu0 0.0
    %5449 = vmatpush.msra.mxu0 0.0
    %5450 = vmatpush.msra.mxu0 0.0
    %5451 = vmatpush.msra.mxu0 0.0
    %5452 = vmatpush.msra.mxu0 0.0
    %5453 = vmatpush.msra.mxu0 0.0
    %5454 = vmatpush.msra.mxu0 0.0
    %5455 = vmatpush.msra.mxu0 0.0
    %5456 = vmatpush.msra.mxu0 0.0
    %5457 = vmatpush.msra.mxu0 0.0
    %5458 = vmatpush.msra.mxu0 0.0
    %5459 = vmatpush.msra.mxu0 0.0
    %5460 = vmatpush.msra.mxu0 0.0
    %5461 = vmatpush.msra.mxu0 0.0
    %5462 = vmatpush.msra.mxu0 0.0
    %5463 = vmatpush.msra.mxu0 %v225
    %5464 = vmatmul.f32.gmra.mxu0 %v5271
    %v5465 = vpop.f32.mrf.mxu0
    %v5466 = vadd.f32 0.0, %v5465
    %5467 = vmatmul.f32.gmra.mxu0 %v5274
    %v5468 = vpop.f32.mrf.mxu0
    %v5469 = vadd.f32 0.0, %v5468
    %5470 = vmatmul.f32.gmra.mxu0 %v5277
    %v5471 = vpop.f32.mrf.mxu0
    %v5472 = vadd.f32 0.0, %v5471
    %5473 = vmatmul.f32.gmra.mxu0 %v5280
    %v5474 = vpop.f32.mrf.mxu0
    %v5475 = vadd.f32 0.0, %v5474
    %5476 = vmatmul.f32.gmra.mxu0 %v5283
    %v5477 = vpop.f32.mrf.mxu0
    %v5478 = vadd.f32 0.0, %v5477
    %5479 = vmatmul.f32.gmra.mxu0 %v5286
    %v5480 = vpop.f32.mrf.mxu0
    %v5481 = vadd.f32 0.0, %v5480
    %5482 = vmatmul.f32.gmra.mxu0 %v5289
    %v5483 = vpop.f32.mrf.mxu0
    %v5484 = vadd.f32 0.0, %v5483
    %5485 = vmatmul.f32.gmra.mxu0 %v5292
    %v5486 = vpop.f32.mrf.mxu0
    %v5487 = vadd.f32 0.0, %v5486
    %5488 = vmatmul.f32.gmra.mxu0 %v5295
    %v5489 = vpop.f32.mrf.mxu0
    %v5490 = vadd.f32 0.0, %v5489
    %5491 = vmatmul.f32.gmra.mxu0 %v5298
    %v5492 = vpop.f32.mrf.mxu0
    %v5493 = vadd.f32 0.0, %v5492
    %5494 = vmatmul.f32.gmra.mxu0 %v5301
    %v5495 = vpop.f32.mrf.mxu0
    %v5496 = vadd.f32 0.0, %v5495
    %5497 = vmatmul.f32.gmra.mxu0 %v5304
    %v5498 = vpop.f32.mrf.mxu0
    %v5499 = vadd.f32 0.0, %v5498
    %5500 = vmatmul.f32.gmra.mxu0 %v5307
    %v5501 = vpop.f32.mrf.mxu0
    %v5502 = vadd.f32 0.0, %v5501
    %5503 = vmatmul.f32.gmra.mxu0 %v5310
    %v5504 = vpop.f32.mrf.mxu0
    %v5505 = vadd.f32 0.0, %v5504
    %5506 = vmatmul.f32.gmra.mxu0 %v5313
    %v5507 = vpop.f32.mrf.mxu0
    %v5508 = vadd.f32 0.0, %v5507
    %5509 = vmatmul.f32.gmra.mxu0 %v5316
    %v5510 = vpop.f32.mrf.mxu0
    %v5511 = vadd.f32 0.0, %v5510
    %5512 = vdwg.mxu0
    %5513 = vmatpush.msra.mxu0 0.0
    %5514 = vmatpush.msra.mxu0 0.0
    %5515 = vmatpush.msra.mxu0 0.0
    %5516 = vmatpush.msra.mxu0 0.0
    %5517 = vmatpush.msra.mxu0 0.0
    %5518 = vmatpush.msra.mxu0 0.0
    %5519 = vmatpush.msra.mxu0 0.0
    %5520 = vmatpush.msra.mxu0 0.0
    %5521 = vmatpush.msra.mxu0 0.0
    %5522 = vmatpush.msra.mxu0 0.0
    %5523 = vmatpush.msra.mxu0 0.0
    %5524 = vmatpush.msra.mxu0 0.0
    %5525 = vmatpush.msra.mxu0 0.0
    %5526 = vmatpush.msra.mxu0 0.0
    %5527 = vmatpush.msra.mxu0 0.0
    %5528 = vmatpush.msra.mxu0 %v226
    %5529 = vmatmul.f32.gmra.mxu0 %v5271
    %v5530 = vpop.f32.mrf.mxu0
    %v5531 = vadd.f32 0.0, %v5530
    %5532 = vmatmul.f32.gmra.mxu0 %v5274
    %v5533 = vpop.f32.mrf.mxu0
    %v5534 = vadd.f32 0.0, %v5533
    %5535 = vmatmul.f32.gmra.mxu0 %v5277
    %v5536 = vpop.f32.mrf.mxu0
    %v5537 = vadd.f32 0.0, %v5536
    %5538 = vmatmul.f32.gmra.mxu0 %v5280
    %v5539 = vpop.f32.mrf.mxu0
    %v5540 = vadd.f32 0.0, %v5539
    %5541 = vmatmul.f32.gmra.mxu0 %v5283
    %v5542 = vpop.f32.mrf.mxu0
    %v5543 = vadd.f32 0.0, %v5542
    %5544 = vmatmul.f32.gmra.mxu0 %v5286
    %v5545 = vpop.f32.mrf.mxu0
    %v5546 = vadd.f32 0.0, %v5545
    %5547 = vmatmul.f32.gmra.mxu0 %v5289
    %v5548 = vpop.f32.mrf.mxu0
    %v5549 = vadd.f32 0.0, %v5548
    %5550 = vmatmul.f32.gmra.mxu0 %v5292
    %v5551 = vpop.f32.mrf.mxu0
    %v5552 = vadd.f32 0.0, %v5551
    %5553 = vmatmul.f32.gmra.mxu0 %v5295
    %v5554 = vpop.f32.mrf.mxu0
    %v5555 = vadd.f32 0.0, %v5554
    %5556 = vmatmul.f32.gmra.mxu0 %v5298
    %v5557 = vpop.f32.mrf.mxu0
    %v5558 = vadd.f32 0.0, %v5557
    %5559 = vmatmul.f32.gmra.mxu0 %v5301
    %v5560 = vpop.f32.mrf.mxu0
    %v5561 = vadd.f32 0.0, %v5560
    %5562 = vmatmul.f32.gmra.mxu0 %v5304
    %v5563 = vpop.f32.mrf.mxu0
    %v5564 = vadd.f32 0.0, %v5563
    %5565 = vmatmul.f32.gmra.mxu0 %v5307
    %v5566 = vpop.f32.mrf.mxu0
    %v5567 = vadd.f32 0.0, %v5566
    %5568 = vmatmul.f32.gmra.mxu0 %v5310
    %v5569 = vpop.f32.mrf.mxu0
    %v5570 = vadd.f32 0.0, %v5569
    %5571 = vmatmul.f32.gmra.mxu0 %v5313
    %v5572 = vpop.f32.mrf.mxu0
    %v5573 = vadd.f32 0.0, %v5572
    %5574 = vmatmul.f32.gmra.mxu0 %v5316
    %v5575 = vpop.f32.mrf.mxu0
    %v5576 = vadd.f32 0.0, %v5575
    %5577 = vdwg.mxu0
    %v5578 = vpack.c.bf16 %v5339, %v5336
    %v5579 = vpack.c.bf16 %v5404, %v5401
    %v5580 = vpack.c.bf16 %v5469, %v5466
    %v5581 = vpack.c.bf16 %v5534, %v5531
    %v5582 = vpack.c.bf16 %v5345, %v5342
    %v5583 = vpack.c.bf16 %v5410, %v5407
    %v5584 = vpack.c.bf16 %v5475, %v5472
    %v5585 = vpack.c.bf16 %v5540, %v5537
    %v5586 = vpack.c.bf16 %v5351, %v5348
    %v5587 = vpack.c.bf16 %v5416, %v5413
    %v5588 = vpack.c.bf16 %v5481, %v5478
    %v5589 = vpack.c.bf16 %v5546, %v5543
    %v5590 = vpack.c.bf16 %v5357, %v5354
    %v5591 = vpack.c.bf16 %v5422, %v5419
    %v5592 = vpack.c.bf16 %v5487, %v5484
    %v5593 = vpack.c.bf16 %v5552, %v5549
    %v5594 = vpack.c.bf16 %v5363, %v5360
    %v5595 = vpack.c.bf16 %v5428, %v5425
    %v5596 = vpack.c.bf16 %v5493, %v5490
    %v5597 = vpack.c.bf16 %v5558, %v5555
    %v5598 = vpack.c.bf16 %v5369, %v5366
    %v5599 = vpack.c.bf16 %v5434, %v5431
    %v5600 = vpack.c.bf16 %v5499, %v5496
    %v5601 = vpack.c.bf16 %v5564, %v5561
    %v5602 = vpack.c.bf16 %v5375, %v5372
    %v5603 = vpack.c.bf16 %v5440, %v5437
    %v5604 = vpack.c.bf16 %v5505, %v5502
    %v5605 = vpack.c.bf16 %v5570, %v5567
    %v5606 = vpack.c.bf16 %v5381, %v5378
    %v5607 = vpack.c.bf16 %v5446, %v5443
    %v5608 = vpack.c.bf16 %v5511, %v5508
    %v5609 = vpack.c.bf16 %v5576, %v5573
    %5610 = vmatpush.bf16.msra.mxu0 %v5606
    %5611 = vmatpush.bf16.msra.mxu0 %v5602
    %5612 = vmatpush.bf16.msra.mxu0 %v5598
    %5613 = vmatpush.bf16.msra.mxu0 %v5594
    %5614 = vmatpush.bf16.msra.mxu0 %v5590
    %5615 = vmatpush.bf16.msra.mxu0 %v5586
    %5616 = vmatpush.bf16.msra.mxu0 %v5582
    %5617 = vmatpush.bf16.msra.mxu0 %v5578
    %5618 = vmatmul.bf16.gmra.mxu0 %v3162
    %v5619 = vpop.f32.mrf.mxu0
    %v5620 = vadd.f32 0.0, %v5619
    %v5621 = vpop.f32.mrf.mxu0
    %v5622 = vadd.f32 0.0, %v5621
    %5623 = vmatmul.bf16.gmra.mxu0 %v3163
    %v5624 = vpop.f32.mrf.mxu0
    %v5625 = vadd.f32 0.0, %v5624
    %v5626 = vpop.f32.mrf.mxu0
    %v5627 = vadd.f32 0.0, %v5626
    %5628 = vmatmul.bf16.gmra.mxu0 %v3164
    %v5629 = vpop.f32.mrf.mxu0
    %v5630 = vadd.f32 0.0, %v5629
    %v5631 = vpop.f32.mrf.mxu0
    %v5632 = vadd.f32 0.0, %v5631
    %5633 = vmatmul.bf16.gmra.mxu0 %v3165
    %v5634 = vpop.f32.mrf.mxu0
    %v5635 = vadd.f32 0.0, %v5634
    %v5636 = vpop.f32.mrf.mxu0
    %v5637 = vadd.f32 0.0, %v5636
    %5638 = vmatmul.bf16.gmra.mxu0 %v3166
    %v5639 = vpop.f32.mrf.mxu0
    %v5640 = vadd.f32 0.0, %v5639
    %v5641 = vpop.f32.mrf.mxu0
    %v5642 = vadd.f32 0.0, %v5641
    %5643 = vmatmul.bf16.gmra.mxu0 %v3167
    %v5644 = vpop.f32.mrf.mxu0
    %v5645 = vadd.f32 0.0, %v5644
    %v5646 = vpop.f32.mrf.mxu0
    %v5647 = vadd.f32 0.0, %v5646
    %5648 = vmatmul.bf16.gmra.mxu0 %v3168
    %v5649 = vpop.f32.mrf.mxu0
    %v5650 = vadd.f32 0.0, %v5649
    %v5651 = vpop.f32.mrf.mxu0
    %v5652 = vadd.f32 0.0, %v5651
    %5653 = vmatmul.bf16.gmra.mxu0 %v3169
    %v5654 = vpop.f32.mrf.mxu0
    %v5655 = vadd.f32 0.0, %v5654
    %v5656 = vpop.f32.mrf.mxu0
    %v5657 = vadd.f32 0.0, %v5656
    %5658 = vmatmul.bf16.gmra.mxu0 %v3170
    %v5659 = vpop.f32.mrf.mxu0
    %v5660 = vadd.f32 0.0, %v5659
    %v5661 = vpop.f32.mrf.mxu0
    %v5662 = vadd.f32 0.0, %v5661
    %5663 = vmatmul.bf16.gmra.mxu0 %v3171
    %v5664 = vpop.f32.mrf.mxu0
    %v5665 = vadd.f32 0.0, %v5664
    %v5666 = vpop.f32.mrf.mxu0
    %v5667 = vadd.f32 0.0, %v5666
    %5668 = vmatmul.bf16.gmra.mxu0 %v3172
    %v5669 = vpop.f32.mrf.mxu0
    %v5670 = vadd.f32 0.0, %v5669
    %v5671 = vpop.f32.mrf.mxu0
    %v5672 = vadd.f32 0.0, %v5671
    %5673 = vmatmul.bf16.gmra.mxu0 %v3173
    %v5674 = vpop.f32.mrf.mxu0
    %v5675 = vadd.f32 0.0, %v5674
    %v5676 = vpop.f32.mrf.mxu0
    %v5677 = vadd.f32 0.0, %v5676
    %5678 = vmatmul.bf16.gmra.mxu0 %v3174
    %v5679 = vpop.f32.mrf.mxu0
    %v5680 = vadd.f32 0.0, %v5679
    %v5681 = vpop.f32.mrf.mxu0
    %v5682 = vadd.f32 0.0, %v5681
    %5683 = vmatmul.bf16.gmra.mxu0 %v3175
    %v5684 = vpop.f32.mrf.mxu0
    %v5685 = vadd.f32 0.0, %v5684
    %v5686 = vpop.f32.mrf.mxu0
    %v5687 = vadd.f32 0.0, %v5686
    %5688 = vmatmul.bf16.gmra.mxu0 %v3176
    %v5689 = vpop.f32.mrf.mxu0
    %v5690 = vadd.f32 0.0, %v5689
    %v5691 = vpop.f32.mrf.mxu0
    %v5692 = vadd.f32 0.0, %v5691
    %5693 = vmatmul.bf16.gmra.mxu0 %v3177
    %v5694 = vpop.f32.mrf.mxu0
    %v5695 = vadd.f32 0.0, %v5694
    %v5696 = vpop.f32.mrf.mxu0
    %v5697 = vadd.f32 0.0, %v5696
    %5698 = vdwg.mxu0
    %5699 = vmatpush.bf16.msra.mxu0 %v5607
    %5700 = vmatpush.bf16.msra.mxu0 %v5603
    %5701 = vmatpush.bf16.msra.mxu0 %v5599
    %5702 = vmatpush.bf16.msra.mxu0 %v5595
    %5703 = vmatpush.bf16.msra.mxu0 %v5591
    %5704 = vmatpush.bf16.msra.mxu0 %v5587
    %5705 = vmatpush.bf16.msra.mxu0 %v5583
    %5706 = vmatpush.bf16.msra.mxu0 %v5579
    %5707 = vmatmul.bf16.gmra.mxu0 %v3162
    %v5708 = vpop.f32.mrf.mxu0
    %v5709 = vadd.f32 0.0, %v5708
    %v5710 = vpop.f32.mrf.mxu0
    %v5711 = vadd.f32 0.0, %v5710
    %5712 = vmatmul.bf16.gmra.mxu0 %v3163
    %v5713 = vpop.f32.mrf.mxu0
    %v5714 = vadd.f32 0.0, %v5713
    %v5715 = vpop.f32.mrf.mxu0
    %v5716 = vadd.f32 0.0, %v5715
    %5717 = vmatmul.bf16.gmra.mxu0 %v3164
    %v5718 = vpop.f32.mrf.mxu0
    %v5719 = vadd.f32 0.0, %v5718
    %v5720 = vpop.f32.mrf.mxu0
    %v5721 = vadd.f32 0.0, %v5720
    %5722 = vmatmul.bf16.gmra.mxu0 %v3165
    %v5723 = vpop.f32.mrf.mxu0
    %v5724 = vadd.f32 0.0, %v5723
    %v5725 = vpop.f32.mrf.mxu0
    %v5726 = vadd.f32 0.0, %v5725
    %5727 = vmatmul.bf16.gmra.mxu0 %v3166
    %v5728 = vpop.f32.mrf.mxu0
    %v5729 = vadd.f32 0.0, %v5728
    %v5730 = vpop.f32.mrf.mxu0
    %v5731 = vadd.f32 0.0, %v5730
    %5732 = vmatmul.bf16.gmra.mxu0 %v3167
    %v5733 = vpop.f32.mrf.mxu0
    %v5734 = vadd.f32 0.0, %v5733
    %v5735 = vpop.f32.mrf.mxu0
    %v5736 = vadd.f32 0.0, %v5735
    %5737 = vmatmul.bf16.gmra.mxu0 %v3168
    %v5738 = vpop.f32.mrf.mxu0
    %v5739 = vadd.f32 0.0, %v5738
    %v5740 = vpop.f32.mrf.mxu0
    %v5741 = vadd.f32 0.0, %v5740
    %5742 = vmatmul.bf16.gmra.mxu0 %v3169
    %v5743 = vpop.f32.mrf.mxu0
    %v5744 = vadd.f32 0.0, %v5743
    %v5745 = vpop.f32.mrf.mxu0
    %v5746 = vadd.f32 0.0, %v5745
    %5747 = vmatmul.bf16.gmra.mxu0 %v3170
    %v5748 = vpop.f32.mrf.mxu0
    %v5749 = vadd.f32 0.0, %v5748
    %v5750 = vpop.f32.mrf.mxu0
    %v5751 = vadd.f32 0.0, %v5750
    %5752 = vmatmul.bf16.gmra.mxu0 %v3171
    %v5753 = vpop.f32.mrf.mxu0
    %v5754 = vadd.f32 0.0, %v5753
    %v5755 = vpop.f32.mrf.mxu0
    %v5756 = vadd.f32 0.0, %v5755
    %5757 = vmatmul.bf16.gmra.mxu0 %v3172
    %v5758 = vpop.f32.mrf.mxu0
    %v5759 = vadd.f32 0.0, %v5758
    %v5760 = vpop.f32.mrf.mxu0
    %v5761 = vadd.f32 0.0, %v5760
    %5762 = vmatmul.bf16.gmra.mxu0 %v3173
    %v5763 = vpop.f32.mrf.mxu0
    %v5764 = vadd.f32 0.0, %v5763
    %v5765 = vpop.f32.mrf.mxu0
    %v5766 = vadd.f32 0.0, %v5765
    %5767 = vmatmul.bf16.gmra.mxu0 %v3174
    %v5768 = vpop.f32.mrf.mxu0
    %v5769 = vadd.f32 0.0, %v5768
    %v5770 = vpop.f32.mrf.mxu0
    %v5771 = vadd.f32 0.0, %v5770
    %5772 = vmatmul.bf16.gmra.mxu0 %v3175
    %v5773 = vpop.f32.mrf.mxu0
    %v5774 = vadd.f32 0.0, %v5773
    %v5775 = vpop.f32.mrf.mxu0
    %v5776 = vadd.f32 0.0, %v5775
    %5777 = vmatmul.bf16.gmra.mxu0 %v3176
    %v5778 = vpop.f32.mrf.mxu0
    %v5779 = vadd.f32 0.0, %v5778
    %v5780 = vpop.f32.mrf.mxu0
    %v5781 = vadd.f32 0.0, %v5780
    %5782 = vmatmul.bf16.gmra.mxu0 %v3177
    %v5783 = vpop.f32.mrf.mxu0
    %v5784 = vadd.f32 0.0, %v5783
    %v5785 = vpop.f32.mrf.mxu0
    %v5786 = vadd.f32 0.0, %v5785
    %5787 = vdwg.mxu0
    %5788 = vmatpush.bf16.msra.mxu0 %v5608
    %5789 = vmatpush.bf16.msra.mxu0 %v5604
    %5790 = vmatpush.bf16.msra.mxu0 %v5600
    %5791 = vmatpush.bf16.msra.mxu0 %v5596
    %5792 = vmatpush.bf16.msra.mxu0 %v5592
    %5793 = vmatpush.bf16.msra.mxu0 %v5588
    %5794 = vmatpush.bf16.msra.mxu0 %v5584
    %5795 = vmatpush.bf16.msra.mxu0 %v5580
    %5796 = vmatmul.bf16.gmra.mxu0 %v3162
    %v5797 = vpop.f32.mrf.mxu0
    %v5798 = vadd.f32 0.0, %v5797
    %v5799 = vpop.f32.mrf.mxu0
    %v5800 = vadd.f32 0.0, %v5799
    %5801 = vmatmul.bf16.gmra.mxu0 %v3163
    %v5802 = vpop.f32.mrf.mxu0
    %v5803 = vadd.f32 0.0, %v5802
    %v5804 = vpop.f32.mrf.mxu0
    %v5805 = vadd.f32 0.0, %v5804
    %5806 = vmatmul.bf16.gmra.mxu0 %v3164
    %v5807 = vpop.f32.mrf.mxu0
    %v5808 = vadd.f32 0.0, %v5807
    %v5809 = vpop.f32.mrf.mxu0
    %v5810 = vadd.f32 0.0, %v5809
    %5811 = vmatmul.bf16.gmra.mxu0 %v3165
    %v5812 = vpop.f32.mrf.mxu0
    %v5813 = vadd.f32 0.0, %v5812
    %v5814 = vpop.f32.mrf.mxu0
    %v5815 = vadd.f32 0.0, %v5814
    %5816 = vmatmul.bf16.gmra.mxu0 %v3166
    %v5817 = vpop.f32.mrf.mxu0
    %v5818 = vadd.f32 0.0, %v5817
    %v5819 = vpop.f32.mrf.mxu0
    %v5820 = vadd.f32 0.0, %v5819
    %5821 = vmatmul.bf16.gmra.mxu0 %v3167
    %v5822 = vpop.f32.mrf.mxu0
    %v5823 = vadd.f32 0.0, %v5822
    %v5824 = vpop.f32.mrf.mxu0
    %v5825 = vadd.f32 0.0, %v5824
    %5826 = vmatmul.bf16.gmra.mxu0 %v3168
    %v5827 = vpop.f32.mrf.mxu0
    %v5828 = vadd.f32 0.0, %v5827
    %v5829 = vpop.f32.mrf.mxu0
    %v5830 = vadd.f32 0.0, %v5829
    %5831 = vmatmul.bf16.gmra.mxu0 %v3169
    %v5832 = vpop.f32.mrf.mxu0
    %v5833 = vadd.f32 0.0, %v5832
    %v5834 = vpop.f32.mrf.mxu0
    %v5835 = vadd.f32 0.0, %v5834
    %5836 = vmatmul.bf16.gmra.mxu0 %v3170
    %v5837 = vpop.f32.mrf.mxu0
    %v5838 = vadd.f32 0.0, %v5837
    %v5839 = vpop.f32.mrf.mxu0
    %v5840 = vadd.f32 0.0, %v5839
    %5841 = vmatmul.bf16.gmra.mxu0 %v3171
    %v5842 = vpop.f32.mrf.mxu0
    %v5843 = vadd.f32 0.0, %v5842
    %v5844 = vpop.f32.mrf.mxu0
    %v5845 = vadd.f32 0.0, %v5844
    %5846 = vmatmul.bf16.gmra.mxu0 %v3172
    %v5847 = vpop.f32.mrf.mxu0
    %v5848 = vadd.f32 0.0, %v5847
    %v5849 = vpop.f32.mrf.mxu0
    %v5850 = vadd.f32 0.0, %v5849
    %5851 = vmatmul.bf16.gmra.mxu0 %v3173
    %v5852 = vpop.f32.mrf.mxu0
    %v5853 = vadd.f32 0.0, %v5852
    %v5854 = vpop.f32.mrf.mxu0
    %v5855 = vadd.f32 0.0, %v5854
    %5856 = vmatmul.bf16.gmra.mxu0 %v3174
    %v5857 = vpop.f32.mrf.mxu0
    %v5858 = vadd.f32 0.0, %v5857
    %v5859 = vpop.f32.mrf.mxu0
    %v5860 = vadd.f32 0.0, %v5859
    %5861 = vmatmul.bf16.gmra.mxu0 %v3175
    %v5862 = vpop.f32.mrf.mxu0
    %v5863 = vadd.f32 0.0, %v5862
    %v5864 = vpop.f32.mrf.mxu0
    %v5865 = vadd.f32 0.0, %v5864
    %5866 = vmatmul.bf16.gmra.mxu0 %v3176
    %v5867 = vpop.f32.mrf.mxu0
    %v5868 = vadd.f32 0.0, %v5867
    %v5869 = vpop.f32.mrf.mxu0
    %v5870 = vadd.f32 0.0, %v5869
    %5871 = vmatmul.bf16.gmra.mxu0 %v3177
    %v5872 = vpop.f32.mrf.mxu0
    %v5873 = vadd.f32 0.0, %v5872
    %v5874 = vpop.f32.mrf.mxu0
    %v5875 = vadd.f32 0.0, %v5874
    %5876 = vdwg.mxu0
    %5877 = vmatpush.bf16.msra.mxu0 %v5609
    %5878 = vmatpush.bf16.msra.mxu0 %v5605
    %5879 = vmatpush.bf16.msra.mxu0 %v5601
    %5880 = vmatpush.bf16.msra.mxu0 %v5597
    %5881 = vmatpush.bf16.msra.mxu0 %v5593
    %5882 = vmatpush.bf16.msra.mxu0 %v5589
    %5883 = vmatpush.bf16.msra.mxu0 %v5585
    %5884 = vmatpush.bf16.msra.mxu0 %v5581
    %5885 = vmatmul.bf16.gmra.mxu0 %v3162
    %v5886 = vpop.f32.mrf.mxu0
    %v5887 = vadd.f32 0.0, %v5886
    %v5888 = vpop.f32.mrf.mxu0
    %v5889 = vadd.f32 0.0, %v5888
    %5890 = vmatmul.bf16.gmra.mxu0 %v3163
    %v5891 = vpop.f32.mrf.mxu0
    %v5892 = vadd.f32 0.0, %v5891
    %v5893 = vpop.f32.mrf.mxu0
    %v5894 = vadd.f32 0.0, %v5893
    %5895 = vmatmul.bf16.gmra.mxu0 %v3164
    %v5896 = vpop.f32.mrf.mxu0
    %v5897 = vadd.f32 0.0, %v5896
    %v5898 = vpop.f32.mrf.mxu0
    %v5899 = vadd.f32 0.0, %v5898
    %5900 = vmatmul.bf16.gmra.mxu0 %v3165
    %v5901 = vpop.f32.mrf.mxu0
    %v5902 = vadd.f32 0.0, %v5901
    %v5903 = vpop.f32.mrf.mxu0
    %v5904 = vadd.f32 0.0, %v5903
    %5905 = vmatmul.bf16.gmra.mxu0 %v3166
    %v5906 = vpop.f32.mrf.mxu0
    %v5907 = vadd.f32 0.0, %v5906
    %v5908 = vpop.f32.mrf.mxu0
    %v5909 = vadd.f32 0.0, %v5908
    %5910 = vmatmul.bf16.gmra.mxu0 %v3167
    %v5911 = vpop.f32.mrf.mxu0
    %v5912 = vadd.f32 0.0, %v5911
    %v5913 = vpop.f32.mrf.mxu0
    %v5914 = vadd.f32 0.0, %v5913
    %5915 = vmatmul.bf16.gmra.mxu0 %v3168
    %v5916 = vpop.f32.mrf.mxu0
    %v5917 = vadd.f32 0.0, %v5916
    %v5918 = vpop.f32.mrf.mxu0
    %v5919 = vadd.f32 0.0, %v5918
    %5920 = vmatmul.bf16.gmra.mxu0 %v3169
    %v5921 = vpop.f32.mrf.mxu0
    %v5922 = vadd.f32 0.0, %v5921
    %v5923 = vpop.f32.mrf.mxu0
    %v5924 = vadd.f32 0.0, %v5923
    %5925 = vmatmul.bf16.gmra.mxu0 %v3170
    %v5926 = vpop.f32.mrf.mxu0
    %v5927 = vadd.f32 0.0, %v5926
    %v5928 = vpop.f32.mrf.mxu0
    %v5929 = vadd.f32 0.0, %v5928
    %5930 = vmatmul.bf16.gmra.mxu0 %v3171
    %v5931 = vpop.f32.mrf.mxu0
    %v5932 = vadd.f32 0.0, %v5931
    %v5933 = vpop.f32.mrf.mxu0
    %v5934 = vadd.f32 0.0, %v5933
    %5935 = vmatmul.bf16.gmra.mxu0 %v3172
    %v5936 = vpop.f32.mrf.mxu0
    %v5937 = vadd.f32 0.0, %v5936
    %v5938 = vpop.f32.mrf.mxu0
    %v5939 = vadd.f32 0.0, %v5938
    %5940 = vmatmul.bf16.gmra.mxu0 %v3173
    %v5941 = vpop.f32.mrf.mxu0
    %v5942 = vadd.f32 0.0, %v5941
    %v5943 = vpop.f32.mrf.mxu0
    %v5944 = vadd.f32 0.0, %v5943
    %5945 = vmatmul.bf16.gmra.mxu0 %v3174
    %v5946 = vpop.f32.mrf.mxu0
    %v5947 = vadd.f32 0.0, %v5946
    %v5948 = vpop.f32.mrf.mxu0
    %v5949 = vadd.f32 0.0, %v5948
    %5950 = vmatmul.bf16.gmra.mxu0 %v3175
    %v5951 = vpop.f32.mrf.mxu0
    %v5952 = vadd.f32 0.0, %v5951
    %v5953 = vpop.f32.mrf.mxu0
    %v5954 = vadd.f32 0.0, %v5953
    %5955 = vmatmul.bf16.gmra.mxu0 %v3176
    %v5956 = vpop.f32.mrf.mxu0
    %v5957 = vadd.f32 0.0, %v5956
    %v5958 = vpop.f32.mrf.mxu0
    %v5959 = vadd.f32 0.0, %v5958
    %5960 = vmatmul.bf16.gmra.mxu0 %v3177
    %v5961 = vpop.f32.mrf.mxu0
    %v5962 = vadd.f32 0.0, %v5961
    %v5963 = vpop.f32.mrf.mxu0
    %v5964 = vadd.f32 0.0, %v5963
    %5965 = vdwg.mxu0
    %v5966 = vmul.f32 %v5620, %v2253
    %v5967 = vmul.f32 %v5709, %v2254
    %v5968 = vmul.f32 %v5798, %v2255
    %v5969 = vmul.f32 %v5887, %v2256
    %v5970 = vmul.f32 %v5622, %v2269
    %v5971 = vmul.f32 %v5711, %v2270
    %v5972 = vmul.f32 %v5800, %v2271
    %v5973 = vmul.f32 %v5889, %v2272
    %v5974 = vmul.f32 %v5625, %v2285
    %v5975 = vmul.f32 %v5714, %v2286
    %v5976 = vmul.f32 %v5803, %v2287
    %v5977 = vmul.f32 %v5892, %v2288
    %v5978 = vmul.f32 %v5627, %v2301
    %v5979 = vmul.f32 %v5716, %v2302
    %v5980 = vmul.f32 %v5805, %v2303
    %v5981 = vmul.f32 %v5894, %v2304
    %v5982 = vmul.f32 %v5630, %v2317
    %v5983 = vmul.f32 %v5719, %v2318
    %v5984 = vmul.f32 %v5808, %v2319
    %v5985 = vmul.f32 %v5897, %v2320
    %v5986 = vmul.f32 %v5632, %v2333
    %v5987 = vmul.f32 %v5721, %v2334
    %v5988 = vmul.f32 %v5810, %v2335
    %v5989 = vmul.f32 %v5899, %v2336
    %v5990 = vmul.f32 %v5635, %v2349
    %v5991 = vmul.f32 %v5724, %v2350
    %v5992 = vmul.f32 %v5813, %v2351
    %v5993 = vmul.f32 %v5902, %v2352
    %v5994 = vmul.f32 %v5637, %v2365
    %v5995 = vmul.f32 %v5726, %v2366
    %v5996 = vmul.f32 %v5815, %v2367
    %v5997 = vmul.f32 %v5904, %v2368
    %v5998 = vmul.f32 %v5640, %v2381
    %v5999 = vmul.f32 %v5729, %v2382
    %v6000 = vmul.f32 %v5818, %v2383
    %v6001 = vmul.f32 %v5907, %v2384
    %v6002 = vmul.f32 %v5642, %v2397
    %v6003 = vmul.f32 %v5731, %v2398
    %v6004 = vmul.f32 %v5820, %v2399
    %v6005 = vmul.f32 %v5909, %v2400
    %v6006 = vmul.f32 %v5645, %v2413
    %v6007 = vmul.f32 %v5734, %v2414
    %v6008 = vmul.f32 %v5823, %v2415
    %v6009 = vmul.f32 %v5912, %v2416
    %v6010 = vmul.f32 %v5647, %v2429
    %v6011 = vmul.f32 %v5736, %v2430
    %v6012 = vmul.f32 %v5825, %v2431
    %v6013 = vmul.f32 %v5914, %v2432
    %v6014 = vmul.f32 %v5650, %v2445
    %v6015 = vmul.f32 %v5739, %v2446
    %v6016 = vmul.f32 %v5828, %v2447
    %v6017 = vmul.f32 %v5917, %v2448
    %v6018 = vmul.f32 %v5652, %v2461
    %v6019 = vmul.f32 %v5741, %v2462
    %v6020 = vmul.f32 %v5830, %v2463
    %v6021 = vmul.f32 %v5919, %v2464
    %v6022 = vmul.f32 %v5655, %v2477
    %v6023 = vmul.f32 %v5744, %v2478
    %v6024 = vmul.f32 %v5833, %v2479
    %v6025 = vmul.f32 %v5922, %v2480
    %v6026 = vmul.f32 %v5657, %v2493
    %v6027 = vmul.f32 %v5746, %v2494
    %v6028 = vmul.f32 %v5835, %v2495
    %v6029 = vmul.f32 %v5924, %v2496
    %v6030 = vmul.f32 %v5660, %v2509
    %v6031 = vmul.f32 %v5749, %v2510
    %v6032 = vmul.f32 %v5838, %v2511
    %v6033 = vmul.f32 %v5927, %v2512
    %v6034 = vmul.f32 %v5662, %v2525
    %v6035 = vmul.f32 %v5751, %v2526
    %v6036 = vmul.f32 %v5840, %v2527
    %v6037 = vmul.f32 %v5929, %v2528
    %v6038 = vmul.f32 %v5665, %v2541
    %v6039 = vmul.f32 %v5754, %v2542
    %v6040 = vmul.f32 %v5843, %v2543
    %v6041 = vmul.f32 %v5932, %v2544
    %v6042 = vmul.f32 %v5667, %v2557
    %v6043 = vmul.f32 %v5756, %v2558
    %v6044 = vmul.f32 %v5845, %v2559
    %v6045 = vmul.f32 %v5934, %v2560
    %v6046 = vmul.f32 %v5670, %v2573
    %v6047 = vmul.f32 %v5759, %v2574
    %v6048 = vmul.f32 %v5848, %v2575
    %v6049 = vmul.f32 %v5937, %v2576
    %v6050 = vmul.f32 %v5672, %v2589
    %v6051 = vmul.f32 %v5761, %v2590
    %v6052 = vmul.f32 %v5850, %v2591
    %v6053 = vmul.f32 %v5939, %v2592
    %v6054 = vmul.f32 %v5675, %v2605
    %v6055 = vmul.f32 %v5764, %v2606
    %v6056 = vmul.f32 %v5853, %v2607
    %v6057 = vmul.f32 %v5942, %v2608
    %v6058 = vmul.f32 %v5677, %v2621
    %v6059 = vmul.f32 %v5766, %v2622
    %v6060 = vmul.f32 %v5855, %v2623
    %v6061 = vmul.f32 %v5944, %v2624
    %v6062 = vmul.f32 %v5680, %v2637
    %v6063 = vmul.f32 %v5769, %v2638
    %v6064 = vmul.f32 %v5858, %v2639
    %v6065 = vmul.f32 %v5947, %v2640
    %v6066 = vmul.f32 %v5682, %v2653
    %v6067 = vmul.f32 %v5771, %v2654
    %v6068 = vmul.f32 %v5860, %v2655
    %v6069 = vmul.f32 %v5949, %v2656
    %v6070 = vmul.f32 %v5685, %v2669
    %v6071 = vmul.f32 %v5774, %v2670
    %v6072 = vmul.f32 %v5863, %v2671
    %v6073 = vmul.f32 %v5952, %v2672
    %v6074 = vmul.f32 %v5687, %v2685
    %v6075 = vmul.f32 %v5776, %v2686
    %v6076 = vmul.f32 %v5865, %v2687
    %v6077 = vmul.f32 %v5954, %v2688
    %v6078 = vmul.f32 %v5690, %v2701
    %v6079 = vmul.f32 %v5779, %v2702
    %v6080 = vmul.f32 %v5868, %v2703
    %v6081 = vmul.f32 %v5957, %v2704
    %v6082 = vmul.f32 %v5692, %v2717
    %v6083 = vmul.f32 %v5781, %v2718
    %v6084 = vmul.f32 %v5870, %v2719
    %v6085 = vmul.f32 %v5959, %v2720
    %v6086 = vmul.f32 %v5695, %v2733
    %v6087 = vmul.f32 %v5784, %v2734
    %v6088 = vmul.f32 %v5873, %v2735
    %v6089 = vmul.f32 %v5962, %v2736
    %v6090 = vmul.f32 %v5697, %v2749
    %v6091 = vmul.f32 %v5786, %v2750
    %v6092 = vmul.f32 %v5875, %v2751
    %v6093 = vmul.f32 %v5964, %v2752
    %v6094 = vadd.f32 %v5966, %v5967
    %v6095 = vadd.f32 %v5970, %v5971
    %v6096 = vadd.f32 %v5974, %v5975
    %v6097 = vadd.f32 %v5978, %v5979
    %v6098 = vadd.f32 %v5982, %v5983
    %v6099 = vadd.f32 %v5986, %v5987
    %v6100 = vadd.f32 %v5990, %v5991
    %v6101 = vadd.f32 %v5994, %v5995
    %v6102 = vadd.f32 %v5998, %v5999
    %v6103 = vadd.f32 %v6002, %v6003
    %v6104 = vadd.f32 %v6006, %v6007
    %v6105 = vadd.f32 %v6010, %v6011
    %v6106 = vadd.f32 %v6014, %v6015
    %v6107 = vadd.f32 %v6018, %v6019
    %v6108 = vadd.f32 %v6022, %v6023
    %v6109 = vadd.f32 %v6026, %v6027
    %v6110 = vadd.f32 %v6030, %v6031
    %v6111 = vadd.f32 %v6034, %v6035
    %v6112 = vadd.f32 %v6038, %v6039
    %v6113 = vadd.f32 %v6042, %v6043
    %v6114 = vadd.f32 %v6046, %v6047
    %v6115 = vadd.f32 %v6050, %v6051
    %v6116 = vadd.f32 %v6054, %v6055
    %v6117 = vadd.f32 %v6058, %v6059
    %v6118 = vadd.f32 %v6062, %v6063
    %v6119 = vadd.f32 %v6066, %v6067
    %v6120 = vadd.f32 %v6070, %v6071
    %v6121 = vadd.f32 %v6074, %v6075
    %v6122 = vadd.f32 %v6078, %v6079
    %v6123 = vadd.f32 %v6082, %v6083
    %v6124 = vadd.f32 %v6086, %v6087
    %v6125 = vadd.f32 %v6090, %v6091
    %v6126 = vadd.f32 %v5968, %v5969
    %v6127 = vadd.f32 %v5972, %v5973
    %v6128 = vadd.f32 %v5976, %v5977
    %v6129 = vadd.f32 %v5980, %v5981
    %v6130 = vadd.f32 %v5984, %v5985
    %v6131 = vadd.f32 %v5988, %v5989
    %v6132 = vadd.f32 %v5992, %v5993
    %v6133 = vadd.f32 %v5996, %v5997
    %v6134 = vadd.f32 %v6000, %v6001
    %v6135 = vadd.f32 %v6004, %v6005
    %v6136 = vadd.f32 %v6008, %v6009
    %v6137 = vadd.f32 %v6012, %v6013
    %v6138 = vadd.f32 %v6016, %v6017
    %v6139 = vadd.f32 %v6020, %v6021
    %v6140 = vadd.f32 %v6024, %v6025
    %v6141 = vadd.f32 %v6028, %v6029
    %v6142 = vadd.f32 %v6032, %v6033
    %v6143 = vadd.f32 %v6036, %v6037
    %v6144 = vadd.f32 %v6040, %v6041
    %v6145 = vadd.f32 %v6044, %v6045
    %v6146 = vadd.f32 %v6048, %v6049
    %v6147 = vadd.f32 %v6052, %v6053
    %v6148 = vadd.f32 %v6056, %v6057
    %v6149 = vadd.f32 %v6060, %v6061
    %v6150 = vadd.f32 %v6064, %v6065
    %v6151 = vadd.f32 %v6068, %v6069
    %v6152 = vadd.f32 %v6072, %v6073
    %v6153 = vadd.f32 %v6076, %v6077
    %v6154 = vadd.f32 %v6080, %v6081
    %v6155 = vadd.f32 %v6084, %v6085
    %v6156 = vadd.f32 %v6088, %v6089
    %v6157 = vadd.f32 %v6092, %v6093
    %v6158 = vadd.f32 %v6094, %v6126
    %v6159 = vadd.f32 %v6095, %v6127
    %v6160 = vadd.f32 %v6096, %v6128
    %v6161 = vadd.f32 %v6097, %v6129
    %v6162 = vadd.f32 %v6098, %v6130
    %v6163 = vadd.f32 %v6099, %v6131
    %v6164 = vadd.f32 %v6100, %v6132
    %v6165 = vadd.f32 %v6101, %v6133
    %v6166 = vadd.f32 %v6102, %v6134
    %v6167 = vadd.f32 %v6103, %v6135
    %v6168 = vadd.f32 %v6104, %v6136
    %v6169 = vadd.f32 %v6105, %v6137
    %v6170 = vadd.f32 %v6106, %v6138
    %v6171 = vadd.f32 %v6107, %v6139
    %v6172 = vadd.f32 %v6108, %v6140
    %v6173 = vadd.f32 %v6109, %v6141
    %v6174 = vadd.f32 %v6110, %v6142
    %v6175 = vadd.f32 %v6111, %v6143
    %v6176 = vadd.f32 %v6112, %v6144
    %v6177 = vadd.f32 %v6113, %v6145
    %v6178 = vadd.f32 %v6114, %v6146
    %v6179 = vadd.f32 %v6115, %v6147
    %v6180 = vadd.f32 %v6116, %v6148
    %v6181 = vadd.f32 %v6117, %v6149
    %v6182 = vadd.f32 %v6118, %v6150
    %v6183 = vadd.f32 %v6119, %v6151
    %v6184 = vadd.f32 %v6120, %v6152
    %v6185 = vadd.f32 %v6121, %v6153
    %v6186 = vadd.f32 %v6122, %v6154
    %v6187 = vadd.f32 %v6123, %v6155
    %v6188 = vadd.f32 %v6124, %v6156
    %v6189 = vadd.f32 %v6125, %v6157
    %v6190 = vpack.c.bf16 %v6159, %v6158
    %v6191 = vpack.c.bf16 %v6161, %v6160
    %v6192 = vpack.c.bf16 %v6163, %v6162
    %v6193 = vpack.c.bf16 %v6165, %v6164
    %v6194 = vpack.c.bf16 %v6167, %v6166
    %v6195 = vpack.c.bf16 %v6169, %v6168
    %v6196 = vpack.c.bf16 %v6171, %v6170
    %v6197 = vpack.c.bf16 %v6173, %v6172
    %v6198 = vpack.c.bf16 %v6175, %v6174
    %v6199 = vpack.c.bf16 %v6177, %v6176
    %v6200 = vpack.c.bf16 %v6179, %v6178
    %v6201 = vpack.c.bf16 %v6181, %v6180
    %v6202 = vpack.c.bf16 %v6183, %v6182
    %v6203 = vpack.c.bf16 %v6185, %v6184
    %v6204 = vpack.c.bf16 %v6187, %v6186
    %v6205 = vpack.c.bf16 %v6189, %v6188
    %6206 = vmatpush.bf16.msra.mxu0 %v6197
    %6207 = vmatpush.bf16.msra.mxu0 %v6196
    %6208 = vmatpush.bf16.msra.mxu0 %v6195
    %6209 = vmatpush.bf16.msra.mxu0 %v6194
    %6210 = vmatpush.bf16.msra.mxu0 %v6193
    %6211 = vmatpush.bf16.msra.mxu0 %v6192
    %6212 = vmatpush.bf16.msra.mxu0 %v6191
    %6213 = vmatpush.bf16.msra.mxu0 %v6190
    %6214 = vmatmul.bf16.gmra.mxu0 %v3838
    %v6215 = vpop.f32.mrf.mxu0
    %v6216 = vadd.f32 0.0, %v6215
    %v6217 = vpop.f32.mrf.mxu0
    %v6218 = vadd.f32 0.0, %v6217
    %6219 = vmatmul.bf16.gmra.mxu0 %v3840
    %v6220 = vpop.f32.mrf.mxu0
    %v6221 = vadd.f32 0.0, %v6220
    %v6222 = vpop.f32.mrf.mxu0
    %v6223 = vadd.f32 0.0, %v6222
    %6224 = vmatmul.bf16.gmra.mxu0 %v3842
    %v6225 = vpop.f32.mrf.mxu0
    %v6226 = vadd.f32 0.0, %v6225
    %v6227 = vpop.f32.mrf.mxu0
    %v6228 = vadd.f32 0.0, %v6227
    %6229 = vmatmul.bf16.gmra.mxu0 %v3844
    %v6230 = vpop.f32.mrf.mxu0
    %v6231 = vadd.f32 0.0, %v6230
    %v6232 = vpop.f32.mrf.mxu0
    %v6233 = vadd.f32 0.0, %v6232
    %6234 = vmatmul.bf16.gmra.mxu0 %v3846
    %v6235 = vpop.f32.mrf.mxu0
    %v6236 = vadd.f32 0.0, %v6235
    %v6237 = vpop.f32.mrf.mxu0
    %v6238 = vadd.f32 0.0, %v6237
    %6239 = vmatmul.bf16.gmra.mxu0 %v3848
    %v6240 = vpop.f32.mrf.mxu0
    %v6241 = vadd.f32 0.0, %v6240
    %v6242 = vpop.f32.mrf.mxu0
    %v6243 = vadd.f32 0.0, %v6242
    %6244 = vmatmul.bf16.gmra.mxu0 %v3850
    %v6245 = vpop.f32.mrf.mxu0
    %v6246 = vadd.f32 0.0, %v6245
    %v6247 = vpop.f32.mrf.mxu0
    %v6248 = vadd.f32 0.0, %v6247
    %6249 = vmatmul.bf16.gmra.mxu0 %v3852
    %v6250 = vpop.f32.mrf.mxu0
    %v6251 = vadd.f32 0.0, %v6250
    %v6252 = vpop.f32.mrf.mxu0
    %v6253 = vadd.f32 0.0, %v6252
    %6254 = vdwg.mxu0
    %6255 = vmatpush.bf16.msra.mxu0 %v6205
    %6256 = vmatpush.bf16.msra.mxu0 %v6204
    %6257 = vmatpush.bf16.msra.mxu0 %v6203
    %6258 = vmatpush.bf16.msra.mxu0 %v6202
    %6259 = vmatpush.bf16.msra.mxu0 %v6201
    %6260 = vmatpush.bf16.msra.mxu0 %v6200
    %6261 = vmatpush.bf16.msra.mxu0 %v6199
    %6262 = vmatpush.bf16.msra.mxu0 %v6198
    %6263 = vmatmul.bf16.gmra.mxu0 %v3839
    %v6264 = vpop.f32.mrf.mxu0
    %v6265 = vadd.f32 %v6216, %v6264
    %v6266 = vpop.f32.mrf.mxu0
    %v6267 = vadd.f32 %v6218, %v6266
    %6268 = vmatmul.bf16.gmra.mxu0 %v3841
    %v6269 = vpop.f32.mrf.mxu0
    %v6270 = vadd.f32 %v6221, %v6269
    %v6271 = vpop.f32.mrf.mxu0
    %v6272 = vadd.f32 %v6223, %v6271
    %6273 = vmatmul.bf16.gmra.mxu0 %v3843
    %v6274 = vpop.f32.mrf.mxu0
    %v6275 = vadd.f32 %v6226, %v6274
    %v6276 = vpop.f32.mrf.mxu0
    %v6277 = vadd.f32 %v6228, %v6276
    %6278 = vmatmul.bf16.gmra.mxu0 %v3845
    %v6279 = vpop.f32.mrf.mxu0
    %v6280 = vadd.f32 %v6231, %v6279
    %v6281 = vpop.f32.mrf.mxu0
    %v6282 = vadd.f32 %v6233, %v6281
    %6283 = vmatmul.bf16.gmra.mxu0 %v3847
    %v6284 = vpop.f32.mrf.mxu0
    %v6285 = vadd.f32 %v6236, %v6284
    %v6286 = vpop.f32.mrf.mxu0
    %v6287 = vadd.f32 %v6238, %v6286
    %6288 = vmatmul.bf16.gmra.mxu0 %v3849
    %v6289 = vpop.f32.mrf.mxu0
    %v6290 = vadd.f32 %v6241, %v6289
    %v6291 = vpop.f32.mrf.mxu0
    %v6292 = vadd.f32 %v6243, %v6291
    %6293 = vmatmul.bf16.gmra.mxu0 %v3851
    %v6294 = vpop.f32.mrf.mxu0
    %v6295 = vadd.f32 %v6246, %v6294
    %v6296 = vpop.f32.mrf.mxu0
    %v6297 = vadd.f32 %v6248, %v6296
    %6298 = vmatmul.bf16.gmra.mxu0 %v3853
    %v6299 = vpop.f32.mrf.mxu0
    %v6300 = vadd.f32 %v6251, %v6299
    %v6301 = vpop.f32.mrf.mxu0
    %v6302 = vadd.f32 %v6253, %v6301
    %6303 = vdwg.mxu0
    %s6304 = scalar_lea.vmem [#allocation11], 4
    %v6305 = vld [vmem:[%s6304] sm:$0x3]
    %s6306 = scalar_lea.vmem %s7, 16
    %v6307 = vld [vmem:[%s6306] sm:$0xff]
    %6308 = vmatpush.msra.mxu0 0.0
    %6309 = vmatpush.msra.mxu0 0.0
    %6310 = vmatpush.msra.mxu0 0.0
    %6311 = vmatpush.msra.mxu0 0.0
    %6312 = vmatpush.msra.mxu0 0.0
    %6313 = vmatpush.msra.mxu0 0.0
    %6314 = vmatpush.msra.mxu0 0.0
    %6315 = vmatpush.msra.mxu0 0.0
    %6316 = vmatpush.msra.mxu0 0.0
    %6317 = vmatpush.msra.mxu0 0.0
    %6318 = vmatpush.msra.mxu0 0.0
    %6319 = vmatpush.msra.mxu0 0.0
    %6320 = vmatpush.msra.mxu0 0.0
    %6321 = vmatpush.msra.mxu0 0.0
    %6322 = vmatpush.msra.mxu0 0.0
    %6323 = vmatpush.msra.mxu0 %v6307
    %6324 = vmatmul.f32.gmra.mxu0 %v5271
    %v6325 = vpop.f32.mrf.mxu0
    %v6326 = vadd.f32 %v6265, %v6325
    %6327 = vmatmul.f32.gmra.mxu0 %v5274
    %v6328 = vpop.f32.mrf.mxu0
    %v6329 = vadd.f32 %v6267, %v6328
    %6330 = vmatmul.f32.gmra.mxu0 %v5277
    %v6331 = vpop.f32.mrf.mxu0
    %v6332 = vadd.f32 %v6270, %v6331
    %6333 = vmatmul.f32.gmra.mxu0 %v5280
    %v6334 = vpop.f32.mrf.mxu0
    %v6335 = vadd.f32 %v6272, %v6334
    %6336 = vmatmul.f32.gmra.mxu0 %v5283
    %v6337 = vpop.f32.mrf.mxu0
    %v6338 = vadd.f32 %v6275, %v6337
    %6339 = vmatmul.f32.gmra.mxu0 %v5286
    %v6340 = vpop.f32.mrf.mxu0
    %v6341 = vadd.f32 %v6277, %v6340
    %6342 = vmatmul.f32.gmra.mxu0 %v5289
    %v6343 = vpop.f32.mrf.mxu0
    %v6344 = vadd.f32 %v6280, %v6343
    %6345 = vmatmul.f32.gmra.mxu0 %v5292
    %v6346 = vpop.f32.mrf.mxu0
    %v6347 = vadd.f32 %v6282, %v6346
    %6348 = vmatmul.f32.gmra.mxu0 %v5295
    %v6349 = vpop.f32.mrf.mxu0
    %v6350 = vadd.f32 %v6285, %v6349
    %6351 = vmatmul.f32.gmra.mxu0 %v5298
    %v6352 = vpop.f32.mrf.mxu0
    %v6353 = vadd.f32 %v6287, %v6352
    %6354 = vmatmul.f32.gmra.mxu0 %v5301
    %v6355 = vpop.f32.mrf.mxu0
    %v6356 = vadd.f32 %v6290, %v6355
    %6357 = vmatmul.f32.gmra.mxu0 %v5304
    %v6358 = vpop.f32.mrf.mxu0
    %v6359 = vadd.f32 %v6292, %v6358
    %6360 = vmatmul.f32.gmra.mxu0 %v5307
    %v6361 = vpop.f32.mrf.mxu0
    %v6362 = vadd.f32 %v6295, %v6361
    %6363 = vmatmul.f32.gmra.mxu0 %v5310
    %v6364 = vpop.f32.mrf.mxu0
    %v6365 = vadd.f32 %v6297, %v6364
    %6366 = vmatmul.f32.gmra.mxu0 %v5313
    %v6367 = vpop.f32.mrf.mxu0
    %v6368 = vadd.f32 %v6300, %v6367
    %6369 = vmatmul.f32.gmra.mxu0 %v5316
    %v6370 = vpop.f32.mrf.mxu0
    %v6371 = vadd.f32 %v6302, %v6370
    %6372 = vdwg.mxu0
    %v6373 = vperm.slane %v6305, 0
    %v6374 = vmul.f32 %v6326, %v6373
    %v6375 = vmul.f32 %v6329, %v6373
    %v6376 = vmul.f32 %v6332, %v6373
    %v6377 = vmul.f32 %v6335, %v6373
    %v6378 = vmul.f32 %v6338, %v6373
    %v6379 = vmul.f32 %v6341, %v6373
    %v6380 = vmul.f32 %v6344, %v6373
    %v6381 = vmul.f32 %v6347, %v6373
    %v6382 = vmul.f32 %v6350, %v6373
    %v6383 = vmul.f32 %v6353, %v6373
    %v6384 = vmul.f32 %v6356, %v6373
    %v6385 = vmul.f32 %v6359, %v6373
    %v6386 = vmul.f32 %v6362, %v6373
    %v6387 = vmul.f32 %v6365, %v6373
    %v6388 = vmul.f32 %v6368, %v6373
    %v6389 = vmul.f32 %v6371, %v6373
    %v6390 = vperm.slane %v6305, 1
    %v6391 = vadd.f32 %v6374, %v6390
    %v6392 = vadd.f32 %v6375, %v6390
    %v6393 = vadd.f32 %v6376, %v6390
    %v6394 = vadd.f32 %v6377, %v6390
    %v6395 = vadd.f32 %v6378, %v6390
    %v6396 = vadd.f32 %v6379, %v6390
    %v6397 = vadd.f32 %v6380, %v6390
    %v6398 = vadd.f32 %v6381, %v6390
    %v6399 = vadd.f32 %v6382, %v6390
    %v6400 = vadd.f32 %v6383, %v6390
    %v6401 = vadd.f32 %v6384, %v6390
    %v6402 = vadd.f32 %v6385, %v6390
    %v6403 = vadd.f32 %v6386, %v6390
    %v6404 = vadd.f32 %v6387, %v6390
    %v6405 = vadd.f32 %v6388, %v6390
    %v6406 = vadd.f32 %v6389, %v6390
    %v6407 = vmax.f32 %v6391, 0.0
    %v6408 = vmax.f32 %v6392, 0.0
    %v6409 = vmax.f32 %v6393, 0.0
    %v6410 = vmax.f32 %v6394, 0.0
    %v6411 = vmax.f32 %v6395, 0.0
    %v6412 = vmax.f32 %v6396, 0.0
    %v6413 = vmax.f32 %v6397, 0.0
    %v6414 = vmax.f32 %v6398, 0.0
    %v6415 = vmax.f32 %v6399, 0.0
    %v6416 = vmax.f32 %v6400, 0.0
    %v6417 = vmax.f32 %v6401, 0.0
    %v6418 = vmax.f32 %v6402, 0.0
    %v6419 = vmax.f32 %v6403, 0.0
    %v6420 = vmax.f32 %v6404, 0.0
    %v6421 = vmax.f32 %v6405, 0.0
    %v6422 = vmax.f32 %v6406, 0.0
    %v6423 = vadd.f32 %v5254, %v6407
    %v6424 = vadd.f32 %v5255, %v6408
    %v6425 = vadd.f32 %v5256, %v6409
    %v6426 = vadd.f32 %v5257, %v6410
    %v6427 = vadd.f32 %v5258, %v6411
    %v6428 = vadd.f32 %v5259, %v6412
    %v6429 = vadd.f32 %v5260, %v6413
    %v6430 = vadd.f32 %v5261, %v6414
    %v6431 = vadd.f32 %v5262, %v6415
    %v6432 = vadd.f32 %v5263, %v6416
    %v6433 = vadd.f32 %v5264, %v6417
    %v6434 = vadd.f32 %v5265, %v6418
    %v6435 = vadd.f32 %v5266, %v6419
    %v6436 = vadd.f32 %v5267, %v6420
    %v6437 = vadd.f32 %v5268, %v6421
    %v6438 = vadd.f32 %v5269, %v6422
    %v6440 = vsel %vm2757, %v6423, 0
    %v6443 = vsel %vm2757, %v6424, 0
    %v6446 = vsel %vm2757, %v6425, 0
    %v6449 = vsel %vm2757, %v6426, 0
    %v6452 = vsel %vm2757, %v6427, 0
    %v6455 = vsel %vm2757, %v6428, 0
    %v6458 = vsel %vm2757, %v6429, 0
    %v6461 = vsel %vm2757, %v6430, 0
    %v6464 = vsel %vm2757, %v6431, 0
    %v6467 = vsel %vm2757, %v6432, 0
    %v6470 = vsel %vm2757, %v6433, 0
    %v6473 = vsel %vm2757, %v6434, 0
    %v6476 = vsel %vm2757, %v6435, 0
    %v6479 = vsel %vm2757, %v6436, 0
    %v6482 = vsel %vm2757, %v6437, 0
    %v6485 = vsel %vm2757, %v6438, 0
    %6487 = vmatpush.msra.mxu0 0.0
    %6488 = vmatpush.msra.mxu0 0.0
    %6489 = vmatpush.msra.mxu0 0.0
    %6490 = vmatpush.msra.mxu0 0.0
    %6491 = vmatpush.msra.mxu0 0.0
    %6492 = vmatpush.msra.mxu0 0.0
    %6493 = vmatpush.msra.mxu0 0.0
    %6494 = vmatpush.msra.mxu0 0.0
    %6495 = vmatpush.msra.mxu0 0.0
    %6496 = vmatpush.msra.mxu0 0.0
    %6497 = vmatpush.msra.mxu0 0.0
    %6498 = vmatpush.msra.mxu0 0.0
    %6499 = vmatpush.msra.mxu0 0.0
    %6500 = vmatpush.msra.mxu0 0.0
    %6501 = vmatpush.msra.mxu0 0.0
    %6502 = vmatpush.msra.mxu0 %v223
    %6503 = vmatmul.f32.gmra.mxu0 %v6440
    %v6504 = vpop.f32.mrf.mxu0
    %v6505 = vadd.f32 0.0, %v6504
    %6506 = vmatmul.f32.gmra.mxu0 %v6443
    %v6507 = vpop.f32.mrf.mxu0
    %v6508 = vadd.f32 0.0, %v6507
    %6509 = vmatmul.f32.gmra.mxu0 %v6446
    %v6510 = vpop.f32.mrf.mxu0
    %v6511 = vadd.f32 0.0, %v6510
    %6512 = vmatmul.f32.gmra.mxu0 %v6449
    %v6513 = vpop.f32.mrf.mxu0
    %v6514 = vadd.f32 0.0, %v6513
    %6515 = vmatmul.f32.gmra.mxu0 %v6452
    %v6516 = vpop.f32.mrf.mxu0
    %v6517 = vadd.f32 0.0, %v6516
    %6518 = vmatmul.f32.gmra.mxu0 %v6455
    %v6519 = vpop.f32.mrf.mxu0
    %v6520 = vadd.f32 0.0, %v6519
    %6521 = vmatmul.f32.gmra.mxu0 %v6458
    %v6522 = vpop.f32.mrf.mxu0
    %v6523 = vadd.f32 0.0, %v6522
    %6524 = vmatmul.f32.gmra.mxu0 %v6461
    %v6525 = vpop.f32.mrf.mxu0
    %v6526 = vadd.f32 0.0, %v6525
    %6527 = vmatmul.f32.gmra.mxu0 %v6464
    %v6528 = vpop.f32.mrf.mxu0
    %v6529 = vadd.f32 0.0, %v6528
    %6530 = vmatmul.f32.gmra.mxu0 %v6467
    %v6531 = vpop.f32.mrf.mxu0
    %v6532 = vadd.f32 0.0, %v6531
    %6533 = vmatmul.f32.gmra.mxu0 %v6470
    %v6534 = vpop.f32.mrf.mxu0
    %v6535 = vadd.f32 0.0, %v6534
    %6536 = vmatmul.f32.gmra.mxu0 %v6473
    %v6537 = vpop.f32.mrf.mxu0
    %v6538 = vadd.f32 0.0, %v6537
    %6539 = vmatmul.f32.gmra.mxu0 %v6476
    %v6540 = vpop.f32.mrf.mxu0
    %v6541 = vadd.f32 0.0, %v6540
    %6542 = vmatmul.f32.gmra.mxu0 %v6479
    %v6543 = vpop.f32.mrf.mxu0
    %v6544 = vadd.f32 0.0, %v6543
    %6545 = vmatmul.f32.gmra.mxu0 %v6482
    %v6546 = vpop.f32.mrf.mxu0
    %v6547 = vadd.f32 0.0, %v6546
    %6548 = vmatmul.f32.gmra.mxu0 %v6485
    %v6549 = vpop.f32.mrf.mxu0
    %v6550 = vadd.f32 0.0, %v6549
    %6551 = vdwg.mxu0
    %6552 = vmatpush.msra.mxu0 0.0
    %6553 = vmatpush.msra.mxu0 0.0
    %6554 = vmatpush.msra.mxu0 0.0
    %6555 = vmatpush.msra.mxu0 0.0
    %6556 = vmatpush.msra.mxu0 0.0
    %6557 = vmatpush.msra.mxu0 0.0
    %6558 = vmatpush.msra.mxu0 0.0
    %6559 = vmatpush.msra.mxu0 0.0
    %6560 = vmatpush.msra.mxu0 0.0
    %6561 = vmatpush.msra.mxu0 0.0
    %6562 = vmatpush.msra.mxu0 0.0
    %6563 = vmatpush.msra.mxu0 0.0
    %6564 = vmatpush.msra.mxu0 0.0
    %6565 = vmatpush.msra.mxu0 0.0
    %6566 = vmatpush.msra.mxu0 0.0
    %6567 = vmatpush.msra.mxu0 %v224
    %6568 = vmatmul.f32.gmra.mxu0 %v6440
    %v6569 = vpop.f32.mrf.mxu0
    %v6570 = vadd.f32 0.0, %v6569
    %6571 = vmatmul.f32.gmra.mxu0 %v6443
    %v6572 = vpop.f32.mrf.mxu0
    %v6573 = vadd.f32 0.0, %v6572
    %6574 = vmatmul.f32.gmra.mxu0 %v6446
    %v6575 = vpop.f32.mrf.mxu0
    %v6576 = vadd.f32 0.0, %v6575
    %6577 = vmatmul.f32.gmra.mxu0 %v6449
    %v6578 = vpop.f32.mrf.mxu0
    %v6579 = vadd.f32 0.0, %v6578
    %6580 = vmatmul.f32.gmra.mxu0 %v6452
    %v6581 = vpop.f32.mrf.mxu0
    %v6582 = vadd.f32 0.0, %v6581
    %6583 = vmatmul.f32.gmra.mxu0 %v6455
    %v6584 = vpop.f32.mrf.mxu0
    %v6585 = vadd.f32 0.0, %v6584
    %6586 = vmatmul.f32.gmra.mxu0 %v6458
    %v6587 = vpop.f32.mrf.mxu0
    %v6588 = vadd.f32 0.0, %v6587
    %6589 = vmatmul.f32.gmra.mxu0 %v6461
    %v6590 = vpop.f32.mrf.mxu0
    %v6591 = vadd.f32 0.0, %v6590
    %6592 = vmatmul.f32.gmra.mxu0 %v6464
    %v6593 = vpop.f32.mrf.mxu0
    %v6594 = vadd.f32 0.0, %v6593
    %6595 = vmatmul.f32.gmra.mxu0 %v6467
    %v6596 = vpop.f32.mrf.mxu0
    %v6597 = vadd.f32 0.0, %v6596
    %6598 = vmatmul.f32.gmra.mxu0 %v6470
    %v6599 = vpop.f32.mrf.mxu0
    %v6600 = vadd.f32 0.0, %v6599
    %6601 = vmatmul.f32.gmra.mxu0 %v6473
    %v6602 = vpop.f32.mrf.mxu0
    %v6603 = vadd.f32 0.0, %v6602
    %6604 = vmatmul.f32.gmra.mxu0 %v6476
    %v6605 = vpop.f32.mrf.mxu0
    %v6606 = vadd.f32 0.0, %v6605
    %6607 = vmatmul.f32.gmra.mxu0 %v6479
    %v6608 = vpop.f32.mrf.mxu0
    %v6609 = vadd.f32 0.0, %v6608
    %6610 = vmatmul.f32.gmra.mxu0 %v6482
    %v6611 = vpop.f32.mrf.mxu0
    %v6612 = vadd.f32 0.0, %v6611
    %6613 = vmatmul.f32.gmra.mxu0 %v6485
    %v6614 = vpop.f32.mrf.mxu0
    %v6615 = vadd.f32 0.0, %v6614
    %6616 = vdwg.mxu0
    %6617 = vmatpush.msra.mxu0 0.0
    %6618 = vmatpush.msra.mxu0 0.0
    %6619 = vmatpush.msra.mxu0 0.0
    %6620 = vmatpush.msra.mxu0 0.0
    %6621 = vmatpush.msra.mxu0 0.0
    %6622 = vmatpush.msra.mxu0 0.0
    %6623 = vmatpush.msra.mxu0 0.0
    %6624 = vmatpush.msra.mxu0 0.0
    %6625 = vmatpush.msra.mxu0 0.0
    %6626 = vmatpush.msra.mxu0 0.0
    %6627 = vmatpush.msra.mxu0 0.0
    %6628 = vmatpush.msra.mxu0 0.0
    %6629 = vmatpush.msra.mxu0 0.0
    %6630 = vmatpush.msra.mxu0 0.0
    %6631 = vmatpush.msra.mxu0 0.0
    %6632 = vmatpush.msra.mxu0 %v225
    %6633 = vmatmul.f32.gmra.mxu0 %v6440
    %v6634 = vpop.f32.mrf.mxu0
    %v6635 = vadd.f32 0.0, %v6634
    %6636 = vmatmul.f32.gmra.mxu0 %v6443
    %v6637 = vpop.f32.mrf.mxu0
    %v6638 = vadd.f32 0.0, %v6637
    %6639 = vmatmul.f32.gmra.mxu0 %v6446
    %v6640 = vpop.f32.mrf.mxu0
    %v6641 = vadd.f32 0.0, %v6640
    %6642 = vmatmul.f32.gmra.mxu0 %v6449
    %v6643 = vpop.f32.mrf.mxu0
    %v6644 = vadd.f32 0.0, %v6643
    %6645 = vmatmul.f32.gmra.mxu0 %v6452
    %v6646 = vpop.f32.mrf.mxu0
    %v6647 = vadd.f32 0.0, %v6646
    %6648 = vmatmul.f32.gmra.mxu0 %v6455
    %v6649 = vpop.f32.mrf.mxu0
    %v6650 = vadd.f32 0.0, %v6649
    %6651 = vmatmul.f32.gmra.mxu0 %v6458
    %v6652 = vpop.f32.mrf.mxu0
    %v6653 = vadd.f32 0.0, %v6652
    %6654 = vmatmul.f32.gmra.mxu0 %v6461
    %v6655 = vpop.f32.mrf.mxu0
    %v6656 = vadd.f32 0.0, %v6655
    %6657 = vmatmul.f32.gmra.mxu0 %v6464
    %v6658 = vpop.f32.mrf.mxu0
    %v6659 = vadd.f32 0.0, %v6658
    %6660 = vmatmul.f32.gmra.mxu0 %v6467
    %v6661 = vpop.f32.mrf.mxu0
    %v6662 = vadd.f32 0.0, %v6661
    %6663 = vmatmul.f32.gmra.mxu0 %v6470
    %v6664 = vpop.f32.mrf.mxu0
    %v6665 = vadd.f32 0.0, %v6664
    %6666 = vmatmul.f32.gmra.mxu0 %v6473
    %v6667 = vpop.f32.mrf.mxu0
    %v6668 = vadd.f32 0.0, %v6667
    %6669 = vmatmul.f32.gmra.mxu0 %v6476
    %v6670 = vpop.f32.mrf.mxu0
    %v6671 = vadd.f32 0.0, %v6670
    %6672 = vmatmul.f32.gmra.mxu0 %v6479
    %v6673 = vpop.f32.mrf.mxu0
    %v6674 = vadd.f32 0.0, %v6673
    %6675 = vmatmul.f32.gmra.mxu0 %v6482
    %v6676 = vpop.f32.mrf.mxu0
    %v6677 = vadd.f32 0.0, %v6676
    %6678 = vmatmul.f32.gmra.mxu0 %v6485
    %v6679 = vpop.f32.mrf.mxu0
    %v6680 = vadd.f32 0.0, %v6679
    %6681 = vdwg.mxu0
    %6682 = vmatpush.msra.mxu0 0.0
    %6683 = vmatpush.msra.mxu0 0.0
    %6684 = vmatpush.msra.mxu0 0.0
    %6685 = vmatpush.msra.mxu0 0.0
    %6686 = vmatpush.msra.mxu0 0.0
    %6687 = vmatpush.msra.mxu0 0.0
    %6688 = vmatpush.msra.mxu0 0.0
    %6689 = vmatpush.msra.mxu0 0.0
    %6690 = vmatpush.msra.mxu0 0.0
    %6691 = vmatpush.msra.mxu0 0.0
    %6692 = vmatpush.msra.mxu0 0.0
    %6693 = vmatpush.msra.mxu0 0.0
    %6694 = vmatpush.msra.mxu0 0.0
    %6695 = vmatpush.msra.mxu0 0.0
    %6696 = vmatpush.msra.mxu0 0.0
    %6697 = vmatpush.msra.mxu0 %v226
    %6698 = vmatmul.f32.gmra.mxu0 %v6440
    %v6699 = vpop.f32.mrf.mxu0
    %v6700 = vadd.f32 0.0, %v6699
    %6701 = vmatmul.f32.gmra.mxu0 %v6443
    %v6702 = vpop.f32.mrf.mxu0
    %v6703 = vadd.f32 0.0, %v6702
    %6704 = vmatmul.f32.gmra.mxu0 %v6446
    %v6705 = vpop.f32.mrf.mxu0
    %v6706 = vadd.f32 0.0, %v6705
    %6707 = vmatmul.f32.gmra.mxu0 %v6449
    %v6708 = vpop.f32.mrf.mxu0
    %v6709 = vadd.f32 0.0, %v6708
    %6710 = vmatmul.f32.gmra.mxu0 %v6452
    %v6711 = vpop.f32.mrf.mxu0
    %v6712 = vadd.f32 0.0, %v6711
    %6713 = vmatmul.f32.gmra.mxu0 %v6455
    %v6714 = vpop.f32.mrf.mxu0
    %v6715 = vadd.f32 0.0, %v6714
    %6716 = vmatmul.f32.gmra.mxu0 %v6458
    %v6717 = vpop.f32.mrf.mxu0
    %v6718 = vadd.f32 0.0, %v6717
    %6719 = vmatmul.f32.gmra.mxu0 %v6461
    %v6720 = vpop.f32.mrf.mxu0
    %v6721 = vadd.f32 0.0, %v6720
    %6722 = vmatmul.f32.gmra.mxu0 %v6464
    %v6723 = vpop.f32.mrf.mxu0
    %v6724 = vadd.f32 0.0, %v6723
    %6725 = vmatmul.f32.gmra.mxu0 %v6467
    %v6726 = vpop.f32.mrf.mxu0
    %v6727 = vadd.f32 0.0, %v6726
    %6728 = vmatmul.f32.gmra.mxu0 %v6470
    %v6729 = vpop.f32.mrf.mxu0
    %v6730 = vadd.f32 0.0, %v6729
    %6731 = vmatmul.f32.gmra.mxu0 %v6473
    %v6732 = vpop.f32.mrf.mxu0
    %v6733 = vadd.f32 0.0, %v6732
    %6734 = vmatmul.f32.gmra.mxu0 %v6476
    %v6735 = vpop.f32.mrf.mxu0
    %v6736 = vadd.f32 0.0, %v6735
    %6737 = vmatmul.f32.gmra.mxu0 %v6479
    %v6738 = vpop.f32.mrf.mxu0
    %v6739 = vadd.f32 0.0, %v6738
    %6740 = vmatmul.f32.gmra.mxu0 %v6482
    %v6741 = vpop.f32.mrf.mxu0
    %v6742 = vadd.f32 0.0, %v6741
    %6743 = vmatmul.f32.gmra.mxu0 %v6485
    %v6744 = vpop.f32.mrf.mxu0
    %v6745 = vadd.f32 0.0, %v6744
    %6746 = vdwg.mxu0
    %v6747 = vpack.c.bf16 %v6508, %v6505
    %v6748 = vpack.c.bf16 %v6573, %v6570
    %v6749 = vpack.c.bf16 %v6638, %v6635
    %v6750 = vpack.c.bf16 %v6703, %v6700
    %v6751 = vpack.c.bf16 %v6514, %v6511
    %v6752 = vpack.c.bf16 %v6579, %v6576
    %v6753 = vpack.c.bf16 %v6644, %v6641
    %v6754 = vpack.c.bf16 %v6709, %v6706
    %v6755 = vpack.c.bf16 %v6520, %v6517
    %v6756 = vpack.c.bf16 %v6585, %v6582
    %v6757 = vpack.c.bf16 %v6650, %v6647
    %v6758 = vpack.c.bf16 %v6715, %v6712
    %v6759 = vpack.c.bf16 %v6526, %v6523
    %v6760 = vpack.c.bf16 %v6591, %v6588
    %v6761 = vpack.c.bf16 %v6656, %v6653
    %v6762 = vpack.c.bf16 %v6721, %v6718
    %v6763 = vpack.c.bf16 %v6532, %v6529
    %v6764 = vpack.c.bf16 %v6597, %v6594
    %v6765 = vpack.c.bf16 %v6662, %v6659
    %v6766 = vpack.c.bf16 %v6727, %v6724
    %v6767 = vpack.c.bf16 %v6538, %v6535
    %v6768 = vpack.c.bf16 %v6603, %v6600
    %v6769 = vpack.c.bf16 %v6668, %v6665
    %v6770 = vpack.c.bf16 %v6733, %v6730
    %v6771 = vpack.c.bf16 %v6544, %v6541
    %v6772 = vpack.c.bf16 %v6609, %v6606
    %v6773 = vpack.c.bf16 %v6674, %v6671
    %v6774 = vpack.c.bf16 %v6739, %v6736
    %v6775 = vpack.c.bf16 %v6550, %v6547
    %v6776 = vpack.c.bf16 %v6615, %v6612
    %v6777 = vpack.c.bf16 %v6680, %v6677
    %v6778 = vpack.c.bf16 %v6745, %v6742
    %6779 = vmatpush.bf16.msra.mxu0 %v6775
    %6780 = vmatpush.bf16.msra.mxu0 %v6771
    %6781 = vmatpush.bf16.msra.mxu0 %v6767
    %6782 = vmatpush.bf16.msra.mxu0 %v6763
    %6783 = vmatpush.bf16.msra.mxu0 %v6759
    %6784 = vmatpush.bf16.msra.mxu0 %v6755
    %6785 = vmatpush.bf16.msra.mxu0 %v6751
    %6786 = vmatpush.bf16.msra.mxu0 %v6747
    %6787 = vmatmul.bf16.gmra.mxu0 %v3162
    %v6788 = vpop.f32.mrf.mxu0
    %v6789 = vadd.f32 0.0, %v6788
    %v6790 = vpop.f32.mrf.mxu0
    %v6791 = vadd.f32 0.0, %v6790
    %6792 = vmatmul.bf16.gmra.mxu0 %v3163
    %v6793 = vpop.f32.mrf.mxu0
    %v6794 = vadd.f32 0.0, %v6793
    %v6795 = vpop.f32.mrf.mxu0
    %v6796 = vadd.f32 0.0, %v6795
    %6797 = vmatmul.bf16.gmra.mxu0 %v3164
    %v6798 = vpop.f32.mrf.mxu0
    %v6799 = vadd.f32 0.0, %v6798
    %v6800 = vpop.f32.mrf.mxu0
    %v6801 = vadd.f32 0.0, %v6800
    %6802 = vmatmul.bf16.gmra.mxu0 %v3165
    %v6803 = vpop.f32.mrf.mxu0
    %v6804 = vadd.f32 0.0, %v6803
    %v6805 = vpop.f32.mrf.mxu0
    %v6806 = vadd.f32 0.0, %v6805
    %6807 = vmatmul.bf16.gmra.mxu0 %v3166
    %v6808 = vpop.f32.mrf.mxu0
    %v6809 = vadd.f32 0.0, %v6808
    %v6810 = vpop.f32.mrf.mxu0
    %v6811 = vadd.f32 0.0, %v6810
    %6812 = vmatmul.bf16.gmra.mxu0 %v3167
    %v6813 = vpop.f32.mrf.mxu0
    %v6814 = vadd.f32 0.0, %v6813
    %v6815 = vpop.f32.mrf.mxu0
    %v6816 = vadd.f32 0.0, %v6815
    %6817 = vmatmul.bf16.gmra.mxu0 %v3168
    %v6818 = vpop.f32.mrf.mxu0
    %v6819 = vadd.f32 0.0, %v6818
    %v6820 = vpop.f32.mrf.mxu0
    %v6821 = vadd.f32 0.0, %v6820
    %6822 = vmatmul.bf16.gmra.mxu0 %v3169
    %v6823 = vpop.f32.mrf.mxu0
    %v6824 = vadd.f32 0.0, %v6823
    %v6825 = vpop.f32.mrf.mxu0
    %v6826 = vadd.f32 0.0, %v6825
    %6827 = vmatmul.bf16.gmra.mxu0 %v3170
    %v6828 = vpop.f32.mrf.mxu0
    %v6829 = vadd.f32 0.0, %v6828
    %v6830 = vpop.f32.mrf.mxu0
    %v6831 = vadd.f32 0.0, %v6830
    %6832 = vmatmul.bf16.gmra.mxu0 %v3171
    %v6833 = vpop.f32.mrf.mxu0
    %v6834 = vadd.f32 0.0, %v6833
    %v6835 = vpop.f32.mrf.mxu0
    %v6836 = vadd.f32 0.0, %v6835
    %6837 = vmatmul.bf16.gmra.mxu0 %v3172
    %v6838 = vpop.f32.mrf.mxu0
    %v6839 = vadd.f32 0.0, %v6838
    %v6840 = vpop.f32.mrf.mxu0
    %v6841 = vadd.f32 0.0, %v6840
    %6842 = vmatmul.bf16.gmra.mxu0 %v3173
    %v6843 = vpop.f32.mrf.mxu0
    %v6844 = vadd.f32 0.0, %v6843
    %v6845 = vpop.f32.mrf.mxu0
    %v6846 = vadd.f32 0.0, %v6845
    %6847 = vmatmul.bf16.gmra.mxu0 %v3174
    %v6848 = vpop.f32.mrf.mxu0
    %v6849 = vadd.f32 0.0, %v6848
    %v6850 = vpop.f32.mrf.mxu0
    %v6851 = vadd.f32 0.0, %v6850
    %6852 = vmatmul.bf16.gmra.mxu0 %v3175
    %v6853 = vpop.f32.mrf.mxu0
    %v6854 = vadd.f32 0.0, %v6853
    %v6855 = vpop.f32.mrf.mxu0
    %v6856 = vadd.f32 0.0, %v6855
    %6857 = vmatmul.bf16.gmra.mxu0 %v3176
    %v6858 = vpop.f32.mrf.mxu0
    %v6859 = vadd.f32 0.0, %v6858
    %v6860 = vpop.f32.mrf.mxu0
    %v6861 = vadd.f32 0.0, %v6860
    %6862 = vmatmul.bf16.gmra.mxu0 %v3177
    %v6863 = vpop.f32.mrf.mxu0
    %v6864 = vadd.f32 0.0, %v6863
    %v6865 = vpop.f32.mrf.mxu0
    %v6866 = vadd.f32 0.0, %v6865
    %6867 = vdwg.mxu0
    %6868 = vmatpush.bf16.msra.mxu0 %v6776
    %6869 = vmatpush.bf16.msra.mxu0 %v6772
    %6870 = vmatpush.bf16.msra.mxu0 %v6768
    %6871 = vmatpush.bf16.msra.mxu0 %v6764
    %6872 = vmatpush.bf16.msra.mxu0 %v6760
    %6873 = vmatpush.bf16.msra.mxu0 %v6756
    %6874 = vmatpush.bf16.msra.mxu0 %v6752
    %6875 = vmatpush.bf16.msra.mxu0 %v6748
    %6876 = vmatmul.bf16.gmra.mxu0 %v3162
    %v6877 = vpop.f32.mrf.mxu0
    %v6878 = vadd.f32 0.0, %v6877
    %v6879 = vpop.f32.mrf.mxu0
    %v6880 = vadd.f32 0.0, %v6879
    %6881 = vmatmul.bf16.gmra.mxu0 %v3163
    %v6882 = vpop.f32.mrf.mxu0
    %v6883 = vadd.f32 0.0, %v6882
    %v6884 = vpop.f32.mrf.mxu0
    %v6885 = vadd.f32 0.0, %v6884
    %6886 = vmatmul.bf16.gmra.mxu0 %v3164
    %v6887 = vpop.f32.mrf.mxu0
    %v6888 = vadd.f32 0.0, %v6887
    %v6889 = vpop.f32.mrf.mxu0
    %v6890 = vadd.f32 0.0, %v6889
    %6891 = vmatmul.bf16.gmra.mxu0 %v3165
    %v6892 = vpop.f32.mrf.mxu0
    %v6893 = vadd.f32 0.0, %v6892
    %v6894 = vpop.f32.mrf.mxu0
    %v6895 = vadd.f32 0.0, %v6894
    %6896 = vmatmul.bf16.gmra.mxu0 %v3166
    %v6897 = vpop.f32.mrf.mxu0
    %v6898 = vadd.f32 0.0, %v6897
    %v6899 = vpop.f32.mrf.mxu0
    %v6900 = vadd.f32 0.0, %v6899
    %6901 = vmatmul.bf16.gmra.mxu0 %v3167
    %v6902 = vpop.f32.mrf.mxu0
    %v6903 = vadd.f32 0.0, %v6902
    %v6904 = vpop.f32.mrf.mxu0
    %v6905 = vadd.f32 0.0, %v6904
    %6906 = vmatmul.bf16.gmra.mxu0 %v3168
    %v6907 = vpop.f32.mrf.mxu0
    %v6908 = vadd.f32 0.0, %v6907
    %v6909 = vpop.f32.mrf.mxu0
    %v6910 = vadd.f32 0.0, %v6909
    %6911 = vmatmul.bf16.gmra.mxu0 %v3169
    %v6912 = vpop.f32.mrf.mxu0
    %v6913 = vadd.f32 0.0, %v6912
    %v6914 = vpop.f32.mrf.mxu0
    %v6915 = vadd.f32 0.0, %v6914
    %6916 = vmatmul.bf16.gmra.mxu0 %v3170
    %v6917 = vpop.f32.mrf.mxu0
    %v6918 = vadd.f32 0.0, %v6917
    %v6919 = vpop.f32.mrf.mxu0
    %v6920 = vadd.f32 0.0, %v6919
    %6921 = vmatmul.bf16.gmra.mxu0 %v3171
    %v6922 = vpop.f32.mrf.mxu0
    %v6923 = vadd.f32 0.0, %v6922
    %v6924 = vpop.f32.mrf.mxu0
    %v6925 = vadd.f32 0.0, %v6924
    %6926 = vmatmul.bf16.gmra.mxu0 %v3172
    %v6927 = vpop.f32.mrf.mxu0
    %v6928 = vadd.f32 0.0, %v6927
    %v6929 = vpop.f32.mrf.mxu0
    %v6930 = vadd.f32 0.0, %v6929
    %6931 = vmatmul.bf16.gmra.mxu0 %v3173
    %v6932 = vpop.f32.mrf.mxu0
    %v6933 = vadd.f32 0.0, %v6932
    %v6934 = vpop.f32.mrf.mxu0
    %v6935 = vadd.f32 0.0, %v6934
    %6936 = vmatmul.bf16.gmra.mxu0 %v3174
    %v6937 = vpop.f32.mrf.mxu0
    %v6938 = vadd.f32 0.0, %v6937
    %v6939 = vpop.f32.mrf.mxu0
    %v6940 = vadd.f32 0.0, %v6939
    %6941 = vmatmul.bf16.gmra.mxu0 %v3175
    %v6942 = vpop.f32.mrf.mxu0
    %v6943 = vadd.f32 0.0, %v6942
    %v6944 = vpop.f32.mrf.mxu0
    %v6945 = vadd.f32 0.0, %v6944
    %6946 = vmatmul.bf16.gmra.mxu0 %v3176
    %v6947 = vpop.f32.mrf.mxu0
    %v6948 = vadd.f32 0.0, %v6947
    %v6949 = vpop.f32.mrf.mxu0
    %v6950 = vadd.f32 0.0, %v6949
    %6951 = vmatmul.bf16.gmra.mxu0 %v3177
    %v6952 = vpop.f32.mrf.mxu0
    %v6953 = vadd.f32 0.0, %v6952
    %v6954 = vpop.f32.mrf.mxu0
    %v6955 = vadd.f32 0.0, %v6954
    %6956 = vdwg.mxu0
    %6957 = vmatpush.bf16.msra.mxu0 %v6777
    %6958 = vmatpush.bf16.msra.mxu0 %v6773
    %6959 = vmatpush.bf16.msra.mxu0 %v6769
    %6960 = vmatpush.bf16.msra.mxu0 %v6765
    %6961 = vmatpush.bf16.msra.mxu0 %v6761
    %6962 = vmatpush.bf16.msra.mxu0 %v6757
    %6963 = vmatpush.bf16.msra.mxu0 %v6753
    %6964 = vmatpush.bf16.msra.mxu0 %v6749
    %6965 = vmatmul.bf16.gmra.mxu0 %v3162
    %v6966 = vpop.f32.mrf.mxu0
    %v6967 = vadd.f32 0.0, %v6966
    %v6968 = vpop.f32.mrf.mxu0
    %v6969 = vadd.f32 0.0, %v6968
    %6970 = vmatmul.bf16.gmra.mxu0 %v3163
    %v6971 = vpop.f32.mrf.mxu0
    %v6972 = vadd.f32 0.0, %v6971
    %v6973 = vpop.f32.mrf.mxu0
    %v6974 = vadd.f32 0.0, %v6973
    %6975 = vmatmul.bf16.gmra.mxu0 %v3164
    %v6976 = vpop.f32.mrf.mxu0
    %v6977 = vadd.f32 0.0, %v6976
    %v6978 = vpop.f32.mrf.mxu0
    %v6979 = vadd.f32 0.0, %v6978
    %6980 = vmatmul.bf16.gmra.mxu0 %v3165
    %v6981 = vpop.f32.mrf.mxu0
    %v6982 = vadd.f32 0.0, %v6981
    %v6983 = vpop.f32.mrf.mxu0
    %v6984 = vadd.f32 0.0, %v6983
    %6985 = vmatmul.bf16.gmra.mxu0 %v3166
    %v6986 = vpop.f32.mrf.mxu0
    %v6987 = vadd.f32 0.0, %v6986
    %v6988 = vpop.f32.mrf.mxu0
    %v6989 = vadd.f32 0.0, %v6988
    %6990 = vmatmul.bf16.gmra.mxu0 %v3167
    %v6991 = vpop.f32.mrf.mxu0
    %v6992 = vadd.f32 0.0, %v6991
    %v6993 = vpop.f32.mrf.mxu0
    %v6994 = vadd.f32 0.0, %v6993
    %6995 = vmatmul.bf16.gmra.mxu0 %v3168
    %v6996 = vpop.f32.mrf.mxu0
    %v6997 = vadd.f32 0.0, %v6996
    %v6998 = vpop.f32.mrf.mxu0
    %v6999 = vadd.f32 0.0, %v6998
    %7000 = vmatmul.bf16.gmra.mxu0 %v3169
    %v7001 = vpop.f32.mrf.mxu0
    %v7002 = vadd.f32 0.0, %v7001
    %v7003 = vpop.f32.mrf.mxu0
    %v7004 = vadd.f32 0.0, %v7003
    %7005 = vmatmul.bf16.gmra.mxu0 %v3170
    %v7006 = vpop.f32.mrf.mxu0
    %v7007 = vadd.f32 0.0, %v7006
    %v7008 = vpop.f32.mrf.mxu0
    %v7009 = vadd.f32 0.0, %v7008
    %7010 = vmatmul.bf16.gmra.mxu0 %v3171
    %v7011 = vpop.f32.mrf.mxu0
    %v7012 = vadd.f32 0.0, %v7011
    %v7013 = vpop.f32.mrf.mxu0
    %v7014 = vadd.f32 0.0, %v7013
    %7015 = vmatmul.bf16.gmra.mxu0 %v3172
    %v7016 = vpop.f32.mrf.mxu0
    %v7017 = vadd.f32 0.0, %v7016
    %v7018 = vpop.f32.mrf.mxu0
    %v7019 = vadd.f32 0.0, %v7018
    %7020 = vmatmul.bf16.gmra.mxu0 %v3173
    %v7021 = vpop.f32.mrf.mxu0
    %v7022 = vadd.f32 0.0, %v7021
    %v7023 = vpop.f32.mrf.mxu0
    %v7024 = vadd.f32 0.0, %v7023
    %7025 = vmatmul.bf16.gmra.mxu0 %v3174
    %v7026 = vpop.f32.mrf.mxu0
    %v7027 = vadd.f32 0.0, %v7026
    %v7028 = vpop.f32.mrf.mxu0
    %v7029 = vadd.f32 0.0, %v7028
    %7030 = vmatmul.bf16.gmra.mxu0 %v3175
    %v7031 = vpop.f32.mrf.mxu0
    %v7032 = vadd.f32 0.0, %v7031
    %v7033 = vpop.f32.mrf.mxu0
    %v7034 = vadd.f32 0.0, %v7033
    %7035 = vmatmul.bf16.gmra.mxu0 %v3176
    %v7036 = vpop.f32.mrf.mxu0
    %v7037 = vadd.f32 0.0, %v7036
    %v7038 = vpop.f32.mrf.mxu0
    %v7039 = vadd.f32 0.0, %v7038
    %7040 = vmatmul.bf16.gmra.mxu0 %v3177
    %v7041 = vpop.f32.mrf.mxu0
    %v7042 = vadd.f32 0.0, %v7041
    %v7043 = vpop.f32.mrf.mxu0
    %v7044 = vadd.f32 0.0, %v7043
    %7045 = vdwg.mxu0
    %7046 = vmatpush.bf16.msra.mxu0 %v6778
    %7047 = vmatpush.bf16.msra.mxu0 %v6774
    %7048 = vmatpush.bf16.msra.mxu0 %v6770
    %7049 = vmatpush.bf16.msra.mxu0 %v6766
    %7050 = vmatpush.bf16.msra.mxu0 %v6762
    %7051 = vmatpush.bf16.msra.mxu0 %v6758
    %7052 = vmatpush.bf16.msra.mxu0 %v6754
    %7053 = vmatpush.bf16.msra.mxu0 %v6750
    %7054 = vmatmul.bf16.gmra.mxu0 %v3162
    %v7055 = vpop.f32.mrf.mxu0
    %v7056 = vadd.f32 0.0, %v7055
    %v7057 = vpop.f32.mrf.mxu0
    %v7058 = vadd.f32 0.0, %v7057
    %7059 = vmatmul.bf16.gmra.mxu0 %v3163
    %v7060 = vpop.f32.mrf.mxu0
    %v7061 = vadd.f32 0.0, %v7060
    %v7062 = vpop.f32.mrf.mxu0
    %v7063 = vadd.f32 0.0, %v7062
    %7064 = vmatmul.bf16.gmra.mxu0 %v3164
    %v7065 = vpop.f32.mrf.mxu0
    %v7066 = vadd.f32 0.0, %v7065
    %v7067 = vpop.f32.mrf.mxu0
    %v7068 = vadd.f32 0.0, %v7067
    %7069 = vmatmul.bf16.gmra.mxu0 %v3165
    %v7070 = vpop.f32.mrf.mxu0
    %v7071 = vadd.f32 0.0, %v7070
    %v7072 = vpop.f32.mrf.mxu0
    %v7073 = vadd.f32 0.0, %v7072
    %7074 = vmatmul.bf16.gmra.mxu0 %v3166
    %v7075 = vpop.f32.mrf.mxu0
    %v7076 = vadd.f32 0.0, %v7075
    %v7077 = vpop.f32.mrf.mxu0
    %v7078 = vadd.f32 0.0, %v7077
    %7079 = vmatmul.bf16.gmra.mxu0 %v3167
    %v7080 = vpop.f32.mrf.mxu0
    %v7081 = vadd.f32 0.0, %v7080
    %v7082 = vpop.f32.mrf.mxu0
    %v7083 = vadd.f32 0.0, %v7082
    %7084 = vmatmul.bf16.gmra.mxu0 %v3168
    %v7085 = vpop.f32.mrf.mxu0
    %v7086 = vadd.f32 0.0, %v7085
    %v7087 = vpop.f32.mrf.mxu0
    %v7088 = vadd.f32 0.0, %v7087
    %7089 = vmatmul.bf16.gmra.mxu0 %v3169
    %v7090 = vpop.f32.mrf.mxu0
    %v7091 = vadd.f32 0.0, %v7090
    %v7092 = vpop.f32.mrf.mxu0
    %v7093 = vadd.f32 0.0, %v7092
    %7094 = vmatmul.bf16.gmra.mxu0 %v3170
    %v7095 = vpop.f32.mrf.mxu0
    %v7096 = vadd.f32 0.0, %v7095
    %v7097 = vpop.f32.mrf.mxu0
    %v7098 = vadd.f32 0.0, %v7097
    %7099 = vmatmul.bf16.gmra.mxu0 %v3171
    %v7100 = vpop.f32.mrf.mxu0
    %v7101 = vadd.f32 0.0, %v7100
    %v7102 = vpop.f32.mrf.mxu0
    %v7103 = vadd.f32 0.0, %v7102
    %7104 = vmatmul.bf16.gmra.mxu0 %v3172
    %v7105 = vpop.f32.mrf.mxu0
    %v7106 = vadd.f32 0.0, %v7105
    %v7107 = vpop.f32.mrf.mxu0
    %v7108 = vadd.f32 0.0, %v7107
    %7109 = vmatmul.bf16.gmra.mxu0 %v3173
    %v7110 = vpop.f32.mrf.mxu0
    %v7111 = vadd.f32 0.0, %v7110
    %v7112 = vpop.f32.mrf.mxu0
    %v7113 = vadd.f32 0.0, %v7112
    %7114 = vmatmul.bf16.gmra.mxu0 %v3174
    %v7115 = vpop.f32.mrf.mxu0
    %v7116 = vadd.f32 0.0, %v7115
    %v7117 = vpop.f32.mrf.mxu0
    %v7118 = vadd.f32 0.0, %v7117
    %7119 = vmatmul.bf16.gmra.mxu0 %v3175
    %v7120 = vpop.f32.mrf.mxu0
    %v7121 = vadd.f32 0.0, %v7120
    %v7122 = vpop.f32.mrf.mxu0
    %v7123 = vadd.f32 0.0, %v7122
    %7124 = vmatmul.bf16.gmra.mxu0 %v3176
    %v7125 = vpop.f32.mrf.mxu0
    %v7126 = vadd.f32 0.0, %v7125
    %v7127 = vpop.f32.mrf.mxu0
    %v7128 = vadd.f32 0.0, %v7127
    %7129 = vmatmul.bf16.gmra.mxu0 %v3177
    %v7130 = vpop.f32.mrf.mxu0
    %v7131 = vadd.f32 0.0, %v7130
    %v7132 = vpop.f32.mrf.mxu0
    %v7133 = vadd.f32 0.0, %v7132
    %7134 = vdwg.mxu0
    %v7135 = vmul.f32 %v6789, %v2257
    %v7136 = vmul.f32 %v6878, %v2258
    %v7137 = vmul.f32 %v6967, %v2259
    %v7138 = vmul.f32 %v7056, %v2260
    %v7139 = vmul.f32 %v6791, %v2273
    %v7140 = vmul.f32 %v6880, %v2274
    %v7141 = vmul.f32 %v6969, %v2275
    %v7142 = vmul.f32 %v7058, %v2276
    %v7143 = vmul.f32 %v6794, %v2289
    %v7144 = vmul.f32 %v6883, %v2290
    %v7145 = vmul.f32 %v6972, %v2291
    %v7146 = vmul.f32 %v7061, %v2292
    %v7147 = vmul.f32 %v6796, %v2305
    %v7148 = vmul.f32 %v6885, %v2306
    %v7149 = vmul.f32 %v6974, %v2307
    %v7150 = vmul.f32 %v7063, %v2308
    %v7151 = vmul.f32 %v6799, %v2321
    %v7152 = vmul.f32 %v6888, %v2322
    %v7153 = vmul.f32 %v6977, %v2323
    %v7154 = vmul.f32 %v7066, %v2324
    %v7155 = vmul.f32 %v6801, %v2337
    %v7156 = vmul.f32 %v6890, %v2338
    %v7157 = vmul.f32 %v6979, %v2339
    %v7158 = vmul.f32 %v7068, %v2340
    %v7159 = vmul.f32 %v6804, %v2353
    %v7160 = vmul.f32 %v6893, %v2354
    %v7161 = vmul.f32 %v6982, %v2355
    %v7162 = vmul.f32 %v7071, %v2356
    %v7163 = vmul.f32 %v6806, %v2369
    %v7164 = vmul.f32 %v6895, %v2370
    %v7165 = vmul.f32 %v6984, %v2371
    %v7166 = vmul.f32 %v7073, %v2372
    %v7167 = vmul.f32 %v6809, %v2385
    %v7168 = vmul.f32 %v6898, %v2386
    %v7169 = vmul.f32 %v6987, %v2387
    %v7170 = vmul.f32 %v7076, %v2388
    %v7171 = vmul.f32 %v6811, %v2401
    %v7172 = vmul.f32 %v6900, %v2402
    %v7173 = vmul.f32 %v6989, %v2403
    %v7174 = vmul.f32 %v7078, %v2404
    %v7175 = vmul.f32 %v6814, %v2417
    %v7176 = vmul.f32 %v6903, %v2418
    %v7177 = vmul.f32 %v6992, %v2419
    %v7178 = vmul.f32 %v7081, %v2420
    %v7179 = vmul.f32 %v6816, %v2433
    %v7180 = vmul.f32 %v6905, %v2434
    %v7181 = vmul.f32 %v6994, %v2435
    %v7182 = vmul.f32 %v7083, %v2436
    %v7183 = vmul.f32 %v6819, %v2449
    %v7184 = vmul.f32 %v6908, %v2450
    %v7185 = vmul.f32 %v6997, %v2451
    %v7186 = vmul.f32 %v7086, %v2452
    %v7187 = vmul.f32 %v6821, %v2465
    %v7188 = vmul.f32 %v6910, %v2466
    %v7189 = vmul.f32 %v6999, %v2467
    %v7190 = vmul.f32 %v7088, %v2468
    %v7191 = vmul.f32 %v6824, %v2481
    %v7192 = vmul.f32 %v6913, %v2482
    %v7193 = vmul.f32 %v7002, %v2483
    %v7194 = vmul.f32 %v7091, %v2484
    %v7195 = vmul.f32 %v6826, %v2497
    %v7196 = vmul.f32 %v6915, %v2498
    %v7197 = vmul.f32 %v7004, %v2499
    %v7198 = vmul.f32 %v7093, %v2500
    %v7199 = vmul.f32 %v6829, %v2513
    %v7200 = vmul.f32 %v6918, %v2514
    %v7201 = vmul.f32 %v7007, %v2515
    %v7202 = vmul.f32 %v7096, %v2516
    %v7203 = vmul.f32 %v6831, %v2529
    %v7204 = vmul.f32 %v6920, %v2530
    %v7205 = vmul.f32 %v7009, %v2531
    %v7206 = vmul.f32 %v7098, %v2532
    %v7207 = vmul.f32 %v6834, %v2545
    %v7208 = vmul.f32 %v6923, %v2546
    %v7209 = vmul.f32 %v7012, %v2547
    %v7210 = vmul.f32 %v7101, %v2548
    %v7211 = vmul.f32 %v6836, %v2561
    %v7212 = vmul.f32 %v6925, %v2562
    %v7213 = vmul.f32 %v7014, %v2563
    %v7214 = vmul.f32 %v7103, %v2564
    %v7215 = vmul.f32 %v6839, %v2577
    %v7216 = vmul.f32 %v6928, %v2578
    %v7217 = vmul.f32 %v7017, %v2579
    %v7218 = vmul.f32 %v7106, %v2580
    %v7219 = vmul.f32 %v6841, %v2593
    %v7220 = vmul.f32 %v6930, %v2594
    %v7221 = vmul.f32 %v7019, %v2595
    %v7222 = vmul.f32 %v7108, %v2596
    %v7223 = vmul.f32 %v6844, %v2609
    %v7224 = vmul.f32 %v6933, %v2610
    %v7225 = vmul.f32 %v7022, %v2611
    %v7226 = vmul.f32 %v7111, %v2612
    %v7227 = vmul.f32 %v6846, %v2625
    %v7228 = vmul.f32 %v6935, %v2626
    %v7229 = vmul.f32 %v7024, %v2627
    %v7230 = vmul.f32 %v7113, %v2628
    %v7231 = vmul.f32 %v6849, %v2641
    %v7232 = vmul.f32 %v6938, %v2642
    %v7233 = vmul.f32 %v7027, %v2643
    %v7234 = vmul.f32 %v7116, %v2644
    %v7235 = vmul.f32 %v6851, %v2657
    %v7236 = vmul.f32 %v6940, %v2658
    %v7237 = vmul.f32 %v7029, %v2659
    %v7238 = vmul.f32 %v7118, %v2660
    %v7239 = vmul.f32 %v6854, %v2673
    %v7240 = vmul.f32 %v6943, %v2674
    %v7241 = vmul.f32 %v7032, %v2675
    %v7242 = vmul.f32 %v7121, %v2676
    %v7243 = vmul.f32 %v6856, %v2689
    %v7244 = vmul.f32 %v6945, %v2690
    %v7245 = vmul.f32 %v7034, %v2691
    %v7246 = vmul.f32 %v7123, %v2692
    %v7247 = vmul.f32 %v6859, %v2705
    %v7248 = vmul.f32 %v6948, %v2706
    %v7249 = vmul.f32 %v7037, %v2707
    %v7250 = vmul.f32 %v7126, %v2708
    %v7251 = vmul.f32 %v6861, %v2721
    %v7252 = vmul.f32 %v6950, %v2722
    %v7253 = vmul.f32 %v7039, %v2723
    %v7254 = vmul.f32 %v7128, %v2724
    %v7255 = vmul.f32 %v6864, %v2737
    %v7256 = vmul.f32 %v6953, %v2738
    %v7257 = vmul.f32 %v7042, %v2739
    %v7258 = vmul.f32 %v7131, %v2740
    %v7259 = vmul.f32 %v6866, %v2753
    %v7260 = vmul.f32 %v6955, %v2754
    %v7261 = vmul.f32 %v7044, %v2755
    %v7262 = vmul.f32 %v7133, %v2756
    %v7263 = vadd.f32 %v7135, %v7136
    %v7264 = vadd.f32 %v7139, %v7140
    %v7265 = vadd.f32 %v7143, %v7144
    %v7266 = vadd.f32 %v7147, %v7148
    %v7267 = vadd.f32 %v7151, %v7152
    %v7268 = vadd.f32 %v7155, %v7156
    %v7269 = vadd.f32 %v7159, %v7160
    %v7270 = vadd.f32 %v7163, %v7164
    %v7271 = vadd.f32 %v7167, %v7168
    %v7272 = vadd.f32 %v7171, %v7172
    %v7273 = vadd.f32 %v7175, %v7176
    %v7274 = vadd.f32 %v7179, %v7180
    %v7275 = vadd.f32 %v7183, %v7184
    %v7276 = vadd.f32 %v7187, %v7188
    %v7277 = vadd.f32 %v7191, %v7192
    %v7278 = vadd.f32 %v7195, %v7196
    %v7279 = vadd.f32 %v7199, %v7200
    %v7280 = vadd.f32 %v7203, %v7204
    %v7281 = vadd.f32 %v7207, %v7208
    %v7282 = vadd.f32 %v7211, %v7212
    %v7283 = vadd.f32 %v7215, %v7216
    %v7284 = vadd.f32 %v7219, %v7220
    %v7285 = vadd.f32 %v7223, %v7224
    %v7286 = vadd.f32 %v7227, %v7228
    %v7287 = vadd.f32 %v7231, %v7232
    %v7288 = vadd.f32 %v7235, %v7236
    %v7289 = vadd.f32 %v7239, %v7240
    %v7290 = vadd.f32 %v7243, %v7244
    %v7291 = vadd.f32 %v7247, %v7248
    %v7292 = vadd.f32 %v7251, %v7252
    %v7293 = vadd.f32 %v7255, %v7256
    %v7294 = vadd.f32 %v7259, %v7260
    %v7295 = vadd.f32 %v7137, %v7138
    %v7296 = vadd.f32 %v7141, %v7142
    %v7297 = vadd.f32 %v7145, %v7146
    %v7298 = vadd.f32 %v7149, %v7150
    %v7299 = vadd.f32 %v7153, %v7154
    %v7300 = vadd.f32 %v7157, %v7158
    %v7301 = vadd.f32 %v7161, %v7162
    %v7302 = vadd.f32 %v7165, %v7166
    %v7303 = vadd.f32 %v7169, %v7170
    %v7304 = vadd.f32 %v7173, %v7174
    %v7305 = vadd.f32 %v7177, %v7178
    %v7306 = vadd.f32 %v7181, %v7182
    %v7307 = vadd.f32 %v7185, %v7186
    %v7308 = vadd.f32 %v7189, %v7190
    %v7309 = vadd.f32 %v7193, %v7194
    %v7310 = vadd.f32 %v7197, %v7198
    %v7311 = vadd.f32 %v7201, %v7202
    %v7312 = vadd.f32 %v7205, %v7206
    %v7313 = vadd.f32 %v7209, %v7210
    %v7314 = vadd.f32 %v7213, %v7214
    %v7315 = vadd.f32 %v7217, %v7218
    %v7316 = vadd.f32 %v7221, %v7222
    %v7317 = vadd.f32 %v7225, %v7226
    %v7318 = vadd.f32 %v7229, %v7230
    %v7319 = vadd.f32 %v7233, %v7234
    %v7320 = vadd.f32 %v7237, %v7238
    %v7321 = vadd.f32 %v7241, %v7242
    %v7322 = vadd.f32 %v7245, %v7246
    %v7323 = vadd.f32 %v7249, %v7250
    %v7324 = vadd.f32 %v7253, %v7254
    %v7325 = vadd.f32 %v7257, %v7258
    %v7326 = vadd.f32 %v7261, %v7262
    %v7327 = vadd.f32 %v7263, %v7295
    %v7328 = vadd.f32 %v7264, %v7296
    %v7329 = vadd.f32 %v7265, %v7297
    %v7330 = vadd.f32 %v7266, %v7298
    %v7331 = vadd.f32 %v7267, %v7299
    %v7332 = vadd.f32 %v7268, %v7300
    %v7333 = vadd.f32 %v7269, %v7301
    %v7334 = vadd.f32 %v7270, %v7302
    %v7335 = vadd.f32 %v7271, %v7303
    %v7336 = vadd.f32 %v7272, %v7304
    %v7337 = vadd.f32 %v7273, %v7305
    %v7338 = vadd.f32 %v7274, %v7306
    %v7339 = vadd.f32 %v7275, %v7307
    %v7340 = vadd.f32 %v7276, %v7308
    %v7341 = vadd.f32 %v7277, %v7309
    %v7342 = vadd.f32 %v7278, %v7310
    %v7343 = vadd.f32 %v7279, %v7311
    %v7344 = vadd.f32 %v7280, %v7312
    %v7345 = vadd.f32 %v7281, %v7313
    %v7346 = vadd.f32 %v7282, %v7314
    %v7347 = vadd.f32 %v7283, %v7315
    %v7348 = vadd.f32 %v7284, %v7316
    %v7349 = vadd.f32 %v7285, %v7317
    %v7350 = vadd.f32 %v7286, %v7318
    %v7351 = vadd.f32 %v7287, %v7319
    %v7352 = vadd.f32 %v7288, %v7320
    %v7353 = vadd.f32 %v7289, %v7321
    %v7354 = vadd.f32 %v7290, %v7322
    %v7355 = vadd.f32 %v7291, %v7323
    %v7356 = vadd.f32 %v7292, %v7324
    %v7357 = vadd.f32 %v7293, %v7325
    %v7358 = vadd.f32 %v7294, %v7326
    %7359 = vmatpush.msra.mxu0 %v7342
    %7360 = vmatpush.msra.mxu0 %v7341
    %7361 = vmatpush.msra.mxu0 %v7340
    %7362 = vmatpush.msra.mxu0 %v7339
    %7363 = vmatpush.msra.mxu0 %v7338
    %7364 = vmatpush.msra.mxu0 %v7337
    %7365 = vmatpush.msra.mxu0 %v7336
    %7366 = vmatpush.msra.mxu0 %v7335
    %7367 = vmatpush.msra.mxu0 %v7334
    %7368 = vmatpush.msra.mxu0 %v7333
    %7369 = vmatpush.msra.mxu0 %v7332
    %7370 = vmatpush.msra.mxu0 %v7331
    %7371 = vmatpush.msra.mxu0 %v7330
    %7372 = vmatpush.msra.mxu0 %v7329
    %7373 = vmatpush.msra.mxu0 %v7328
    %7374 = vmatpush.msra.mxu0 %v7327
    %7375 = vmatmul.f32.gmra.mxu0 %v189
    %v7376 = vpop.f32.mrf.mxu0
    %v7377 = vadd.f32 0.0, %v7376
    %7378 = vmatmul.f32.gmra.mxu0 %v191
    %v7379 = vpop.f32.mrf.mxu0
    %v7380 = vadd.f32 0.0, %v7379
    %7381 = vmatmul.f32.gmra.mxu0 %v193
    %v7382 = vpop.f32.mrf.mxu0
    %v7383 = vadd.f32 0.0, %v7382
    %7384 = vmatmul.f32.gmra.mxu0 %v195
    %v7385 = vpop.f32.mrf.mxu0
    %v7386 = vadd.f32 0.0, %v7385
    %7387 = vmatmul.f32.gmra.mxu0 %v197
    %v7388 = vpop.f32.mrf.mxu0
    %v7389 = vadd.f32 0.0, %v7388
    %7390 = vmatmul.f32.gmra.mxu0 %v199
    %v7391 = vpop.f32.mrf.mxu0
    %v7392 = vadd.f32 0.0, %v7391
    %7393 = vmatmul.f32.gmra.mxu0 %v201
    %v7394 = vpop.f32.mrf.mxu0
    %v7395 = vadd.f32 0.0, %v7394
    %7396 = vmatmul.f32.gmra.mxu0 %v203
    %v7397 = vpop.f32.mrf.mxu0
    %v7398 = vadd.f32 0.0, %v7397
    %7399 = vmatmul.f32.gmra.mxu0 %v205
    %v7400 = vpop.f32.mrf.mxu0
    %v7401 = vadd.f32 0.0, %v7400
    %7402 = vmatmul.f32.gmra.mxu0 %v207
    %v7403 = vpop.f32.mrf.mxu0
    %v7404 = vadd.f32 0.0, %v7403
    %7405 = vmatmul.f32.gmra.mxu0 %v209
    %v7406 = vpop.f32.mrf.mxu0
    %v7407 = vadd.f32 0.0, %v7406
    %7408 = vmatmul.f32.gmra.mxu0 %v211
    %v7409 = vpop.f32.mrf.mxu0
    %v7410 = vadd.f32 0.0, %v7409
    %7411 = vmatmul.f32.gmra.mxu0 %v213
    %v7412 = vpop.f32.mrf.mxu0
    %v7413 = vadd.f32 0.0, %v7412
    %7414 = vmatmul.f32.gmra.mxu0 %v215
    %v7415 = vpop.f32.mrf.mxu0
    %v7416 = vadd.f32 0.0, %v7415
    %7417 = vmatmul.f32.gmra.mxu0 %v217
    %v7418 = vpop.f32.mrf.mxu0
    %v7419 = vadd.f32 0.0, %v7418
    %7420 = vmatmul.f32.gmra.mxu0 %v219
    %v7421 = vpop.f32.mrf.mxu0
    %v7422 = vadd.f32 0.0, %v7421
    %7423 = vdwg.mxu0
    %7424 = vmatpush.msra.mxu0 %v7358
    %7425 = vmatpush.msra.mxu0 %v7357
    %7426 = vmatpush.msra.mxu0 %v7356
    %7427 = vmatpush.msra.mxu0 %v7355
    %7428 = vmatpush.msra.mxu0 %v7354
    %7429 = vmatpush.msra.mxu0 %v7353
    %7430 = vmatpush.msra.mxu0 %v7352
    %7431 = vmatpush.msra.mxu0 %v7351
    %7432 = vmatpush.msra.mxu0 %v7350
    %7433 = vmatpush.msra.mxu0 %v7349
    %7434 = vmatpush.msra.mxu0 %v7348
    %7435 = vmatpush.msra.mxu0 %v7347
    %7436 = vmatpush.msra.mxu0 %v7346
    %7437 = vmatpush.msra.mxu0 %v7345
    %7438 = vmatpush.msra.mxu0 %v7344
    %7439 = vmatpush.msra.mxu0 %v7343
    %7440 = vmatmul.f32.gmra.mxu0 %v190
    %v7441 = vpop.f32.mrf.mxu0
    %v7442 = vadd.f32 %v7377, %v7441
    %7443 = vmatmul.f32.gmra.mxu0 %v192
    %v7444 = vpop.f32.mrf.mxu0
    %v7445 = vadd.f32 %v7380, %v7444
    %7446 = vmatmul.f32.gmra.mxu0 %v194
    %v7447 = vpop.f32.mrf.mxu0
    %v7448 = vadd.f32 %v7383, %v7447
    %7449 = vmatmul.f32.gmra.mxu0 %v196
    %v7450 = vpop.f32.mrf.mxu0
    %v7451 = vadd.f32 %v7386, %v7450
    %7452 = vmatmul.f32.gmra.mxu0 %v198
    %v7453 = vpop.f32.mrf.mxu0
    %v7454 = vadd.f32 %v7389, %v7453
    %7455 = vmatmul.f32.gmra.mxu0 %v200
    %v7456 = vpop.f32.mrf.mxu0
    %v7457 = vadd.f32 %v7392, %v7456
    %7458 = vmatmul.f32.gmra.mxu0 %v202
    %v7459 = vpop.f32.mrf.mxu0
    %v7460 = vadd.f32 %v7395, %v7459
    %7461 = vmatmul.f32.gmra.mxu0 %v204
    %v7462 = vpop.f32.mrf.mxu0
    %v7463 = vadd.f32 %v7398, %v7462
    %7464 = vmatmul.f32.gmra.mxu0 %v206
    %v7465 = vpop.f32.mrf.mxu0
    %v7466 = vadd.f32 %v7401, %v7465
    %7467 = vmatmul.f32.gmra.mxu0 %v208
    %v7468 = vpop.f32.mrf.mxu0
    %v7469 = vadd.f32 %v7404, %v7468
    %7470 = vmatmul.f32.gmra.mxu0 %v210
    %v7471 = vpop.f32.mrf.mxu0
    %v7472 = vadd.f32 %v7407, %v7471
    %7473 = vmatmul.f32.gmra.mxu0 %v212
    %v7474 = vpop.f32.mrf.mxu0
    %v7475 = vadd.f32 %v7410, %v7474
    %7476 = vmatmul.f32.gmra.mxu0 %v214
    %v7477 = vpop.f32.mrf.mxu0
    %v7478 = vadd.f32 %v7413, %v7477
    %7479 = vmatmul.f32.gmra.mxu0 %v216
    %v7480 = vpop.f32.mrf.mxu0
    %v7481 = vadd.f32 %v7416, %v7480
    %7482 = vmatmul.f32.gmra.mxu0 %v218
    %v7483 = vpop.f32.mrf.mxu0
    %v7484 = vadd.f32 %v7419, %v7483
    %7485 = vmatmul.f32.gmra.mxu0 %v220
    %v7486 = vpop.f32.mrf.mxu0
    %v7487 = vadd.f32 %v7422, %v7486
    %7488 = vdwg.mxu0
    %s7489 = scalar_lea.vmem [#allocation11], 6
    %v7490 = vld [vmem:[%s7489] sm:$0x3]
    %s7491 = scalar_lea.vmem %s7, 24
    %v7492 = vld [vmem:[%s7491] sm:$0xff]
    %7493 = vmatpush.msra.mxu0 0.0
    %7494 = vmatpush.msra.mxu0 0.0
    %7495 = vmatpush.msra.mxu0 0.0
    %7496 = vmatpush.msra.mxu0 0.0
    %7497 = vmatpush.msra.mxu0 0.0
    %7498 = vmatpush.msra.mxu0 0.0
    %7499 = vmatpush.msra.mxu0 0.0
    %7500 = vmatpush.msra.mxu0 0.0
    %7501 = vmatpush.msra.mxu0 0.0
    %7502 = vmatpush.msra.mxu0 0.0
    %7503 = vmatpush.msra.mxu0 0.0
    %7504 = vmatpush.msra.mxu0 0.0
    %7505 = vmatpush.msra.mxu0 0.0
    %7506 = vmatpush.msra.mxu0 0.0
    %7507 = vmatpush.msra.mxu0 0.0
    %7508 = vmatpush.msra.mxu0 %v7492
    %7509 = vmatmul.f32.gmra.mxu0 %v6440
    %v7510 = vpop.f32.mrf.mxu0
    %v7511 = vadd.f32 %v7442, %v7510
    %7512 = vmatmul.f32.gmra.mxu0 %v6443
    %v7513 = vpop.f32.mrf.mxu0
    %v7514 = vadd.f32 %v7445, %v7513
    %7515 = vmatmul.f32.gmra.mxu0 %v6446
    %v7516 = vpop.f32.mrf.mxu0
    %v7517 = vadd.f32 %v7448, %v7516
    %7518 = vmatmul.f32.gmra.mxu0 %v6449
    %v7519 = vpop.f32.mrf.mxu0
    %v7520 = vadd.f32 %v7451, %v7519
    %7521 = vmatmul.f32.gmra.mxu0 %v6452
    %v7522 = vpop.f32.mrf.mxu0
    %v7523 = vadd.f32 %v7454, %v7522
    %7524 = vmatmul.f32.gmra.mxu0 %v6455
    %v7525 = vpop.f32.mrf.mxu0
    %v7526 = vadd.f32 %v7457, %v7525
    %7527 = vmatmul.f32.gmra.mxu0 %v6458
    %v7528 = vpop.f32.mrf.mxu0
    %v7529 = vadd.f32 %v7460, %v7528
    %7530 = vmatmul.f32.gmra.mxu0 %v6461
    %v7531 = vpop.f32.mrf.mxu0
    %v7532 = vadd.f32 %v7463, %v7531
    %7533 = vmatmul.f32.gmra.mxu0 %v6464
    %v7534 = vpop.f32.mrf.mxu0
    %v7535 = vadd.f32 %v7466, %v7534
    %7536 = vmatmul.f32.gmra.mxu0 %v6467
    %v7537 = vpop.f32.mrf.mxu0
    %v7538 = vadd.f32 %v7469, %v7537
    %7539 = vmatmul.f32.gmra.mxu0 %v6470
    %v7540 = vpop.f32.mrf.mxu0
    %v7541 = vadd.f32 %v7472, %v7540
    %7542 = vmatmul.f32.gmra.mxu0 %v6473
    %v7543 = vpop.f32.mrf.mxu0
    %v7544 = vadd.f32 %v7475, %v7543
    %7545 = vmatmul.f32.gmra.mxu0 %v6476
    %v7546 = vpop.f32.mrf.mxu0
    %v7547 = vadd.f32 %v7478, %v7546
    %7548 = vmatmul.f32.gmra.mxu0 %v6479
    %v7549 = vpop.f32.mrf.mxu0
    %v7550 = vadd.f32 %v7481, %v7549
    %7551 = vmatmul.f32.gmra.mxu0 %v6482
    %v7552 = vpop.f32.mrf.mxu0
    %v7553 = vadd.f32 %v7484, %v7552
    %7554 = vmatmul.f32.gmra.mxu0 %v6485
    %v7555 = vpop.f32.mrf.mxu0
    %v7556 = vadd.f32 %v7487, %v7555
    %7557 = vdwg.mxu0
    %v7558 = vperm.slane %v7490, 0
    %v7559 = vmul.f32 %v7511, %v7558
    %v7560 = vmul.f32 %v7514, %v7558
    %v7561 = vmul.f32 %v7517, %v7558
    %v7562 = vmul.f32 %v7520, %v7558
    %v7563 = vmul.f32 %v7523, %v7558
    %v7564 = vmul.f32 %v7526, %v7558
    %v7565 = vmul.f32 %v7529, %v7558
    %v7566 = vmul.f32 %v7532, %v7558
    %v7567 = vmul.f32 %v7535, %v7558
    %v7568 = vmul.f32 %v7538, %v7558
    %v7569 = vmul.f32 %v7541, %v7558
    %v7570 = vmul.f32 %v7544, %v7558
    %v7571 = vmul.f32 %v7547, %v7558
    %v7572 = vmul.f32 %v7550, %v7558
    %v7573 = vmul.f32 %v7553, %v7558
    %v7574 = vmul.f32 %v7556, %v7558
    %v7575 = vperm.slane %v7490, 1
    %v7576 = vadd.f32 %v7559, %v7575
    %v7577 = vadd.f32 %v7560, %v7575
    %v7578 = vadd.f32 %v7561, %v7575
    %v7579 = vadd.f32 %v7562, %v7575
    %v7580 = vadd.f32 %v7563, %v7575
    %v7581 = vadd.f32 %v7564, %v7575
    %v7582 = vadd.f32 %v7565, %v7575
    %v7583 = vadd.f32 %v7566, %v7575
    %v7584 = vadd.f32 %v7567, %v7575
    %v7585 = vadd.f32 %v7568, %v7575
    %v7586 = vadd.f32 %v7569, %v7575
    %v7587 = vadd.f32 %v7570, %v7575
    %v7588 = vadd.f32 %v7571, %v7575
    %v7589 = vadd.f32 %v7572, %v7575
    %v7590 = vadd.f32 %v7573, %v7575
    %v7591 = vadd.f32 %v7574, %v7575
    %7592 = vst [vmem:[#allocation13] sm:$0xff] %v7576
    %7593 = vst [vmem:[#allocation13 + $0x8] sm:$0xff] %v7577
    %7594 = vst [vmem:[#allocation13 + $0x10] sm:$0xff] %v7578
    %7595 = vst [vmem:[#allocation13 + $0x18] sm:$0xff] %v7579
    %7596 = vst [vmem:[#allocation13 + $0x20] sm:$0xff] %v7580
    %7597 = vst [vmem:[#allocation13 + $0x28] sm:$0xff] %v7581
    %7598 = vst [vmem:[#allocation13 + $0x30] sm:$0xff] %v7582
    %7599 = vst [vmem:[#allocation13 + $0x38] sm:$0xff] %v7583
    %7600 = vst [vmem:[#allocation13 + $0x40] sm:$0xff] %v7584
    %7601 = vst [vmem:[#allocation13 + $0x48] sm:$0xff] %v7585
    %7602 = vst [vmem:[#allocation13 + $0x50] sm:$0xff] %v7586
    %7603 = vst [vmem:[#allocation13 + $0x58] sm:$0xff] %v7587
    %7604 = vst [vmem:[#allocation13 + $0x60] sm:$0xff] %v7588
    %7605 = vst [vmem:[#allocation13 + $0x68] sm:$0xff] %v7589
    %7606 = vst [vmem:[#allocation13 + $0x70] sm:$0xff] %v7590
    %7607 = vst [vmem:[#allocation13 + $0x78] sm:$0xff] %v7591
    // Predicated region
    $region62: #{tpu_custom_call.1} parent=1 // pred_check
      _
    $region63: #{tpu_custom_call.1} parent=1 // pred_check_branch
      %7609 = sbr.rel (0) target = $region65
    $region64: #{tpu_custom_call.1} parent=1 // pred_region
      %7611 = vsyncadd [#allocation4], 0
      %s7612 = sshll.u32 [#allocation13], 4
      %s7613 = int_to_ptr.vmem [resolvable:$true] %s7612
      %s7614 = sshll.u32 %s9, 4
      %s7615 = int_to_ptr.hbm [resolvable:$true] %s7614
      %7620 = dma.vmem_to_hbm [thread:$0]  %s7613, 2048, %s7615, [#allocation4], 128, 128, 8
    $region65: #{tpu_custom_call.1} parent=1 // pred_fallthru
      _
    // Predicated region
    $region66: #{tpu_custom_call.1} parent=1 // pred_check
      _
    $region67: #{tpu_custom_call.1} parent=1 // pred_check_branch
      %7622 = sbr.rel (0) target = $region69
    $region68: #{tpu_custom_call.1} parent=1 // pred_region
      %7624 = dma.done [#allocation4], 2048
    $region69: #{tpu_custom_call.1} parent=1 // pred_fallthru
      _
    %7625 = vsyncpa [#allocation3], 1
    %7626 = vsyncpa [#allocation6], 1
    %7627 = vsyncpa [#allocation9], 1
    %7628 = vsyncpa [#allocation12], 1
    %7629 = vsyncpa [#allocation4], 1

</llo_original>
